<compile_context>
chip_gen: v5e
topology: v5e:2x2
jax: 0.10.0
libtpu: 0.0.40
codegen_flags: <defaults>
</compile_context>

<pallas_src>
import functools

import jax
import jax.numpy as jnp
import numpy as np
from jax.experimental import pallas as pl
from jax.experimental.pallas import tpu as pltpu

_BN_EPS = 1e-5
_INV_SQRT2 = 0.7071067811865476
_LANE = 128


def _round_up(x, m):
    return (x + m - 1) // m * m


def _pick_row_tile(m, hw, target=2048):
    """Largest multiple of 16 dividing m that is <= target.

    Falls back to hw (which always divides m = n*hw), so there is never a ragged
    tile that would pollute the BN partial sums.
    """
    cand = (min(m, target) // 16) * 16
    while cand >= 16:
        if m % cand == 0:
            return cand
        cand -= 16
    return hw


def _vmem_limit_bytes():
    """Scoped-VMEM cap derived from the part: raise toward physical capacity on
    v5e/v6e (128 MiB), stay tight on v7x (64 MiB); keep headroom for Mosaic scratch."""
    try:
        cap = pltpu.get_tpu_info().vmem_capacity_bytes
    except Exception:
        cap = 64 * 1024 * 1024
    return int(max(min(cap - (16 << 20), 100 << 20), 32 << 20))


def _gelu_exact(x):
    # nn.GELU() default = exact erf-based GELU
    return 0.5 * x * (1.0 + jax.lax.erf(x * _INV_SQRT2))


# --------------------------- Pallas kernels ---------------------------

def _conv1_kernel(xp_ref, w1_ref, h1_ref, st_ref, *, H, W, C, Cp):
    """gelu(conv3x3(x)) + residual for one (+1 spatially padded) image.

    Single im2col-in-VMEM MXU dot; emits bf16 h1 and BN1 sum/sumsq partials.
    """
    HW = H * W
    xt = xp_ref[...]                                   # (H+2, W+2, C) f32
    xb = xt.astype(jnp.bfloat16)                       # cast the whole tile once

    # im2col: 9 shifted windows -> one (HW, 9C) operand (tap-major, cin-minor),
    # matching the (9C, Cp) weight row order.  One dot instead of 9 K=C dots.
    cols = [xb[dh:dh + H, dw:dw + W, :] for dh in range(3) for dw in range(3)]
    im2col = jnp.concatenate(cols, axis=-1).reshape(HW, 9 * C)
    acc = jnp.dot(im2col, w1_ref[...], preferred_element_type=jnp.float32)
    h = _gelu_exact(acc)                               # (HW, Cp) f32

    # Residual is the centre tap of the same tile (f32).  It cannot be folded into
    # the matmul (GELU is applied between conv1 and the add), so: one padded add.
    res = xt[1:1 + H, 1:1 + W, :].reshape(HW, C)
    if Cp > C:
        res = jnp.concatenate(
            [res, jnp.zeros((HW, Cp - C), jnp.float32)], axis=-1)
    h = h + res

    hb = h.astype(jnp.bfloat16)
    h1_ref[...] = hb
    # BN1 partials from the bf16-rounded value that pass 2 will actually normalize
    # (keeps statistics consistent with the stored data).
    hf = hb.astype(jnp.float32)
    st_ref[...] = jnp.concatenate(
        [jnp.sum(hf, axis=0, keepdims=True),
         jnp.sum(hf * hf, axis=0, keepdims=True)], axis=0)


def _mlp_kernel(h1_ref, w2_ref, b2_ref, w3_ref, h3_ref, st_ref):
    """(BN1-folded) conv2 -> GELU -> conv3 on one row tile; emits h3 + BN3 partials."""
    h2 = jnp.dot(h1_ref[...], w2_ref[...], preferred_element_type=jnp.float32)
    h2 = _gelu_exact(h2 + b2_ref[...])
    h3 = jnp.dot(h2.astype(jnp.bfloat16), w3_ref[...],
                 preferred_element_type=jnp.float32)
    h3_ref[...] = h3
    st_ref[...] = jnp.concatenate(
        [jnp.sum(h3, axis=0, keepdims=True),
         jnp.sum(h3 * h3, axis=0, keepdims=True)], axis=0)


def _bn_affine_kernel(h_ref, sc_ref, sh_ref, o_ref):
    o_ref[...] = h_ref[...] * sc_ref[...] + sh_ref[...]


# --------------------------- wrapper ---------------------------

def _bn_scale_shift(partials, gamma, beta, m):
    """Fold training-mode batch-norm (biased variance over N*H*W) into an affine."""
    s = jnp.sum(partials[:, 0, :], axis=0)
    ss = jnp.sum(partials[:, 1, :], axis=0)
    mean = s / m
    var = jnp.maximum(ss / m - mean * mean, 0.0)
    scale = gamma * jax.lax.rsqrt(var + _BN_EPS)
    shift = beta - mean * scale
    return scale, shift


def prepare_irmlp_params(w1, w2, w3, g1, b1, g3, b3):
    """One-time repack: conv weights -> zero-padded matmul matrices.

    w1 -> (9*C, Cp) bf16 im2col weight (rows tap-major, cin-minor).
    w2 -> (Cp, C2p) kept in f32 so BN1 can be folded in exactly before the bf16 cast.
    w3 -> (C2p, OUTp) bf16.
    """
    C = w1.shape[1]
    C4 = w2.shape[0]
    OUT = w3.shape[0]
    Cp = _round_up(C, _LANE)
    C2p = _round_up(C4, _LANE)
    OUTp = _round_up(OUT, _LANE)

    # conv1 (cout, cin, 3, 3) -> (kh, kw, cin, cout) -> (9*cin, cout_padded)
    w1m = jnp.transpose(w1, (2, 3, 1, 0)).reshape(9 * C, C)
    w1m = jnp.pad(w1m, ((0, 0), (0, Cp - C))).astype(jnp.bfloat16)
    # conv2 (4C, C, 1, 1) -> (C_padded, 4C_padded), f32 (BN1 folded later)
    w2m = jnp.pad(jnp.transpose(w2[:, :, 0, 0]),
                  ((0, Cp - C), (0, C2p - C4))).astype(jnp.float32)
    # conv3 (OUT, 4C, 1, 1) -> (4C_padded, OUT_padded), bf16
    w3m = jnp.pad(jnp.transpose(w3[:, :, 0, 0]),
                  ((0, C2p - C4), (0, OUTp - OUT))).astype(jnp.bfloat16)

    g1p = jnp.pad(g1.astype(jnp.float32), (0, Cp - C))
    b1p = jnp.pad(b1.astype(jnp.float32), (0, Cp - C))
    g3p = jnp.pad(g3.astype(jnp.float32), (0, OUTp - OUT))
    b3p = jnp.pad(b3.astype(jnp.float32), (0, OUTp - OUT))
    return w1m, w2m, w3m, g1p, b1p, g3p, b3p


@functools.partial(jax.jit, static_argnames=("out_dim",))
def irmlp_forward(x_nchw, w1m, w2m, w3m, g1p, b1p, g3p, b3p, *, out_dim):
    """x_nchw: (N, C, H, W) float32. Returns (N, out_dim, H, W) float32."""
    N, C, H, W = x_nchw.shape
    Cp = w1m.shape[1]
    C2p = w2m.shape[1]
    OUTp = w3m.shape[1]
    HW = H * W
    M = N * HW
    assert HW % 16 == 0, "H*W must be a multiple of 16 (bf16 sublane granule)"

    cparams = pltpu.CompilerParams(dimension_semantics=("parallel",),
                                   vmem_limit_bytes=_vmem_limit_bytes())

    # Glue: NCHW -> NHWC and +1 spatial zero-pad.  XLA fuses these into a single
    # relayout copy of x.  TODO(synk): fold the relayout/pad into pass 1 (halo DMA).
    x = jnp.transpose(x_nchw, (0, 2, 3, 1))
    xp = jnp.pad(x, ((0, 0), (1, 1), (1, 1), (0, 0)))

    # ---- pass 1: im2col conv1 + GELU + residual, BN1 partials (grid over images) ----
    h1, st1 = pl.pallas_call(
        functools.partial(_conv1_kernel, H=H, W=W, C=C, Cp=Cp),
        grid=(N,),
        in_specs=[
            pl.BlockSpec((None, H + 2, W + 2, C), lambda n: (n, 0, 0, 0)),
            pl.BlockSpec((9 * C, Cp), lambda n: (0, 0)),          # resident weight
        ],
        out_specs=[
            pl.BlockSpec((HW, Cp), lambda n: (n, 0)),
            pl.BlockSpec((None, 2, Cp), lambda n: (n, 0, 0)),
        ],
        out_shape=[
            jax.ShapeDtypeStruct((M, Cp), jnp.bfloat16),
            jax.ShapeDtypeStruct((N, 2, Cp), jnp.float32),
        ],
        compiler_params=cparams,
    )(xp, w1m)

    # Fold BN1 into conv2 (tiny XLA ops): w2' = diag(scale1) @ w2, bias2 = shift1 @ w2.
    scale1, shift1 = _bn_scale_shift(st1, g1p, b1p, M)
    w2f = (scale1[:, None] * w2m).astype(jnp.bfloat16)            # (Cp, C2p) bf16
    b2 = shift1[None, :] @ w2m                                    # (1, C2p) f32

    # ---- pass 2: conv2 (BN1-folded) -> GELU -> conv3, BN3 partials ----
    TM = _pick_row_tile(M, HW)
    G = M // TM
    cost = pl.CostEstimate(
        flops=2 * M * (Cp * C2p + C2p * OUTp),
        transcendentals=M * C2p,
        bytes_accessed=M * Cp * 2 + M * OUTp * 4
        + (Cp * C2p + C2p * OUTp) * 2 + G * 2 * OUTp * 4,
    )
    h3, st3 = pl.pallas_call(
        _mlp_kernel,
        grid=(G,),
        in_specs=[
            pl.BlockSpec((TM, Cp), lambda i: (i, 0)),             # streamed rows
            pl.BlockSpec((Cp, C2p), lambda i: (0, 0)),            # resident weights
            pl.BlockSpec((1, C2p), lambda i: (0, 0)),             # resident bias
            pl.BlockSpec((C2p, OUTp), lambda i: (0, 0)),
        ],
        out_specs=[
            pl.BlockSpec((TM, OUTp), lambda i: (i, 0)),
            pl.BlockSpec((None, 2, OUTp), lambda i: (i, 0, 0)),
        ],
        out_shape=[
            jax.ShapeDtypeStruct((M, OUTp), jnp.float32),
            jax.ShapeDtypeStruct((G, 2, OUTp), jnp.float32),
        ],
        compiler_params=cparams,
        cost_estimate=cost,
    )(h1, w2f, b2, w3m)

    scale3, shift3 = _bn_scale_shift(st3, g3p, b3p, M)

    # ---- pass 3: BN3 affine, written in place over h3 (lane-dense output) ----
    out_flat = pl.pallas_call(
        _bn_affine_kernel,
        grid=(G,),
        in_specs=[
            pl.BlockSpec((TM, OUTp), lambda i: (i, 0)),
            pl.BlockSpec((1, OUTp), lambda i: (0, 0)),
            pl.BlockSpec((1, OUTp), lambda i: (0, 0)),
        ],
        out_specs=pl.BlockSpec((TM, OUTp), lambda i: (i, 0)),
        out_shape=jax.ShapeDtypeStruct((M, OUTp), jnp.float32),
        compiler_params=cparams,
        input_output_aliases={0: 0},
    )(h3, scale3[None, :], shift3[None, :])

    out = out_flat.reshape(N, H, W, OUTp)[..., :out_dim]
    return jnp.transpose(out, (0, 3, 1, 2))


# ---------------- pure-JAX reference (verification only) ----------------

def _bn_train(x_nchw, g, b):
    mu = x_nchw.mean(axis=(0, 2, 3), keepdims=True)
    var = ((x_nchw - mu) ** 2).mean(axis=(0, 2, 3), keepdims=True)
    return ((x_nchw - mu) / jnp.sqrt(var + _BN_EPS)
            * g.reshape(1, -1, 1, 1) + b.reshape(1, -1, 1, 1))


def irmlp_ref(x, w1, w2, w3, g1, b1, g3, b3):
    dn = ('NCHW', 'OIHW', 'NCHW')
    conv = lambda a, w, pad: jax.lax.conv_general_dilated(a, w, (1, 1), pad,
                                                          dimension_numbers=dn)
    out = conv(x, w1, 'SAME')
    out = jax.nn.gelu(out, approximate=False)
    out = out + x
    out = _bn_train(out, g1, b1)
    out = conv(out, w2, 'VALID')
    out = jax.nn.gelu(out, approximate=False)
    out = conv(out, w3, 'VALID')
    out = _bn_train(out, g3, b3)
    return out


if __name__ == "__main__":
    N, C, H, W = 2, 4, 16, 16
    OUT = 8

    key = jax.random.PRNGKey(0)
    k_x, k1, k2, k3 = jax.random.split(key, 4)

    x = jax.random.normal(k_x, (N, C, H, W), dtype=jnp.float32)
    w1 = jax.random.normal(k1, (C, C, 3, 3), dtype=jnp.float32) * 0.2        # conv1
    w2 = jax.random.normal(k2, (4 * C, C, 1, 1), dtype=jnp.float32) * 0.2    # conv2
    w3 = jax.random.normal(k3, (OUT, 4 * C, 1, 1), dtype=jnp.float32) * 0.2  # conv3
    g1 = jnp.ones((C,), jnp.float32)
    b1 = jnp.zeros((C,), jnp.float32)
    g3 = jnp.ones((OUT,), jnp.float32)
    b3 = jnp.zeros((OUT,), jnp.float32)

    params = prepare_irmlp_params(w1, w2, w3, g1, b1, g3, b3)   # one-time repack
    out = irmlp_forward(x, *params, out_dim=OUT)
    out = jax.block_until_ready(out)

    ref = jax.block_until_ready(irmlp_ref(x, w1, w2, w3, g1, b1, g3, b3))
    assert out.shape == (N, OUT, H, W), out.shape
    # Tolerance rationale: matmul operands are bf16 (f32 accumulation).  Per-operand
    # rounding is ~2^-9 relative; it compounds through conv1 -> conv2 -> conv3 and is
    # then amplified by BatchNorm3's 1/sigma (sigma3 ~ 0.2 for this init, i.e. ~5x),
    # so a few 1e-2 absolute on the unit-variance normalized output is the expected
    # bf16 error floor for this module (measured ~4e-2 worst-case on this init).
    np.testing.assert_allclose(np.asarray(out), np.asarray(ref), atol=8e-2, rtol=2e-2)

    print("KERNEL_OK")
</pallas_src>

<mosaic_0001>
module attributes {stable_mosaic.version = 11 : i64} {
  func.func @_conv1_kernel(%arg0: i32, %arg1: memref<1x18x18x4xf32, #tpu.memory_space<vmem>>, %arg2: memref<36x128xbf16, #tpu.memory_space<vmem>>, %arg3: memref<256x128xbf16, #tpu.memory_space<vmem>>, %arg4: memref<1x2x128xf32, #tpu.memory_space<vmem>>) attributes {dimension_semantics = [#tpu.dimension_semantics<parallel>], iteration_bounds = array<i64: 2>, scalar_prefetch = 0 : i64, scratch_operands = 0 : i64, tpu.core_type = #tpu.core_type<tc>, window_params = [{transform_indices = @transform_0, window_bounds = array<i64: 1, 18, 18, 4>}, {pipeline_mode = #tpu.pipeline_mode<synchronous>, transform_indices = @transform_1, window_bounds = array<i64: 36, 128>}, {transform_indices = @transform_2, window_bounds = array<i64: 256, 128>}, {transform_indices = @transform_3, window_bounds = array<i64: 1, 2, 128>}]} {
    %c0 = arith.constant 0 : index
    %c0_0 = arith.constant 0 : index
    %c0_1 = arith.constant 0 : index
    %c0_2 = arith.constant 0 : index
    %0 = vector.load %arg1[%c0, %c0_0, %c0_1, %c0_2] : memref<1x18x18x4xf32, #tpu.memory_space<vmem>>, vector<1x18x18x4xf32>
    %1 = vector.shape_cast %0 : vector<1x18x18x4xf32> to vector<18x18x4xf32>
    %2 = arith.truncf %1 : vector<18x18x4xf32> to vector<18x18x4xbf16>
    %3 = vector.extract_strided_slice %2 {offsets = [0, 0, 0], sizes = [16, 16, 4], strides = [1, 1, 1]} : vector<18x18x4xbf16> to vector<16x16x4xbf16>
    %4 = vector.extract_strided_slice %2 {offsets = [0, 1, 0], sizes = [16, 16, 4], strides = [1, 1, 1]} : vector<18x18x4xbf16> to vector<16x16x4xbf16>
    %5 = vector.extract_strided_slice %2 {offsets = [0, 2, 0], sizes = [16, 16, 4], strides = [1, 1, 1]} : vector<18x18x4xbf16> to vector<16x16x4xbf16>
    %6 = vector.extract_strided_slice %2 {offsets = [1, 0, 0], sizes = [16, 16, 4], strides = [1, 1, 1]} : vector<18x18x4xbf16> to vector<16x16x4xbf16>
    %7 = vector.extract_strided_slice %2 {offsets = [1, 1, 0], sizes = [16, 16, 4], strides = [1, 1, 1]} : vector<18x18x4xbf16> to vector<16x16x4xbf16>
    %8 = vector.extract_strided_slice %2 {offsets = [1, 2, 0], sizes = [16, 16, 4], strides = [1, 1, 1]} : vector<18x18x4xbf16> to vector<16x16x4xbf16>
    %9 = vector.extract_strided_slice %2 {offsets = [2, 0, 0], sizes = [16, 16, 4], strides = [1, 1, 1]} : vector<18x18x4xbf16> to vector<16x16x4xbf16>
    %10 = vector.extract_strided_slice %2 {offsets = [2, 1, 0], sizes = [16, 16, 4], strides = [1, 1, 1]} : vector<18x18x4xbf16> to vector<16x16x4xbf16>
    %11 = vector.extract_strided_slice %2 {offsets = [2, 2, 0], sizes = [16, 16, 4], strides = [1, 1, 1]} : vector<18x18x4xbf16> to vector<16x16x4xbf16>
    %12 = tpu.concatenate %3, %4, %5, %6, %7, %8, %9, %10, %11 in 2 : vector<16x16x4xbf16>, vector<16x16x4xbf16>, vector<16x16x4xbf16>, vector<16x16x4xbf16>, vector<16x16x4xbf16>, vector<16x16x4xbf16>, vector<16x16x4xbf16>, vector<16x16x4xbf16>, vector<16x16x4xbf16> -> vector<16x16x36xbf16>
    %13 = vector.shape_cast %12 : vector<16x16x36xbf16> to vector<256x36xbf16>
    %c0_3 = arith.constant 0 : index
    %c0_4 = arith.constant 0 : index
    %14 = vector.load %arg2[%c0_3, %c0_4] : memref<36x128xbf16, #tpu.memory_space<vmem>>, vector<36x128xbf16>
    %cst = arith.constant dense<0.000000e+00> : vector<256x128xf32>
    %15 = tpu.matmul %13, %14, %cst {dimension_numbers = #tpu.dot_dimension_numbers<[1], [0], [0], [1], [0, 0, 1, 1], [], []>} : vector<256x36xbf16>, vector<36x128xbf16>, vector<256x128xf32> -> vector<256x128xf32>
    %cst_5 = arith.constant 5.000000e-01 : f32
    %16 = vector.broadcast %cst_5 : f32 to vector<256x128xf32>
    %17 = arith.mulf %16, %15 : vector<256x128xf32>
    %cst_6 = arith.constant 0.707106769 : f32
    %18 = vector.broadcast %cst_6 : f32 to vector<256x128xf32>
    %19 = arith.mulf %15, %18 : vector<256x128xf32>
    %20 = math.erf %19 : vector<256x128xf32>
    %cst_7 = arith.constant 1.000000e+00 : f32
    %21 = vector.broadcast %cst_7 : f32 to vector<256x128xf32>
    %22 = arith.addf %21, %20 : vector<256x128xf32>
    %23 = arith.mulf %17, %22 : vector<256x128xf32>
    %24 = vector.extract_strided_slice %1 {offsets = [1, 1, 0], sizes = [16, 16, 4], strides = [1, 1, 1]} : vector<18x18x4xf32> to vector<16x16x4xf32>
    %25 = vector.shape_cast %24 : vector<16x16x4xf32> to vector<256x4xf32>
    %cst_8 = arith.constant 0.000000e+00 : f32
    %26 = vector.broadcast %cst_8 : f32 to vector<256x124xf32>
    %27 = tpu.concatenate %25, %26 in 1 : vector<256x4xf32>, vector<256x124xf32> -> vector<256x128xf32>
    %28 = arith.addf %23, %27 : vector<256x128xf32>
    %29 = arith.truncf %28 : vector<256x128xf32> to vector<256x128xbf16>
    %c0_9 = arith.constant 0 : index
    %c0_10 = arith.constant 0 : index
    %30 = vector.load %arg3[%c0_9, %c0_10] : memref<256x128xbf16, #tpu.memory_space<vmem>>, vector<256x128xbf16>
    tpu.vector_store %arg3[%c0_9, %c0_10], %29 {strides = array<i32>} : memref<256x128xbf16, #tpu.memory_space<vmem>>, vector<256x128xbf16>,
    %31 = arith.extf %29 : vector<256x128xbf16> to vector<256x128xf32>
    %cst_11 = arith.constant dense<0.000000e+00> : vector<128xf32>
    %32 = vector.multi_reduction <add>, %31, %cst_11 [0] : vector<256x128xf32> to vector<128xf32>
    %33 = vector.shape_cast %32 : vector<128xf32> to vector<1x128xf32>
    %34 = arith.mulf %31, %31 : vector<256x128xf32>
    %cst_12 = arith.constant dense<0.000000e+00> : vector<128xf32>
    %35 = vector.multi_reduction <add>, %34, %cst_12 [0] : vector<256x128xf32> to vector<128xf32>
    %36 = vector.shape_cast %35 : vector<128xf32> to vector<1x128xf32>
    %37 = tpu.concatenate %33, %36 in 0 : vector<1x128xf32>, vector<1x128xf32> -> vector<2x128xf32>
    %c0_13 = arith.constant 0 : index
    %c0_14 = arith.constant 0 : index
    %c0_15 = arith.constant 0 : index
    %38 = vector.load %arg4[%c0_13, %c0_14, %c0_15] : memref<1x2x128xf32, #tpu.memory_space<vmem>>, vector<1x2x128xf32>
    %39 = vector.shape_cast %38 : vector<1x2x128xf32> to vector<2x128xf32>
    %40 = vector.shape_cast %37 : vector<2x128xf32> to vector<1x2x128xf32>
    tpu.vector_store %arg4[%c0_13, %c0_14, %c0_15], %40 {strides = array<i32>} : memref<1x2x128xf32, #tpu.memory_space<vmem>>, vector<1x2x128xf32>,
    return
  }
  func.func @transform_0(%arg0: i32) -> (i32, i32, i32, i32) {
    %c0_i32 = arith.constant 0 : i32
    %c0_i32_0 = arith.constant 0 : i32
    %c0_i32_1 = arith.constant 0 : i32
    %c0_i32_2 = arith.constant 0 : i32
    return %arg0, %c0_i32, %c0_i32_0, %c0_i32_1 : i32, i32, i32, i32
  }
  func.func @transform_1(%arg0: i32) -> (i32, i32) {
    %c0_i32 = arith.constant 0 : i32
    %c0_i32_0 = arith.constant 0 : i32
    %c0_i32_1 = arith.constant 0 : i32
    return %c0_i32, %c0_i32_0 : i32, i32
  }
  func.func @transform_2(%arg0: i32) -> (i32, i32) {
    %c0_i32 = arith.constant 0 : i32
    %c0_i32_0 = arith.constant 0 : i32
    return %arg0, %c0_i32 : i32, i32
  }
  func.func @transform_3(%arg0: i32) -> (i32, i32, i32) {
    %c0_i32 = arith.constant 0 : i32
    %c0_i32_0 = arith.constant 0 : i32
    %c0_i32_1 = arith.constant 0 : i32
    return %arg0, %c0_i32, %c0_i32_0 : i32, i32, i32
  }
}

module attributes {stable_mosaic.version = 11 : i64} {
  func.func @_bn_affine_kernel(%arg0: i32, %arg1: memref<512x128xf32, #tpu.memory_space<vmem>>, %arg2: memref<1x128xf32, #tpu.memory_space<vmem>>, %arg3: memref<1x128xf32, #tpu.memory_space<vmem>>, %arg4: memref<512x128xf32, #tpu.memory_space<vmem>>) attributes {dimension_semantics = [#tpu.dimension_semantics<parallel>], iteration_bounds = array<i64: 1>, scalar_prefetch = 0 : i64, scratch_operands = 0 : i64, tpu.core_type = #tpu.core_type<tc>, window_params = [{transform_indices = @transform_0, window_bounds = array<i64: 512, 128>}, {pipeline_mode = #tpu.pipeline_mode<synchronous>, transform_indices = @transform_1, window_bounds = array<i64: 1, 128>}, {pipeline_mode = #tpu.pipeline_mode<synchronous>, transform_indices = @transform_2, window_bounds = array<i64: 1, 128>}, {transform_indices = @transform_3, window_bounds = array<i64: 512, 128>}]} {
    %c0 = arith.constant 0 : index
    %c0_0 = arith.constant 0 : index
    %0 = vector.load %arg1[%c0, %c0_0] : memref<512x128xf32, #tpu.memory_space<vmem>>, vector<512x128xf32>
    %c0_1 = arith.constant 0 : index
    %c0_2 = arith.constant 0 : index
    %1 = vector.load %arg2[%c0_1, %c0_2] : memref<1x128xf32, #tpu.memory_space<vmem>>, vector<1x128xf32>
    %2 = vector.broadcast %1 : vector<1x128xf32> to vector<512x128xf32>
    %3 = arith.mulf %0, %2 : vector<512x128xf32>
    %c0_3 = arith.constant 0 : index
    %c0_4 = arith.constant 0 : index
    %4 = vector.load %arg3[%c0_3, %c0_4] : memref<1x128xf32, #tpu.memory_space<vmem>>, vector<1x128xf32>
    %5 = vector.broadcast %4 : vector<1x128xf32> to vector<512x128xf32>
    %6 = arith.addf %3, %5 : vector<512x128xf32>
    %c0_5 = arith.constant 0 : index
    %c0_6 = arith.constant 0 : index
    %7 = vector.load %arg4[%c0_5, %c0_6] : memref<512x128xf32, #tpu.memory_space<vmem>>, vector<512x128xf32>
    tpu.vector_store %arg4[%c0_5, %c0_6], %6 {strides = array<i32>} : memref<512x128xf32, #tpu.memory_space<vmem>>, vector<512x128xf32>,
    return
  }
  func.func @transform_0(%arg0: i32) -> (i32, i32) {
    %c0_i32 = arith.constant 0 : i32
    %c0_i32_0 = arith.constant 0 : i32
    return %arg0, %c0_i32 : i32, i32
  }
  func.func @transform_1(%arg0: i32) -> (i32, i32) {
    %c0_i32 = arith.constant 0 : i32
    %c0_i32_0 = arith.constant 0 : i32
    %c0_i32_1 = arith.constant 0 : i32
    return %c0_i32, %c0_i32_0 : i32, i32
  }
  func.func @transform_2(%arg0: i32) -> (i32, i32) {
    %c0_i32 = arith.constant 0 : i32
    %c0_i32_0 = arith.constant 0 : i32
    %c0_i32_1 = arith.constant 0 : i32
    return %c0_i32, %c0_i32_0 : i32, i32
  }
  func.func @transform_3(%arg0: i32) -> (i32, i32) {
    %c0_i32 = arith.constant 0 : i32
    %c0_i32_0 = arith.constant 0 : i32
    return %arg0, %c0_i32 : i32, i32
  }
}

module attributes {stable_mosaic.version = 11 : i64} {
  func.func @_mlp_kernel(%arg0: i32, %arg1: memref<512x128xbf16, #tpu.memory_space<vmem>>, %arg2: memref<128x128xbf16, #tpu.memory_space<vmem>>, %arg3: memref<1x128xf32, #tpu.memory_space<vmem>>, %arg4: memref<128x128xbf16, #tpu.memory_space<vmem>>, %arg5: memref<512x128xf32, #tpu.memory_space<vmem>>, %arg6: memref<1x2x128xf32, #tpu.memory_space<vmem>>) attributes {dimension_semantics = [#tpu.dimension_semantics<parallel>], iteration_bounds = array<i64: 1>, scalar_prefetch = 0 : i64, scratch_operands = 0 : i64, tpu.core_type = #tpu.core_type<tc>, window_params = [{transform_indices = @transform_0, window_bounds = array<i64: 512, 128>}, {pipeline_mode = #tpu.pipeline_mode<synchronous>, transform_indices = @transform_1, window_bounds = array<i64: 128, 128>}, {pipeline_mode = #tpu.pipeline_mode<synchronous>, transform_indices = @transform_2, window_bounds = array<i64: 1, 128>}, {pipeline_mode = #tpu.pipeline_mode<synchronous>, transform_indices = @transform_3, window_bounds = array<i64: 128, 128>}, {transform_indices = @transform_4, window_bounds = array<i64: 512, 128>}, {transform_indices = @transform_5, window_bounds = array<i64: 1, 2, 128>}]} {
    %c0 = arith.constant 0 : index
    %c0_0 = arith.constant 0 : index
    %0 = vector.load %arg1[%c0, %c0_0] : memref<512x128xbf16, #tpu.memory_space<vmem>>, vector<512x128xbf16>
    %c0_1 = arith.constant 0 : index
    %c0_2 = arith.constant 0 : index
    %1 = vector.load %arg2[%c0_1, %c0_2] : memref<128x128xbf16, #tpu.memory_space<vmem>>, vector<128x128xbf16>
    %cst = arith.constant dense<0.000000e+00> : vector<512x128xf32>
    %2 = tpu.matmul %0, %1, %cst {dimension_numbers = #tpu.dot_dimension_numbers<[1], [0], [0], [1], [0, 0, 1, 1], [], []>} : vector<512x128xbf16>, vector<128x128xbf16>, vector<512x128xf32> -> vector<512x128xf32>
    %c0_3 = arith.constant 0 : index
    %c0_4 = arith.constant 0 : index
    %3 = vector.load %arg3[%c0_3, %c0_4] : memref<1x128xf32, #tpu.memory_space<vmem>>, vector<1x128xf32>
    %4 = vector.broadcast %3 : vector<1x128xf32> to vector<512x128xf32>
    %5 = arith.addf %2, %4 : vector<512x128xf32>
    %cst_5 = arith.constant 5.000000e-01 : f32
    %6 = vector.broadcast %cst_5 : f32 to vector<512x128xf32>
    %7 = arith.mulf %6, %5 : vector<512x128xf32>
    %cst_6 = arith.constant 0.707106769 : f32
    %8 = vector.broadcast %cst_6 : f32 to vector<512x128xf32>
    %9 = arith.mulf %5, %8 : vector<512x128xf32>
    %10 = math.erf %9 : vector<512x128xf32>
    %cst_7 = arith.constant 1.000000e+00 : f32
    %11 = vector.broadcast %cst_7 : f32 to vector<512x128xf32>
    %12 = arith.addf %11, %10 : vector<512x128xf32>
    %13 = arith.mulf %7, %12 : vector<512x128xf32>
    %14 = arith.truncf %13 : vector<512x128xf32> to vector<512x128xbf16>
    %c0_8 = arith.constant 0 : index
    %c0_9 = arith.constant 0 : index
    %15 = vector.load %arg4[%c0_8, %c0_9] : memref<128x128xbf16, #tpu.memory_space<vmem>>, vector<128x128xbf16>
    %cst_10 = arith.constant dense<0.000000e+00> : vector<512x128xf32>
    %16 = tpu.matmul %14, %15, %cst_10 {dimension_numbers = #tpu.dot_dimension_numbers<[1], [0], [0], [1], [0, 0, 1, 1], [], []>} : vector<512x128xbf16>, vector<128x128xbf16>, vector<512x128xf32> -> vector<512x128xf32>
    %c0_11 = arith.constant 0 : index
    %c0_12 = arith.constant 0 : index
    %17 = vector.load %arg5[%c0_11, %c0_12] : memref<512x128xf32, #tpu.memory_space<vmem>>, vector<512x128xf32>
    tpu.vector_store %arg5[%c0_11, %c0_12], %16 {strides = array<i32>} : memref<512x128xf32, #tpu.memory_space<vmem>>, vector<512x128xf32>,
    %cst_13 = arith.constant dense<0.000000e+00> : vector<128xf32>
    %18 = vector.multi_reduction <add>, %16, %cst_13 [0] : vector<512x128xf32> to vector<128xf32>
    %19 = vector.shape_cast %18 : vector<128xf32> to vector<1x128xf32>
    %20 = arith.mulf %16, %16 : vector<512x128xf32>
    %cst_14 = arith.constant dense<0.000000e+00> : vector<128xf32>
    %21 = vector.multi_reduction <add>, %20, %cst_14 [0] : vector<512x128xf32> to vector<128xf32>
    %22 = vector.shape_cast %21 : vector<128xf32> to vector<1x128xf32>
    %23 = tpu.concatenate %19, %22 in 0 : vector<1x128xf32>, vector<1x128xf32> -> vector<2x128xf32>
    %c0_15 = arith.constant 0 : index
    %c0_16 = arith.constant 0 : index
    %c0_17 = arith.constant 0 : index
    %24 = vector.load %arg6[%c0_15, %c0_16, %c0_17] : memref<1x2x128xf32, #tpu.memory_space<vmem>>, vector<1x2x128xf32>
    %25 = vector.shape_cast %24 : vector<1x2x128xf32> to vector<2x128xf32>
    %26 = vector.shape_cast %23 : vector<2x128xf32> to vector<1x2x128xf32>
    tpu.vector_store %arg6[%c0_15, %c0_16, %c0_17], %26 {strides = array<i32>} : memref<1x2x128xf32, #tpu.memory_space<vmem>>, vector<1x2x128xf32>,
    return
  }
  func.func @transform_0(%arg0: i32) -> (i32, i32) {
    %c0_i32 = arith.constant 0 : i32
    %c0_i32_0 = arith.constant 0 : i32
    return %arg0, %c0_i32 : i32, i32
  }
  func.func @transform_1(%arg0: i32) -> (i32, i32) {
    %c0_i32 = arith.constant 0 : i32
    %c0_i32_0 = arith.constant 0 : i32
    %c0_i32_1 = arith.constant 0 : i32
    return %c0_i32, %c0_i32_0 : i32, i32
  }
  func.func @transform_2(%arg0: i32) -> (i32, i32) {
    %c0_i32 = arith.constant 0 : i32
    %c0_i32_0 = arith.constant 0 : i32
    %c0_i32_1 = arith.constant 0 : i32
    return %c0_i32, %c0_i32_0 : i32, i32
  }
  func.func @transform_3(%arg0: i32) -> (i32, i32) {
    %c0_i32 = arith.constant 0 : i32
    %c0_i32_0 = arith.constant 0 : i32
    %c0_i32_1 = arith.constant 0 : i32
    return %c0_i32, %c0_i32_0 : i32, i32
  }
  func.func @transform_4(%arg0: i32) -> (i32, i32) {
    %c0_i32 = arith.constant 0 : i32
    %c0_i32_0 = arith.constant 0 : i32
    return %arg0, %c0_i32 : i32, i32
  }
  func.func @transform_5(%arg0: i32) -> (i32, i32, i32) {
    %c0_i32 = arith.constant 0 : i32
    %c0_i32_0 = arith.constant 0 : i32
    %c0_i32_1 = arith.constant 0 : i32
    return %arg0, %c0_i32, %c0_i32_0 : i32, i32, i32
  }
}

</mosaic_0001>

<llo_original>
// kernel: irmlp_forward.5
$region0: #{irmlp_forward.5}
  #allocation0 [shape = 'u32[]', space=smem, size = 0x4, offset = 0x4, fixed_abs, tag = 'smem constant byte address 0x4 - core index']
  #allocation1 [shape = 'u32[72,128]{1,0:T(1,128)}', space=vmem, size = 0x9000, scoped, tag = 'internal scratch']
  %s0 = inlined_call_operand.vmem [shape: f32[512,128], index: 0, kind: input, shape index: {}, may-alias: {0,3}]
  %s1 = inlined_call_operand.vmem [shape: f32[1,128], index: 1, kind: input, shape index: {}]
  %s2 = inlined_call_operand.vmem [shape: f32[1,128], index: 2, kind: input, shape index: {}]
  %s3 = inlined_call_operand.vmem [shape: f32[512,128], index: 3, kind: output, shape index: {}, may-alias: {0,3}]
  %s4 = sld [smem:[#allocation0]]
  $region22: #{irmlp_forward.5} parent=0
    _
  %s6 = ssub.s32 1, %s4
  %s7 = scalar_select 0, %s6, %s4
  // Predicated region
  $region2: #{irmlp_forward.5} parent=0 // pred_check
    _
  $region3: #{irmlp_forward.5} parent=0 // pred_check_branch
    %9 = sbr.rel (0) target = $region5
  $region4: #{irmlp_forward.5} parent=0 // pred_region
    _
  $region5: #{irmlp_forward.5} parent=0 // pred_fallthru
    _
  // Predicated region
  $region6: #{irmlp_forward.5} parent=0 // pred_check
    _
  $region7: #{irmlp_forward.5} parent=0 // pred_check_branch
    %11 = sbr.rel (0) target = $region9
  $region8: #{irmlp_forward.5} parent=0 // pred_region
    _
  $region9: #{irmlp_forward.5} parent=0 // pred_fallthru
    _
  // Predicated region
  $region10: #{irmlp_forward.5} parent=0 // pred_check
    _
  $region11: #{irmlp_forward.5} parent=0 // pred_check_branch
    %13 = sbr.rel (0) target = $region13
  $region12: #{irmlp_forward.5} parent=0 // pred_region
    _
  $region13: #{irmlp_forward.5} parent=0 // pred_fallthru
    _
  %v14 = vld [vmem:[%s0] sm:$0xff]
  %v15 = vld [vmem:[%s0 + $0x8] sm:$0xff]
  %v16 = vld [vmem:[%s0 + $0x10] sm:$0xff]
  %v17 = vld [vmem:[%s0 + $0x18] sm:$0xff]
  %v18 = vld [vmem:[%s0 + $0x20] sm:$0xff]
  %v19 = vld [vmem:[%s0 + $0x28] sm:$0xff]
  %v20 = vld [vmem:[%s0 + $0x30] sm:$0xff]
  %v21 = vld [vmem:[%s0 + $0x38] sm:$0xff]
  %v22 = vld [vmem:[%s0 + $0x40] sm:$0xff]
  %v23 = vld [vmem:[%s0 + $0x48] sm:$0xff]
  %v24 = vld [vmem:[%s0 + $0x50] sm:$0xff]
  %v25 = vld [vmem:[%s0 + $0x58] sm:$0xff]
  %v26 = vld [vmem:[%s0 + $0x60] sm:$0xff]
  %v27 = vld [vmem:[%s0 + $0x68] sm:$0xff]
  %v28 = vld [vmem:[%s0 + $0x70] sm:$0xff]
  %v29 = vld [vmem:[%s0 + $0x78] sm:$0xff]
  %v30 = vld [vmem:[%s0 + $0x80] sm:$0xff]
  %v31 = vld [vmem:[%s0 + $0x88] sm:$0xff]
  %v32 = vld [vmem:[%s0 + $0x90] sm:$0xff]
  %v33 = vld [vmem:[%s0 + $0x98] sm:$0xff]
  %v34 = vld [vmem:[%s0 + $0xa0] sm:$0xff]
  %v35 = vld [vmem:[%s0 + $0xa8] sm:$0xff]
  %v36 = vld [vmem:[%s0 + $0xb0] sm:$0xff]
  %v37 = vld [vmem:[%s0 + $0xb8] sm:$0xff]
  %v38 = vld [vmem:[%s0 + $0xc0] sm:$0xff]
  %v39 = vld [vmem:[%s0 + $0xc8] sm:$0xff]
  %v40 = vld [vmem:[%s0 + $0xd0] sm:$0xff]
  %v41 = vld [vmem:[%s0 + $0xd8] sm:$0xff]
  %v42 = vld [vmem:[%s0 + $0xe0] sm:$0xff]
  %v43 = vld [vmem:[%s0 + $0xe8] sm:$0xff]
  %v44 = vld [vmem:[%s0 + $0xf0] sm:$0xff]
  %v45 = vld [vmem:[%s0 + $0xf8] sm:$0xff]
  %v46 = vld [vmem:[%s0 + $0x100] sm:$0xff]
  %v47 = vld [vmem:[%s0 + $0x108] sm:$0xff]
  %v48 = vld [vmem:[%s0 + $0x110] sm:$0xff]
  %v49 = vld [vmem:[%s0 + $0x118] sm:$0xff]
  %v50 = vld [vmem:[%s0 + $0x120] sm:$0xff]
  %v51 = vld [vmem:[%s0 + $0x128] sm:$0xff]
  %v52 = vld [vmem:[%s0 + $0x130] sm:$0xff]
  %v53 = vld [vmem:[%s0 + $0x138] sm:$0xff]
  %v54 = vld [vmem:[%s0 + $0x140] sm:$0xff]
  %v55 = vld [vmem:[%s0 + $0x148] sm:$0xff]
  %v56 = vld [vmem:[%s0 + $0x150] sm:$0xff]
  %v57 = vld [vmem:[%s0 + $0x158] sm:$0xff]
  %v58 = vld [vmem:[%s0 + $0x160] sm:$0xff]
  %v59 = vld [vmem:[%s0 + $0x168] sm:$0xff]
  %v60 = vld [vmem:[%s0 + $0x170] sm:$0xff]
  %v61 = vld [vmem:[%s0 + $0x178] sm:$0xff]
  %v62 = vld [vmem:[%s0 + $0x180] sm:$0xff]
  %v63 = vld [vmem:[%s0 + $0x188] sm:$0xff]
  %v64 = vld [vmem:[%s0 + $0x190] sm:$0xff]
  %v65 = vld [vmem:[%s0 + $0x198] sm:$0xff]
  %v66 = vld [vmem:[%s0 + $0x1a0] sm:$0xff]
  %v67 = vld [vmem:[%s0 + $0x1a8] sm:$0xff]
  %v68 = vld [vmem:[%s0 + $0x1b0] sm:$0xff]
  %v69 = vld [vmem:[%s0 + $0x1b8] sm:$0xff]
  %v70 = vld [vmem:[%s0 + $0x1c0] sm:$0xff]
  %v71 = vld [vmem:[%s0 + $0x1c8] sm:$0xff]
  %v72 = vld [vmem:[%s0 + $0x1d0] sm:$0xff]
  %v73 = vld [vmem:[%s0 + $0x1d8] sm:$0xff]
  %v74 = vld [vmem:[%s0 + $0x1e0] sm:$0xff]
  %v75 = vld [vmem:[%s0 + $0x1e8] sm:$0xff]
  %v76 = vld [vmem:[%s0 + $0x1f0] sm:$0xff]
  %v77 = vld [vmem:[%s0 + $0x1f8] sm:$0xff]
  %v78 = vld [vmem:[%s1] sm:$0x1]
  %v80 = vperm.slane %v78, 0
  %v82 = vmul.f32 %v14, %v80
  %v83 = vmul.f32 %v15, %v80
  %v84 = vmul.f32 %v16, %v80
  %v85 = vmul.f32 %v17, %v80
  %v86 = vmul.f32 %v18, %v80
  %v87 = vmul.f32 %v19, %v80
  %v88 = vmul.f32 %v20, %v80
  %v89 = vmul.f32 %v21, %v80
  %v90 = vmul.f32 %v22, %v80
  %v91 = vmul.f32 %v23, %v80
  %v92 = vmul.f32 %v24, %v80
  %v93 = vmul.f32 %v25, %v80
  %v94 = vmul.f32 %v26, %v80
  %v95 = vmul.f32 %v27, %v80
  %v96 = vmul.f32 %v28, %v80
  %v97 = vmul.f32 %v29, %v80
  %v98 = vmul.f32 %v30, %v80
  %v99 = vmul.f32 %v31, %v80
  %v100 = vmul.f32 %v32, %v80
  %v101 = vmul.f32 %v33, %v80
  %v102 = vmul.f32 %v34, %v80
  %v103 = vmul.f32 %v35, %v80
  %v104 = vmul.f32 %v36, %v80
  %v105 = vmul.f32 %v37, %v80
  %v106 = vmul.f32 %v38, %v80
  %v107 = vmul.f32 %v39, %v80
  %v108 = vmul.f32 %v40, %v80
  %v109 = vmul.f32 %v41, %v80
  %v110 = vmul.f32 %v42, %v80
  %v111 = vmul.f32 %v43, %v80
  %v112 = vmul.f32 %v44, %v80
  %v113 = vmul.f32 %v45, %v80
  %v114 = vmul.f32 %v46, %v80
  %v115 = vmul.f32 %v47, %v80
  %v116 = vmul.f32 %v48, %v80
  %v117 = vmul.f32 %v49, %v80
  %v118 = vmul.f32 %v50, %v80
  %v119 = vmul.f32 %v51, %v80
  %v120 = vmul.f32 %v52, %v80
  %v121 = vmul.f32 %v53, %v80
  %v122 = vmul.f32 %v54, %v80
  %v123 = vmul.f32 %v55, %v80
  %v124 = vmul.f32 %v56, %v80
  %v125 = vmul.f32 %v57, %v80
  %v126 = vmul.f32 %v58, %v80
  %v127 = vmul.f32 %v59, %v80
  %v128 = vmul.f32 %v60, %v80
  %v129 = vmul.f32 %v61, %v80
  %v130 = vmul.f32 %v62, %v80
  %v131 = vmul.f32 %v63, %v80
  %v132 = vmul.f32 %v64, %v80
  %v133 = vmul.f32 %v65, %v80
  %v134 = vmul.f32 %v66, %v80
  %v135 = vmul.f32 %v67, %v80
  %v136 = vmul.f32 %v68, %v80
  %v137 = vmul.f32 %v69, %v80
  %v138 = vmul.f32 %v70, %v80
  %v139 = vmul.f32 %v71, %v80
  %v140 = vmul.f32 %v72, %v80
  %v141 = vmul.f32 %v73, %v80
  %v142 = vmul.f32 %v74, %v80
  %v143 = vmul.f32 %v75, %v80
  %v144 = vmul.f32 %v76, %v80
  %v145 = vmul.f32 %v77, %v80
  %v146 = vld [vmem:[%s2] sm:$0x1]
  %v148 = vperm.slane %v146, 0
  %v150 = vadd.f32 %v82, %v148
  %v151 = vadd.f32 %v83, %v148
  %v152 = vadd.f32 %v84, %v148
  %v153 = vadd.f32 %v85, %v148
  %v154 = vadd.f32 %v86, %v148
  %v155 = vadd.f32 %v87, %v148
  %v156 = vadd.f32 %v88, %v148
  %v157 = vadd.f32 %v89, %v148
  %v158 = vadd.f32 %v90, %v148
  %v159 = vadd.f32 %v91, %v148
  %v160 = vadd.f32 %v92, %v148
  %v161 = vadd.f32 %v93, %v148
  %v162 = vadd.f32 %v94, %v148
  %v163 = vadd.f32 %v95, %v148
  %v164 = vadd.f32 %v96, %v148
  %v165 = vadd.f32 %v97, %v148
  %v166 = vadd.f32 %v98, %v148
  %v167 = vadd.f32 %v99, %v148
  %v168 = vadd.f32 %v100, %v148
  %v169 = vadd.f32 %v101, %v148
  %v170 = vadd.f32 %v102, %v148
  %v171 = vadd.f32 %v103, %v148
  %v172 = vadd.f32 %v104, %v148
  %v173 = vadd.f32 %v105, %v148
  %v174 = vadd.f32 %v106, %v148
  %v175 = vadd.f32 %v107, %v148
  %v176 = vadd.f32 %v108, %v148
  %v177 = vadd.f32 %v109, %v148
  %v178 = vadd.f32 %v110, %v148
  %v179 = vadd.f32 %v111, %v148
  %v180 = vadd.f32 %v112, %v148
  %v181 = vadd.f32 %v113, %v148
  %v182 = vadd.f32 %v114, %v148
  %v183 = vadd.f32 %v115, %v148
  %v184 = vadd.f32 %v116, %v148
  %v185 = vadd.f32 %v117, %v148
  %v186 = vadd.f32 %v118, %v148
  %v187 = vadd.f32 %v119, %v148
  %v188 = vadd.f32 %v120, %v148
  %v189 = vadd.f32 %v121, %v148
  %v190 = vadd.f32 %v122, %v148
  %v191 = vadd.f32 %v123, %v148
  %v192 = vadd.f32 %v124, %v148
  %v193 = vadd.f32 %v125, %v148
  %v194 = vadd.f32 %v126, %v148
  %v195 = vadd.f32 %v127, %v148
  %v196 = vadd.f32 %v128, %v148
  %v197 = vadd.f32 %v129, %v148
  %v198 = vadd.f32 %v130, %v148
  %v199 = vadd.f32 %v131, %v148
  %v200 = vadd.f32 %v132, %v148
  %v201 = vadd.f32 %v133, %v148
  %v202 = vadd.f32 %v134, %v148
  %v203 = vadd.f32 %v135, %v148
  %v204 = vadd.f32 %v136, %v148
  %v205 = vadd.f32 %v137, %v148
  %v206 = vadd.f32 %v138, %v148
  %v207 = vadd.f32 %v139, %v148
  %v208 = vadd.f32 %v140, %v148
  %v209 = vadd.f32 %v141, %v148
  %v210 = vadd.f32 %v142, %v148
  %v211 = vadd.f32 %v143, %v148
  %v212 = vadd.f32 %v144, %v148
  %v213 = vadd.f32 %v145, %v148
  %214 = vst [vmem:[%s3] sm:$0xff] %v150
  %215 = vst [vmem:[%s3 + $0x8] sm:$0xff] %v151
  %216 = vst [vmem:[%s3 + $0x10] sm:$0xff] %v152
  %217 = vst [vmem:[%s3 + $0x18] sm:$0xff] %v153
  %218 = vst [vmem:[%s3 + $0x20] sm:$0xff] %v154
  %219 = vst [vmem:[%s3 + $0x28] sm:$0xff] %v155
  %220 = vst [vmem:[%s3 + $0x30] sm:$0xff] %v156
  %221 = vst [vmem:[%s3 + $0x38] sm:$0xff] %v157
  %222 = vst [vmem:[%s3 + $0x40] sm:$0xff] %v158
  %223 = vst [vmem:[%s3 + $0x48] sm:$0xff] %v159
  %224 = vst [vmem:[%s3 + $0x50] sm:$0xff] %v160
  %225 = vst [vmem:[%s3 + $0x58] sm:$0xff] %v161
  %226 = vst [vmem:[%s3 + $0x60] sm:$0xff] %v162
  %227 = vst [vmem:[%s3 + $0x68] sm:$0xff] %v163
  %228 = vst [vmem:[%s3 + $0x70] sm:$0xff] %v164
  %229 = vst [vmem:[%s3 + $0x78] sm:$0xff] %v165
  %230 = vst [vmem:[%s3 + $0x80] sm:$0xff] %v166
  %231 = vst [vmem:[%s3 + $0x88] sm:$0xff] %v167
  %232 = vst [vmem:[%s3 + $0x90] sm:$0xff] %v168
  %233 = vst [vmem:[%s3 + $0x98] sm:$0xff] %v169
  %234 = vst [vmem:[%s3 + $0xa0] sm:$0xff] %v170
  %235 = vst [vmem:[%s3 + $0xa8] sm:$0xff] %v171
  %236 = vst [vmem:[%s3 + $0xb0] sm:$0xff] %v172
  %237 = vst [vmem:[%s3 + $0xb8] sm:$0xff] %v173
  %238 = vst [vmem:[%s3 + $0xc0] sm:$0xff] %v174
  %239 = vst [vmem:[%s3 + $0xc8] sm:$0xff] %v175
  %240 = vst [vmem:[%s3 + $0xd0] sm:$0xff] %v176
  %241 = vst [vmem:[%s3 + $0xd8] sm:$0xff] %v177
  %242 = vst [vmem:[%s3 + $0xe0] sm:$0xff] %v178
  %243 = vst [vmem:[%s3 + $0xe8] sm:$0xff] %v179
  %244 = vst [vmem:[%s3 + $0xf0] sm:$0xff] %v180
  %245 = vst [vmem:[%s3 + $0xf8] sm:$0xff] %v181
  %246 = vst [vmem:[%s3 + $0x100] sm:$0xff] %v182
  %247 = vst [vmem:[%s3 + $0x108] sm:$0xff] %v183
  %248 = vst [vmem:[%s3 + $0x110] sm:$0xff] %v184
  %249 = vst [vmem:[%s3 + $0x118] sm:$0xff] %v185
  %250 = vst [vmem:[%s3 + $0x120] sm:$0xff] %v186
  %251 = vst [vmem:[%s3 + $0x128] sm:$0xff] %v187
  %252 = vst [vmem:[%s3 + $0x130] sm:$0xff] %v188
  %253 = vst [vmem:[%s3 + $0x138] sm:$0xff] %v189
  %254 = vst [vmem:[%s3 + $0x140] sm:$0xff] %v190
  %255 = vst [vmem:[%s3 + $0x148] sm:$0xff] %v191
  %256 = vst [vmem:[%s3 + $0x150] sm:$0xff] %v192
  %257 = vst [vmem:[%s3 + $0x158] sm:$0xff] %v193
  %258 = vst [vmem:[%s3 + $0x160] sm:$0xff] %v194
  %259 = vst [vmem:[%s3 + $0x168] sm:$0xff] %v195
  %260 = vst [vmem:[%s3 + $0x170] sm:$0xff] %v196
  %261 = vst [vmem:[%s3 + $0x178] sm:$0xff] %v197
  %262 = vst [vmem:[%s3 + $0x180] sm:$0xff] %v198
  %263 = vst [vmem:[%s3 + $0x188] sm:$0xff] %v199
  %264 = vst [vmem:[%s3 + $0x190] sm:$0xff] %v200
  %265 = vst [vmem:[%s3 + $0x198] sm:$0xff] %v201
  %266 = vst [vmem:[%s3 + $0x1a0] sm:$0xff] %v202
  %267 = vst [vmem:[%s3 + $0x1a8] sm:$0xff] %v203
  %268 = vst [vmem:[%s3 + $0x1b0] sm:$0xff] %v204
  %269 = vst [vmem:[%s3 + $0x1b8] sm:$0xff] %v205
  %270 = vst [vmem:[%s3 + $0x1c0] sm:$0xff] %v206
  %271 = vst [vmem:[%s3 + $0x1c8] sm:$0xff] %v207
  %272 = vst [vmem:[%s3 + $0x1d0] sm:$0xff] %v208
  %273 = vst [vmem:[%s3 + $0x1d8] sm:$0xff] %v209
  %274 = vst [vmem:[%s3 + $0x1e0] sm:$0xff] %v210
  %275 = vst [vmem:[%s3 + $0x1e8] sm:$0xff] %v211
  %276 = vst [vmem:[%s3 + $0x1f0] sm:$0xff] %v212
  %277 = vst [vmem:[%s3 + $0x1f8] sm:$0xff] %v213
  // Predicated region
  $region14: #{irmlp_forward.5} parent=0 // pred_check
    _
  $region15: #{irmlp_forward.5} parent=0 // pred_check_branch
    %279 = sbr.rel (0) target = $region17
  $region16: #{irmlp_forward.5} parent=0 // pred_region
    _
  $region17: #{irmlp_forward.5} parent=0 // pred_fallthru
    _
  // Predicated region
  $region18: #{irmlp_forward.5} parent=0 // pred_check
    _
  $region19: #{irmlp_forward.5} parent=0 // pred_check_branch
    %281 = sbr.rel (0) target = $region21
  $region20: #{irmlp_forward.5} parent=0 // pred_region
    _
  $region21: #{irmlp_forward.5} parent=0 // pred_fallthru
    _

// kernel: irmlp_forward.4
$region0: #{irmlp_forward.4}
  #allocation0 [shape = 'u32[]', space=smem, size = 0x4, offset = 0x4, fixed_abs, tag = 'smem constant byte address 0x4 - core index']
  #allocation1 [shape = 'u32[72,128]{1,0:T(1,128)}', space=vmem, size = 0x9000, scoped, tag = 'internal scratch']
  %s0 = inlined_call_operand.vmem [shape: bf16[512,128], index: 0, kind: input, shape index: {}]
  %s1 = inlined_call_operand.vmem [shape: bf16[128,128], index: 1, kind: input, shape index: {}]
  %s2 = inlined_call_operand.vmem [shape: f32[1,128], index: 2, kind: input, shape index: {}]
  %s3 = inlined_call_operand.vmem [shape: bf16[128,128], index: 3, kind: input, shape index: {}]
  %s4 = inlined_call_operand.vmem [shape: f32[512,128], index: 4, kind: output, shape index: {0}]
  %s5 = inlined_call_operand.vmem [shape: f32[1,2,128], index: 5, kind: output, shape index: {1}]
  %6 = xla_tuple %s4, %s5
  %s7 = sld [smem:[#allocation0]]
  $region34: #{irmlp_forward.4} parent=0
    _
  %s9 = ssub.s32 1, %s7
  %s10 = scalar_select 0, %s9, %s7
  // Predicated region
  $region2: #{irmlp_forward.4} parent=0 // pred_check
    _
  $region3: #{irmlp_forward.4} parent=0 // pred_check_branch
    %12 = sbr.rel (0) target = $region5
  $region4: #{irmlp_forward.4} parent=0 // pred_region
    _
  $region5: #{irmlp_forward.4} parent=0 // pred_fallthru
    _
  // Predicated region
  $region6: #{irmlp_forward.4} parent=0 // pred_check
    _
  $region7: #{irmlp_forward.4} parent=0 // pred_check_branch
    %14 = sbr.rel (0) target = $region9
  $region8: #{irmlp_forward.4} parent=0 // pred_region
    _
  $region9: #{irmlp_forward.4} parent=0 // pred_fallthru
    _
  // Predicated region
  $region10: #{irmlp_forward.4} parent=0 // pred_check
    _
  $region11: #{irmlp_forward.4} parent=0 // pred_check_branch
    %16 = sbr.rel (0) target = $region13
  $region12: #{irmlp_forward.4} parent=0 // pred_region
    _
  $region13: #{irmlp_forward.4} parent=0 // pred_fallthru
    _
  // Predicated region
  $region14: #{irmlp_forward.4} parent=0 // pred_check
    _
  $region15: #{irmlp_forward.4} parent=0 // pred_check_branch
    %18 = sbr.rel (0) target = $region17
  $region16: #{irmlp_forward.4} parent=0 // pred_region
    _
  $region17: #{irmlp_forward.4} parent=0 // pred_fallthru
    _
  %v19 = vld [vmem:[%s0] sm:$0xf]
  %v20 = vld [vmem:[%s0 + $0x4] sm:$0xf]
  %v21 = vld [vmem:[%s0 + $0x8] sm:$0xf]
  %v22 = vld [vmem:[%s0 + $0xc] sm:$0xf]
  %v23 = vld [vmem:[%s0 + $0x10] sm:$0xf]
  %v24 = vld [vmem:[%s0 + $0x14] sm:$0xf]
  %v25 = vld [vmem:[%s0 + $0x18] sm:$0xf]
  %v26 = vld [vmem:[%s0 + $0x1c] sm:$0xf]
  %v27 = vld [vmem:[%s0 + $0x20] sm:$0xf]
  %v28 = vld [vmem:[%s0 + $0x24] sm:$0xf]
  %v29 = vld [vmem:[%s0 + $0x28] sm:$0xf]
  %v30 = vld [vmem:[%s0 + $0x2c] sm:$0xf]
  %v31 = vld [vmem:[%s0 + $0x30] sm:$0xf]
  %v32 = vld [vmem:[%s0 + $0x34] sm:$0xf]
  %v33 = vld [vmem:[%s0 + $0x38] sm:$0xf]
  %v34 = vld [vmem:[%s0 + $0x3c] sm:$0xf]
  %v35 = vld [vmem:[%s0 + $0x40] sm:$0xf]
  %v36 = vld [vmem:[%s0 + $0x44] sm:$0xf]
  %v37 = vld [vmem:[%s0 + $0x48] sm:$0xf]
  %v38 = vld [vmem:[%s0 + $0x4c] sm:$0xf]
  %v39 = vld [vmem:[%s0 + $0x50] sm:$0xf]
  %v40 = vld [vmem:[%s0 + $0x54] sm:$0xf]
  %v41 = vld [vmem:[%s0 + $0x58] sm:$0xf]
  %v42 = vld [vmem:[%s0 + $0x5c] sm:$0xf]
  %v43 = vld [vmem:[%s0 + $0x60] sm:$0xf]
  %v44 = vld [vmem:[%s0 + $0x64] sm:$0xf]
  %v45 = vld [vmem:[%s0 + $0x68] sm:$0xf]
  %v46 = vld [vmem:[%s0 + $0x6c] sm:$0xf]
  %v47 = vld [vmem:[%s0 + $0x70] sm:$0xf]
  %v48 = vld [vmem:[%s0 + $0x74] sm:$0xf]
  %v49 = vld [vmem:[%s0 + $0x78] sm:$0xf]
  %v50 = vld [vmem:[%s0 + $0x7c] sm:$0xf]
  %v51 = vld [vmem:[%s0 + $0x80] sm:$0xf]
  %v52 = vld [vmem:[%s0 + $0x84] sm:$0xf]
  %v53 = vld [vmem:[%s0 + $0x88] sm:$0xf]
  %v54 = vld [vmem:[%s0 + $0x8c] sm:$0xf]
  %v55 = vld [vmem:[%s0 + $0x90] sm:$0xf]
  %v56 = vld [vmem:[%s0 + $0x94] sm:$0xf]
  %v57 = vld [vmem:[%s0 + $0x98] sm:$0xf]
  %v58 = vld [vmem:[%s0 + $0x9c] sm:$0xf]
  %v59 = vld [vmem:[%s0 + $0xa0] sm:$0xf]
  %v60 = vld [vmem:[%s0 + $0xa4] sm:$0xf]
  %v61 = vld [vmem:[%s0 + $0xa8] sm:$0xf]
  %v62 = vld [vmem:[%s0 + $0xac] sm:$0xf]
  %v63 = vld [vmem:[%s0 + $0xb0] sm:$0xf]
  %v64 = vld [vmem:[%s0 + $0xb4] sm:$0xf]
  %v65 = vld [vmem:[%s0 + $0xb8] sm:$0xf]
  %v66 = vld [vmem:[%s0 + $0xbc] sm:$0xf]
  %v67 = vld [vmem:[%s0 + $0xc0] sm:$0xf]
  %v68 = vld [vmem:[%s0 + $0xc4] sm:$0xf]
  %v69 = vld [vmem:[%s0 + $0xc8] sm:$0xf]
  %v70 = vld [vmem:[%s0 + $0xcc] sm:$0xf]
  %v71 = vld [vmem:[%s0 + $0xd0] sm:$0xf]
  %v72 = vld [vmem:[%s0 + $0xd4] sm:$0xf]
  %v73 = vld [vmem:[%s0 + $0xd8] sm:$0xf]
  %v74 = vld [vmem:[%s0 + $0xdc] sm:$0xf]
  %v75 = vld [vmem:[%s0 + $0xe0] sm:$0xf]
  %v76 = vld [vmem:[%s0 + $0xe4] sm:$0xf]
  %v77 = vld [vmem:[%s0 + $0xe8] sm:$0xf]
  %v78 = vld [vmem:[%s0 + $0xec] sm:$0xf]
  %v79 = vld [vmem:[%s0 + $0xf0] sm:$0xf]
  %v80 = vld [vmem:[%s0 + $0xf4] sm:$0xf]
  %v81 = vld [vmem:[%s0 + $0xf8] sm:$0xf]
  %v82 = vld [vmem:[%s0 + $0xfc] sm:$0xf]
  %v83 = vld [vmem:[%s1] sm:$0xf]
  %v84 = vld [vmem:[%s1 + $0x4] sm:$0xf]
  %v85 = vld [vmem:[%s1 + $0x8] sm:$0xf]
  %v86 = vld [vmem:[%s1 + $0xc] sm:$0xf]
  %v87 = vld [vmem:[%s1 + $0x10] sm:$0xf]
  %v88 = vld [vmem:[%s1 + $0x14] sm:$0xf]
  %v89 = vld [vmem:[%s1 + $0x18] sm:$0xf]
  %v90 = vld [vmem:[%s1 + $0x1c] sm:$0xf]
  %v91 = vld [vmem:[%s1 + $0x20] sm:$0xf]
  %v92 = vld [vmem:[%s1 + $0x24] sm:$0xf]
  %v93 = vld [vmem:[%s1 + $0x28] sm:$0xf]
  %v94 = vld [vmem:[%s1 + $0x2c] sm:$0xf]
  %v95 = vld [vmem:[%s1 + $0x30] sm:$0xf]
  %v96 = vld [vmem:[%s1 + $0x34] sm:$0xf]
  %v97 = vld [vmem:[%s1 + $0x38] sm:$0xf]
  %v98 = vld [vmem:[%s1 + $0x3c] sm:$0xf]
  %v99 = vld [vmem:[%s2] sm:$0x1]
  %v101 = vperm.slane %v99, 0
  %v167 = vunpack.c.l.b16 %v19
  %v168 = vunpack.c.l.b16 %v20
  %v169 = vunpack.c.l.b16 %v21
  %v170 = vunpack.c.l.b16 %v22
  %v171 = vunpack.c.l.b16 %v23
  %v172 = vunpack.c.l.b16 %v24
  %v173 = vunpack.c.l.b16 %v25
  %v174 = vunpack.c.l.b16 %v26
  %v175 = vunpack.c.l.b16 %v27
  %v176 = vunpack.c.l.b16 %v28
  %v177 = vunpack.c.l.b16 %v29
  %v178 = vunpack.c.l.b16 %v30
  %v179 = vunpack.c.l.b16 %v31
  %v180 = vunpack.c.l.b16 %v32
  %v181 = vunpack.c.l.b16 %v33
  %v182 = vunpack.c.l.b16 %v34
  %v183 = vunpack.c.l.b16 %v35
  %v184 = vunpack.c.l.b16 %v36
  %v185 = vunpack.c.l.b16 %v37
  %v186 = vunpack.c.l.b16 %v38
  %v187 = vunpack.c.l.b16 %v39
  %v188 = vunpack.c.l.b16 %v40
  %v189 = vunpack.c.l.b16 %v41
  %v190 = vunpack.c.l.b16 %v42
  %v191 = vunpack.c.l.b16 %v43
  %v192 = vunpack.c.l.b16 %v44
  %v193 = vunpack.c.l.b16 %v45
  %v194 = vunpack.c.l.b16 %v46
  %v195 = vunpack.c.l.b16 %v47
  %v196 = vunpack.c.l.b16 %v48
  %v197 = vunpack.c.l.b16 %v49
  %v198 = vunpack.c.l.b16 %v50
  %v199 = vunpack.c.l.b16 %v51
  %v200 = vunpack.c.l.b16 %v52
  %v201 = vunpack.c.l.b16 %v53
  %v202 = vunpack.c.l.b16 %v54
  %v203 = vunpack.c.l.b16 %v55
  %v204 = vunpack.c.l.b16 %v56
  %v205 = vunpack.c.l.b16 %v57
  %v206 = vunpack.c.l.b16 %v58
  %v207 = vunpack.c.l.b16 %v59
  %v208 = vunpack.c.l.b16 %v60
  %v209 = vunpack.c.l.b16 %v61
  %v210 = vunpack.c.l.b16 %v62
  %v211 = vunpack.c.l.b16 %v63
  %v212 = vunpack.c.l.b16 %v64
  %v213 = vunpack.c.l.b16 %v65
  %v214 = vunpack.c.l.b16 %v66
  %v215 = vunpack.c.l.b16 %v67
  %v216 = vunpack.c.l.b16 %v68
  %v217 = vunpack.c.l.b16 %v69
  %v218 = vunpack.c.l.b16 %v70
  %v219 = vunpack.c.l.b16 %v71
  %v220 = vunpack.c.l.b16 %v72
  %v221 = vunpack.c.l.b16 %v73
  %v222 = vunpack.c.l.b16 %v74
  %v223 = vunpack.c.l.b16 %v75
  %v224 = vunpack.c.l.b16 %v76
  %v225 = vunpack.c.l.b16 %v77
  %v226 = vunpack.c.l.b16 %v78
  %v227 = vunpack.c.l.b16 %v79
  %v228 = vunpack.c.l.b16 %v80
  %v229 = vunpack.c.l.b16 %v81
  %v230 = vunpack.c.l.b16 %v82
  %v231 = vpack.c.b16 %v168, %v167
  %v232 = vpack.c.b16 %v170, %v169
  %v233 = vpack.c.b16 %v172, %v171
  %v234 = vpack.c.b16 %v174, %v173
  %v235 = vpack.c.b16 %v176, %v175
  %v236 = vpack.c.b16 %v178, %v177
  %v237 = vpack.c.b16 %v180, %v179
  %v238 = vpack.c.b16 %v182, %v181
  %v239 = vpack.c.b16 %v184, %v183
  %v240 = vpack.c.b16 %v186, %v185
  %v241 = vpack.c.b16 %v188, %v187
  %v242 = vpack.c.b16 %v190, %v189
  %v243 = vpack.c.b16 %v192, %v191
  %v244 = vpack.c.b16 %v194, %v193
  %v245 = vpack.c.b16 %v196, %v195
  %v246 = vpack.c.b16 %v198, %v197
  %v247 = vpack.c.b16 %v200, %v199
  %v248 = vpack.c.b16 %v202, %v201
  %v249 = vpack.c.b16 %v204, %v203
  %v250 = vpack.c.b16 %v206, %v205
  %v251 = vpack.c.b16 %v208, %v207
  %v252 = vpack.c.b16 %v210, %v209
  %v253 = vpack.c.b16 %v212, %v211
  %v254 = vpack.c.b16 %v214, %v213
  %v255 = vpack.c.b16 %v216, %v215
  %v256 = vpack.c.b16 %v218, %v217
  %v257 = vpack.c.b16 %v220, %v219
  %v258 = vpack.c.b16 %v222, %v221
  %v259 = vpack.c.b16 %v224, %v223
  %v260 = vpack.c.b16 %v226, %v225
  %v261 = vpack.c.b16 %v228, %v227
  %v262 = vpack.c.b16 %v230, %v229
  %v311 = vunpack.c.l.b16 %v83
  %v312 = vunpack.c.l.b16 %v84
  %v313 = vunpack.c.l.b16 %v85
  %v314 = vunpack.c.l.b16 %v86
  %v315 = vunpack.c.l.b16 %v87
  %v316 = vunpack.c.l.b16 %v88
  %v317 = vunpack.c.l.b16 %v89
  %v318 = vunpack.c.l.b16 %v90
  %v319 = vunpack.c.l.b16 %v91
  %v320 = vunpack.c.l.b16 %v92
  %v321 = vunpack.c.l.b16 %v93
  %v322 = vunpack.c.l.b16 %v94
  %v323 = vunpack.c.l.b16 %v95
  %v324 = vunpack.c.l.b16 %v96
  %v325 = vunpack.c.l.b16 %v97
  %v326 = vunpack.c.l.b16 %v98
  %v327 = vpack.c.b16 %v312, %v311
  %v328 = vpack.c.b16 %v314, %v313
  %v329 = vpack.c.b16 %v316, %v315
  %v330 = vpack.c.b16 %v318, %v317
  %v331 = vpack.c.b16 %v320, %v319
  %v332 = vpack.c.b16 %v322, %v321
  %v333 = vpack.c.b16 %v324, %v323
  %v334 = vpack.c.b16 %v326, %v325
  %343 = vmatpush.bf16.msra.mxu0 %v334
  %344 = vmatpush.bf16.msra.mxu0 %v333
  %345 = vmatpush.bf16.msra.mxu0 %v332
  %346 = vmatpush.bf16.msra.mxu0 %v331
  %347 = vmatpush.bf16.msra.mxu0 %v330
  %348 = vmatpush.bf16.msra.mxu0 %v329
  %349 = vmatpush.bf16.msra.mxu0 %v328
  %350 = vmatpush.bf16.msra.mxu0 %v327
  %351 = vmatmul.bf16.gmra.mxu0 %v231
  %v352 = vpop.f32.mrf.mxu0
  %v353 = vadd.f32 %v101, %v352
  %v354 = vpop.f32.mrf.mxu0
  %v355 = vadd.f32 %v101, %v354
  %356 = vmatmul.bf16.gmra.mxu0 %v232
  %v357 = vpop.f32.mrf.mxu0
  %v358 = vadd.f32 %v101, %v357
  %v359 = vpop.f32.mrf.mxu0
  %v360 = vadd.f32 %v101, %v359
  %361 = vmatmul.bf16.gmra.mxu0 %v233
  %v362 = vpop.f32.mrf.mxu0
  %v363 = vadd.f32 %v101, %v362
  %v364 = vpop.f32.mrf.mxu0
  %v365 = vadd.f32 %v101, %v364
  %366 = vmatmul.bf16.gmra.mxu0 %v234
  %v367 = vpop.f32.mrf.mxu0
  %v368 = vadd.f32 %v101, %v367
  %v369 = vpop.f32.mrf.mxu0
  %v370 = vadd.f32 %v101, %v369
  %371 = vmatmul.bf16.gmra.mxu0 %v235
  %v372 = vpop.f32.mrf.mxu0
  %v373 = vadd.f32 %v101, %v372
  %v374 = vpop.f32.mrf.mxu0
  %v375 = vadd.f32 %v101, %v374
  %376 = vmatmul.bf16.gmra.mxu0 %v236
  %v377 = vpop.f32.mrf.mxu0
  %v378 = vadd.f32 %v101, %v377
  %v379 = vpop.f32.mrf.mxu0
  %v380 = vadd.f32 %v101, %v379
  %381 = vmatmul.bf16.gmra.mxu0 %v237
  %v382 = vpop.f32.mrf.mxu0
  %v383 = vadd.f32 %v101, %v382
  %v384 = vpop.f32.mrf.mxu0
  %v385 = vadd.f32 %v101, %v384
  %386 = vmatmul.bf16.gmra.mxu0 %v238
  %v387 = vpop.f32.mrf.mxu0
  %v388 = vadd.f32 %v101, %v387
  %v389 = vpop.f32.mrf.mxu0
  %v390 = vadd.f32 %v101, %v389
  %391 = vmatmul.bf16.gmra.mxu0 %v239
  %v392 = vpop.f32.mrf.mxu0
  %v393 = vadd.f32 %v101, %v392
  %v394 = vpop.f32.mrf.mxu0
  %v395 = vadd.f32 %v101, %v394
  %396 = vmatmul.bf16.gmra.mxu0 %v240
  %v397 = vpop.f32.mrf.mxu0
  %v398 = vadd.f32 %v101, %v397
  %v399 = vpop.f32.mrf.mxu0
  %v400 = vadd.f32 %v101, %v399
  %401 = vmatmul.bf16.gmra.mxu0 %v241
  %v402 = vpop.f32.mrf.mxu0
  %v403 = vadd.f32 %v101, %v402
  %v404 = vpop.f32.mrf.mxu0
  %v405 = vadd.f32 %v101, %v404
  %406 = vmatmul.bf16.gmra.mxu0 %v242
  %v407 = vpop.f32.mrf.mxu0
  %v408 = vadd.f32 %v101, %v407
  %v409 = vpop.f32.mrf.mxu0
  %v410 = vadd.f32 %v101, %v409
  %411 = vmatmul.bf16.gmra.mxu0 %v243
  %v412 = vpop.f32.mrf.mxu0
  %v413 = vadd.f32 %v101, %v412
  %v414 = vpop.f32.mrf.mxu0
  %v415 = vadd.f32 %v101, %v414
  %416 = vmatmul.bf16.gmra.mxu0 %v244
  %v417 = vpop.f32.mrf.mxu0
  %v418 = vadd.f32 %v101, %v417
  %v419 = vpop.f32.mrf.mxu0
  %v420 = vadd.f32 %v101, %v419
  %421 = vmatmul.bf16.gmra.mxu0 %v245
  %v422 = vpop.f32.mrf.mxu0
  %v423 = vadd.f32 %v101, %v422
  %v424 = vpop.f32.mrf.mxu0
  %v425 = vadd.f32 %v101, %v424
  %426 = vmatmul.bf16.gmra.mxu0 %v246
  %v427 = vpop.f32.mrf.mxu0
  %v428 = vadd.f32 %v101, %v427
  %v429 = vpop.f32.mrf.mxu0
  %v430 = vadd.f32 %v101, %v429
  %431 = vmatmul.bf16.gmra.mxu0 %v247
  %v432 = vpop.f32.mrf.mxu0
  %v433 = vadd.f32 %v101, %v432
  %v434 = vpop.f32.mrf.mxu0
  %v435 = vadd.f32 %v101, %v434
  %436 = vmatmul.bf16.gmra.mxu0 %v248
  %v437 = vpop.f32.mrf.mxu0
  %v438 = vadd.f32 %v101, %v437
  %v439 = vpop.f32.mrf.mxu0
  %v440 = vadd.f32 %v101, %v439
  %441 = vmatmul.bf16.gmra.mxu0 %v249
  %v442 = vpop.f32.mrf.mxu0
  %v443 = vadd.f32 %v101, %v442
  %v444 = vpop.f32.mrf.mxu0
  %v445 = vadd.f32 %v101, %v444
  %446 = vmatmul.bf16.gmra.mxu0 %v250
  %v447 = vpop.f32.mrf.mxu0
  %v448 = vadd.f32 %v101, %v447
  %v449 = vpop.f32.mrf.mxu0
  %v450 = vadd.f32 %v101, %v449
  %451 = vmatmul.bf16.gmra.mxu0 %v251
  %v452 = vpop.f32.mrf.mxu0
  %v453 = vadd.f32 %v101, %v452
  %v454 = vpop.f32.mrf.mxu0
  %v455 = vadd.f32 %v101, %v454
  %456 = vmatmul.bf16.gmra.mxu0 %v252
  %v457 = vpop.f32.mrf.mxu0
  %v458 = vadd.f32 %v101, %v457
  %v459 = vpop.f32.mrf.mxu0
  %v460 = vadd.f32 %v101, %v459
  %461 = vmatmul.bf16.gmra.mxu0 %v253
  %v462 = vpop.f32.mrf.mxu0
  %v463 = vadd.f32 %v101, %v462
  %v464 = vpop.f32.mrf.mxu0
  %v465 = vadd.f32 %v101, %v464
  %466 = vmatmul.bf16.gmra.mxu0 %v254
  %v467 = vpop.f32.mrf.mxu0
  %v468 = vadd.f32 %v101, %v467
  %v469 = vpop.f32.mrf.mxu0
  %v470 = vadd.f32 %v101, %v469
  %471 = vmatmul.bf16.gmra.mxu0 %v255
  %v472 = vpop.f32.mrf.mxu0
  %v473 = vadd.f32 %v101, %v472
  %v474 = vpop.f32.mrf.mxu0
  %v475 = vadd.f32 %v101, %v474
  %476 = vmatmul.bf16.gmra.mxu0 %v256
  %v477 = vpop.f32.mrf.mxu0
  %v478 = vadd.f32 %v101, %v477
  %v479 = vpop.f32.mrf.mxu0
  %v480 = vadd.f32 %v101, %v479
  %481 = vmatmul.bf16.gmra.mxu0 %v257
  %v482 = vpop.f32.mrf.mxu0
  %v483 = vadd.f32 %v101, %v482
  %v484 = vpop.f32.mrf.mxu0
  %v485 = vadd.f32 %v101, %v484
  %486 = vmatmul.bf16.gmra.mxu0 %v258
  %v487 = vpop.f32.mrf.mxu0
  %v488 = vadd.f32 %v101, %v487
  %v489 = vpop.f32.mrf.mxu0
  %v490 = vadd.f32 %v101, %v489
  %491 = vmatmul.bf16.gmra.mxu0 %v259
  %v492 = vpop.f32.mrf.mxu0
  %v493 = vadd.f32 %v101, %v492
  %v494 = vpop.f32.mrf.mxu0
  %v495 = vadd.f32 %v101, %v494
  %496 = vmatmul.bf16.gmra.mxu0 %v260
  %v497 = vpop.f32.mrf.mxu0
  %v498 = vadd.f32 %v101, %v497
  %v499 = vpop.f32.mrf.mxu0
  %v500 = vadd.f32 %v101, %v499
  %501 = vmatmul.bf16.gmra.mxu0 %v261
  %v502 = vpop.f32.mrf.mxu0
  %v503 = vadd.f32 %v101, %v502
  %v504 = vpop.f32.mrf.mxu0
  %v505 = vadd.f32 %v101, %v504
  %506 = vmatmul.bf16.gmra.mxu0 %v262
  %v507 = vpop.f32.mrf.mxu0
  %v508 = vadd.f32 %v101, %v507
  %v509 = vpop.f32.mrf.mxu0
  %v510 = vadd.f32 %v101, %v509
  %511 = vdwg.mxu0
  %v512 = vmul.f32 %v353, 0.5
  %v513 = vmul.f32 %v355, 0.5
  %v514 = vmul.f32 %v358, 0.5
  %v515 = vmul.f32 %v360, 0.5
  %v516 = vmul.f32 %v363, 0.5
  %v517 = vmul.f32 %v365, 0.5
  %v518 = vmul.f32 %v368, 0.5
  %v519 = vmul.f32 %v370, 0.5
  %v520 = vmul.f32 %v373, 0.5
  %v521 = vmul.f32 %v375, 0.5
  %v522 = vmul.f32 %v378, 0.5
  %v523 = vmul.f32 %v380, 0.5
  %v524 = vmul.f32 %v383, 0.5
  %v525 = vmul.f32 %v385, 0.5
  %v526 = vmul.f32 %v388, 0.5
  %v527 = vmul.f32 %v390, 0.5
  %v528 = vmul.f32 %v393, 0.5
  %v529 = vmul.f32 %v395, 0.5
  %v530 = vmul.f32 %v398, 0.5
  %v531 = vmul.f32 %v400, 0.5
  %v532 = vmul.f32 %v403, 0.5
  %v533 = vmul.f32 %v405, 0.5
  %v534 = vmul.f32 %v408, 0.5
  %v535 = vmul.f32 %v410, 0.5
  %v536 = vmul.f32 %v413, 0.5
  %v537 = vmul.f32 %v415, 0.5
  %v538 = vmul.f32 %v418, 0.5
  %v539 = vmul.f32 %v420, 0.5
  %v540 = vmul.f32 %v423, 0.5
  %v541 = vmul.f32 %v425, 0.5
  %v542 = vmul.f32 %v428, 0.5
  %v543 = vmul.f32 %v430, 0.5
  %v544 = vmul.f32 %v433, 0.5
  %v545 = vmul.f32 %v435, 0.5
  %v546 = vmul.f32 %v438, 0.5
  %v547 = vmul.f32 %v440, 0.5
  %v548 = vmul.f32 %v443, 0.5
  %v549 = vmul.f32 %v445, 0.5
  %v550 = vmul.f32 %v448, 0.5
  %v551 = vmul.f32 %v450, 0.5
  %v552 = vmul.f32 %v453, 0.5
  %v553 = vmul.f32 %v455, 0.5
  %v554 = vmul.f32 %v458, 0.5
  %v555 = vmul.f32 %v460, 0.5
  %v556 = vmul.f32 %v463, 0.5
  %v557 = vmul.f32 %v465, 0.5
  %v558 = vmul.f32 %v468, 0.5
  %v559 = vmul.f32 %v470, 0.5
  %v560 = vmul.f32 %v473, 0.5
  %v561 = vmul.f32 %v475, 0.5
  %v562 = vmul.f32 %v478, 0.5
  %v563 = vmul.f32 %v480, 0.5
  %v564 = vmul.f32 %v483, 0.5
  %v565 = vmul.f32 %v485, 0.5
  %v566 = vmul.f32 %v488, 0.5
  %v567 = vmul.f32 %v490, 0.5
  %v568 = vmul.f32 %v493, 0.5
  %v569 = vmul.f32 %v495, 0.5
  %v570 = vmul.f32 %v498, 0.5
  %v571 = vmul.f32 %v500, 0.5
  %v572 = vmul.f32 %v503, 0.5
  %v573 = vmul.f32 %v505, 0.5
  %v574 = vmul.f32 %v508, 0.5
  %v575 = vmul.f32 %v510, 0.5
  %v576 = vmul.f32 %v353, 0.70710677
  %v577 = vmul.f32 %v355, 0.70710677
  %v578 = vmul.f32 %v358, 0.70710677
  %v579 = vmul.f32 %v360, 0.70710677
  %v580 = vmul.f32 %v363, 0.70710677
  %v581 = vmul.f32 %v365, 0.70710677
  %v582 = vmul.f32 %v368, 0.70710677
  %v583 = vmul.f32 %v370, 0.70710677
  %v584 = vmul.f32 %v373, 0.70710677
  %v585 = vmul.f32 %v375, 0.70710677
  %v586 = vmul.f32 %v378, 0.70710677
  %v587 = vmul.f32 %v380, 0.70710677
  %v588 = vmul.f32 %v383, 0.70710677
  %v589 = vmul.f32 %v385, 0.70710677
  %v590 = vmul.f32 %v388, 0.70710677
  %v591 = vmul.f32 %v390, 0.70710677
  %v592 = vmul.f32 %v393, 0.70710677
  %v593 = vmul.f32 %v395, 0.70710677
  %v594 = vmul.f32 %v398, 0.70710677
  %v595 = vmul.f32 %v400, 0.70710677
  %v596 = vmul.f32 %v403, 0.70710677
  %v597 = vmul.f32 %v405, 0.70710677
  %v598 = vmul.f32 %v408, 0.70710677
  %v599 = vmul.f32 %v410, 0.70710677
  %v600 = vmul.f32 %v413, 0.70710677
  %v601 = vmul.f32 %v415, 0.70710677
  %v602 = vmul.f32 %v418, 0.70710677
  %v603 = vmul.f32 %v420, 0.70710677
  %v604 = vmul.f32 %v423, 0.70710677
  %v605 = vmul.f32 %v425, 0.70710677
  %v606 = vmul.f32 %v428, 0.70710677
  %v607 = vmul.f32 %v430, 0.70710677
  %v608 = vmul.f32 %v433, 0.70710677
  %v609 = vmul.f32 %v435, 0.70710677
  %v610 = vmul.f32 %v438, 0.70710677
  %v611 = vmul.f32 %v440, 0.70710677
  %v612 = vmul.f32 %v443, 0.70710677
  %v613 = vmul.f32 %v445, 0.70710677
  %v614 = vmul.f32 %v448, 0.70710677
  %v615 = vmul.f32 %v450, 0.70710677
  %v616 = vmul.f32 %v453, 0.70710677
  %v617 = vmul.f32 %v455, 0.70710677
  %v618 = vmul.f32 %v458, 0.70710677
  %v619 = vmul.f32 %v460, 0.70710677
  %v620 = vmul.f32 %v463, 0.70710677
  %v621 = vmul.f32 %v465, 0.70710677
  %v622 = vmul.f32 %v468, 0.70710677
  %v623 = vmul.f32 %v470, 0.70710677
  %v624 = vmul.f32 %v473, 0.70710677
  %v625 = vmul.f32 %v475, 0.70710677
  %v626 = vmul.f32 %v478, 0.70710677
  %v627 = vmul.f32 %v480, 0.70710677
  %v628 = vmul.f32 %v483, 0.70710677
  %v629 = vmul.f32 %v485, 0.70710677
  %v630 = vmul.f32 %v488, 0.70710677
  %v631 = vmul.f32 %v490, 0.70710677
  %v632 = vmul.f32 %v493, 0.70710677
  %v633 = vmul.f32 %v495, 0.70710677
  %v634 = vmul.f32 %v498, 0.70710677
  %v635 = vmul.f32 %v500, 0.70710677
  %v636 = vmul.f32 %v503, 0.70710677
  %v637 = vmul.f32 %v505, 0.70710677
  %v638 = vmul.f32 %v508, 0.70710677
  %v639 = vmul.f32 %v510, 0.70710677
  %v640 = vmul.f32 %v576, %v576
  %v641 = vmin.f32 16.0, %v640
  %v642 = vmul.f32 %v641, 2.1237322e-06
  %v643 = vadd.f32 %v642, 0.00028619796
  %v644 = vmul.f32 %v641, %v643
  %v645 = vadd.f32 %v644, 0.0036580483
  %v646 = vmul.f32 %v641, %v645
  %v647 = vadd.f32 %v646, 0.05243302
  %v648 = vmul.f32 %v641, %v647
  %v649 = vadd.f32 %v648, 0.18741608
  %v650 = vmul.f32 %v641, %v649
  %v651 = vadd.f32 %v650, 1.1283791
  %v652 = vmul.f32 %v576, %v651
  %v653 = vmul.f32 %v641, 3.8918573e-05
  %v654 = vadd.f32 %v653, 0.001143296
  %v655 = vmul.f32 %v641, %v654
  %v656 = vadd.f32 %v655, 0.014752088
  %v657 = vmul.f32 %v641, %v656
  %v658 = vadd.f32 %v657, 0.112945676
  %v659 = vmul.f32 %v641, %v658
  %v660 = vadd.f32 %v659, 0.4994258
  %v661 = vmul.f32 %v641, %v660
  %v662 = vadd.f32 %v661, 1.0
  %v663 = vrcp.pop %v662
  %v664 = vmul.f32 %v662, %v663
  %v665 = vsub.f32 1.0, %v664
  %v666 = vmul.f32 %v663, %v665
  %v667 = vadd.f32 %v663, %v666
  %vm668 = vweird.f32 %v662
  %vm669 = vweird.f32 %v663
  %vm670 = vmor %vm668, %vm669
  %v671 = vsel %vm670, %v663, %v667
  %v672 = vand.u32 2147483647, %v662
  %vm673 = vcmp.eq.f32.partialorder %v672, 8.507059e+37
  %v674 = vand.u32 %v662, 2147483648
  %v675 = vor.u32 1.1754944e-38, %v674
  %v676 = vsel %vm673, %v675, %v671
  %v677 = vmul.f32 %v652, %v676
  %v678 = vmin.f32 %v677, 1.0
  %v679 = vmax.f32 %v678, -1.0
  %v680 = vmul.f32 %v577, %v577
  %v681 = vmin.f32 16.0, %v680
  %v682 = vmul.f32 %v681, 2.1237322e-06
  %v683 = vadd.f32 %v682, 0.00028619796
  %v684 = vmul.f32 %v681, %v683
  %v685 = vadd.f32 %v684, 0.0036580483
  %v686 = vmul.f32 %v681, %v685
  %v687 = vadd.f32 %v686, 0.05243302
  %v688 = vmul.f32 %v681, %v687
  %v689 = vadd.f32 %v688, 0.18741608
  %v690 = vmul.f32 %v681, %v689
  %v691 = vadd.f32 %v690, 1.1283791
  %v692 = vmul.f32 %v577, %v691
  %v693 = vmul.f32 %v681, 3.8918573e-05
  %v694 = vadd.f32 %v693, 0.001143296
  %v695 = vmul.f32 %v681, %v694
  %v696 = vadd.f32 %v695, 0.014752088
  %v697 = vmul.f32 %v681, %v696
  %v698 = vadd.f32 %v697, 0.112945676
  %v699 = vmul.f32 %v681, %v698
  %v700 = vadd.f32 %v699, 0.4994258
  %v701 = vmul.f32 %v681, %v700
  %v702 = vadd.f32 %v701, 1.0
  %v703 = vrcp.pop %v702
  %v704 = vmul.f32 %v702, %v703
  %v705 = vsub.f32 1.0, %v704
  %v706 = vmul.f32 %v703, %v705
  %v707 = vadd.f32 %v703, %v706
  %vm708 = vweird.f32 %v702
  %vm709 = vweird.f32 %v703
  %vm710 = vmor %vm708, %vm709
  %v711 = vsel %vm710, %v703, %v707
  %v712 = vand.u32 2147483647, %v702
  %vm713 = vcmp.eq.f32.partialorder %v712, 8.507059e+37
  %v714 = vand.u32 %v702, 2147483648
  %v715 = vor.u32 1.1754944e-38, %v714
  %v716 = vsel %vm713, %v715, %v711
  %v717 = vmul.f32 %v692, %v716
  %v718 = vmin.f32 %v717, 1.0
  %v719 = vmax.f32 %v718, -1.0
  %v720 = vmul.f32 %v578, %v578
  %v721 = vmin.f32 16.0, %v720
  %v722 = vmul.f32 %v721, 2.1237322e-06
  %v723 = vadd.f32 %v722, 0.00028619796
  %v724 = vmul.f32 %v721, %v723
  %v725 = vadd.f32 %v724, 0.0036580483
  %v726 = vmul.f32 %v721, %v725
  %v727 = vadd.f32 %v726, 0.05243302
  %v728 = vmul.f32 %v721, %v727
  %v729 = vadd.f32 %v728, 0.18741608
  %v730 = vmul.f32 %v721, %v729
  %v731 = vadd.f32 %v730, 1.1283791
  %v732 = vmul.f32 %v578, %v731
  %v733 = vmul.f32 %v721, 3.8918573e-05
  %v734 = vadd.f32 %v733, 0.001143296
  %v735 = vmul.f32 %v721, %v734
  %v736 = vadd.f32 %v735, 0.014752088
  %v737 = vmul.f32 %v721, %v736
  %v738 = vadd.f32 %v737, 0.112945676
  %v739 = vmul.f32 %v721, %v738
  %v740 = vadd.f32 %v739, 0.4994258
  %v741 = vmul.f32 %v721, %v740
  %v742 = vadd.f32 %v741, 1.0
  %v743 = vrcp.pop %v742
  %v744 = vmul.f32 %v742, %v743
  %v745 = vsub.f32 1.0, %v744
  %v746 = vmul.f32 %v743, %v745
  %v747 = vadd.f32 %v743, %v746
  %vm748 = vweird.f32 %v742
  %vm749 = vweird.f32 %v743
  %vm750 = vmor %vm748, %vm749
  %v751 = vsel %vm750, %v743, %v747
  %v752 = vand.u32 2147483647, %v742
  %vm753 = vcmp.eq.f32.partialorder %v752, 8.507059e+37
  %v754 = vand.u32 %v742, 2147483648
  %v755 = vor.u32 1.1754944e-38, %v754
  %v756 = vsel %vm753, %v755, %v751
  %v757 = vmul.f32 %v732, %v756
  %v758 = vmin.f32 %v757, 1.0
  %v759 = vmax.f32 %v758, -1.0
  %v760 = vmul.f32 %v579, %v579
  %v761 = vmin.f32 16.0, %v760
  %v762 = vmul.f32 %v761, 2.1237322e-06
  %v763 = vadd.f32 %v762, 0.00028619796
  %v764 = vmul.f32 %v761, %v763
  %v765 = vadd.f32 %v764, 0.0036580483
  %v766 = vmul.f32 %v761, %v765
  %v767 = vadd.f32 %v766, 0.05243302
  %v768 = vmul.f32 %v761, %v767
  %v769 = vadd.f32 %v768, 0.18741608
  %v770 = vmul.f32 %v761, %v769
  %v771 = vadd.f32 %v770, 1.1283791
  %v772 = vmul.f32 %v579, %v771
  %v773 = vmul.f32 %v761, 3.8918573e-05
  %v774 = vadd.f32 %v773, 0.001143296
  %v775 = vmul.f32 %v761, %v774
  %v776 = vadd.f32 %v775, 0.014752088
  %v777 = vmul.f32 %v761, %v776
  %v778 = vadd.f32 %v777, 0.112945676
  %v779 = vmul.f32 %v761, %v778
  %v780 = vadd.f32 %v779, 0.4994258
  %v781 = vmul.f32 %v761, %v780
  %v782 = vadd.f32 %v781, 1.0
  %v783 = vrcp.pop %v782
  %v784 = vmul.f32 %v782, %v783
  %v785 = vsub.f32 1.0, %v784
  %v786 = vmul.f32 %v783, %v785
  %v787 = vadd.f32 %v783, %v786
  %vm788 = vweird.f32 %v782
  %vm789 = vweird.f32 %v783
  %vm790 = vmor %vm788, %vm789
  %v791 = vsel %vm790, %v783, %v787
  %v792 = vand.u32 2147483647, %v782
  %vm793 = vcmp.eq.f32.partialorder %v792, 8.507059e+37
  %v794 = vand.u32 %v782, 2147483648
  %v795 = vor.u32 1.1754944e-38, %v794
  %v796 = vsel %vm793, %v795, %v791
  %v797 = vmul.f32 %v772, %v796
  %v798 = vmin.f32 %v797, 1.0
  %v799 = vmax.f32 %v798, -1.0
  %v800 = vmul.f32 %v580, %v580
  %v801 = vmin.f32 16.0, %v800
  %v802 = vmul.f32 %v801, 2.1237322e-06
  %v803 = vadd.f32 %v802, 0.00028619796
  %v804 = vmul.f32 %v801, %v803
  %v805 = vadd.f32 %v804, 0.0036580483
  %v806 = vmul.f32 %v801, %v805
  %v807 = vadd.f32 %v806, 0.05243302
  %v808 = vmul.f32 %v801, %v807
  %v809 = vadd.f32 %v808, 0.18741608
  %v810 = vmul.f32 %v801, %v809
  %v811 = vadd.f32 %v810, 1.1283791
  %v812 = vmul.f32 %v580, %v811
  %v813 = vmul.f32 %v801, 3.8918573e-05
  %v814 = vadd.f32 %v813, 0.001143296
  %v815 = vmul.f32 %v801, %v814
  %v816 = vadd.f32 %v815, 0.014752088
  %v817 = vmul.f32 %v801, %v816
  %v818 = vadd.f32 %v817, 0.112945676
  %v819 = vmul.f32 %v801, %v818
  %v820 = vadd.f32 %v819, 0.4994258
  %v821 = vmul.f32 %v801, %v820
  %v822 = vadd.f32 %v821, 1.0
  %v823 = vrcp.pop %v822
  %v824 = vmul.f32 %v822, %v823
  %v825 = vsub.f32 1.0, %v824
  %v826 = vmul.f32 %v823, %v825
  %v827 = vadd.f32 %v823, %v826
  %vm828 = vweird.f32 %v822
  %vm829 = vweird.f32 %v823
  %vm830 = vmor %vm828, %vm829
  %v831 = vsel %vm830, %v823, %v827
  %v832 = vand.u32 2147483647, %v822
  %vm833 = vcmp.eq.f32.partialorder %v832, 8.507059e+37
  %v834 = vand.u32 %v822, 2147483648
  %v835 = vor.u32 1.1754944e-38, %v834
  %v836 = vsel %vm833, %v835, %v831
  %v837 = vmul.f32 %v812, %v836
  %v838 = vmin.f32 %v837, 1.0
  %v839 = vmax.f32 %v838, -1.0
  %v840 = vmul.f32 %v581, %v581
  %v841 = vmin.f32 16.0, %v840
  %v842 = vmul.f32 %v841, 2.1237322e-06
  %v843 = vadd.f32 %v842, 0.00028619796
  %v844 = vmul.f32 %v841, %v843
  %v845 = vadd.f32 %v844, 0.0036580483
  %v846 = vmul.f32 %v841, %v845
  %v847 = vadd.f32 %v846, 0.05243302
  %v848 = vmul.f32 %v841, %v847
  %v849 = vadd.f32 %v848, 0.18741608
  %v850 = vmul.f32 %v841, %v849
  %v851 = vadd.f32 %v850, 1.1283791
  %v852 = vmul.f32 %v581, %v851
  %v853 = vmul.f32 %v841, 3.8918573e-05
  %v854 = vadd.f32 %v853, 0.001143296
  %v855 = vmul.f32 %v841, %v854
  %v856 = vadd.f32 %v855, 0.014752088
  %v857 = vmul.f32 %v841, %v856
  %v858 = vadd.f32 %v857, 0.112945676
  %v859 = vmul.f32 %v841, %v858
  %v860 = vadd.f32 %v859, 0.4994258
  %v861 = vmul.f32 %v841, %v860
  %v862 = vadd.f32 %v861, 1.0
  %v863 = vrcp.pop %v862
  %v864 = vmul.f32 %v862, %v863
  %v865 = vsub.f32 1.0, %v864
  %v866 = vmul.f32 %v863, %v865
  %v867 = vadd.f32 %v863, %v866
  %vm868 = vweird.f32 %v862
  %vm869 = vweird.f32 %v863
  %vm870 = vmor %vm868, %vm869
  %v871 = vsel %vm870, %v863, %v867
  %v872 = vand.u32 2147483647, %v862
  %vm873 = vcmp.eq.f32.partialorder %v872, 8.507059e+37
  %v874 = vand.u32 %v862, 2147483648
  %v875 = vor.u32 1.1754944e-38, %v874
  %v876 = vsel %vm873, %v875, %v871
  %v877 = vmul.f32 %v852, %v876
  %v878 = vmin.f32 %v877, 1.0
  %v879 = vmax.f32 %v878, -1.0
  %v880 = vmul.f32 %v582, %v582
  %v881 = vmin.f32 16.0, %v880
  %v882 = vmul.f32 %v881, 2.1237322e-06
  %v883 = vadd.f32 %v882, 0.00028619796
  %v884 = vmul.f32 %v881, %v883
  %v885 = vadd.f32 %v884, 0.0036580483
  %v886 = vmul.f32 %v881, %v885
  %v887 = vadd.f32 %v886, 0.05243302
  %v888 = vmul.f32 %v881, %v887
  %v889 = vadd.f32 %v888, 0.18741608
  %v890 = vmul.f32 %v881, %v889
  %v891 = vadd.f32 %v890, 1.1283791
  %v892 = vmul.f32 %v582, %v891
  %v893 = vmul.f32 %v881, 3.8918573e-05
  %v894 = vadd.f32 %v893, 0.001143296
  %v895 = vmul.f32 %v881, %v894
  %v896 = vadd.f32 %v895, 0.014752088
  %v897 = vmul.f32 %v881, %v896
  %v898 = vadd.f32 %v897, 0.112945676
  %v899 = vmul.f32 %v881, %v898
  %v900 = vadd.f32 %v899, 0.4994258
  %v901 = vmul.f32 %v881, %v900
  %v902 = vadd.f32 %v901, 1.0
  %v903 = vrcp.pop %v902
  %v904 = vmul.f32 %v902, %v903
  %v905 = vsub.f32 1.0, %v904
  %v906 = vmul.f32 %v903, %v905
  %v907 = vadd.f32 %v903, %v906
  %vm908 = vweird.f32 %v902
  %vm909 = vweird.f32 %v903
  %vm910 = vmor %vm908, %vm909
  %v911 = vsel %vm910, %v903, %v907
  %v912 = vand.u32 2147483647, %v902
  %vm913 = vcmp.eq.f32.partialorder %v912, 8.507059e+37
  %v914 = vand.u32 %v902, 2147483648
  %v915 = vor.u32 1.1754944e-38, %v914
  %v916 = vsel %vm913, %v915, %v911
  %v917 = vmul.f32 %v892, %v916
  %v918 = vmin.f32 %v917, 1.0
  %v919 = vmax.f32 %v918, -1.0
  %v920 = vmul.f32 %v583, %v583
  %v921 = vmin.f32 16.0, %v920
  %v922 = vmul.f32 %v921, 2.1237322e-06
  %v923 = vadd.f32 %v922, 0.00028619796
  %v924 = vmul.f32 %v921, %v923
  %v925 = vadd.f32 %v924, 0.0036580483
  %v926 = vmul.f32 %v921, %v925
  %v927 = vadd.f32 %v926, 0.05243302
  %v928 = vmul.f32 %v921, %v927
  %v929 = vadd.f32 %v928, 0.18741608
  %v930 = vmul.f32 %v921, %v929
  %v931 = vadd.f32 %v930, 1.1283791
  %v932 = vmul.f32 %v583, %v931
  %v933 = vmul.f32 %v921, 3.8918573e-05
  %v934 = vadd.f32 %v933, 0.001143296
  %v935 = vmul.f32 %v921, %v934
  %v936 = vadd.f32 %v935, 0.014752088
  %v937 = vmul.f32 %v921, %v936
  %v938 = vadd.f32 %v937, 0.112945676
  %v939 = vmul.f32 %v921, %v938
  %v940 = vadd.f32 %v939, 0.4994258
  %v941 = vmul.f32 %v921, %v940
  %v942 = vadd.f32 %v941, 1.0
  %v943 = vrcp.pop %v942
  %v944 = vmul.f32 %v942, %v943
  %v945 = vsub.f32 1.0, %v944
  %v946 = vmul.f32 %v943, %v945
  %v947 = vadd.f32 %v943, %v946
  %vm948 = vweird.f32 %v942
  %vm949 = vweird.f32 %v943
  %vm950 = vmor %vm948, %vm949
  %v951 = vsel %vm950, %v943, %v947
  %v952 = vand.u32 2147483647, %v942
  %vm953 = vcmp.eq.f32.partialorder %v952, 8.507059e+37
  %v954 = vand.u32 %v942, 2147483648
  %v955 = vor.u32 1.1754944e-38, %v954
  %v956 = vsel %vm953, %v955, %v951
  %v957 = vmul.f32 %v932, %v956
  %v958 = vmin.f32 %v957, 1.0
  %v959 = vmax.f32 %v958, -1.0
  %v960 = vmul.f32 %v584, %v584
  %v961 = vmin.f32 16.0, %v960
  %v962 = vmul.f32 %v961, 2.1237322e-06
  %v963 = vadd.f32 %v962, 0.00028619796
  %v964 = vmul.f32 %v961, %v963
  %v965 = vadd.f32 %v964, 0.0036580483
  %v966 = vmul.f32 %v961, %v965
  %v967 = vadd.f32 %v966, 0.05243302
  %v968 = vmul.f32 %v961, %v967
  %v969 = vadd.f32 %v968, 0.18741608
  %v970 = vmul.f32 %v961, %v969
  %v971 = vadd.f32 %v970, 1.1283791
  %v972 = vmul.f32 %v584, %v971
  %v973 = vmul.f32 %v961, 3.8918573e-05
  %v974 = vadd.f32 %v973, 0.001143296
  %v975 = vmul.f32 %v961, %v974
  %v976 = vadd.f32 %v975, 0.014752088
  %v977 = vmul.f32 %v961, %v976
  %v978 = vadd.f32 %v977, 0.112945676
  %v979 = vmul.f32 %v961, %v978
  %v980 = vadd.f32 %v979, 0.4994258
  %v981 = vmul.f32 %v961, %v980
  %v982 = vadd.f32 %v981, 1.0
  %v983 = vrcp.pop %v982
  %v984 = vmul.f32 %v982, %v983
  %v985 = vsub.f32 1.0, %v984
  %v986 = vmul.f32 %v983, %v985
  %v987 = vadd.f32 %v983, %v986
  %vm988 = vweird.f32 %v982
  %vm989 = vweird.f32 %v983
  %vm990 = vmor %vm988, %vm989
  %v991 = vsel %vm990, %v983, %v987
  %v992 = vand.u32 2147483647, %v982
  %vm993 = vcmp.eq.f32.partialorder %v992, 8.507059e+37
  %v994 = vand.u32 %v982, 2147483648
  %v995 = vor.u32 1.1754944e-38, %v994
  %v996 = vsel %vm993, %v995, %v991
  %v997 = vmul.f32 %v972, %v996
  %v998 = vmin.f32 %v997, 1.0
  %v999 = vmax.f32 %v998, -1.0
  %v1000 = vmul.f32 %v585, %v585
  %v1001 = vmin.f32 16.0, %v1000
  %v1002 = vmul.f32 %v1001, 2.1237322e-06
  %v1003 = vadd.f32 %v1002, 0.00028619796
  %v1004 = vmul.f32 %v1001, %v1003
  %v1005 = vadd.f32 %v1004, 0.0036580483
  %v1006 = vmul.f32 %v1001, %v1005
  %v1007 = vadd.f32 %v1006, 0.05243302
  %v1008 = vmul.f32 %v1001, %v1007
  %v1009 = vadd.f32 %v1008, 0.18741608
  %v1010 = vmul.f32 %v1001, %v1009
  %v1011 = vadd.f32 %v1010, 1.1283791
  %v1012 = vmul.f32 %v585, %v1011
  %v1013 = vmul.f32 %v1001, 3.8918573e-05
  %v1014 = vadd.f32 %v1013, 0.001143296
  %v1015 = vmul.f32 %v1001, %v1014
  %v1016 = vadd.f32 %v1015, 0.014752088
  %v1017 = vmul.f32 %v1001, %v1016
  %v1018 = vadd.f32 %v1017, 0.112945676
  %v1019 = vmul.f32 %v1001, %v1018
  %v1020 = vadd.f32 %v1019, 0.4994258
  %v1021 = vmul.f32 %v1001, %v1020
  %v1022 = vadd.f32 %v1021, 1.0
  %v1023 = vrcp.pop %v1022
  %v1024 = vmul.f32 %v1022, %v1023
  %v1025 = vsub.f32 1.0, %v1024
  %v1026 = vmul.f32 %v1023, %v1025
  %v1027 = vadd.f32 %v1023, %v1026
  %vm1028 = vweird.f32 %v1022
  %vm1029 = vweird.f32 %v1023
  %vm1030 = vmor %vm1028, %vm1029
  %v1031 = vsel %vm1030, %v1023, %v1027
  %v1032 = vand.u32 2147483647, %v1022
  %vm1033 = vcmp.eq.f32.partialorder %v1032, 8.507059e+37
  %v1034 = vand.u32 %v1022, 2147483648
  %v1035 = vor.u32 1.1754944e-38, %v1034
  %v1036 = vsel %vm1033, %v1035, %v1031
  %v1037 = vmul.f32 %v1012, %v1036
  %v1038 = vmin.f32 %v1037, 1.0
  %v1039 = vmax.f32 %v1038, -1.0
  %v1040 = vmul.f32 %v586, %v586
  %v1041 = vmin.f32 16.0, %v1040
  %v1042 = vmul.f32 %v1041, 2.1237322e-06
  %v1043 = vadd.f32 %v1042, 0.00028619796
  %v1044 = vmul.f32 %v1041, %v1043
  %v1045 = vadd.f32 %v1044, 0.0036580483
  %v1046 = vmul.f32 %v1041, %v1045
  %v1047 = vadd.f32 %v1046, 0.05243302
  %v1048 = vmul.f32 %v1041, %v1047
  %v1049 = vadd.f32 %v1048, 0.18741608
  %v1050 = vmul.f32 %v1041, %v1049
  %v1051 = vadd.f32 %v1050, 1.1283791
  %v1052 = vmul.f32 %v586, %v1051
  %v1053 = vmul.f32 %v1041, 3.8918573e-05
  %v1054 = vadd.f32 %v1053, 0.001143296
  %v1055 = vmul.f32 %v1041, %v1054
  %v1056 = vadd.f32 %v1055, 0.014752088
  %v1057 = vmul.f32 %v1041, %v1056
  %v1058 = vadd.f32 %v1057, 0.112945676
  %v1059 = vmul.f32 %v1041, %v1058
  %v1060 = vadd.f32 %v1059, 0.4994258
  %v1061 = vmul.f32 %v1041, %v1060
  %v1062 = vadd.f32 %v1061, 1.0
  %v1063 = vrcp.pop %v1062
  %v1064 = vmul.f32 %v1062, %v1063
  %v1065 = vsub.f32 1.0, %v1064
  %v1066 = vmul.f32 %v1063, %v1065
  %v1067 = vadd.f32 %v1063, %v1066
  %vm1068 = vweird.f32 %v1062
  %vm1069 = vweird.f32 %v1063
  %vm1070 = vmor %vm1068, %vm1069
  %v1071 = vsel %vm1070, %v1063, %v1067
  %v1072 = vand.u32 2147483647, %v1062
  %vm1073 = vcmp.eq.f32.partialorder %v1072, 8.507059e+37
  %v1074 = vand.u32 %v1062, 2147483648
  %v1075 = vor.u32 1.1754944e-38, %v1074
  %v1076 = vsel %vm1073, %v1075, %v1071
  %v1077 = vmul.f32 %v1052, %v1076
  %v1078 = vmin.f32 %v1077, 1.0
  %v1079 = vmax.f32 %v1078, -1.0
  %v1080 = vmul.f32 %v587, %v587
  %v1081 = vmin.f32 16.0, %v1080
  %v1082 = vmul.f32 %v1081, 2.1237322e-06
  %v1083 = vadd.f32 %v1082, 0.00028619796
  %v1084 = vmul.f32 %v1081, %v1083
  %v1085 = vadd.f32 %v1084, 0.0036580483
  %v1086 = vmul.f32 %v1081, %v1085
  %v1087 = vadd.f32 %v1086, 0.05243302
  %v1088 = vmul.f32 %v1081, %v1087
  %v1089 = vadd.f32 %v1088, 0.18741608
  %v1090 = vmul.f32 %v1081, %v1089
  %v1091 = vadd.f32 %v1090, 1.1283791
  %v1092 = vmul.f32 %v587, %v1091
  %v1093 = vmul.f32 %v1081, 3.8918573e-05
  %v1094 = vadd.f32 %v1093, 0.001143296
  %v1095 = vmul.f32 %v1081, %v1094
  %v1096 = vadd.f32 %v1095, 0.014752088
  %v1097 = vmul.f32 %v1081, %v1096
  %v1098 = vadd.f32 %v1097, 0.112945676
  %v1099 = vmul.f32 %v1081, %v1098
  %v1100 = vadd.f32 %v1099, 0.4994258
  %v1101 = vmul.f32 %v1081, %v1100
  %v1102 = vadd.f32 %v1101, 1.0
  %v1103 = vrcp.pop %v1102
  %v1104 = vmul.f32 %v1102, %v1103
  %v1105 = vsub.f32 1.0, %v1104
  %v1106 = vmul.f32 %v1103, %v1105
  %v1107 = vadd.f32 %v1103, %v1106
  %vm1108 = vweird.f32 %v1102
  %vm1109 = vweird.f32 %v1103
  %vm1110 = vmor %vm1108, %vm1109
  %v1111 = vsel %vm1110, %v1103, %v1107
  %v1112 = vand.u32 2147483647, %v1102
  %vm1113 = vcmp.eq.f32.partialorder %v1112, 8.507059e+37
  %v1114 = vand.u32 %v1102, 2147483648
  %v1115 = vor.u32 1.1754944e-38, %v1114
  %v1116 = vsel %vm1113, %v1115, %v1111
  %v1117 = vmul.f32 %v1092, %v1116
  %v1118 = vmin.f32 %v1117, 1.0
  %v1119 = vmax.f32 %v1118, -1.0
  %v1120 = vmul.f32 %v588, %v588
  %v1121 = vmin.f32 16.0, %v1120
  %v1122 = vmul.f32 %v1121, 2.1237322e-06
  %v1123 = vadd.f32 %v1122, 0.00028619796
  %v1124 = vmul.f32 %v1121, %v1123
  %v1125 = vadd.f32 %v1124, 0.0036580483
  %v1126 = vmul.f32 %v1121, %v1125
  %v1127 = vadd.f32 %v1126, 0.05243302
  %v1128 = vmul.f32 %v1121, %v1127
  %v1129 = vadd.f32 %v1128, 0.18741608
  %v1130 = vmul.f32 %v1121, %v1129
  %v1131 = vadd.f32 %v1130, 1.1283791
  %v1132 = vmul.f32 %v588, %v1131
  %v1133 = vmul.f32 %v1121, 3.8918573e-05
  %v1134 = vadd.f32 %v1133, 0.001143296
  %v1135 = vmul.f32 %v1121, %v1134
  %v1136 = vadd.f32 %v1135, 0.014752088
  %v1137 = vmul.f32 %v1121, %v1136
  %v1138 = vadd.f32 %v1137, 0.112945676
  %v1139 = vmul.f32 %v1121, %v1138
  %v1140 = vadd.f32 %v1139, 0.4994258
  %v1141 = vmul.f32 %v1121, %v1140
  %v1142 = vadd.f32 %v1141, 1.0
  %v1143 = vrcp.pop %v1142
  %v1144 = vmul.f32 %v1142, %v1143
  %v1145 = vsub.f32 1.0, %v1144
  %v1146 = vmul.f32 %v1143, %v1145
  %v1147 = vadd.f32 %v1143, %v1146
  %vm1148 = vweird.f32 %v1142
  %vm1149 = vweird.f32 %v1143
  %vm1150 = vmor %vm1148, %vm1149
  %v1151 = vsel %vm1150, %v1143, %v1147
  %v1152 = vand.u32 2147483647, %v1142
  %vm1153 = vcmp.eq.f32.partialorder %v1152, 8.507059e+37
  %v1154 = vand.u32 %v1142, 2147483648
  %v1155 = vor.u32 1.1754944e-38, %v1154
  %v1156 = vsel %vm1153, %v1155, %v1151
  %v1157 = vmul.f32 %v1132, %v1156
  %v1158 = vmin.f32 %v1157, 1.0
  %v1159 = vmax.f32 %v1158, -1.0
  %v1160 = vmul.f32 %v589, %v589
  %v1161 = vmin.f32 16.0, %v1160
  %v1162 = vmul.f32 %v1161, 2.1237322e-06
  %v1163 = vadd.f32 %v1162, 0.00028619796
  %v1164 = vmul.f32 %v1161, %v1163
  %v1165 = vadd.f32 %v1164, 0.0036580483
  %v1166 = vmul.f32 %v1161, %v1165
  %v1167 = vadd.f32 %v1166, 0.05243302
  %v1168 = vmul.f32 %v1161, %v1167
  %v1169 = vadd.f32 %v1168, 0.18741608
  %v1170 = vmul.f32 %v1161, %v1169
  %v1171 = vadd.f32 %v1170, 1.1283791
  %v1172 = vmul.f32 %v589, %v1171
  %v1173 = vmul.f32 %v1161, 3.8918573e-05
  %v1174 = vadd.f32 %v1173, 0.001143296
  %v1175 = vmul.f32 %v1161, %v1174
  %v1176 = vadd.f32 %v1175, 0.014752088
  %v1177 = vmul.f32 %v1161, %v1176
  %v1178 = vadd.f32 %v1177, 0.112945676
  %v1179 = vmul.f32 %v1161, %v1178
  %v1180 = vadd.f32 %v1179, 0.4994258
  %v1181 = vmul.f32 %v1161, %v1180
  %v1182 = vadd.f32 %v1181, 1.0
  %v1183 = vrcp.pop %v1182
  %v1184 = vmul.f32 %v1182, %v1183
  %v1185 = vsub.f32 1.0, %v1184
  %v1186 = vmul.f32 %v1183, %v1185
  %v1187 = vadd.f32 %v1183, %v1186
  %vm1188 = vweird.f32 %v1182
  %vm1189 = vweird.f32 %v1183
  %vm1190 = vmor %vm1188, %vm1189
  %v1191 = vsel %vm1190, %v1183, %v1187
  %v1192 = vand.u32 2147483647, %v1182
  %vm1193 = vcmp.eq.f32.partialorder %v1192, 8.507059e+37
  %v1194 = vand.u32 %v1182, 2147483648
  %v1195 = vor.u32 1.1754944e-38, %v1194
  %v1196 = vsel %vm1193, %v1195, %v1191
  %v1197 = vmul.f32 %v1172, %v1196
  %v1198 = vmin.f32 %v1197, 1.0
  %v1199 = vmax.f32 %v1198, -1.0
  %v1200 = vmul.f32 %v590, %v590
  %v1201 = vmin.f32 16.0, %v1200
  %v1202 = vmul.f32 %v1201, 2.1237322e-06
  %v1203 = vadd.f32 %v1202, 0.00028619796
  %v1204 = vmul.f32 %v1201, %v1203
  %v1205 = vadd.f32 %v1204, 0.0036580483
  %v1206 = vmul.f32 %v1201, %v1205
  %v1207 = vadd.f32 %v1206, 0.05243302
  %v1208 = vmul.f32 %v1201, %v1207
  %v1209 = vadd.f32 %v1208, 0.18741608
  %v1210 = vmul.f32 %v1201, %v1209
  %v1211 = vadd.f32 %v1210, 1.1283791
  %v1212 = vmul.f32 %v590, %v1211
  %v1213 = vmul.f32 %v1201, 3.8918573e-05
  %v1214 = vadd.f32 %v1213, 0.001143296
  %v1215 = vmul.f32 %v1201, %v1214
  %v1216 = vadd.f32 %v1215, 0.014752088
  %v1217 = vmul.f32 %v1201, %v1216
  %v1218 = vadd.f32 %v1217, 0.112945676
  %v1219 = vmul.f32 %v1201, %v1218
  %v1220 = vadd.f32 %v1219, 0.4994258
  %v1221 = vmul.f32 %v1201, %v1220
  %v1222 = vadd.f32 %v1221, 1.0
  %v1223 = vrcp.pop %v1222
  %v1224 = vmul.f32 %v1222, %v1223
  %v1225 = vsub.f32 1.0, %v1224
  %v1226 = vmul.f32 %v1223, %v1225
  %v1227 = vadd.f32 %v1223, %v1226
  %vm1228 = vweird.f32 %v1222
  %vm1229 = vweird.f32 %v1223
  %vm1230 = vmor %vm1228, %vm1229
  %v1231 = vsel %vm1230, %v1223, %v1227
  %v1232 = vand.u32 2147483647, %v1222
  %vm1233 = vcmp.eq.f32.partialorder %v1232, 8.507059e+37
  %v1234 = vand.u32 %v1222, 2147483648
  %v1235 = vor.u32 1.1754944e-38, %v1234
  %v1236 = vsel %vm1233, %v1235, %v1231
  %v1237 = vmul.f32 %v1212, %v1236
  %v1238 = vmin.f32 %v1237, 1.0
  %v1239 = vmax.f32 %v1238, -1.0
  %v1240 = vmul.f32 %v591, %v591
  %v1241 = vmin.f32 16.0, %v1240
  %v1242 = vmul.f32 %v1241, 2.1237322e-06
  %v1243 = vadd.f32 %v1242, 0.00028619796
  %v1244 = vmul.f32 %v1241, %v1243
  %v1245 = vadd.f32 %v1244, 0.0036580483
  %v1246 = vmul.f32 %v1241, %v1245
  %v1247 = vadd.f32 %v1246, 0.05243302
  %v1248 = vmul.f32 %v1241, %v1247
  %v1249 = vadd.f32 %v1248, 0.18741608
  %v1250 = vmul.f32 %v1241, %v1249
  %v1251 = vadd.f32 %v1250, 1.1283791
  %v1252 = vmul.f32 %v591, %v1251
  %v1253 = vmul.f32 %v1241, 3.8918573e-05
  %v1254 = vadd.f32 %v1253, 0.001143296
  %v1255 = vmul.f32 %v1241, %v1254
  %v1256 = vadd.f32 %v1255, 0.014752088
  %v1257 = vmul.f32 %v1241, %v1256
  %v1258 = vadd.f32 %v1257, 0.112945676
  %v1259 = vmul.f32 %v1241, %v1258
  %v1260 = vadd.f32 %v1259, 0.4994258
  %v1261 = vmul.f32 %v1241, %v1260
  %v1262 = vadd.f32 %v1261, 1.0
  %v1263 = vrcp.pop %v1262
  %v1264 = vmul.f32 %v1262, %v1263
  %v1265 = vsub.f32 1.0, %v1264
  %v1266 = vmul.f32 %v1263, %v1265
  %v1267 = vadd.f32 %v1263, %v1266
  %vm1268 = vweird.f32 %v1262
  %vm1269 = vweird.f32 %v1263
  %vm1270 = vmor %vm1268, %vm1269
  %v1271 = vsel %vm1270, %v1263, %v1267
  %v1272 = vand.u32 2147483647, %v1262
  %vm1273 = vcmp.eq.f32.partialorder %v1272, 8.507059e+37
  %v1274 = vand.u32 %v1262, 2147483648
  %v1275 = vor.u32 1.1754944e-38, %v1274
  %v1276 = vsel %vm1273, %v1275, %v1271
  %v1277 = vmul.f32 %v1252, %v1276
  %v1278 = vmin.f32 %v1277, 1.0
  %v1279 = vmax.f32 %v1278, -1.0
  %v1280 = vmul.f32 %v592, %v592
  %v1281 = vmin.f32 16.0, %v1280
  %v1282 = vmul.f32 %v1281, 2.1237322e-06
  %v1283 = vadd.f32 %v1282, 0.00028619796
  %v1284 = vmul.f32 %v1281, %v1283
  %v1285 = vadd.f32 %v1284, 0.0036580483
  %v1286 = vmul.f32 %v1281, %v1285
  %v1287 = vadd.f32 %v1286, 0.05243302
  %v1288 = vmul.f32 %v1281, %v1287
  %v1289 = vadd.f32 %v1288, 0.18741608
  %v1290 = vmul.f32 %v1281, %v1289
  %v1291 = vadd.f32 %v1290, 1.1283791
  %v1292 = vmul.f32 %v592, %v1291
  %v1293 = vmul.f32 %v1281, 3.8918573e-05
  %v1294 = vadd.f32 %v1293, 0.001143296
  %v1295 = vmul.f32 %v1281, %v1294
  %v1296 = vadd.f32 %v1295, 0.014752088
  %v1297 = vmul.f32 %v1281, %v1296
  %v1298 = vadd.f32 %v1297, 0.112945676
  %v1299 = vmul.f32 %v1281, %v1298
  %v1300 = vadd.f32 %v1299, 0.4994258
  %v1301 = vmul.f32 %v1281, %v1300
  %v1302 = vadd.f32 %v1301, 1.0
  %v1303 = vrcp.pop %v1302
  %v1304 = vmul.f32 %v1302, %v1303
  %v1305 = vsub.f32 1.0, %v1304
  %v1306 = vmul.f32 %v1303, %v1305
  %v1307 = vadd.f32 %v1303, %v1306
  %vm1308 = vweird.f32 %v1302
  %vm1309 = vweird.f32 %v1303
  %vm1310 = vmor %vm1308, %vm1309
  %v1311 = vsel %vm1310, %v1303, %v1307
  %v1312 = vand.u32 2147483647, %v1302
  %vm1313 = vcmp.eq.f32.partialorder %v1312, 8.507059e+37
  %v1314 = vand.u32 %v1302, 2147483648
  %v1315 = vor.u32 1.1754944e-38, %v1314
  %v1316 = vsel %vm1313, %v1315, %v1311
  %v1317 = vmul.f32 %v1292, %v1316
  %v1318 = vmin.f32 %v1317, 1.0
  %v1319 = vmax.f32 %v1318, -1.0
  %v1320 = vmul.f32 %v593, %v593
  %v1321 = vmin.f32 16.0, %v1320
  %v1322 = vmul.f32 %v1321, 2.1237322e-06
  %v1323 = vadd.f32 %v1322, 0.00028619796
  %v1324 = vmul.f32 %v1321, %v1323
  %v1325 = vadd.f32 %v1324, 0.0036580483
  %v1326 = vmul.f32 %v1321, %v1325
  %v1327 = vadd.f32 %v1326, 0.05243302
  %v1328 = vmul.f32 %v1321, %v1327
  %v1329 = vadd.f32 %v1328, 0.18741608
  %v1330 = vmul.f32 %v1321, %v1329
  %v1331 = vadd.f32 %v1330, 1.1283791
  %v1332 = vmul.f32 %v593, %v1331
  %v1333 = vmul.f32 %v1321, 3.8918573e-05
  %v1334 = vadd.f32 %v1333, 0.001143296
  %v1335 = vmul.f32 %v1321, %v1334
  %v1336 = vadd.f32 %v1335, 0.014752088
  %v1337 = vmul.f32 %v1321, %v1336
  %v1338 = vadd.f32 %v1337, 0.112945676
  %v1339 = vmul.f32 %v1321, %v1338
  %v1340 = vadd.f32 %v1339, 0.4994258
  %v1341 = vmul.f32 %v1321, %v1340
  %v1342 = vadd.f32 %v1341, 1.0
  %v1343 = vrcp.pop %v1342
  %v1344 = vmul.f32 %v1342, %v1343
  %v1345 = vsub.f32 1.0, %v1344
  %v1346 = vmul.f32 %v1343, %v1345
  %v1347 = vadd.f32 %v1343, %v1346
  %vm1348 = vweird.f32 %v1342
  %vm1349 = vweird.f32 %v1343
  %vm1350 = vmor %vm1348, %vm1349
  %v1351 = vsel %vm1350, %v1343, %v1347
  %v1352 = vand.u32 2147483647, %v1342
  %vm1353 = vcmp.eq.f32.partialorder %v1352, 8.507059e+37
  %v1354 = vand.u32 %v1342, 2147483648
  %v1355 = vor.u32 1.1754944e-38, %v1354
  %v1356 = vsel %vm1353, %v1355, %v1351
  %v1357 = vmul.f32 %v1332, %v1356
  %v1358 = vmin.f32 %v1357, 1.0
  %v1359 = vmax.f32 %v1358, -1.0
  %v1360 = vmul.f32 %v594, %v594
  %v1361 = vmin.f32 16.0, %v1360
  %v1362 = vmul.f32 %v1361, 2.1237322e-06
  %v1363 = vadd.f32 %v1362, 0.00028619796
  %v1364 = vmul.f32 %v1361, %v1363
  %v1365 = vadd.f32 %v1364, 0.0036580483
  %v1366 = vmul.f32 %v1361, %v1365
  %v1367 = vadd.f32 %v1366, 0.05243302
  %v1368 = vmul.f32 %v1361, %v1367
  %v1369 = vadd.f32 %v1368, 0.18741608
  %v1370 = vmul.f32 %v1361, %v1369
  %v1371 = vadd.f32 %v1370, 1.1283791
  %v1372 = vmul.f32 %v594, %v1371
  %v1373 = vmul.f32 %v1361, 3.8918573e-05
  %v1374 = vadd.f32 %v1373, 0.001143296
  %v1375 = vmul.f32 %v1361, %v1374
  %v1376 = vadd.f32 %v1375, 0.014752088
  %v1377 = vmul.f32 %v1361, %v1376
  %v1378 = vadd.f32 %v1377, 0.112945676
  %v1379 = vmul.f32 %v1361, %v1378
  %v1380 = vadd.f32 %v1379, 0.4994258
  %v1381 = vmul.f32 %v1361, %v1380
  %v1382 = vadd.f32 %v1381, 1.0
  %v1383 = vrcp.pop %v1382
  %v1384 = vmul.f32 %v1382, %v1383
  %v1385 = vsub.f32 1.0, %v1384
  %v1386 = vmul.f32 %v1383, %v1385
  %v1387 = vadd.f32 %v1383, %v1386
  %vm1388 = vweird.f32 %v1382
  %vm1389 = vweird.f32 %v1383
  %vm1390 = vmor %vm1388, %vm1389
  %v1391 = vsel %vm1390, %v1383, %v1387
  %v1392 = vand.u32 2147483647, %v1382
  %vm1393 = vcmp.eq.f32.partialorder %v1392, 8.507059e+37
  %v1394 = vand.u32 %v1382, 2147483648
  %v1395 = vor.u32 1.1754944e-38, %v1394
  %v1396 = vsel %vm1393, %v1395, %v1391
  %v1397 = vmul.f32 %v1372, %v1396
  %v1398 = vmin.f32 %v1397, 1.0
  %v1399 = vmax.f32 %v1398, -1.0
  %v1400 = vmul.f32 %v595, %v595
  %v1401 = vmin.f32 16.0, %v1400
  %v1402 = vmul.f32 %v1401, 2.1237322e-06
  %v1403 = vadd.f32 %v1402, 0.00028619796
  %v1404 = vmul.f32 %v1401, %v1403
  %v1405 = vadd.f32 %v1404, 0.0036580483
  %v1406 = vmul.f32 %v1401, %v1405
  %v1407 = vadd.f32 %v1406, 0.05243302
  %v1408 = vmul.f32 %v1401, %v1407
  %v1409 = vadd.f32 %v1408, 0.18741608
  %v1410 = vmul.f32 %v1401, %v1409
  %v1411 = vadd.f32 %v1410, 1.1283791
  %v1412 = vmul.f32 %v595, %v1411
  %v1413 = vmul.f32 %v1401, 3.8918573e-05
  %v1414 = vadd.f32 %v1413, 0.001143296
  %v1415 = vmul.f32 %v1401, %v1414
  %v1416 = vadd.f32 %v1415, 0.014752088
  %v1417 = vmul.f32 %v1401, %v1416
  %v1418 = vadd.f32 %v1417, 0.112945676
  %v1419 = vmul.f32 %v1401, %v1418
  %v1420 = vadd.f32 %v1419, 0.4994258
  %v1421 = vmul.f32 %v1401, %v1420
  %v1422 = vadd.f32 %v1421, 1.0
  %v1423 = vrcp.pop %v1422
  %v1424 = vmul.f32 %v1422, %v1423
  %v1425 = vsub.f32 1.0, %v1424
  %v1426 = vmul.f32 %v1423, %v1425
  %v1427 = vadd.f32 %v1423, %v1426
  %vm1428 = vweird.f32 %v1422
  %vm1429 = vweird.f32 %v1423
  %vm1430 = vmor %vm1428, %vm1429
  %v1431 = vsel %vm1430, %v1423, %v1427
  %v1432 = vand.u32 2147483647, %v1422
  %vm1433 = vcmp.eq.f32.partialorder %v1432, 8.507059e+37
  %v1434 = vand.u32 %v1422, 2147483648
  %v1435 = vor.u32 1.1754944e-38, %v1434
  %v1436 = vsel %vm1433, %v1435, %v1431
  %v1437 = vmul.f32 %v1412, %v1436
  %v1438 = vmin.f32 %v1437, 1.0
  %v1439 = vmax.f32 %v1438, -1.0
  %v1440 = vmul.f32 %v596, %v596
  %v1441 = vmin.f32 16.0, %v1440
  %v1442 = vmul.f32 %v1441, 2.1237322e-06
  %v1443 = vadd.f32 %v1442, 0.00028619796
  %v1444 = vmul.f32 %v1441, %v1443
  %v1445 = vadd.f32 %v1444, 0.0036580483
  %v1446 = vmul.f32 %v1441, %v1445
  %v1447 = vadd.f32 %v1446, 0.05243302
  %v1448 = vmul.f32 %v1441, %v1447
  %v1449 = vadd.f32 %v1448, 0.18741608
  %v1450 = vmul.f32 %v1441, %v1449
  %v1451 = vadd.f32 %v1450, 1.1283791
  %v1452 = vmul.f32 %v596, %v1451
  %v1453 = vmul.f32 %v1441, 3.8918573e-05
  %v1454 = vadd.f32 %v1453, 0.001143296
  %v1455 = vmul.f32 %v1441, %v1454
  %v1456 = vadd.f32 %v1455, 0.014752088
  %v1457 = vmul.f32 %v1441, %v1456
  %v1458 = vadd.f32 %v1457, 0.112945676
  %v1459 = vmul.f32 %v1441, %v1458
  %v1460 = vadd.f32 %v1459, 0.4994258
  %v1461 = vmul.f32 %v1441, %v1460
  %v1462 = vadd.f32 %v1461, 1.0
  %v1463 = vrcp.pop %v1462
  %v1464 = vmul.f32 %v1462, %v1463
  %v1465 = vsub.f32 1.0, %v1464
  %v1466 = vmul.f32 %v1463, %v1465
  %v1467 = vadd.f32 %v1463, %v1466
  %vm1468 = vweird.f32 %v1462
  %vm1469 = vweird.f32 %v1463
  %vm1470 = vmor %vm1468, %vm1469
  %v1471 = vsel %vm1470, %v1463, %v1467
  %v1472 = vand.u32 2147483647, %v1462
  %vm1473 = vcmp.eq.f32.partialorder %v1472, 8.507059e+37
  %v1474 = vand.u32 %v1462, 2147483648
  %v1475 = vor.u32 1.1754944e-38, %v1474
  %v1476 = vsel %vm1473, %v1475, %v1471
  %v1477 = vmul.f32 %v1452, %v1476
  %v1478 = vmin.f32 %v1477, 1.0
  %v1479 = vmax.f32 %v1478, -1.0
  %v1480 = vmul.f32 %v597, %v597
  %v1481 = vmin.f32 16.0, %v1480
  %v1482 = vmul.f32 %v1481, 2.1237322e-06
  %v1483 = vadd.f32 %v1482, 0.00028619796
  %v1484 = vmul.f32 %v1481, %v1483
  %v1485 = vadd.f32 %v1484, 0.0036580483
  %v1486 = vmul.f32 %v1481, %v1485
  %v1487 = vadd.f32 %v1486, 0.05243302
  %v1488 = vmul.f32 %v1481, %v1487
  %v1489 = vadd.f32 %v1488, 0.18741608
  %v1490 = vmul.f32 %v1481, %v1489
  %v1491 = vadd.f32 %v1490, 1.1283791
  %v1492 = vmul.f32 %v597, %v1491
  %v1493 = vmul.f32 %v1481, 3.8918573e-05
  %v1494 = vadd.f32 %v1493, 0.001143296
  %v1495 = vmul.f32 %v1481, %v1494
  %v1496 = vadd.f32 %v1495, 0.014752088
  %v1497 = vmul.f32 %v1481, %v1496
  %v1498 = vadd.f32 %v1497, 0.112945676
  %v1499 = vmul.f32 %v1481, %v1498
  %v1500 = vadd.f32 %v1499, 0.4994258
  %v1501 = vmul.f32 %v1481, %v1500
  %v1502 = vadd.f32 %v1501, 1.0
  %v1503 = vrcp.pop %v1502
  %v1504 = vmul.f32 %v1502, %v1503
  %v1505 = vsub.f32 1.0, %v1504
  %v1506 = vmul.f32 %v1503, %v1505
  %v1507 = vadd.f32 %v1503, %v1506
  %vm1508 = vweird.f32 %v1502
  %vm1509 = vweird.f32 %v1503
  %vm1510 = vmor %vm1508, %vm1509
  %v1511 = vsel %vm1510, %v1503, %v1507
  %v1512 = vand.u32 2147483647, %v1502
  %vm1513 = vcmp.eq.f32.partialorder %v1512, 8.507059e+37
  %v1514 = vand.u32 %v1502, 2147483648
  %v1515 = vor.u32 1.1754944e-38, %v1514
  %v1516 = vsel %vm1513, %v1515, %v1511
  %v1517 = vmul.f32 %v1492, %v1516
  %v1518 = vmin.f32 %v1517, 1.0
  %v1519 = vmax.f32 %v1518, -1.0
  %v1520 = vmul.f32 %v598, %v598
  %v1521 = vmin.f32 16.0, %v1520
  %v1522 = vmul.f32 %v1521, 2.1237322e-06
  %v1523 = vadd.f32 %v1522, 0.00028619796
  %v1524 = vmul.f32 %v1521, %v1523
  %v1525 = vadd.f32 %v1524, 0.0036580483
  %v1526 = vmul.f32 %v1521, %v1525
  %v1527 = vadd.f32 %v1526, 0.05243302
  %v1528 = vmul.f32 %v1521, %v1527
  %v1529 = vadd.f32 %v1528, 0.18741608
  %v1530 = vmul.f32 %v1521, %v1529
  %v1531 = vadd.f32 %v1530, 1.1283791
  %v1532 = vmul.f32 %v598, %v1531
  %v1533 = vmul.f32 %v1521, 3.8918573e-05
  %v1534 = vadd.f32 %v1533, 0.001143296
  %v1535 = vmul.f32 %v1521, %v1534
  %v1536 = vadd.f32 %v1535, 0.014752088
  %v1537 = vmul.f32 %v1521, %v1536
  %v1538 = vadd.f32 %v1537, 0.112945676
  %v1539 = vmul.f32 %v1521, %v1538
  %v1540 = vadd.f32 %v1539, 0.4994258
  %v1541 = vmul.f32 %v1521, %v1540
  %v1542 = vadd.f32 %v1541, 1.0
  %v1543 = vrcp.pop %v1542
  %v1544 = vmul.f32 %v1542, %v1543
  %v1545 = vsub.f32 1.0, %v1544
  %v1546 = vmul.f32 %v1543, %v1545
  %v1547 = vadd.f32 %v1543, %v1546
  %vm1548 = vweird.f32 %v1542
  %vm1549 = vweird.f32 %v1543
  %vm1550 = vmor %vm1548, %vm1549
  %v1551 = vsel %vm1550, %v1543, %v1547
  %v1552 = vand.u32 2147483647, %v1542
  %vm1553 = vcmp.eq.f32.partialorder %v1552, 8.507059e+37
  %v1554 = vand.u32 %v1542, 2147483648
  %v1555 = vor.u32 1.1754944e-38, %v1554
  %v1556 = vsel %vm1553, %v1555, %v1551
  %v1557 = vmul.f32 %v1532, %v1556
  %v1558 = vmin.f32 %v1557, 1.0
  %v1559 = vmax.f32 %v1558, -1.0
  %v1560 = vmul.f32 %v599, %v599
  %v1561 = vmin.f32 16.0, %v1560
  %v1562 = vmul.f32 %v1561, 2.1237322e-06
  %v1563 = vadd.f32 %v1562, 0.00028619796
  %v1564 = vmul.f32 %v1561, %v1563
  %v1565 = vadd.f32 %v1564, 0.0036580483
  %v1566 = vmul.f32 %v1561, %v1565
  %v1567 = vadd.f32 %v1566, 0.05243302
  %v1568 = vmul.f32 %v1561, %v1567
  %v1569 = vadd.f32 %v1568, 0.18741608
  %v1570 = vmul.f32 %v1561, %v1569
  %v1571 = vadd.f32 %v1570, 1.1283791
  %v1572 = vmul.f32 %v599, %v1571
  %v1573 = vmul.f32 %v1561, 3.8918573e-05
  %v1574 = vadd.f32 %v1573, 0.001143296
  %v1575 = vmul.f32 %v1561, %v1574
  %v1576 = vadd.f32 %v1575, 0.014752088
  %v1577 = vmul.f32 %v1561, %v1576
  %v1578 = vadd.f32 %v1577, 0.112945676
  %v1579 = vmul.f32 %v1561, %v1578
  %v1580 = vadd.f32 %v1579, 0.4994258
  %v1581 = vmul.f32 %v1561, %v1580
  %v1582 = vadd.f32 %v1581, 1.0
  %v1583 = vrcp.pop %v1582
  %v1584 = vmul.f32 %v1582, %v1583
  %v1585 = vsub.f32 1.0, %v1584
  %v1586 = vmul.f32 %v1583, %v1585
  %v1587 = vadd.f32 %v1583, %v1586
  %vm1588 = vweird.f32 %v1582
  %vm1589 = vweird.f32 %v1583
  %vm1590 = vmor %vm1588, %vm1589
  %v1591 = vsel %vm1590, %v1583, %v1587
  %v1592 = vand.u32 2147483647, %v1582
  %vm1593 = vcmp.eq.f32.partialorder %v1592, 8.507059e+37
  %v1594 = vand.u32 %v1582, 2147483648
  %v1595 = vor.u32 1.1754944e-38, %v1594
  %v1596 = vsel %vm1593, %v1595, %v1591
  %v1597 = vmul.f32 %v1572, %v1596
  %v1598 = vmin.f32 %v1597, 1.0
  %v1599 = vmax.f32 %v1598, -1.0
  %v1600 = vmul.f32 %v600, %v600
  %v1601 = vmin.f32 16.0, %v1600
  %v1602 = vmul.f32 %v1601, 2.1237322e-06
  %v1603 = vadd.f32 %v1602, 0.00028619796
  %v1604 = vmul.f32 %v1601, %v1603
  %v1605 = vadd.f32 %v1604, 0.0036580483
  %v1606 = vmul.f32 %v1601, %v1605
  %v1607 = vadd.f32 %v1606, 0.05243302
  %v1608 = vmul.f32 %v1601, %v1607
  %v1609 = vadd.f32 %v1608, 0.18741608
  %v1610 = vmul.f32 %v1601, %v1609
  %v1611 = vadd.f32 %v1610, 1.1283791
  %v1612 = vmul.f32 %v600, %v1611
  %v1613 = vmul.f32 %v1601, 3.8918573e-05
  %v1614 = vadd.f32 %v1613, 0.001143296
  %v1615 = vmul.f32 %v1601, %v1614
  %v1616 = vadd.f32 %v1615, 0.014752088
  %v1617 = vmul.f32 %v1601, %v1616
  %v1618 = vadd.f32 %v1617, 0.112945676
  %v1619 = vmul.f32 %v1601, %v1618
  %v1620 = vadd.f32 %v1619, 0.4994258
  %v1621 = vmul.f32 %v1601, %v1620
  %v1622 = vadd.f32 %v1621, 1.0
  %v1623 = vrcp.pop %v1622
  %v1624 = vmul.f32 %v1622, %v1623
  %v1625 = vsub.f32 1.0, %v1624
  %v1626 = vmul.f32 %v1623, %v1625
  %v1627 = vadd.f32 %v1623, %v1626
  %vm1628 = vweird.f32 %v1622
  %vm1629 = vweird.f32 %v1623
  %vm1630 = vmor %vm1628, %vm1629
  %v1631 = vsel %vm1630, %v1623, %v1627
  %v1632 = vand.u32 2147483647, %v1622
  %vm1633 = vcmp.eq.f32.partialorder %v1632, 8.507059e+37
  %v1634 = vand.u32 %v1622, 2147483648
  %v1635 = vor.u32 1.1754944e-38, %v1634
  %v1636 = vsel %vm1633, %v1635, %v1631
  %v1637 = vmul.f32 %v1612, %v1636
  %v1638 = vmin.f32 %v1637, 1.0
  %v1639 = vmax.f32 %v1638, -1.0
  %v1640 = vmul.f32 %v601, %v601
  %v1641 = vmin.f32 16.0, %v1640
  %v1642 = vmul.f32 %v1641, 2.1237322e-06
  %v1643 = vadd.f32 %v1642, 0.00028619796
  %v1644 = vmul.f32 %v1641, %v1643
  %v1645 = vadd.f32 %v1644, 0.0036580483
  %v1646 = vmul.f32 %v1641, %v1645
  %v1647 = vadd.f32 %v1646, 0.05243302
  %v1648 = vmul.f32 %v1641, %v1647
  %v1649 = vadd.f32 %v1648, 0.18741608
  %v1650 = vmul.f32 %v1641, %v1649
  %v1651 = vadd.f32 %v1650, 1.1283791
  %v1652 = vmul.f32 %v601, %v1651
  %v1653 = vmul.f32 %v1641, 3.8918573e-05
  %v1654 = vadd.f32 %v1653, 0.001143296
  %v1655 = vmul.f32 %v1641, %v1654
  %v1656 = vadd.f32 %v1655, 0.014752088
  %v1657 = vmul.f32 %v1641, %v1656
  %v1658 = vadd.f32 %v1657, 0.112945676
  %v1659 = vmul.f32 %v1641, %v1658
  %v1660 = vadd.f32 %v1659, 0.4994258
  %v1661 = vmul.f32 %v1641, %v1660
  %v1662 = vadd.f32 %v1661, 1.0
  %v1663 = vrcp.pop %v1662
  %v1664 = vmul.f32 %v1662, %v1663
  %v1665 = vsub.f32 1.0, %v1664
  %v1666 = vmul.f32 %v1663, %v1665
  %v1667 = vadd.f32 %v1663, %v1666
  %vm1668 = vweird.f32 %v1662
  %vm1669 = vweird.f32 %v1663
  %vm1670 = vmor %vm1668, %vm1669
  %v1671 = vsel %vm1670, %v1663, %v1667
  %v1672 = vand.u32 2147483647, %v1662
  %vm1673 = vcmp.eq.f32.partialorder %v1672, 8.507059e+37
  %v1674 = vand.u32 %v1662, 2147483648
  %v1675 = vor.u32 1.1754944e-38, %v1674
  %v1676 = vsel %vm1673, %v1675, %v1671
  %v1677 = vmul.f32 %v1652, %v1676
  %v1678 = vmin.f32 %v1677, 1.0
  %v1679 = vmax.f32 %v1678, -1.0
  %v1680 = vmul.f32 %v602, %v602
  %v1681 = vmin.f32 16.0, %v1680
  %v1682 = vmul.f32 %v1681, 2.1237322e-06
  %v1683 = vadd.f32 %v1682, 0.00028619796
  %v1684 = vmul.f32 %v1681, %v1683
  %v1685 = vadd.f32 %v1684, 0.0036580483
  %v1686 = vmul.f32 %v1681, %v1685
  %v1687 = vadd.f32 %v1686, 0.05243302
  %v1688 = vmul.f32 %v1681, %v1687
  %v1689 = vadd.f32 %v1688, 0.18741608
  %v1690 = vmul.f32 %v1681, %v1689
  %v1691 = vadd.f32 %v1690, 1.1283791
  %v1692 = vmul.f32 %v602, %v1691
  %v1693 = vmul.f32 %v1681, 3.8918573e-05
  %v1694 = vadd.f32 %v1693, 0.001143296
  %v1695 = vmul.f32 %v1681, %v1694
  %v1696 = vadd.f32 %v1695, 0.014752088
  %v1697 = vmul.f32 %v1681, %v1696
  %v1698 = vadd.f32 %v1697, 0.112945676
  %v1699 = vmul.f32 %v1681, %v1698
  %v1700 = vadd.f32 %v1699, 0.4994258
  %v1701 = vmul.f32 %v1681, %v1700
  %v1702 = vadd.f32 %v1701, 1.0
  %v1703 = vrcp.pop %v1702
  %v1704 = vmul.f32 %v1702, %v1703
  %v1705 = vsub.f32 1.0, %v1704
  %v1706 = vmul.f32 %v1703, %v1705
  %v1707 = vadd.f32 %v1703, %v1706
  %vm1708 = vweird.f32 %v1702
  %vm1709 = vweird.f32 %v1703
  %vm1710 = vmor %vm1708, %vm1709
  %v1711 = vsel %vm1710, %v1703, %v1707
  %v1712 = vand.u32 2147483647, %v1702
  %vm1713 = vcmp.eq.f32.partialorder %v1712, 8.507059e+37
  %v1714 = vand.u32 %v1702, 2147483648
  %v1715 = vor.u32 1.1754944e-38, %v1714
  %v1716 = vsel %vm1713, %v1715, %v1711
  %v1717 = vmul.f32 %v1692, %v1716
  %v1718 = vmin.f32 %v1717, 1.0
  %v1719 = vmax.f32 %v1718, -1.0
  %v1720 = vmul.f32 %v603, %v603
  %v1721 = vmin.f32 16.0, %v1720
  %v1722 = vmul.f32 %v1721, 2.1237322e-06
  %v1723 = vadd.f32 %v1722, 0.00028619796
  %v1724 = vmul.f32 %v1721, %v1723
  %v1725 = vadd.f32 %v1724, 0.0036580483
  %v1726 = vmul.f32 %v1721, %v1725
  %v1727 = vadd.f32 %v1726, 0.05243302
  %v1728 = vmul.f32 %v1721, %v1727
  %v1729 = vadd.f32 %v1728, 0.18741608
  %v1730 = vmul.f32 %v1721, %v1729
  %v1731 = vadd.f32 %v1730, 1.1283791
  %v1732 = vmul.f32 %v603, %v1731
  %v1733 = vmul.f32 %v1721, 3.8918573e-05
  %v1734 = vadd.f32 %v1733, 0.001143296
  %v1735 = vmul.f32 %v1721, %v1734
  %v1736 = vadd.f32 %v1735, 0.014752088
  %v1737 = vmul.f32 %v1721, %v1736
  %v1738 = vadd.f32 %v1737, 0.112945676
  %v1739 = vmul.f32 %v1721, %v1738
  %v1740 = vadd.f32 %v1739, 0.4994258
  %v1741 = vmul.f32 %v1721, %v1740
  %v1742 = vadd.f32 %v1741, 1.0
  %v1743 = vrcp.pop %v1742
  %v1744 = vmul.f32 %v1742, %v1743
  %v1745 = vsub.f32 1.0, %v1744
  %v1746 = vmul.f32 %v1743, %v1745
  %v1747 = vadd.f32 %v1743, %v1746
  %vm1748 = vweird.f32 %v1742
  %vm1749 = vweird.f32 %v1743
  %vm1750 = vmor %vm1748, %vm1749
  %v1751 = vsel %vm1750, %v1743, %v1747
  %v1752 = vand.u32 2147483647, %v1742
  %vm1753 = vcmp.eq.f32.partialorder %v1752, 8.507059e+37
  %v1754 = vand.u32 %v1742, 2147483648
  %v1755 = vor.u32 1.1754944e-38, %v1754
  %v1756 = vsel %vm1753, %v1755, %v1751
  %v1757 = vmul.f32 %v1732, %v1756
  %v1758 = vmin.f32 %v1757, 1.0
  %v1759 = vmax.f32 %v1758, -1.0
  %v1760 = vmul.f32 %v604, %v604
  %v1761 = vmin.f32 16.0, %v1760
  %v1762 = vmul.f32 %v1761, 2.1237322e-06
  %v1763 = vadd.f32 %v1762, 0.00028619796
  %v1764 = vmul.f32 %v1761, %v1763
  %v1765 = vadd.f32 %v1764, 0.0036580483
  %v1766 = vmul.f32 %v1761, %v1765
  %v1767 = vadd.f32 %v1766, 0.05243302
  %v1768 = vmul.f32 %v1761, %v1767
  %v1769 = vadd.f32 %v1768, 0.18741608
  %v1770 = vmul.f32 %v1761, %v1769
  %v1771 = vadd.f32 %v1770, 1.1283791
  %v1772 = vmul.f32 %v604, %v1771
  %v1773 = vmul.f32 %v1761, 3.8918573e-05
  %v1774 = vadd.f32 %v1773, 0.001143296
  %v1775 = vmul.f32 %v1761, %v1774
  %v1776 = vadd.f32 %v1775, 0.014752088
  %v1777 = vmul.f32 %v1761, %v1776
  %v1778 = vadd.f32 %v1777, 0.112945676
  %v1779 = vmul.f32 %v1761, %v1778
  %v1780 = vadd.f32 %v1779, 0.4994258
  %v1781 = vmul.f32 %v1761, %v1780
  %v1782 = vadd.f32 %v1781, 1.0
  %v1783 = vrcp.pop %v1782
  %v1784 = vmul.f32 %v1782, %v1783
  %v1785 = vsub.f32 1.0, %v1784
  %v1786 = vmul.f32 %v1783, %v1785
  %v1787 = vadd.f32 %v1783, %v1786
  %vm1788 = vweird.f32 %v1782
  %vm1789 = vweird.f32 %v1783
  %vm1790 = vmor %vm1788, %vm1789
  %v1791 = vsel %vm1790, %v1783, %v1787
  %v1792 = vand.u32 2147483647, %v1782
  %vm1793 = vcmp.eq.f32.partialorder %v1792, 8.507059e+37
  %v1794 = vand.u32 %v1782, 2147483648
  %v1795 = vor.u32 1.1754944e-38, %v1794
  %v1796 = vsel %vm1793, %v1795, %v1791
  %v1797 = vmul.f32 %v1772, %v1796
  %v1798 = vmin.f32 %v1797, 1.0
  %v1799 = vmax.f32 %v1798, -1.0
  %v1800 = vmul.f32 %v605, %v605
  %v1801 = vmin.f32 16.0, %v1800
  %v1802 = vmul.f32 %v1801, 2.1237322e-06
  %v1803 = vadd.f32 %v1802, 0.00028619796
  %v1804 = vmul.f32 %v1801, %v1803
  %v1805 = vadd.f32 %v1804, 0.0036580483
  %v1806 = vmul.f32 %v1801, %v1805
  %v1807 = vadd.f32 %v1806, 0.05243302
  %v1808 = vmul.f32 %v1801, %v1807
  %v1809 = vadd.f32 %v1808, 0.18741608
  %v1810 = vmul.f32 %v1801, %v1809
  %v1811 = vadd.f32 %v1810, 1.1283791
  %v1812 = vmul.f32 %v605, %v1811
  %v1813 = vmul.f32 %v1801, 3.8918573e-05
  %v1814 = vadd.f32 %v1813, 0.001143296
  %v1815 = vmul.f32 %v1801, %v1814
  %v1816 = vadd.f32 %v1815, 0.014752088
  %v1817 = vmul.f32 %v1801, %v1816
  %v1818 = vadd.f32 %v1817, 0.112945676
  %v1819 = vmul.f32 %v1801, %v1818
  %v1820 = vadd.f32 %v1819, 0.4994258
  %v1821 = vmul.f32 %v1801, %v1820
  %v1822 = vadd.f32 %v1821, 1.0
  %v1823 = vrcp.pop %v1822
  %v1824 = vmul.f32 %v1822, %v1823
  %v1825 = vsub.f32 1.0, %v1824
  %v1826 = vmul.f32 %v1823, %v1825
  %v1827 = vadd.f32 %v1823, %v1826
  %vm1828 = vweird.f32 %v1822
  %vm1829 = vweird.f32 %v1823
  %vm1830 = vmor %vm1828, %vm1829
  %v1831 = vsel %vm1830, %v1823, %v1827
  %v1832 = vand.u32 2147483647, %v1822
  %vm1833 = vcmp.eq.f32.partialorder %v1832, 8.507059e+37
  %v1834 = vand.u32 %v1822, 2147483648
  %v1835 = vor.u32 1.1754944e-38, %v1834
  %v1836 = vsel %vm1833, %v1835, %v1831
  %v1837 = vmul.f32 %v1812, %v1836
  %v1838 = vmin.f32 %v1837, 1.0
  %v1839 = vmax.f32 %v1838, -1.0
  %v1840 = vmul.f32 %v606, %v606
  %v1841 = vmin.f32 16.0, %v1840
  %v1842 = vmul.f32 %v1841, 2.1237322e-06
  %v1843 = vadd.f32 %v1842, 0.00028619796
  %v1844 = vmul.f32 %v1841, %v1843
  %v1845 = vadd.f32 %v1844, 0.0036580483
  %v1846 = vmul.f32 %v1841, %v1845
  %v1847 = vadd.f32 %v1846, 0.05243302
  %v1848 = vmul.f32 %v1841, %v1847
  %v1849 = vadd.f32 %v1848, 0.18741608
  %v1850 = vmul.f32 %v1841, %v1849
  %v1851 = vadd.f32 %v1850, 1.1283791
  %v1852 = vmul.f32 %v606, %v1851
  %v1853 = vmul.f32 %v1841, 3.8918573e-05
  %v1854 = vadd.f32 %v1853, 0.001143296
  %v1855 = vmul.f32 %v1841, %v1854
  %v1856 = vadd.f32 %v1855, 0.014752088
  %v1857 = vmul.f32 %v1841, %v1856
  %v1858 = vadd.f32 %v1857, 0.112945676
  %v1859 = vmul.f32 %v1841, %v1858
  %v1860 = vadd.f32 %v1859, 0.4994258
  %v1861 = vmul.f32 %v1841, %v1860
  %v1862 = vadd.f32 %v1861, 1.0
  %v1863 = vrcp.pop %v1862
  %v1864 = vmul.f32 %v1862, %v1863
  %v1865 = vsub.f32 1.0, %v1864
  %v1866 = vmul.f32 %v1863, %v1865
  %v1867 = vadd.f32 %v1863, %v1866
  %vm1868 = vweird.f32 %v1862
  %vm1869 = vweird.f32 %v1863
  %vm1870 = vmor %vm1868, %vm1869
  %v1871 = vsel %vm1870, %v1863, %v1867
  %v1872 = vand.u32 2147483647, %v1862
  %vm1873 = vcmp.eq.f32.partialorder %v1872, 8.507059e+37
  %v1874 = vand.u32 %v1862, 2147483648
  %v1875 = vor.u32 1.1754944e-38, %v1874
  %v1876 = vsel %vm1873, %v1875, %v1871
  %v1877 = vmul.f32 %v1852, %v1876
  %v1878 = vmin.f32 %v1877, 1.0
  %v1879 = vmax.f32 %v1878, -1.0
  %v1880 = vmul.f32 %v607, %v607
  %v1881 = vmin.f32 16.0, %v1880
  %v1882 = vmul.f32 %v1881, 2.1237322e-06
  %v1883 = vadd.f32 %v1882, 0.00028619796
  %v1884 = vmul.f32 %v1881, %v1883
  %v1885 = vadd.f32 %v1884, 0.0036580483
  %v1886 = vmul.f32 %v1881, %v1885
  %v1887 = vadd.f32 %v1886, 0.05243302
  %v1888 = vmul.f32 %v1881, %v1887
  %v1889 = vadd.f32 %v1888, 0.18741608
  %v1890 = vmul.f32 %v1881, %v1889
  %v1891 = vadd.f32 %v1890, 1.1283791
  %v1892 = vmul.f32 %v607, %v1891
  %v1893 = vmul.f32 %v1881, 3.8918573e-05
  %v1894 = vadd.f32 %v1893, 0.001143296
  %v1895 = vmul.f32 %v1881, %v1894
  %v1896 = vadd.f32 %v1895, 0.014752088
  %v1897 = vmul.f32 %v1881, %v1896
  %v1898 = vadd.f32 %v1897, 0.112945676
  %v1899 = vmul.f32 %v1881, %v1898
  %v1900 = vadd.f32 %v1899, 0.4994258
  %v1901 = vmul.f32 %v1881, %v1900
  %v1902 = vadd.f32 %v1901, 1.0
  %v1903 = vrcp.pop %v1902
  %v1904 = vmul.f32 %v1902, %v1903
  %v1905 = vsub.f32 1.0, %v1904
  %v1906 = vmul.f32 %v1903, %v1905
  %v1907 = vadd.f32 %v1903, %v1906
  %vm1908 = vweird.f32 %v1902
  %vm1909 = vweird.f32 %v1903
  %vm1910 = vmor %vm1908, %vm1909
  %v1911 = vsel %vm1910, %v1903, %v1907
  %v1912 = vand.u32 2147483647, %v1902
  %vm1913 = vcmp.eq.f32.partialorder %v1912, 8.507059e+37
  %v1914 = vand.u32 %v1902, 2147483648
  %v1915 = vor.u32 1.1754944e-38, %v1914
  %v1916 = vsel %vm1913, %v1915, %v1911
  %v1917 = vmul.f32 %v1892, %v1916
  %v1918 = vmin.f32 %v1917, 1.0
  %v1919 = vmax.f32 %v1918, -1.0
  %v1920 = vmul.f32 %v608, %v608
  %v1921 = vmin.f32 16.0, %v1920
  %v1922 = vmul.f32 %v1921, 2.1237322e-06
  %v1923 = vadd.f32 %v1922, 0.00028619796
  %v1924 = vmul.f32 %v1921, %v1923
  %v1925 = vadd.f32 %v1924, 0.0036580483
  %v1926 = vmul.f32 %v1921, %v1925
  %v1927 = vadd.f32 %v1926, 0.05243302
  %v1928 = vmul.f32 %v1921, %v1927
  %v1929 = vadd.f32 %v1928, 0.18741608
  %v1930 = vmul.f32 %v1921, %v1929
  %v1931 = vadd.f32 %v1930, 1.1283791
  %v1932 = vmul.f32 %v608, %v1931
  %v1933 = vmul.f32 %v1921, 3.8918573e-05
  %v1934 = vadd.f32 %v1933, 0.001143296
  %v1935 = vmul.f32 %v1921, %v1934
  %v1936 = vadd.f32 %v1935, 0.014752088
  %v1937 = vmul.f32 %v1921, %v1936
  %v1938 = vadd.f32 %v1937, 0.112945676
  %v1939 = vmul.f32 %v1921, %v1938
  %v1940 = vadd.f32 %v1939, 0.4994258
  %v1941 = vmul.f32 %v1921, %v1940
  %v1942 = vadd.f32 %v1941, 1.0
  %v1943 = vrcp.pop %v1942
  %v1944 = vmul.f32 %v1942, %v1943
  %v1945 = vsub.f32 1.0, %v1944
  %v1946 = vmul.f32 %v1943, %v1945
  %v1947 = vadd.f32 %v1943, %v1946
  %vm1948 = vweird.f32 %v1942
  %vm1949 = vweird.f32 %v1943
  %vm1950 = vmor %vm1948, %vm1949
  %v1951 = vsel %vm1950, %v1943, %v1947
  %v1952 = vand.u32 2147483647, %v1942
  %vm1953 = vcmp.eq.f32.partialorder %v1952, 8.507059e+37
  %v1954 = vand.u32 %v1942, 2147483648
  %v1955 = vor.u32 1.1754944e-38, %v1954
  %v1956 = vsel %vm1953, %v1955, %v1951
  %v1957 = vmul.f32 %v1932, %v1956
  %v1958 = vmin.f32 %v1957, 1.0
  %v1959 = vmax.f32 %v1958, -1.0
  %v1960 = vmul.f32 %v609, %v609
  %v1961 = vmin.f32 16.0, %v1960
  %v1962 = vmul.f32 %v1961, 2.1237322e-06
  %v1963 = vadd.f32 %v1962, 0.00028619796
  %v1964 = vmul.f32 %v1961, %v1963
  %v1965 = vadd.f32 %v1964, 0.0036580483
  %v1966 = vmul.f32 %v1961, %v1965
  %v1967 = vadd.f32 %v1966, 0.05243302
  %v1968 = vmul.f32 %v1961, %v1967
  %v1969 = vadd.f32 %v1968, 0.18741608
  %v1970 = vmul.f32 %v1961, %v1969
  %v1971 = vadd.f32 %v1970, 1.1283791
  %v1972 = vmul.f32 %v609, %v1971
  %v1973 = vmul.f32 %v1961, 3.8918573e-05
  %v1974 = vadd.f32 %v1973, 0.001143296
  %v1975 = vmul.f32 %v1961, %v1974
  %v1976 = vadd.f32 %v1975, 0.014752088
  %v1977 = vmul.f32 %v1961, %v1976
  %v1978 = vadd.f32 %v1977, 0.112945676
  %v1979 = vmul.f32 %v1961, %v1978
  %v1980 = vadd.f32 %v1979, 0.4994258
  %v1981 = vmul.f32 %v1961, %v1980
  %v1982 = vadd.f32 %v1981, 1.0
  %v1983 = vrcp.pop %v1982
  %v1984 = vmul.f32 %v1982, %v1983
  %v1985 = vsub.f32 1.0, %v1984
  %v1986 = vmul.f32 %v1983, %v1985
  %v1987 = vadd.f32 %v1983, %v1986
  %vm1988 = vweird.f32 %v1982
  %vm1989 = vweird.f32 %v1983
  %vm1990 = vmor %vm1988, %vm1989
  %v1991 = vsel %vm1990, %v1983, %v1987
  %v1992 = vand.u32 2147483647, %v1982
  %vm1993 = vcmp.eq.f32.partialorder %v1992, 8.507059e+37
  %v1994 = vand.u32 %v1982, 2147483648
  %v1995 = vor.u32 1.1754944e-38, %v1994
  %v1996 = vsel %vm1993, %v1995, %v1991
  %v1997 = vmul.f32 %v1972, %v1996
  %v1998 = vmin.f32 %v1997, 1.0
  %v1999 = vmax.f32 %v1998, -1.0
  %v2000 = vmul.f32 %v610, %v610
  %v2001 = vmin.f32 16.0, %v2000
  %v2002 = vmul.f32 %v2001, 2.1237322e-06
  %v2003 = vadd.f32 %v2002, 0.00028619796
  %v2004 = vmul.f32 %v2001, %v2003
  %v2005 = vadd.f32 %v2004, 0.0036580483
  %v2006 = vmul.f32 %v2001, %v2005
  %v2007 = vadd.f32 %v2006, 0.05243302
  %v2008 = vmul.f32 %v2001, %v2007
  %v2009 = vadd.f32 %v2008, 0.18741608
  %v2010 = vmul.f32 %v2001, %v2009
  %v2011 = vadd.f32 %v2010, 1.1283791
  %v2012 = vmul.f32 %v610, %v2011
  %v2013 = vmul.f32 %v2001, 3.8918573e-05
  %v2014 = vadd.f32 %v2013, 0.001143296
  %v2015 = vmul.f32 %v2001, %v2014
  %v2016 = vadd.f32 %v2015, 0.014752088
  %v2017 = vmul.f32 %v2001, %v2016
  %v2018 = vadd.f32 %v2017, 0.112945676
  %v2019 = vmul.f32 %v2001, %v2018
  %v2020 = vadd.f32 %v2019, 0.4994258
  %v2021 = vmul.f32 %v2001, %v2020
  %v2022 = vadd.f32 %v2021, 1.0
  %v2023 = vrcp.pop %v2022
  %v2024 = vmul.f32 %v2022, %v2023
  %v2025 = vsub.f32 1.0, %v2024
  %v2026 = vmul.f32 %v2023, %v2025
  %v2027 = vadd.f32 %v2023, %v2026
  %vm2028 = vweird.f32 %v2022
  %vm2029 = vweird.f32 %v2023
  %vm2030 = vmor %vm2028, %vm2029
  %v2031 = vsel %vm2030, %v2023, %v2027
  %v2032 = vand.u32 2147483647, %v2022
  %vm2033 = vcmp.eq.f32.partialorder %v2032, 8.507059e+37
  %v2034 = vand.u32 %v2022, 2147483648
  %v2035 = vor.u32 1.1754944e-38, %v2034
  %v2036 = vsel %vm2033, %v2035, %v2031
  %v2037 = vmul.f32 %v2012, %v2036
  %v2038 = vmin.f32 %v2037, 1.0
  %v2039 = vmax.f32 %v2038, -1.0
  %v2040 = vmul.f32 %v611, %v611
  %v2041 = vmin.f32 16.0, %v2040
  %v2042 = vmul.f32 %v2041, 2.1237322e-06
  %v2043 = vadd.f32 %v2042, 0.00028619796
  %v2044 = vmul.f32 %v2041, %v2043
  %v2045 = vadd.f32 %v2044, 0.0036580483
  %v2046 = vmul.f32 %v2041, %v2045
  %v2047 = vadd.f32 %v2046, 0.05243302
  %v2048 = vmul.f32 %v2041, %v2047
  %v2049 = vadd.f32 %v2048, 0.18741608
  %v2050 = vmul.f32 %v2041, %v2049
  %v2051 = vadd.f32 %v2050, 1.1283791
  %v2052 = vmul.f32 %v611, %v2051
  %v2053 = vmul.f32 %v2041, 3.8918573e-05
  %v2054 = vadd.f32 %v2053, 0.001143296
  %v2055 = vmul.f32 %v2041, %v2054
  %v2056 = vadd.f32 %v2055, 0.014752088
  %v2057 = vmul.f32 %v2041, %v2056
  %v2058 = vadd.f32 %v2057, 0.112945676
  %v2059 = vmul.f32 %v2041, %v2058
  %v2060 = vadd.f32 %v2059, 0.4994258
  %v2061 = vmul.f32 %v2041, %v2060
  %v2062 = vadd.f32 %v2061, 1.0
  %v2063 = vrcp.pop %v2062
  %v2064 = vmul.f32 %v2062, %v2063
  %v2065 = vsub.f32 1.0, %v2064
  %v2066 = vmul.f32 %v2063, %v2065
  %v2067 = vadd.f32 %v2063, %v2066
  %vm2068 = vweird.f32 %v2062
  %vm2069 = vweird.f32 %v2063
  %vm2070 = vmor %vm2068, %vm2069
  %v2071 = vsel %vm2070, %v2063, %v2067
  %v2072 = vand.u32 2147483647, %v2062
  %vm2073 = vcmp.eq.f32.partialorder %v2072, 8.507059e+37
  %v2074 = vand.u32 %v2062, 2147483648
  %v2075 = vor.u32 1.1754944e-38, %v2074
  %v2076 = vsel %vm2073, %v2075, %v2071
  %v2077 = vmul.f32 %v2052, %v2076
  %v2078 = vmin.f32 %v2077, 1.0
  %v2079 = vmax.f32 %v2078, -1.0
  %v2080 = vmul.f32 %v612, %v612
  %v2081 = vmin.f32 16.0, %v2080
  %v2082 = vmul.f32 %v2081, 2.1237322e-06
  %v2083 = vadd.f32 %v2082, 0.00028619796
  %v2084 = vmul.f32 %v2081, %v2083
  %v2085 = vadd.f32 %v2084, 0.0036580483
  %v2086 = vmul.f32 %v2081, %v2085
  %v2087 = vadd.f32 %v2086, 0.05243302
  %v2088 = vmul.f32 %v2081, %v2087
  %v2089 = vadd.f32 %v2088, 0.18741608
  %v2090 = vmul.f32 %v2081, %v2089
  %v2091 = vadd.f32 %v2090, 1.1283791
  %v2092 = vmul.f32 %v612, %v2091
  %v2093 = vmul.f32 %v2081, 3.8918573e-05
  %v2094 = vadd.f32 %v2093, 0.001143296
  %v2095 = vmul.f32 %v2081, %v2094
  %v2096 = vadd.f32 %v2095, 0.014752088
  %v2097 = vmul.f32 %v2081, %v2096
  %v2098 = vadd.f32 %v2097, 0.112945676
  %v2099 = vmul.f32 %v2081, %v2098
  %v2100 = vadd.f32 %v2099, 0.4994258
  %v2101 = vmul.f32 %v2081, %v2100
  %v2102 = vadd.f32 %v2101, 1.0
  %v2103 = vrcp.pop %v2102
  %v2104 = vmul.f32 %v2102, %v2103
  %v2105 = vsub.f32 1.0, %v2104
  %v2106 = vmul.f32 %v2103, %v2105
  %v2107 = vadd.f32 %v2103, %v2106
  %vm2108 = vweird.f32 %v2102
  %vm2109 = vweird.f32 %v2103
  %vm2110 = vmor %vm2108, %vm2109
  %v2111 = vsel %vm2110, %v2103, %v2107
  %v2112 = vand.u32 2147483647, %v2102
  %vm2113 = vcmp.eq.f32.partialorder %v2112, 8.507059e+37
  %v2114 = vand.u32 %v2102, 2147483648
  %v2115 = vor.u32 1.1754944e-38, %v2114
  %v2116 = vsel %vm2113, %v2115, %v2111
  %v2117 = vmul.f32 %v2092, %v2116
  %v2118 = vmin.f32 %v2117, 1.0
  %v2119 = vmax.f32 %v2118, -1.0
  %v2120 = vmul.f32 %v613, %v613
  %v2121 = vmin.f32 16.0, %v2120
  %v2122 = vmul.f32 %v2121, 2.1237322e-06
  %v2123 = vadd.f32 %v2122, 0.00028619796
  %v2124 = vmul.f32 %v2121, %v2123
  %v2125 = vadd.f32 %v2124, 0.0036580483
  %v2126 = vmul.f32 %v2121, %v2125
  %v2127 = vadd.f32 %v2126, 0.05243302
  %v2128 = vmul.f32 %v2121, %v2127
  %v2129 = vadd.f32 %v2128, 0.18741608
  %v2130 = vmul.f32 %v2121, %v2129
  %v2131 = vadd.f32 %v2130, 1.1283791
  %v2132 = vmul.f32 %v613, %v2131
  %v2133 = vmul.f32 %v2121, 3.8918573e-05
  %v2134 = vadd.f32 %v2133, 0.001143296
  %v2135 = vmul.f32 %v2121, %v2134
  %v2136 = vadd.f32 %v2135, 0.014752088
  %v2137 = vmul.f32 %v2121, %v2136
  %v2138 = vadd.f32 %v2137, 0.112945676
  %v2139 = vmul.f32 %v2121, %v2138
  %v2140 = vadd.f32 %v2139, 0.4994258
  %v2141 = vmul.f32 %v2121, %v2140
  %v2142 = vadd.f32 %v2141, 1.0
  %v2143 = vrcp.pop %v2142
  %v2144 = vmul.f32 %v2142, %v2143
  %v2145 = vsub.f32 1.0, %v2144
  %v2146 = vmul.f32 %v2143, %v2145
  %v2147 = vadd.f32 %v2143, %v2146
  %vm2148 = vweird.f32 %v2142
  %vm2149 = vweird.f32 %v2143
  %vm2150 = vmor %vm2148, %vm2149
  %v2151 = vsel %vm2150, %v2143, %v2147
  %v2152 = vand.u32 2147483647, %v2142
  %vm2153 = vcmp.eq.f32.partialorder %v2152, 8.507059e+37
  %v2154 = vand.u32 %v2142, 2147483648
  %v2155 = vor.u32 1.1754944e-38, %v2154
  %v2156 = vsel %vm2153, %v2155, %v2151
  %v2157 = vmul.f32 %v2132, %v2156
  %v2158 = vmin.f32 %v2157, 1.0
  %v2159 = vmax.f32 %v2158, -1.0
  %v2160 = vmul.f32 %v614, %v614
  %v2161 = vmin.f32 16.0, %v2160
  %v2162 = vmul.f32 %v2161, 2.1237322e-06
  %v2163 = vadd.f32 %v2162, 0.00028619796
  %v2164 = vmul.f32 %v2161, %v2163
  %v2165 = vadd.f32 %v2164, 0.0036580483
  %v2166 = vmul.f32 %v2161, %v2165
  %v2167 = vadd.f32 %v2166, 0.05243302
  %v2168 = vmul.f32 %v2161, %v2167
  %v2169 = vadd.f32 %v2168, 0.18741608
  %v2170 = vmul.f32 %v2161, %v2169
  %v2171 = vadd.f32 %v2170, 1.1283791
  %v2172 = vmul.f32 %v614, %v2171
  %v2173 = vmul.f32 %v2161, 3.8918573e-05
  %v2174 = vadd.f32 %v2173, 0.001143296
  %v2175 = vmul.f32 %v2161, %v2174
  %v2176 = vadd.f32 %v2175, 0.014752088
  %v2177 = vmul.f32 %v2161, %v2176
  %v2178 = vadd.f32 %v2177, 0.112945676
  %v2179 = vmul.f32 %v2161, %v2178
  %v2180 = vadd.f32 %v2179, 0.4994258
  %v2181 = vmul.f32 %v2161, %v2180
  %v2182 = vadd.f32 %v2181, 1.0
  %v2183 = vrcp.pop %v2182
  %v2184 = vmul.f32 %v2182, %v2183
  %v2185 = vsub.f32 1.0, %v2184
  %v2186 = vmul.f32 %v2183, %v2185
  %v2187 = vadd.f32 %v2183, %v2186
  %vm2188 = vweird.f32 %v2182
  %vm2189 = vweird.f32 %v2183
  %vm2190 = vmor %vm2188, %vm2189
  %v2191 = vsel %vm2190, %v2183, %v2187
  %v2192 = vand.u32 2147483647, %v2182
  %vm2193 = vcmp.eq.f32.partialorder %v2192, 8.507059e+37
  %v2194 = vand.u32 %v2182, 2147483648
  %v2195 = vor.u32 1.1754944e-38, %v2194
  %v2196 = vsel %vm2193, %v2195, %v2191
  %v2197 = vmul.f32 %v2172, %v2196
  %v2198 = vmin.f32 %v2197, 1.0
  %v2199 = vmax.f32 %v2198, -1.0
  %v2200 = vmul.f32 %v615, %v615
  %v2201 = vmin.f32 16.0, %v2200
  %v2202 = vmul.f32 %v2201, 2.1237322e-06
  %v2203 = vadd.f32 %v2202, 0.00028619796
  %v2204 = vmul.f32 %v2201, %v2203
  %v2205 = vadd.f32 %v2204, 0.0036580483
  %v2206 = vmul.f32 %v2201, %v2205
  %v2207 = vadd.f32 %v2206, 0.05243302
  %v2208 = vmul.f32 %v2201, %v2207
  %v2209 = vadd.f32 %v2208, 0.18741608
  %v2210 = vmul.f32 %v2201, %v2209
  %v2211 = vadd.f32 %v2210, 1.1283791
  %v2212 = vmul.f32 %v615, %v2211
  %v2213 = vmul.f32 %v2201, 3.8918573e-05
  %v2214 = vadd.f32 %v2213, 0.001143296
  %v2215 = vmul.f32 %v2201, %v2214
  %v2216 = vadd.f32 %v2215, 0.014752088
  %v2217 = vmul.f32 %v2201, %v2216
  %v2218 = vadd.f32 %v2217, 0.112945676
  %v2219 = vmul.f32 %v2201, %v2218
  %v2220 = vadd.f32 %v2219, 0.4994258
  %v2221 = vmul.f32 %v2201, %v2220
  %v2222 = vadd.f32 %v2221, 1.0
  %v2223 = vrcp.pop %v2222
  %v2224 = vmul.f32 %v2222, %v2223
  %v2225 = vsub.f32 1.0, %v2224
  %v2226 = vmul.f32 %v2223, %v2225
  %v2227 = vadd.f32 %v2223, %v2226
  %vm2228 = vweird.f32 %v2222
  %vm2229 = vweird.f32 %v2223
  %vm2230 = vmor %vm2228, %vm2229
  %v2231 = vsel %vm2230, %v2223, %v2227
  %v2232 = vand.u32 2147483647, %v2222
  %vm2233 = vcmp.eq.f32.partialorder %v2232, 8.507059e+37
  %v2234 = vand.u32 %v2222, 2147483648
  %v2235 = vor.u32 1.1754944e-38, %v2234
  %v2236 = vsel %vm2233, %v2235, %v2231
  %v2237 = vmul.f32 %v2212, %v2236
  %v2238 = vmin.f32 %v2237, 1.0
  %v2239 = vmax.f32 %v2238, -1.0
  %v2240 = vmul.f32 %v616, %v616
  %v2241 = vmin.f32 16.0, %v2240
  %v2242 = vmul.f32 %v2241, 2.1237322e-06
  %v2243 = vadd.f32 %v2242, 0.00028619796
  %v2244 = vmul.f32 %v2241, %v2243
  %v2245 = vadd.f32 %v2244, 0.0036580483
  %v2246 = vmul.f32 %v2241, %v2245
  %v2247 = vadd.f32 %v2246, 0.05243302
  %v2248 = vmul.f32 %v2241, %v2247
  %v2249 = vadd.f32 %v2248, 0.18741608
  %v2250 = vmul.f32 %v2241, %v2249
  %v2251 = vadd.f32 %v2250, 1.1283791
  %v2252 = vmul.f32 %v616, %v2251
  %v2253 = vmul.f32 %v2241, 3.8918573e-05
  %v2254 = vadd.f32 %v2253, 0.001143296
  %v2255 = vmul.f32 %v2241, %v2254
  %v2256 = vadd.f32 %v2255, 0.014752088
  %v2257 = vmul.f32 %v2241, %v2256
  %v2258 = vadd.f32 %v2257, 0.112945676
  %v2259 = vmul.f32 %v2241, %v2258
  %v2260 = vadd.f32 %v2259, 0.4994258
  %v2261 = vmul.f32 %v2241, %v2260
  %v2262 = vadd.f32 %v2261, 1.0
  %v2263 = vrcp.pop %v2262
  %v2264 = vmul.f32 %v2262, %v2263
  %v2265 = vsub.f32 1.0, %v2264
  %v2266 = vmul.f32 %v2263, %v2265
  %v2267 = vadd.f32 %v2263, %v2266
  %vm2268 = vweird.f32 %v2262
  %vm2269 = vweird.f32 %v2263
  %vm2270 = vmor %vm2268, %vm2269
  %v2271 = vsel %vm2270, %v2263, %v2267
  %v2272 = vand.u32 2147483647, %v2262
  %vm2273 = vcmp.eq.f32.partialorder %v2272, 8.507059e+37
  %v2274 = vand.u32 %v2262, 2147483648
  %v2275 = vor.u32 1.1754944e-38, %v2274
  %v2276 = vsel %vm2273, %v2275, %v2271
  %v2277 = vmul.f32 %v2252, %v2276
  %v2278 = vmin.f32 %v2277, 1.0
  %v2279 = vmax.f32 %v2278, -1.0
  %v2280 = vmul.f32 %v617, %v617
  %v2281 = vmin.f32 16.0, %v2280
  %v2282 = vmul.f32 %v2281, 2.1237322e-06
  %v2283 = vadd.f32 %v2282, 0.00028619796
  %v2284 = vmul.f32 %v2281, %v2283
  %v2285 = vadd.f32 %v2284, 0.0036580483
  %v2286 = vmul.f32 %v2281, %v2285
  %v2287 = vadd.f32 %v2286, 0.05243302
  %v2288 = vmul.f32 %v2281, %v2287
  %v2289 = vadd.f32 %v2288, 0.18741608
  %v2290 = vmul.f32 %v2281, %v2289
  %v2291 = vadd.f32 %v2290, 1.1283791
  %v2292 = vmul.f32 %v617, %v2291
  %v2293 = vmul.f32 %v2281, 3.8918573e-05
  %v2294 = vadd.f32 %v2293, 0.001143296
  %v2295 = vmul.f32 %v2281, %v2294
  %v2296 = vadd.f32 %v2295, 0.014752088
  %v2297 = vmul.f32 %v2281, %v2296
  %v2298 = vadd.f32 %v2297, 0.112945676
  %v2299 = vmul.f32 %v2281, %v2298
  %v2300 = vadd.f32 %v2299, 0.4994258
  %v2301 = vmul.f32 %v2281, %v2300
  %v2302 = vadd.f32 %v2301, 1.0
  %v2303 = vrcp.pop %v2302
  %v2304 = vmul.f32 %v2302, %v2303
  %v2305 = vsub.f32 1.0, %v2304
  %v2306 = vmul.f32 %v2303, %v2305
  %v2307 = vadd.f32 %v2303, %v2306
  %vm2308 = vweird.f32 %v2302
  %vm2309 = vweird.f32 %v2303
  %vm2310 = vmor %vm2308, %vm2309
  %v2311 = vsel %vm2310, %v2303, %v2307
  %v2312 = vand.u32 2147483647, %v2302
  %vm2313 = vcmp.eq.f32.partialorder %v2312, 8.507059e+37
  %v2314 = vand.u32 %v2302, 2147483648
  %v2315 = vor.u32 1.1754944e-38, %v2314
  %v2316 = vsel %vm2313, %v2315, %v2311
  %v2317 = vmul.f32 %v2292, %v2316
  %v2318 = vmin.f32 %v2317, 1.0
  %v2319 = vmax.f32 %v2318, -1.0
  %v2320 = vmul.f32 %v618, %v618
  %v2321 = vmin.f32 16.0, %v2320
  %v2322 = vmul.f32 %v2321, 2.1237322e-06
  %v2323 = vadd.f32 %v2322, 0.00028619796
  %v2324 = vmul.f32 %v2321, %v2323
  %v2325 = vadd.f32 %v2324, 0.0036580483
  %v2326 = vmul.f32 %v2321, %v2325
  %v2327 = vadd.f32 %v2326, 0.05243302
  %v2328 = vmul.f32 %v2321, %v2327
  %v2329 = vadd.f32 %v2328, 0.18741608
  %v2330 = vmul.f32 %v2321, %v2329
  %v2331 = vadd.f32 %v2330, 1.1283791
  %v2332 = vmul.f32 %v618, %v2331
  %v2333 = vmul.f32 %v2321, 3.8918573e-05
  %v2334 = vadd.f32 %v2333, 0.001143296
  %v2335 = vmul.f32 %v2321, %v2334
  %v2336 = vadd.f32 %v2335, 0.014752088
  %v2337 = vmul.f32 %v2321, %v2336
  %v2338 = vadd.f32 %v2337, 0.112945676
  %v2339 = vmul.f32 %v2321, %v2338
  %v2340 = vadd.f32 %v2339, 0.4994258
  %v2341 = vmul.f32 %v2321, %v2340
  %v2342 = vadd.f32 %v2341, 1.0
  %v2343 = vrcp.pop %v2342
  %v2344 = vmul.f32 %v2342, %v2343
  %v2345 = vsub.f32 1.0, %v2344
  %v2346 = vmul.f32 %v2343, %v2345
  %v2347 = vadd.f32 %v2343, %v2346
  %vm2348 = vweird.f32 %v2342
  %vm2349 = vweird.f32 %v2343
  %vm2350 = vmor %vm2348, %vm2349
  %v2351 = vsel %vm2350, %v2343, %v2347
  %v2352 = vand.u32 2147483647, %v2342
  %vm2353 = vcmp.eq.f32.partialorder %v2352, 8.507059e+37
  %v2354 = vand.u32 %v2342, 2147483648
  %v2355 = vor.u32 1.1754944e-38, %v2354
  %v2356 = vsel %vm2353, %v2355, %v2351
  %v2357 = vmul.f32 %v2332, %v2356
  %v2358 = vmin.f32 %v2357, 1.0
  %v2359 = vmax.f32 %v2358, -1.0
  %v2360 = vmul.f32 %v619, %v619
  %v2361 = vmin.f32 16.0, %v2360
  %v2362 = vmul.f32 %v2361, 2.1237322e-06
  %v2363 = vadd.f32 %v2362, 0.00028619796
  %v2364 = vmul.f32 %v2361, %v2363
  %v2365 = vadd.f32 %v2364, 0.0036580483
  %v2366 = vmul.f32 %v2361, %v2365
  %v2367 = vadd.f32 %v2366, 0.05243302
  %v2368 = vmul.f32 %v2361, %v2367
  %v2369 = vadd.f32 %v2368, 0.18741608
  %v2370 = vmul.f32 %v2361, %v2369
  %v2371 = vadd.f32 %v2370, 1.1283791
  %v2372 = vmul.f32 %v619, %v2371
  %v2373 = vmul.f32 %v2361, 3.8918573e-05
  %v2374 = vadd.f32 %v2373, 0.001143296
  %v2375 = vmul.f32 %v2361, %v2374
  %v2376 = vadd.f32 %v2375, 0.014752088
  %v2377 = vmul.f32 %v2361, %v2376
  %v2378 = vadd.f32 %v2377, 0.112945676
  %v2379 = vmul.f32 %v2361, %v2378
  %v2380 = vadd.f32 %v2379, 0.4994258
  %v2381 = vmul.f32 %v2361, %v2380
  %v2382 = vadd.f32 %v2381, 1.0
  %v2383 = vrcp.pop %v2382
  %v2384 = vmul.f32 %v2382, %v2383
  %v2385 = vsub.f32 1.0, %v2384
  %v2386 = vmul.f32 %v2383, %v2385
  %v2387 = vadd.f32 %v2383, %v2386
  %vm2388 = vweird.f32 %v2382
  %vm2389 = vweird.f32 %v2383
  %vm2390 = vmor %vm2388, %vm2389
  %v2391 = vsel %vm2390, %v2383, %v2387
  %v2392 = vand.u32 2147483647, %v2382
  %vm2393 = vcmp.eq.f32.partialorder %v2392, 8.507059e+37
  %v2394 = vand.u32 %v2382, 2147483648
  %v2395 = vor.u32 1.1754944e-38, %v2394
  %v2396 = vsel %vm2393, %v2395, %v2391
  %v2397 = vmul.f32 %v2372, %v2396
  %v2398 = vmin.f32 %v2397, 1.0
  %v2399 = vmax.f32 %v2398, -1.0
  %v2400 = vmul.f32 %v620, %v620
  %v2401 = vmin.f32 16.0, %v2400
  %v2402 = vmul.f32 %v2401, 2.1237322e-06
  %v2403 = vadd.f32 %v2402, 0.00028619796
  %v2404 = vmul.f32 %v2401, %v2403
  %v2405 = vadd.f32 %v2404, 0.0036580483
  %v2406 = vmul.f32 %v2401, %v2405
  %v2407 = vadd.f32 %v2406, 0.05243302
  %v2408 = vmul.f32 %v2401, %v2407
  %v2409 = vadd.f32 %v2408, 0.18741608
  %v2410 = vmul.f32 %v2401, %v2409
  %v2411 = vadd.f32 %v2410, 1.1283791
  %v2412 = vmul.f32 %v620, %v2411
  %v2413 = vmul.f32 %v2401, 3.8918573e-05
  %v2414 = vadd.f32 %v2413, 0.001143296
  %v2415 = vmul.f32 %v2401, %v2414
  %v2416 = vadd.f32 %v2415, 0.014752088
  %v2417 = vmul.f32 %v2401, %v2416
  %v2418 = vadd.f32 %v2417, 0.112945676
  %v2419 = vmul.f32 %v2401, %v2418
  %v2420 = vadd.f32 %v2419, 0.4994258
  %v2421 = vmul.f32 %v2401, %v2420
  %v2422 = vadd.f32 %v2421, 1.0
  %v2423 = vrcp.pop %v2422
  %v2424 = vmul.f32 %v2422, %v2423
  %v2425 = vsub.f32 1.0, %v2424
  %v2426 = vmul.f32 %v2423, %v2425
  %v2427 = vadd.f32 %v2423, %v2426
  %vm2428 = vweird.f32 %v2422
  %vm2429 = vweird.f32 %v2423
  %vm2430 = vmor %vm2428, %vm2429
  %v2431 = vsel %vm2430, %v2423, %v2427
  %v2432 = vand.u32 2147483647, %v2422
  %vm2433 = vcmp.eq.f32.partialorder %v2432, 8.507059e+37
  %v2434 = vand.u32 %v2422, 2147483648
  %v2435 = vor.u32 1.1754944e-38, %v2434
  %v2436 = vsel %vm2433, %v2435, %v2431
  %v2437 = vmul.f32 %v2412, %v2436
  %v2438 = vmin.f32 %v2437, 1.0
  %v2439 = vmax.f32 %v2438, -1.0
  %v2440 = vmul.f32 %v621, %v621
  %v2441 = vmin.f32 16.0, %v2440
  %v2442 = vmul.f32 %v2441, 2.1237322e-06
  %v2443 = vadd.f32 %v2442, 0.00028619796
  %v2444 = vmul.f32 %v2441, %v2443
  %v2445 = vadd.f32 %v2444, 0.0036580483
  %v2446 = vmul.f32 %v2441, %v2445
  %v2447 = vadd.f32 %v2446, 0.05243302
  %v2448 = vmul.f32 %v2441, %v2447
  %v2449 = vadd.f32 %v2448, 0.18741608
  %v2450 = vmul.f32 %v2441, %v2449
  %v2451 = vadd.f32 %v2450, 1.1283791
  %v2452 = vmul.f32 %v621, %v2451
  %v2453 = vmul.f32 %v2441, 3.8918573e-05
  %v2454 = vadd.f32 %v2453, 0.001143296
  %v2455 = vmul.f32 %v2441, %v2454
  %v2456 = vadd.f32 %v2455, 0.014752088
  %v2457 = vmul.f32 %v2441, %v2456
  %v2458 = vadd.f32 %v2457, 0.112945676
  %v2459 = vmul.f32 %v2441, %v2458
  %v2460 = vadd.f32 %v2459, 0.4994258
  %v2461 = vmul.f32 %v2441, %v2460
  %v2462 = vadd.f32 %v2461, 1.0
  %v2463 = vrcp.pop %v2462
  %v2464 = vmul.f32 %v2462, %v2463
  %v2465 = vsub.f32 1.0, %v2464
  %v2466 = vmul.f32 %v2463, %v2465
  %v2467 = vadd.f32 %v2463, %v2466
  %vm2468 = vweird.f32 %v2462
  %vm2469 = vweird.f32 %v2463
  %vm2470 = vmor %vm2468, %vm2469
  %v2471 = vsel %vm2470, %v2463, %v2467
  %v2472 = vand.u32 2147483647, %v2462
  %vm2473 = vcmp.eq.f32.partialorder %v2472, 8.507059e+37
  %v2474 = vand.u32 %v2462, 2147483648
  %v2475 = vor.u32 1.1754944e-38, %v2474
  %v2476 = vsel %vm2473, %v2475, %v2471
  %v2477 = vmul.f32 %v2452, %v2476
  %v2478 = vmin.f32 %v2477, 1.0
  %v2479 = vmax.f32 %v2478, -1.0
  %v2480 = vmul.f32 %v622, %v622
  %v2481 = vmin.f32 16.0, %v2480
  %v2482 = vmul.f32 %v2481, 2.1237322e-06
  %v2483 = vadd.f32 %v2482, 0.00028619796
  %v2484 = vmul.f32 %v2481, %v2483
  %v2485 = vadd.f32 %v2484, 0.0036580483
  %v2486 = vmul.f32 %v2481, %v2485
  %v2487 = vadd.f32 %v2486, 0.05243302
  %v2488 = vmul.f32 %v2481, %v2487
  %v2489 = vadd.f32 %v2488, 0.18741608
  %v2490 = vmul.f32 %v2481, %v2489
  %v2491 = vadd.f32 %v2490, 1.1283791
  %v2492 = vmul.f32 %v622, %v2491
  %v2493 = vmul.f32 %v2481, 3.8918573e-05
  %v2494 = vadd.f32 %v2493, 0.001143296
  %v2495 = vmul.f32 %v2481, %v2494
  %v2496 = vadd.f32 %v2495, 0.014752088
  %v2497 = vmul.f32 %v2481, %v2496
  %v2498 = vadd.f32 %v2497, 0.112945676
  %v2499 = vmul.f32 %v2481, %v2498
  %v2500 = vadd.f32 %v2499, 0.4994258
  %v2501 = vmul.f32 %v2481, %v2500
  %v2502 = vadd.f32 %v2501, 1.0
  %v2503 = vrcp.pop %v2502
  %v2504 = vmul.f32 %v2502, %v2503
  %v2505 = vsub.f32 1.0, %v2504
  %v2506 = vmul.f32 %v2503, %v2505
  %v2507 = vadd.f32 %v2503, %v2506
  %vm2508 = vweird.f32 %v2502
  %vm2509 = vweird.f32 %v2503
  %vm2510 = vmor %vm2508, %vm2509
  %v2511 = vsel %vm2510, %v2503, %v2507
  %v2512 = vand.u32 2147483647, %v2502
  %vm2513 = vcmp.eq.f32.partialorder %v2512, 8.507059e+37
  %v2514 = vand.u32 %v2502, 2147483648
  %v2515 = vor.u32 1.1754944e-38, %v2514
  %v2516 = vsel %vm2513, %v2515, %v2511
  %v2517 = vmul.f32 %v2492, %v2516
  %v2518 = vmin.f32 %v2517, 1.0
  %v2519 = vmax.f32 %v2518, -1.0
  %v2520 = vmul.f32 %v623, %v623
  %v2521 = vmin.f32 16.0, %v2520
  %v2522 = vmul.f32 %v2521, 2.1237322e-06
  %v2523 = vadd.f32 %v2522, 0.00028619796
  %v2524 = vmul.f32 %v2521, %v2523
  %v2525 = vadd.f32 %v2524, 0.0036580483
  %v2526 = vmul.f32 %v2521, %v2525
  %v2527 = vadd.f32 %v2526, 0.05243302
  %v2528 = vmul.f32 %v2521, %v2527
  %v2529 = vadd.f32 %v2528, 0.18741608
  %v2530 = vmul.f32 %v2521, %v2529
  %v2531 = vadd.f32 %v2530, 1.1283791
  %v2532 = vmul.f32 %v623, %v2531
  %v2533 = vmul.f32 %v2521, 3.8918573e-05
  %v2534 = vadd.f32 %v2533, 0.001143296
  %v2535 = vmul.f32 %v2521, %v2534
  %v2536 = vadd.f32 %v2535, 0.014752088
  %v2537 = vmul.f32 %v2521, %v2536
  %v2538 = vadd.f32 %v2537, 0.112945676
  %v2539 = vmul.f32 %v2521, %v2538
  %v2540 = vadd.f32 %v2539, 0.4994258
  %v2541 = vmul.f32 %v2521, %v2540
  %v2542 = vadd.f32 %v2541, 1.0
  %v2543 = vrcp.pop %v2542
  %v2544 = vmul.f32 %v2542, %v2543
  %v2545 = vsub.f32 1.0, %v2544
  %v2546 = vmul.f32 %v2543, %v2545
  %v2547 = vadd.f32 %v2543, %v2546
  %vm2548 = vweird.f32 %v2542
  %vm2549 = vweird.f32 %v2543
  %vm2550 = vmor %vm2548, %vm2549
  %v2551 = vsel %vm2550, %v2543, %v2547
  %v2552 = vand.u32 2147483647, %v2542
  %vm2553 = vcmp.eq.f32.partialorder %v2552, 8.507059e+37
  %v2554 = vand.u32 %v2542, 2147483648
  %v2555 = vor.u32 1.1754944e-38, %v2554
  %v2556 = vsel %vm2553, %v2555, %v2551
  %v2557 = vmul.f32 %v2532, %v2556
  %v2558 = vmin.f32 %v2557, 1.0
  %v2559 = vmax.f32 %v2558, -1.0
  %v2560 = vmul.f32 %v624, %v624
  %v2561 = vmin.f32 16.0, %v2560
  %v2562 = vmul.f32 %v2561, 2.1237322e-06
  %v2563 = vadd.f32 %v2562, 0.00028619796
  %v2564 = vmul.f32 %v2561, %v2563
  %v2565 = vadd.f32 %v2564, 0.0036580483
  %v2566 = vmul.f32 %v2561, %v2565
  %v2567 = vadd.f32 %v2566, 0.05243302
  %v2568 = vmul.f32 %v2561, %v2567
  %v2569 = vadd.f32 %v2568, 0.18741608
  %v2570 = vmul.f32 %v2561, %v2569
  %v2571 = vadd.f32 %v2570, 1.1283791
  %v2572 = vmul.f32 %v624, %v2571
  %v2573 = vmul.f32 %v2561, 3.8918573e-05
  %v2574 = vadd.f32 %v2573, 0.001143296
  %v2575 = vmul.f32 %v2561, %v2574
  %v2576 = vadd.f32 %v2575, 0.014752088
  %v2577 = vmul.f32 %v2561, %v2576
  %v2578 = vadd.f32 %v2577, 0.112945676
  %v2579 = vmul.f32 %v2561, %v2578
  %v2580 = vadd.f32 %v2579, 0.4994258
  %v2581 = vmul.f32 %v2561, %v2580
  %v2582 = vadd.f32 %v2581, 1.0
  %v2583 = vrcp.pop %v2582
  %v2584 = vmul.f32 %v2582, %v2583
  %v2585 = vsub.f32 1.0, %v2584
  %v2586 = vmul.f32 %v2583, %v2585
  %v2587 = vadd.f32 %v2583, %v2586
  %vm2588 = vweird.f32 %v2582
  %vm2589 = vweird.f32 %v2583
  %vm2590 = vmor %vm2588, %vm2589
  %v2591 = vsel %vm2590, %v2583, %v2587
  %v2592 = vand.u32 2147483647, %v2582
  %vm2593 = vcmp.eq.f32.partialorder %v2592, 8.507059e+37
  %v2594 = vand.u32 %v2582, 2147483648
  %v2595 = vor.u32 1.1754944e-38, %v2594
  %v2596 = vsel %vm2593, %v2595, %v2591
  %v2597 = vmul.f32 %v2572, %v2596
  %v2598 = vmin.f32 %v2597, 1.0
  %v2599 = vmax.f32 %v2598, -1.0
  %v2600 = vmul.f32 %v625, %v625
  %v2601 = vmin.f32 16.0, %v2600
  %v2602 = vmul.f32 %v2601, 2.1237322e-06
  %v2603 = vadd.f32 %v2602, 0.00028619796
  %v2604 = vmul.f32 %v2601, %v2603
  %v2605 = vadd.f32 %v2604, 0.0036580483
  %v2606 = vmul.f32 %v2601, %v2605
  %v2607 = vadd.f32 %v2606, 0.05243302
  %v2608 = vmul.f32 %v2601, %v2607
  %v2609 = vadd.f32 %v2608, 0.18741608
  %v2610 = vmul.f32 %v2601, %v2609
  %v2611 = vadd.f32 %v2610, 1.1283791
  %v2612 = vmul.f32 %v625, %v2611
  %v2613 = vmul.f32 %v2601, 3.8918573e-05
  %v2614 = vadd.f32 %v2613, 0.001143296
  %v2615 = vmul.f32 %v2601, %v2614
  %v2616 = vadd.f32 %v2615, 0.014752088
  %v2617 = vmul.f32 %v2601, %v2616
  %v2618 = vadd.f32 %v2617, 0.112945676
  %v2619 = vmul.f32 %v2601, %v2618
  %v2620 = vadd.f32 %v2619, 0.4994258
  %v2621 = vmul.f32 %v2601, %v2620
  %v2622 = vadd.f32 %v2621, 1.0
  %v2623 = vrcp.pop %v2622
  %v2624 = vmul.f32 %v2622, %v2623
  %v2625 = vsub.f32 1.0, %v2624
  %v2626 = vmul.f32 %v2623, %v2625
  %v2627 = vadd.f32 %v2623, %v2626
  %vm2628 = vweird.f32 %v2622
  %vm2629 = vweird.f32 %v2623
  %vm2630 = vmor %vm2628, %vm2629
  %v2631 = vsel %vm2630, %v2623, %v2627
  %v2632 = vand.u32 2147483647, %v2622
  %vm2633 = vcmp.eq.f32.partialorder %v2632, 8.507059e+37
  %v2634 = vand.u32 %v2622, 2147483648
  %v2635 = vor.u32 1.1754944e-38, %v2634
  %v2636 = vsel %vm2633, %v2635, %v2631
  %v2637 = vmul.f32 %v2612, %v2636
  %v2638 = vmin.f32 %v2637, 1.0
  %v2639 = vmax.f32 %v2638, -1.0
  %v2640 = vmul.f32 %v626, %v626
  %v2641 = vmin.f32 16.0, %v2640
  %v2642 = vmul.f32 %v2641, 2.1237322e-06
  %v2643 = vadd.f32 %v2642, 0.00028619796
  %v2644 = vmul.f32 %v2641, %v2643
  %v2645 = vadd.f32 %v2644, 0.0036580483
  %v2646 = vmul.f32 %v2641, %v2645
  %v2647 = vadd.f32 %v2646, 0.05243302
  %v2648 = vmul.f32 %v2641, %v2647
  %v2649 = vadd.f32 %v2648, 0.18741608
  %v2650 = vmul.f32 %v2641, %v2649
  %v2651 = vadd.f32 %v2650, 1.1283791
  %v2652 = vmul.f32 %v626, %v2651
  %v2653 = vmul.f32 %v2641, 3.8918573e-05
  %v2654 = vadd.f32 %v2653, 0.001143296
  %v2655 = vmul.f32 %v2641, %v2654
  %v2656 = vadd.f32 %v2655, 0.014752088
  %v2657 = vmul.f32 %v2641, %v2656
  %v2658 = vadd.f32 %v2657, 0.112945676
  %v2659 = vmul.f32 %v2641, %v2658
  %v2660 = vadd.f32 %v2659, 0.4994258
  %v2661 = vmul.f32 %v2641, %v2660
  %v2662 = vadd.f32 %v2661, 1.0
  %v2663 = vrcp.pop %v2662
  %v2664 = vmul.f32 %v2662, %v2663
  %v2665 = vsub.f32 1.0, %v2664
  %v2666 = vmul.f32 %v2663, %v2665
  %v2667 = vadd.f32 %v2663, %v2666
  %vm2668 = vweird.f32 %v2662
  %vm2669 = vweird.f32 %v2663
  %vm2670 = vmor %vm2668, %vm2669
  %v2671 = vsel %vm2670, %v2663, %v2667
  %v2672 = vand.u32 2147483647, %v2662
  %vm2673 = vcmp.eq.f32.partialorder %v2672, 8.507059e+37
  %v2674 = vand.u32 %v2662, 2147483648
  %v2675 = vor.u32 1.1754944e-38, %v2674
  %v2676 = vsel %vm2673, %v2675, %v2671
  %v2677 = vmul.f32 %v2652, %v2676
  %v2678 = vmin.f32 %v2677, 1.0
  %v2679 = vmax.f32 %v2678, -1.0
  %v2680 = vmul.f32 %v627, %v627
  %v2681 = vmin.f32 16.0, %v2680
  %v2682 = vmul.f32 %v2681, 2.1237322e-06
  %v2683 = vadd.f32 %v2682, 0.00028619796
  %v2684 = vmul.f32 %v2681, %v2683
  %v2685 = vadd.f32 %v2684, 0.0036580483
  %v2686 = vmul.f32 %v2681, %v2685
  %v2687 = vadd.f32 %v2686, 0.05243302
  %v2688 = vmul.f32 %v2681, %v2687
  %v2689 = vadd.f32 %v2688, 0.18741608
  %v2690 = vmul.f32 %v2681, %v2689
  %v2691 = vadd.f32 %v2690, 1.1283791
  %v2692 = vmul.f32 %v627, %v2691
  %v2693 = vmul.f32 %v2681, 3.8918573e-05
  %v2694 = vadd.f32 %v2693, 0.001143296
  %v2695 = vmul.f32 %v2681, %v2694
  %v2696 = vadd.f32 %v2695, 0.014752088
  %v2697 = vmul.f32 %v2681, %v2696
  %v2698 = vadd.f32 %v2697, 0.112945676
  %v2699 = vmul.f32 %v2681, %v2698
  %v2700 = vadd.f32 %v2699, 0.4994258
  %v2701 = vmul.f32 %v2681, %v2700
  %v2702 = vadd.f32 %v2701, 1.0
  %v2703 = vrcp.pop %v2702
  %v2704 = vmul.f32 %v2702, %v2703
  %v2705 = vsub.f32 1.0, %v2704
  %v2706 = vmul.f32 %v2703, %v2705
  %v2707 = vadd.f32 %v2703, %v2706
  %vm2708 = vweird.f32 %v2702
  %vm2709 = vweird.f32 %v2703
  %vm2710 = vmor %vm2708, %vm2709
  %v2711 = vsel %vm2710, %v2703, %v2707
  %v2712 = vand.u32 2147483647, %v2702
  %vm2713 = vcmp.eq.f32.partialorder %v2712, 8.507059e+37
  %v2714 = vand.u32 %v2702, 2147483648
  %v2715 = vor.u32 1.1754944e-38, %v2714
  %v2716 = vsel %vm2713, %v2715, %v2711
  %v2717 = vmul.f32 %v2692, %v2716
  %v2718 = vmin.f32 %v2717, 1.0
  %v2719 = vmax.f32 %v2718, -1.0
  %v2720 = vmul.f32 %v628, %v628
  %v2721 = vmin.f32 16.0, %v2720
  %v2722 = vmul.f32 %v2721, 2.1237322e-06
  %v2723 = vadd.f32 %v2722, 0.00028619796
  %v2724 = vmul.f32 %v2721, %v2723
  %v2725 = vadd.f32 %v2724, 0.0036580483
  %v2726 = vmul.f32 %v2721, %v2725
  %v2727 = vadd.f32 %v2726, 0.05243302
  %v2728 = vmul.f32 %v2721, %v2727
  %v2729 = vadd.f32 %v2728, 0.18741608
  %v2730 = vmul.f32 %v2721, %v2729
  %v2731 = vadd.f32 %v2730, 1.1283791
  %v2732 = vmul.f32 %v628, %v2731
  %v2733 = vmul.f32 %v2721, 3.8918573e-05
  %v2734 = vadd.f32 %v2733, 0.001143296
  %v2735 = vmul.f32 %v2721, %v2734
  %v2736 = vadd.f32 %v2735, 0.014752088
  %v2737 = vmul.f32 %v2721, %v2736
  %v2738 = vadd.f32 %v2737, 0.112945676
  %v2739 = vmul.f32 %v2721, %v2738
  %v2740 = vadd.f32 %v2739, 0.4994258
  %v2741 = vmul.f32 %v2721, %v2740
  %v2742 = vadd.f32 %v2741, 1.0
  %v2743 = vrcp.pop %v2742
  %v2744 = vmul.f32 %v2742, %v2743
  %v2745 = vsub.f32 1.0, %v2744
  %v2746 = vmul.f32 %v2743, %v2745
  %v2747 = vadd.f32 %v2743, %v2746
  %vm2748 = vweird.f32 %v2742
  %vm2749 = vweird.f32 %v2743
  %vm2750 = vmor %vm2748, %vm2749
  %v2751 = vsel %vm2750, %v2743, %v2747
  %v2752 = vand.u32 2147483647, %v2742
  %vm2753 = vcmp.eq.f32.partialorder %v2752, 8.507059e+37
  %v2754 = vand.u32 %v2742, 2147483648
  %v2755 = vor.u32 1.1754944e-38, %v2754
  %v2756 = vsel %vm2753, %v2755, %v2751
  %v2757 = vmul.f32 %v2732, %v2756
  %v2758 = vmin.f32 %v2757, 1.0
  %v2759 = vmax.f32 %v2758, -1.0
  %v2760 = vmul.f32 %v629, %v629
  %v2761 = vmin.f32 16.0, %v2760
  %v2762 = vmul.f32 %v2761, 2.1237322e-06
  %v2763 = vadd.f32 %v2762, 0.00028619796
  %v2764 = vmul.f32 %v2761, %v2763
  %v2765 = vadd.f32 %v2764, 0.0036580483
  %v2766 = vmul.f32 %v2761, %v2765
  %v2767 = vadd.f32 %v2766, 0.05243302
  %v2768 = vmul.f32 %v2761, %v2767
  %v2769 = vadd.f32 %v2768, 0.18741608
  %v2770 = vmul.f32 %v2761, %v2769
  %v2771 = vadd.f32 %v2770, 1.1283791
  %v2772 = vmul.f32 %v629, %v2771
  %v2773 = vmul.f32 %v2761, 3.8918573e-05
  %v2774 = vadd.f32 %v2773, 0.001143296
  %v2775 = vmul.f32 %v2761, %v2774
  %v2776 = vadd.f32 %v2775, 0.014752088
  %v2777 = vmul.f32 %v2761, %v2776
  %v2778 = vadd.f32 %v2777, 0.112945676
  %v2779 = vmul.f32 %v2761, %v2778
  %v2780 = vadd.f32 %v2779, 0.4994258
  %v2781 = vmul.f32 %v2761, %v2780
  %v2782 = vadd.f32 %v2781, 1.0
  %v2783 = vrcp.pop %v2782
  %v2784 = vmul.f32 %v2782, %v2783
  %v2785 = vsub.f32 1.0, %v2784
  %v2786 = vmul.f32 %v2783, %v2785
  %v2787 = vadd.f32 %v2783, %v2786
  %vm2788 = vweird.f32 %v2782
  %vm2789 = vweird.f32 %v2783
  %vm2790 = vmor %vm2788, %vm2789
  %v2791 = vsel %vm2790, %v2783, %v2787
  %v2792 = vand.u32 2147483647, %v2782
  %vm2793 = vcmp.eq.f32.partialorder %v2792, 8.507059e+37
  %v2794 = vand.u32 %v2782, 2147483648
  %v2795 = vor.u32 1.1754944e-38, %v2794
  %v2796 = vsel %vm2793, %v2795, %v2791
  %v2797 = vmul.f32 %v2772, %v2796
  %v2798 = vmin.f32 %v2797, 1.0
  %v2799 = vmax.f32 %v2798, -1.0
  %v2800 = vmul.f32 %v630, %v630
  %v2801 = vmin.f32 16.0, %v2800
  %v2802 = vmul.f32 %v2801, 2.1237322e-06
  %v2803 = vadd.f32 %v2802, 0.00028619796
  %v2804 = vmul.f32 %v2801, %v2803
  %v2805 = vadd.f32 %v2804, 0.0036580483
  %v2806 = vmul.f32 %v2801, %v2805
  %v2807 = vadd.f32 %v2806, 0.05243302
  %v2808 = vmul.f32 %v2801, %v2807
  %v2809 = vadd.f32 %v2808, 0.18741608
  %v2810 = vmul.f32 %v2801, %v2809
  %v2811 = vadd.f32 %v2810, 1.1283791
  %v2812 = vmul.f32 %v630, %v2811
  %v2813 = vmul.f32 %v2801, 3.8918573e-05
  %v2814 = vadd.f32 %v2813, 0.001143296
  %v2815 = vmul.f32 %v2801, %v2814
  %v2816 = vadd.f32 %v2815, 0.014752088
  %v2817 = vmul.f32 %v2801, %v2816
  %v2818 = vadd.f32 %v2817, 0.112945676
  %v2819 = vmul.f32 %v2801, %v2818
  %v2820 = vadd.f32 %v2819, 0.4994258
  %v2821 = vmul.f32 %v2801, %v2820
  %v2822 = vadd.f32 %v2821, 1.0
  %v2823 = vrcp.pop %v2822
  %v2824 = vmul.f32 %v2822, %v2823
  %v2825 = vsub.f32 1.0, %v2824
  %v2826 = vmul.f32 %v2823, %v2825
  %v2827 = vadd.f32 %v2823, %v2826
  %vm2828 = vweird.f32 %v2822
  %vm2829 = vweird.f32 %v2823
  %vm2830 = vmor %vm2828, %vm2829
  %v2831 = vsel %vm2830, %v2823, %v2827
  %v2832 = vand.u32 2147483647, %v2822
  %vm2833 = vcmp.eq.f32.partialorder %v2832, 8.507059e+37
  %v2834 = vand.u32 %v2822, 2147483648
  %v2835 = vor.u32 1.1754944e-38, %v2834
  %v2836 = vsel %vm2833, %v2835, %v2831
  %v2837 = vmul.f32 %v2812, %v2836
  %v2838 = vmin.f32 %v2837, 1.0
  %v2839 = vmax.f32 %v2838, -1.0
  %v2840 = vmul.f32 %v631, %v631
  %v2841 = vmin.f32 16.0, %v2840
  %v2842 = vmul.f32 %v2841, 2.1237322e-06
  %v2843 = vadd.f32 %v2842, 0.00028619796
  %v2844 = vmul.f32 %v2841, %v2843
  %v2845 = vadd.f32 %v2844, 0.0036580483
  %v2846 = vmul.f32 %v2841, %v2845
  %v2847 = vadd.f32 %v2846, 0.05243302
  %v2848 = vmul.f32 %v2841, %v2847
  %v2849 = vadd.f32 %v2848, 0.18741608
  %v2850 = vmul.f32 %v2841, %v2849
  %v2851 = vadd.f32 %v2850, 1.1283791
  %v2852 = vmul.f32 %v631, %v2851
  %v2853 = vmul.f32 %v2841, 3.8918573e-05
  %v2854 = vadd.f32 %v2853, 0.001143296
  %v2855 = vmul.f32 %v2841, %v2854
  %v2856 = vadd.f32 %v2855, 0.014752088
  %v2857 = vmul.f32 %v2841, %v2856
  %v2858 = vadd.f32 %v2857, 0.112945676
  %v2859 = vmul.f32 %v2841, %v2858
  %v2860 = vadd.f32 %v2859, 0.4994258
  %v2861 = vmul.f32 %v2841, %v2860
  %v2862 = vadd.f32 %v2861, 1.0
  %v2863 = vrcp.pop %v2862
  %v2864 = vmul.f32 %v2862, %v2863
  %v2865 = vsub.f32 1.0, %v2864
  %v2866 = vmul.f32 %v2863, %v2865
  %v2867 = vadd.f32 %v2863, %v2866
  %vm2868 = vweird.f32 %v2862
  %vm2869 = vweird.f32 %v2863
  %vm2870 = vmor %vm2868, %vm2869
  %v2871 = vsel %vm2870, %v2863, %v2867
  %v2872 = vand.u32 2147483647, %v2862
  %vm2873 = vcmp.eq.f32.partialorder %v2872, 8.507059e+37
  %v2874 = vand.u32 %v2862, 2147483648
  %v2875 = vor.u32 1.1754944e-38, %v2874
  %v2876 = vsel %vm2873, %v2875, %v2871
  %v2877 = vmul.f32 %v2852, %v2876
  %v2878 = vmin.f32 %v2877, 1.0
  %v2879 = vmax.f32 %v2878, -1.0
  %v2880 = vmul.f32 %v632, %v632
  %v2881 = vmin.f32 16.0, %v2880
  %v2882 = vmul.f32 %v2881, 2.1237322e-06
  %v2883 = vadd.f32 %v2882, 0.00028619796
  %v2884 = vmul.f32 %v2881, %v2883
  %v2885 = vadd.f32 %v2884, 0.0036580483
  %v2886 = vmul.f32 %v2881, %v2885
  %v2887 = vadd.f32 %v2886, 0.05243302
  %v2888 = vmul.f32 %v2881, %v2887
  %v2889 = vadd.f32 %v2888, 0.18741608
  %v2890 = vmul.f32 %v2881, %v2889
  %v2891 = vadd.f32 %v2890, 1.1283791
  %v2892 = vmul.f32 %v632, %v2891
  %v2893 = vmul.f32 %v2881, 3.8918573e-05
  %v2894 = vadd.f32 %v2893, 0.001143296
  %v2895 = vmul.f32 %v2881, %v2894
  %v2896 = vadd.f32 %v2895, 0.014752088
  %v2897 = vmul.f32 %v2881, %v2896
  %v2898 = vadd.f32 %v2897, 0.112945676
  %v2899 = vmul.f32 %v2881, %v2898
  %v2900 = vadd.f32 %v2899, 0.4994258
  %v2901 = vmul.f32 %v2881, %v2900
  %v2902 = vadd.f32 %v2901, 1.0
  %v2903 = vrcp.pop %v2902
  %v2904 = vmul.f32 %v2902, %v2903
  %v2905 = vsub.f32 1.0, %v2904
  %v2906 = vmul.f32 %v2903, %v2905
  %v2907 = vadd.f32 %v2903, %v2906
  %vm2908 = vweird.f32 %v2902
  %vm2909 = vweird.f32 %v2903
  %vm2910 = vmor %vm2908, %vm2909
  %v2911 = vsel %vm2910, %v2903, %v2907
  %v2912 = vand.u32 2147483647, %v2902
  %vm2913 = vcmp.eq.f32.partialorder %v2912, 8.507059e+37
  %v2914 = vand.u32 %v2902, 2147483648
  %v2915 = vor.u32 1.1754944e-38, %v2914
  %v2916 = vsel %vm2913, %v2915, %v2911
  %v2917 = vmul.f32 %v2892, %v2916
  %v2918 = vmin.f32 %v2917, 1.0
  %v2919 = vmax.f32 %v2918, -1.0
  %v2920 = vmul.f32 %v633, %v633
  %v2921 = vmin.f32 16.0, %v2920
  %v2922 = vmul.f32 %v2921, 2.1237322e-06
  %v2923 = vadd.f32 %v2922, 0.00028619796
  %v2924 = vmul.f32 %v2921, %v2923
  %v2925 = vadd.f32 %v2924, 0.0036580483
  %v2926 = vmul.f32 %v2921, %v2925
  %v2927 = vadd.f32 %v2926, 0.05243302
  %v2928 = vmul.f32 %v2921, %v2927
  %v2929 = vadd.f32 %v2928, 0.18741608
  %v2930 = vmul.f32 %v2921, %v2929
  %v2931 = vadd.f32 %v2930, 1.1283791
  %v2932 = vmul.f32 %v633, %v2931
  %v2933 = vmul.f32 %v2921, 3.8918573e-05
  %v2934 = vadd.f32 %v2933, 0.001143296
  %v2935 = vmul.f32 %v2921, %v2934
  %v2936 = vadd.f32 %v2935, 0.014752088
  %v2937 = vmul.f32 %v2921, %v2936
  %v2938 = vadd.f32 %v2937, 0.112945676
  %v2939 = vmul.f32 %v2921, %v2938
  %v2940 = vadd.f32 %v2939, 0.4994258
  %v2941 = vmul.f32 %v2921, %v2940
  %v2942 = vadd.f32 %v2941, 1.0
  %v2943 = vrcp.pop %v2942
  %v2944 = vmul.f32 %v2942, %v2943
  %v2945 = vsub.f32 1.0, %v2944
  %v2946 = vmul.f32 %v2943, %v2945
  %v2947 = vadd.f32 %v2943, %v2946
  %vm2948 = vweird.f32 %v2942
  %vm2949 = vweird.f32 %v2943
  %vm2950 = vmor %vm2948, %vm2949
  %v2951 = vsel %vm2950, %v2943, %v2947
  %v2952 = vand.u32 2147483647, %v2942
  %vm2953 = vcmp.eq.f32.partialorder %v2952, 8.507059e+37
  %v2954 = vand.u32 %v2942, 2147483648
  %v2955 = vor.u32 1.1754944e-38, %v2954
  %v2956 = vsel %vm2953, %v2955, %v2951
  %v2957 = vmul.f32 %v2932, %v2956
  %v2958 = vmin.f32 %v2957, 1.0
  %v2959 = vmax.f32 %v2958, -1.0
  %v2960 = vmul.f32 %v634, %v634
  %v2961 = vmin.f32 16.0, %v2960
  %v2962 = vmul.f32 %v2961, 2.1237322e-06
  %v2963 = vadd.f32 %v2962, 0.00028619796
  %v2964 = vmul.f32 %v2961, %v2963
  %v2965 = vadd.f32 %v2964, 0.0036580483
  %v2966 = vmul.f32 %v2961, %v2965
  %v2967 = vadd.f32 %v2966, 0.05243302
  %v2968 = vmul.f32 %v2961, %v2967
  %v2969 = vadd.f32 %v2968, 0.18741608
  %v2970 = vmul.f32 %v2961, %v2969
  %v2971 = vadd.f32 %v2970, 1.1283791
  %v2972 = vmul.f32 %v634, %v2971
  %v2973 = vmul.f32 %v2961, 3.8918573e-05
  %v2974 = vadd.f32 %v2973, 0.001143296
  %v2975 = vmul.f32 %v2961, %v2974
  %v2976 = vadd.f32 %v2975, 0.014752088
  %v2977 = vmul.f32 %v2961, %v2976
  %v2978 = vadd.f32 %v2977, 0.112945676
  %v2979 = vmul.f32 %v2961, %v2978
  %v2980 = vadd.f32 %v2979, 0.4994258
  %v2981 = vmul.f32 %v2961, %v2980
  %v2982 = vadd.f32 %v2981, 1.0
  %v2983 = vrcp.pop %v2982
  %v2984 = vmul.f32 %v2982, %v2983
  %v2985 = vsub.f32 1.0, %v2984
  %v2986 = vmul.f32 %v2983, %v2985
  %v2987 = vadd.f32 %v2983, %v2986
  %vm2988 = vweird.f32 %v2982
  %vm2989 = vweird.f32 %v2983
  %vm2990 = vmor %vm2988, %vm2989
  %v2991 = vsel %vm2990, %v2983, %v2987
  %v2992 = vand.u32 2147483647, %v2982
  %vm2993 = vcmp.eq.f32.partialorder %v2992, 8.507059e+37
  %v2994 = vand.u32 %v2982, 2147483648
  %v2995 = vor.u32 1.1754944e-38, %v2994
  %v2996 = vsel %vm2993, %v2995, %v2991
  %v2997 = vmul.f32 %v2972, %v2996
  %v2998 = vmin.f32 %v2997, 1.0
  %v2999 = vmax.f32 %v2998, -1.0
  %v3000 = vmul.f32 %v635, %v635
  %v3001 = vmin.f32 16.0, %v3000
  %v3002 = vmul.f32 %v3001, 2.1237322e-06
  %v3003 = vadd.f32 %v3002, 0.00028619796
  %v3004 = vmul.f32 %v3001, %v3003
  %v3005 = vadd.f32 %v3004, 0.0036580483
  %v3006 = vmul.f32 %v3001, %v3005
  %v3007 = vadd.f32 %v3006, 0.05243302
  %v3008 = vmul.f32 %v3001, %v3007
  %v3009 = vadd.f32 %v3008, 0.18741608
  %v3010 = vmul.f32 %v3001, %v3009
  %v3011 = vadd.f32 %v3010, 1.1283791
  %v3012 = vmul.f32 %v635, %v3011
  %v3013 = vmul.f32 %v3001, 3.8918573e-05
  %v3014 = vadd.f32 %v3013, 0.001143296
  %v3015 = vmul.f32 %v3001, %v3014
  %v3016 = vadd.f32 %v3015, 0.014752088
  %v3017 = vmul.f32 %v3001, %v3016
  %v3018 = vadd.f32 %v3017, 0.112945676
  %v3019 = vmul.f32 %v3001, %v3018
  %v3020 = vadd.f32 %v3019, 0.4994258
  %v3021 = vmul.f32 %v3001, %v3020
  %v3022 = vadd.f32 %v3021, 1.0
  %v3023 = vrcp.pop %v3022
  %v3024 = vmul.f32 %v3022, %v3023
  %v3025 = vsub.f32 1.0, %v3024
  %v3026 = vmul.f32 %v3023, %v3025
  %v3027 = vadd.f32 %v3023, %v3026
  %vm3028 = vweird.f32 %v3022
  %vm3029 = vweird.f32 %v3023
  %vm3030 = vmor %vm3028, %vm3029
  %v3031 = vsel %vm3030, %v3023, %v3027
  %v3032 = vand.u32 2147483647, %v3022
  %vm3033 = vcmp.eq.f32.partialorder %v3032, 8.507059e+37
  %v3034 = vand.u32 %v3022, 2147483648
  %v3035 = vor.u32 1.1754944e-38, %v3034
  %v3036 = vsel %vm3033, %v3035, %v3031
  %v3037 = vmul.f32 %v3012, %v3036
  %v3038 = vmin.f32 %v3037, 1.0
  %v3039 = vmax.f32 %v3038, -1.0
  %v3040 = vmul.f32 %v636, %v636
  %v3041 = vmin.f32 16.0, %v3040
  %v3042 = vmul.f32 %v3041, 2.1237322e-06
  %v3043 = vadd.f32 %v3042, 0.00028619796
  %v3044 = vmul.f32 %v3041, %v3043
  %v3045 = vadd.f32 %v3044, 0.0036580483
  %v3046 = vmul.f32 %v3041, %v3045
  %v3047 = vadd.f32 %v3046, 0.05243302
  %v3048 = vmul.f32 %v3041, %v3047
  %v3049 = vadd.f32 %v3048, 0.18741608
  %v3050 = vmul.f32 %v3041, %v3049
  %v3051 = vadd.f32 %v3050, 1.1283791
  %v3052 = vmul.f32 %v636, %v3051
  %v3053 = vmul.f32 %v3041, 3.8918573e-05
  %v3054 = vadd.f32 %v3053, 0.001143296
  %v3055 = vmul.f32 %v3041, %v3054
  %v3056 = vadd.f32 %v3055, 0.014752088
  %v3057 = vmul.f32 %v3041, %v3056
  %v3058 = vadd.f32 %v3057, 0.112945676
  %v3059 = vmul.f32 %v3041, %v3058
  %v3060 = vadd.f32 %v3059, 0.4994258
  %v3061 = vmul.f32 %v3041, %v3060
  %v3062 = vadd.f32 %v3061, 1.0
  %v3063 = vrcp.pop %v3062
  %v3064 = vmul.f32 %v3062, %v3063
  %v3065 = vsub.f32 1.0, %v3064
  %v3066 = vmul.f32 %v3063, %v3065
  %v3067 = vadd.f32 %v3063, %v3066
  %vm3068 = vweird.f32 %v3062
  %vm3069 = vweird.f32 %v3063
  %vm3070 = vmor %vm3068, %vm3069
  %v3071 = vsel %vm3070, %v3063, %v3067
  %v3072 = vand.u32 2147483647, %v3062
  %vm3073 = vcmp.eq.f32.partialorder %v3072, 8.507059e+37
  %v3074 = vand.u32 %v3062, 2147483648
  %v3075 = vor.u32 1.1754944e-38, %v3074
  %v3076 = vsel %vm3073, %v3075, %v3071
  %v3077 = vmul.f32 %v3052, %v3076
  %v3078 = vmin.f32 %v3077, 1.0
  %v3079 = vmax.f32 %v3078, -1.0
  %v3080 = vmul.f32 %v637, %v637
  %v3081 = vmin.f32 16.0, %v3080
  %v3082 = vmul.f32 %v3081, 2.1237322e-06
  %v3083 = vadd.f32 %v3082, 0.00028619796
  %v3084 = vmul.f32 %v3081, %v3083
  %v3085 = vadd.f32 %v3084, 0.0036580483
  %v3086 = vmul.f32 %v3081, %v3085
  %v3087 = vadd.f32 %v3086, 0.05243302
  %v3088 = vmul.f32 %v3081, %v3087
  %v3089 = vadd.f32 %v3088, 0.18741608
  %v3090 = vmul.f32 %v3081, %v3089
  %v3091 = vadd.f32 %v3090, 1.1283791
  %v3092 = vmul.f32 %v637, %v3091
  %v3093 = vmul.f32 %v3081, 3.8918573e-05
  %v3094 = vadd.f32 %v3093, 0.001143296
  %v3095 = vmul.f32 %v3081, %v3094
  %v3096 = vadd.f32 %v3095, 0.014752088
  %v3097 = vmul.f32 %v3081, %v3096
  %v3098 = vadd.f32 %v3097, 0.112945676
  %v3099 = vmul.f32 %v3081, %v3098
  %v3100 = vadd.f32 %v3099, 0.4994258
  %v3101 = vmul.f32 %v3081, %v3100
  %v3102 = vadd.f32 %v3101, 1.0
  %v3103 = vrcp.pop %v3102
  %v3104 = vmul.f32 %v3102, %v3103
  %v3105 = vsub.f32 1.0, %v3104
  %v3106 = vmul.f32 %v3103, %v3105
  %v3107 = vadd.f32 %v3103, %v3106
  %vm3108 = vweird.f32 %v3102
  %vm3109 = vweird.f32 %v3103
  %vm3110 = vmor %vm3108, %vm3109
  %v3111 = vsel %vm3110, %v3103, %v3107
  %v3112 = vand.u32 2147483647, %v3102
  %vm3113 = vcmp.eq.f32.partialorder %v3112, 8.507059e+37
  %v3114 = vand.u32 %v3102, 2147483648
  %v3115 = vor.u32 1.1754944e-38, %v3114
  %v3116 = vsel %vm3113, %v3115, %v3111
  %v3117 = vmul.f32 %v3092, %v3116
  %v3118 = vmin.f32 %v3117, 1.0
  %v3119 = vmax.f32 %v3118, -1.0
  %v3120 = vmul.f32 %v638, %v638
  %v3121 = vmin.f32 16.0, %v3120
  %v3122 = vmul.f32 %v3121, 2.1237322e-06
  %v3123 = vadd.f32 %v3122, 0.00028619796
  %v3124 = vmul.f32 %v3121, %v3123
  %v3125 = vadd.f32 %v3124, 0.0036580483
  %v3126 = vmul.f32 %v3121, %v3125
  %v3127 = vadd.f32 %v3126, 0.05243302
  %v3128 = vmul.f32 %v3121, %v3127
  %v3129 = vadd.f32 %v3128, 0.18741608
  %v3130 = vmul.f32 %v3121, %v3129
  %v3131 = vadd.f32 %v3130, 1.1283791
  %v3132 = vmul.f32 %v638, %v3131
  %v3133 = vmul.f32 %v3121, 3.8918573e-05
  %v3134 = vadd.f32 %v3133, 0.001143296
  %v3135 = vmul.f32 %v3121, %v3134
  %v3136 = vadd.f32 %v3135, 0.014752088
  %v3137 = vmul.f32 %v3121, %v3136
  %v3138 = vadd.f32 %v3137, 0.112945676
  %v3139 = vmul.f32 %v3121, %v3138
  %v3140 = vadd.f32 %v3139, 0.4994258
  %v3141 = vmul.f32 %v3121, %v3140
  %v3142 = vadd.f32 %v3141, 1.0
  %v3143 = vrcp.pop %v3142
  %v3144 = vmul.f32 %v3142, %v3143
  %v3145 = vsub.f32 1.0, %v3144
  %v3146 = vmul.f32 %v3143, %v3145
  %v3147 = vadd.f32 %v3143, %v3146
  %vm3148 = vweird.f32 %v3142
  %vm3149 = vweird.f32 %v3143
  %vm3150 = vmor %vm3148, %vm3149
  %v3151 = vsel %vm3150, %v3143, %v3147
  %v3152 = vand.u32 2147483647, %v3142
  %vm3153 = vcmp.eq.f32.partialorder %v3152, 8.507059e+37
  %v3154 = vand.u32 %v3142, 2147483648
  %v3155 = vor.u32 1.1754944e-38, %v3154
  %v3156 = vsel %vm3153, %v3155, %v3151
  %v3157 = vmul.f32 %v3132, %v3156
  %v3158 = vmin.f32 %v3157, 1.0
  %v3159 = vmax.f32 %v3158, -1.0
  %v3160 = vmul.f32 %v639, %v639
  %v3161 = vmin.f32 16.0, %v3160
  %v3162 = vmul.f32 %v3161, 2.1237322e-06
  %v3163 = vadd.f32 %v3162, 0.00028619796
  %v3164 = vmul.f32 %v3161, %v3163
  %v3165 = vadd.f32 %v3164, 0.0036580483
  %v3166 = vmul.f32 %v3161, %v3165
  %v3167 = vadd.f32 %v3166, 0.05243302
  %v3168 = vmul.f32 %v3161, %v3167
  %v3169 = vadd.f32 %v3168, 0.18741608
  %v3170 = vmul.f32 %v3161, %v3169
  %v3171 = vadd.f32 %v3170, 1.1283791
  %v3172 = vmul.f32 %v639, %v3171
  %v3173 = vmul.f32 %v3161, 3.8918573e-05
  %v3174 = vadd.f32 %v3173, 0.001143296
  %v3175 = vmul.f32 %v3161, %v3174
  %v3176 = vadd.f32 %v3175, 0.014752088
  %v3177 = vmul.f32 %v3161, %v3176
  %v3178 = vadd.f32 %v3177, 0.112945676
  %v3179 = vmul.f32 %v3161, %v3178
  %v3180 = vadd.f32 %v3179, 0.4994258
  %v3181 = vmul.f32 %v3161, %v3180
  %v3182 = vadd.f32 %v3181, 1.0
  %v3183 = vrcp.pop %v3182
  %v3184 = vmul.f32 %v3182, %v3183
  %v3185 = vsub.f32 1.0, %v3184
  %v3186 = vmul.f32 %v3183, %v3185
  %v3187 = vadd.f32 %v3183, %v3186
  %vm3188 = vweird.f32 %v3182
  %vm3189 = vweird.f32 %v3183
  %vm3190 = vmor %vm3188, %vm3189
  %v3191 = vsel %vm3190, %v3183, %v3187
  %v3192 = vand.u32 2147483647, %v3182
  %vm3193 = vcmp.eq.f32.partialorder %v3192, 8.507059e+37
  %v3194 = vand.u32 %v3182, 2147483648
  %v3195 = vor.u32 1.1754944e-38, %v3194
  %v3196 = vsel %vm3193, %v3195, %v3191
  %v3197 = vmul.f32 %v3172, %v3196
  %v3198 = vmin.f32 %v3197, 1.0
  %v3199 = vmax.f32 %v3198, -1.0
  %v3200 = vadd.f32 %v679, 1.0
  %v3201 = vadd.f32 %v719, 1.0
  %v3202 = vadd.f32 %v759, 1.0
  %v3203 = vadd.f32 %v799, 1.0
  %v3204 = vadd.f32 %v839, 1.0
  %v3205 = vadd.f32 %v879, 1.0
  %v3206 = vadd.f32 %v919, 1.0
  %v3207 = vadd.f32 %v959, 1.0
  %v3208 = vadd.f32 %v999, 1.0
  %v3209 = vadd.f32 %v1039, 1.0
  %v3210 = vadd.f32 %v1079, 1.0
  %v3211 = vadd.f32 %v1119, 1.0
  %v3212 = vadd.f32 %v1159, 1.0
  %v3213 = vadd.f32 %v1199, 1.0
  %v3214 = vadd.f32 %v1239, 1.0
  %v3215 = vadd.f32 %v1279, 1.0
  %v3216 = vadd.f32 %v1319, 1.0
  %v3217 = vadd.f32 %v1359, 1.0
  %v3218 = vadd.f32 %v1399, 1.0
  %v3219 = vadd.f32 %v1439, 1.0
  %v3220 = vadd.f32 %v1479, 1.0
  %v3221 = vadd.f32 %v1519, 1.0
  %v3222 = vadd.f32 %v1559, 1.0
  %v3223 = vadd.f32 %v1599, 1.0
  %v3224 = vadd.f32 %v1639, 1.0
  %v3225 = vadd.f32 %v1679, 1.0
  %v3226 = vadd.f32 %v1719, 1.0
  %v3227 = vadd.f32 %v1759, 1.0
  %v3228 = vadd.f32 %v1799, 1.0
  %v3229 = vadd.f32 %v1839, 1.0
  %v3230 = vadd.f32 %v1879, 1.0
  %v3231 = vadd.f32 %v1919, 1.0
  %v3232 = vadd.f32 %v1959, 1.0
  %v3233 = vadd.f32 %v1999, 1.0
  %v3234 = vadd.f32 %v2039, 1.0
  %v3235 = vadd.f32 %v2079, 1.0
  %v3236 = vadd.f32 %v2119, 1.0
  %v3237 = vadd.f32 %v2159, 1.0
  %v3238 = vadd.f32 %v2199, 1.0
  %v3239 = vadd.f32 %v2239, 1.0
  %v3240 = vadd.f32 %v2279, 1.0
  %v3241 = vadd.f32 %v2319, 1.0
  %v3242 = vadd.f32 %v2359, 1.0
  %v3243 = vadd.f32 %v2399, 1.0
  %v3244 = vadd.f32 %v2439, 1.0
  %v3245 = vadd.f32 %v2479, 1.0
  %v3246 = vadd.f32 %v2519, 1.0
  %v3247 = vadd.f32 %v2559, 1.0
  %v3248 = vadd.f32 %v2599, 1.0
  %v3249 = vadd.f32 %v2639, 1.0
  %v3250 = vadd.f32 %v2679, 1.0
  %v3251 = vadd.f32 %v2719, 1.0
  %v3252 = vadd.f32 %v2759, 1.0
  %v3253 = vadd.f32 %v2799, 1.0
  %v3254 = vadd.f32 %v2839, 1.0
  %v3255 = vadd.f32 %v2879, 1.0
  %v3256 = vadd.f32 %v2919, 1.0
  %v3257 = vadd.f32 %v2959, 1.0
  %v3258 = vadd.f32 %v2999, 1.0
  %v3259 = vadd.f32 %v3039, 1.0
  %v3260 = vadd.f32 %v3079, 1.0
  %v3261 = vadd.f32 %v3119, 1.0
  %v3262 = vadd.f32 %v3159, 1.0
  %v3263 = vadd.f32 %v3199, 1.0
  %v3264 = vmul.f32 %v512, %v3200
  %v3265 = vmul.f32 %v513, %v3201
  %v3266 = vmul.f32 %v514, %v3202
  %v3267 = vmul.f32 %v515, %v3203
  %v3268 = vmul.f32 %v516, %v3204
  %v3269 = vmul.f32 %v517, %v3205
  %v3270 = vmul.f32 %v518, %v3206
  %v3271 = vmul.f32 %v519, %v3207
  %v3272 = vmul.f32 %v520, %v3208
  %v3273 = vmul.f32 %v521, %v3209
  %v3274 = vmul.f32 %v522, %v3210
  %v3275 = vmul.f32 %v523, %v3211
  %v3276 = vmul.f32 %v524, %v3212
  %v3277 = vmul.f32 %v525, %v3213
  %v3278 = vmul.f32 %v526, %v3214
  %v3279 = vmul.f32 %v527, %v3215
  %v3280 = vmul.f32 %v528, %v3216
  %v3281 = vmul.f32 %v529, %v3217
  %v3282 = vmul.f32 %v530, %v3218
  %v3283 = vmul.f32 %v531, %v3219
  %v3284 = vmul.f32 %v532, %v3220
  %v3285 = vmul.f32 %v533, %v3221
  %v3286 = vmul.f32 %v534, %v3222
  %v3287 = vmul.f32 %v535, %v3223
  %v3288 = vmul.f32 %v536, %v3224
  %v3289 = vmul.f32 %v537, %v3225
  %v3290 = vmul.f32 %v538, %v3226
  %v3291 = vmul.f32 %v539, %v3227
  %v3292 = vmul.f32 %v540, %v3228
  %v3293 = vmul.f32 %v541, %v3229
  %v3294 = vmul.f32 %v542, %v3230
  %v3295 = vmul.f32 %v543, %v3231
  %v3296 = vmul.f32 %v544, %v3232
  %v3297 = vmul.f32 %v545, %v3233
  %v3298 = vmul.f32 %v546, %v3234
  %v3299 = vmul.f32 %v547, %v3235
  %v3300 = vmul.f32 %v548, %v3236
  %v3301 = vmul.f32 %v549, %v3237
  %v3302 = vmul.f32 %v550, %v3238
  %v3303 = vmul.f32 %v551, %v3239
  %v3304 = vmul.f32 %v552, %v3240
  %v3305 = vmul.f32 %v553, %v3241
  %v3306 = vmul.f32 %v554, %v3242
  %v3307 = vmul.f32 %v555, %v3243
  %v3308 = vmul.f32 %v556, %v3244
  %v3309 = vmul.f32 %v557, %v3245
  %v3310 = vmul.f32 %v558, %v3246
  %v3311 = vmul.f32 %v559, %v3247
  %v3312 = vmul.f32 %v560, %v3248
  %v3313 = vmul.f32 %v561, %v3249
  %v3314 = vmul.f32 %v562, %v3250
  %v3315 = vmul.f32 %v563, %v3251
  %v3316 = vmul.f32 %v564, %v3252
  %v3317 = vmul.f32 %v565, %v3253
  %v3318 = vmul.f32 %v566, %v3254
  %v3319 = vmul.f32 %v567, %v3255
  %v3320 = vmul.f32 %v568, %v3256
  %v3321 = vmul.f32 %v569, %v3257
  %v3322 = vmul.f32 %v570, %v3258
  %v3323 = vmul.f32 %v571, %v3259
  %v3324 = vmul.f32 %v572, %v3260
  %v3325 = vmul.f32 %v573, %v3261
  %v3326 = vmul.f32 %v574, %v3262
  %v3327 = vmul.f32 %v575, %v3263
  %v3328 = vpack.c.bf16 %v3265, %v3264
  %v3329 = vpack.c.bf16 %v3267, %v3266
  %v3330 = vpack.c.bf16 %v3269, %v3268
  %v3331 = vpack.c.bf16 %v3271, %v3270
  %v3332 = vpack.c.bf16 %v3273, %v3272
  %v3333 = vpack.c.bf16 %v3275, %v3274
  %v3334 = vpack.c.bf16 %v3277, %v3276
  %v3335 = vpack.c.bf16 %v3279, %v3278
  %v3336 = vpack.c.bf16 %v3281, %v3280
  %v3337 = vpack.c.bf16 %v3283, %v3282
  %v3338 = vpack.c.bf16 %v3285, %v3284
  %v3339 = vpack.c.bf16 %v3287, %v3286
  %v3340 = vpack.c.bf16 %v3289, %v3288
  %v3341 = vpack.c.bf16 %v3291, %v3290
  %v3342 = vpack.c.bf16 %v3293, %v3292
  %v3343 = vpack.c.bf16 %v3295, %v3294
  %v3344 = vpack.c.bf16 %v3297, %v3296
  %v3345 = vpack.c.bf16 %v3299, %v3298
  %v3346 = vpack.c.bf16 %v3301, %v3300
  %v3347 = vpack.c.bf16 %v3303, %v3302
  %v3348 = vpack.c.bf16 %v3305, %v3304
  %v3349 = vpack.c.bf16 %v3307, %v3306
  %v3350 = vpack.c.bf16 %v3309, %v3308
  %v3351 = vpack.c.bf16 %v3311, %v3310
  %v3352 = vpack.c.bf16 %v3313, %v3312
  %v3353 = vpack.c.bf16 %v3315, %v3314
  %v3354 = vpack.c.bf16 %v3317, %v3316
  %v3355 = vpack.c.bf16 %v3319, %v3318
  %v3356 = vpack.c.bf16 %v3321, %v3320
  %v3357 = vpack.c.bf16 %v3323, %v3322
  %v3358 = vpack.c.bf16 %v3325, %v3324
  %v3359 = vpack.c.bf16 %v3327, %v3326
  %v3360 = vld [vmem:[%s3] sm:$0xf]
  %v3361 = vld [vmem:[%s3 + $0x4] sm:$0xf]
  %v3362 = vld [vmem:[%s3 + $0x8] sm:$0xf]
  %v3363 = vld [vmem:[%s3 + $0xc] sm:$0xf]
  %v3364 = vld [vmem:[%s3 + $0x10] sm:$0xf]
  %v3365 = vld [vmem:[%s3 + $0x14] sm:$0xf]
  %v3366 = vld [vmem:[%s3 + $0x18] sm:$0xf]
  %v3367 = vld [vmem:[%s3 + $0x1c] sm:$0xf]
  %v3368 = vld [vmem:[%s3 + $0x20] sm:$0xf]
  %v3369 = vld [vmem:[%s3 + $0x24] sm:$0xf]
  %v3370 = vld [vmem:[%s3 + $0x28] sm:$0xf]
  %v3371 = vld [vmem:[%s3 + $0x2c] sm:$0xf]
  %v3372 = vld [vmem:[%s3 + $0x30] sm:$0xf]
  %v3373 = vld [vmem:[%s3 + $0x34] sm:$0xf]
  %v3374 = vld [vmem:[%s3 + $0x38] sm:$0xf]
  %v3375 = vld [vmem:[%s3 + $0x3c] sm:$0xf]
  %v3392 = vunpack.c.l.b16 %v3360
  %v3393 = vunpack.c.l.b16 %v3361
  %v3394 = vunpack.c.l.b16 %v3362
  %v3395 = vunpack.c.l.b16 %v3363
  %v3396 = vunpack.c.l.b16 %v3364
  %v3397 = vunpack.c.l.b16 %v3365
  %v3398 = vunpack.c.l.b16 %v3366
  %v3399 = vunpack.c.l.b16 %v3367
  %v3400 = vunpack.c.l.b16 %v3368
  %v3401 = vunpack.c.l.b16 %v3369
  %v3402 = vunpack.c.l.b16 %v3370
  %v3403 = vunpack.c.l.b16 %v3371
  %v3404 = vunpack.c.l.b16 %v3372
  %v3405 = vunpack.c.l.b16 %v3373
  %v3406 = vunpack.c.l.b16 %v3374
  %v3407 = vunpack.c.l.b16 %v3375
  %v3408 = vpack.c.b16 %v3393, %v3392
  %v3409 = vpack.c.b16 %v3395, %v3394
  %v3410 = vpack.c.b16 %v3397, %v3396
  %v3411 = vpack.c.b16 %v3399, %v3398
  %v3412 = vpack.c.b16 %v3401, %v3400
  %v3413 = vpack.c.b16 %v3403, %v3402
  %v3414 = vpack.c.b16 %v3405, %v3404
  %v3415 = vpack.c.b16 %v3407, %v3406
  %3424 = vmatpush.bf16.msra.mxu0 %v3415
  %3425 = vmatpush.bf16.msra.mxu0 %v3414
  %3426 = vmatpush.bf16.msra.mxu0 %v3413
  %3427 = vmatpush.bf16.msra.mxu0 %v3412
  %3428 = vmatpush.bf16.msra.mxu0 %v3411
  %3429 = vmatpush.bf16.msra.mxu0 %v3410
  %3430 = vmatpush.bf16.msra.mxu0 %v3409
  %3431 = vmatpush.bf16.msra.mxu0 %v3408
  %3432 = vmatmul.bf16.gmra.mxu0 %v3328
  %v3433 = vpop.f32.mrf.mxu0
  %v3434 = vadd.f32 0.0, %v3433
  %v3435 = vpop.f32.mrf.mxu0
  %v3436 = vadd.f32 0.0, %v3435
  %3437 = vmatmul.bf16.gmra.mxu0 %v3329
  %v3438 = vpop.f32.mrf.mxu0
  %v3439 = vadd.f32 0.0, %v3438
  %v3440 = vpop.f32.mrf.mxu0
  %v3441 = vadd.f32 0.0, %v3440
  %3442 = vmatmul.bf16.gmra.mxu0 %v3330
  %v3443 = vpop.f32.mrf.mxu0
  %v3444 = vadd.f32 0.0, %v3443
  %v3445 = vpop.f32.mrf.mxu0
  %v3446 = vadd.f32 0.0, %v3445
  %3447 = vmatmul.bf16.gmra.mxu0 %v3331
  %v3448 = vpop.f32.mrf.mxu0
  %v3449 = vadd.f32 0.0, %v3448
  %v3450 = vpop.f32.mrf.mxu0
  %v3451 = vadd.f32 0.0, %v3450
  %3452 = vmatmul.bf16.gmra.mxu0 %v3332
  %v3453 = vpop.f32.mrf.mxu0
  %v3454 = vadd.f32 0.0, %v3453
  %v3455 = vpop.f32.mrf.mxu0
  %v3456 = vadd.f32 0.0, %v3455
  %3457 = vmatmul.bf16.gmra.mxu0 %v3333
  %v3458 = vpop.f32.mrf.mxu0
  %v3459 = vadd.f32 0.0, %v3458
  %v3460 = vpop.f32.mrf.mxu0
  %v3461 = vadd.f32 0.0, %v3460
  %3462 = vmatmul.bf16.gmra.mxu0 %v3334
  %v3463 = vpop.f32.mrf.mxu0
  %v3464 = vadd.f32 0.0, %v3463
  %v3465 = vpop.f32.mrf.mxu0
  %v3466 = vadd.f32 0.0, %v3465
  %3467 = vmatmul.bf16.gmra.mxu0 %v3335
  %v3468 = vpop.f32.mrf.mxu0
  %v3469 = vadd.f32 0.0, %v3468
  %v3470 = vpop.f32.mrf.mxu0
  %v3471 = vadd.f32 0.0, %v3470
  %3472 = vmatmul.bf16.gmra.mxu0 %v3336
  %v3473 = vpop.f32.mrf.mxu0
  %v3474 = vadd.f32 0.0, %v3473
  %v3475 = vpop.f32.mrf.mxu0
  %v3476 = vadd.f32 0.0, %v3475
  %3477 = vmatmul.bf16.gmra.mxu0 %v3337
  %v3478 = vpop.f32.mrf.mxu0
  %v3479 = vadd.f32 0.0, %v3478
  %v3480 = vpop.f32.mrf.mxu0
  %v3481 = vadd.f32 0.0, %v3480
  %3482 = vmatmul.bf16.gmra.mxu0 %v3338
  %v3483 = vpop.f32.mrf.mxu0
  %v3484 = vadd.f32 0.0, %v3483
  %v3485 = vpop.f32.mrf.mxu0
  %v3486 = vadd.f32 0.0, %v3485
  %3487 = vmatmul.bf16.gmra.mxu0 %v3339
  %v3488 = vpop.f32.mrf.mxu0
  %v3489 = vadd.f32 0.0, %v3488
  %v3490 = vpop.f32.mrf.mxu0
  %v3491 = vadd.f32 0.0, %v3490
  %3492 = vmatmul.bf16.gmra.mxu0 %v3340
  %v3493 = vpop.f32.mrf.mxu0
  %v3494 = vadd.f32 0.0, %v3493
  %v3495 = vpop.f32.mrf.mxu0
  %v3496 = vadd.f32 0.0, %v3495
  %3497 = vmatmul.bf16.gmra.mxu0 %v3341
  %v3498 = vpop.f32.mrf.mxu0
  %v3499 = vadd.f32 0.0, %v3498
  %v3500 = vpop.f32.mrf.mxu0
  %v3501 = vadd.f32 0.0, %v3500
  %3502 = vmatmul.bf16.gmra.mxu0 %v3342
  %v3503 = vpop.f32.mrf.mxu0
  %v3504 = vadd.f32 0.0, %v3503
  %v3505 = vpop.f32.mrf.mxu0
  %v3506 = vadd.f32 0.0, %v3505
  %3507 = vmatmul.bf16.gmra.mxu0 %v3343
  %v3508 = vpop.f32.mrf.mxu0
  %v3509 = vadd.f32 0.0, %v3508
  %v3510 = vpop.f32.mrf.mxu0
  %v3511 = vadd.f32 0.0, %v3510
  %3512 = vmatmul.bf16.gmra.mxu0 %v3344
  %v3513 = vpop.f32.mrf.mxu0
  %v3514 = vadd.f32 0.0, %v3513
  %v3515 = vpop.f32.mrf.mxu0
  %v3516 = vadd.f32 0.0, %v3515
  %3517 = vmatmul.bf16.gmra.mxu0 %v3345
  %v3518 = vpop.f32.mrf.mxu0
  %v3519 = vadd.f32 0.0, %v3518
  %v3520 = vpop.f32.mrf.mxu0
  %v3521 = vadd.f32 0.0, %v3520
  %3522 = vmatmul.bf16.gmra.mxu0 %v3346
  %v3523 = vpop.f32.mrf.mxu0
  %v3524 = vadd.f32 0.0, %v3523
  %v3525 = vpop.f32.mrf.mxu0
  %v3526 = vadd.f32 0.0, %v3525
  %3527 = vmatmul.bf16.gmra.mxu0 %v3347
  %v3528 = vpop.f32.mrf.mxu0
  %v3529 = vadd.f32 0.0, %v3528
  %v3530 = vpop.f32.mrf.mxu0
  %v3531 = vadd.f32 0.0, %v3530
  %3532 = vmatmul.bf16.gmra.mxu0 %v3348
  %v3533 = vpop.f32.mrf.mxu0
  %v3534 = vadd.f32 0.0, %v3533
  %v3535 = vpop.f32.mrf.mxu0
  %v3536 = vadd.f32 0.0, %v3535
  %3537 = vmatmul.bf16.gmra.mxu0 %v3349
  %v3538 = vpop.f32.mrf.mxu0
  %v3539 = vadd.f32 0.0, %v3538
  %v3540 = vpop.f32.mrf.mxu0
  %v3541 = vadd.f32 0.0, %v3540
  %3542 = vmatmul.bf16.gmra.mxu0 %v3350
  %v3543 = vpop.f32.mrf.mxu0
  %v3544 = vadd.f32 0.0, %v3543
  %v3545 = vpop.f32.mrf.mxu0
  %v3546 = vadd.f32 0.0, %v3545
  %3547 = vmatmul.bf16.gmra.mxu0 %v3351
  %v3548 = vpop.f32.mrf.mxu0
  %v3549 = vadd.f32 0.0, %v3548
  %v3550 = vpop.f32.mrf.mxu0
  %v3551 = vadd.f32 0.0, %v3550
  %3552 = vmatmul.bf16.gmra.mxu0 %v3352
  %v3553 = vpop.f32.mrf.mxu0
  %v3554 = vadd.f32 0.0, %v3553
  %v3555 = vpop.f32.mrf.mxu0
  %v3556 = vadd.f32 0.0, %v3555
  %3557 = vmatmul.bf16.gmra.mxu0 %v3353
  %v3558 = vpop.f32.mrf.mxu0
  %v3559 = vadd.f32 0.0, %v3558
  %v3560 = vpop.f32.mrf.mxu0
  %v3561 = vadd.f32 0.0, %v3560
  %3562 = vmatmul.bf16.gmra.mxu0 %v3354
  %v3563 = vpop.f32.mrf.mxu0
  %v3564 = vadd.f32 0.0, %v3563
  %v3565 = vpop.f32.mrf.mxu0
  %v3566 = vadd.f32 0.0, %v3565
  %3567 = vmatmul.bf16.gmra.mxu0 %v3355
  %v3568 = vpop.f32.mrf.mxu0
  %v3569 = vadd.f32 0.0, %v3568
  %v3570 = vpop.f32.mrf.mxu0
  %v3571 = vadd.f32 0.0, %v3570
  %3572 = vmatmul.bf16.gmra.mxu0 %v3356
  %v3573 = vpop.f32.mrf.mxu0
  %v3574 = vadd.f32 0.0, %v3573
  %v3575 = vpop.f32.mrf.mxu0
  %v3576 = vadd.f32 0.0, %v3575
  %3577 = vmatmul.bf16.gmra.mxu0 %v3357
  %v3578 = vpop.f32.mrf.mxu0
  %v3579 = vadd.f32 0.0, %v3578
  %v3580 = vpop.f32.mrf.mxu0
  %v3581 = vadd.f32 0.0, %v3580
  %3582 = vmatmul.bf16.gmra.mxu0 %v3358
  %v3583 = vpop.f32.mrf.mxu0
  %v3584 = vadd.f32 0.0, %v3583
  %v3585 = vpop.f32.mrf.mxu0
  %v3586 = vadd.f32 0.0, %v3585
  %3587 = vmatmul.bf16.gmra.mxu0 %v3359
  %v3588 = vpop.f32.mrf.mxu0
  %v3589 = vadd.f32 0.0, %v3588
  %v3590 = vpop.f32.mrf.mxu0
  %v3591 = vadd.f32 0.0, %v3590
  %3592 = vdwg.mxu0
  %3593 = vst [vmem:[%s4] sm:$0xff] %v3434
  %3594 = vst [vmem:[%s4 + $0x8] sm:$0xff] %v3436
  %3595 = vst [vmem:[%s4 + $0x10] sm:$0xff] %v3439
  %3596 = vst [vmem:[%s4 + $0x18] sm:$0xff] %v3441
  %3597 = vst [vmem:[%s4 + $0x20] sm:$0xff] %v3444
  %3598 = vst [vmem:[%s4 + $0x28] sm:$0xff] %v3446
  %3599 = vst [vmem:[%s4 + $0x30] sm:$0xff] %v3449
  %3600 = vst [vmem:[%s4 + $0x38] sm:$0xff] %v3451
  %3601 = vst [vmem:[%s4 + $0x40] sm:$0xff] %v3454
  %3602 = vst [vmem:[%s4 + $0x48] sm:$0xff] %v3456
  %3603 = vst [vmem:[%s4 + $0x50] sm:$0xff] %v3459
  %3604 = vst [vmem:[%s4 + $0x58] sm:$0xff] %v3461
  %3605 = vst [vmem:[%s4 + $0x60] sm:$0xff] %v3464
  %3606 = vst [vmem:[%s4 + $0x68] sm:$0xff] %v3466
  %3607 = vst [vmem:[%s4 + $0x70] sm:$0xff] %v3469
  %3608 = vst [vmem:[%s4 + $0x78] sm:$0xff] %v3471
  %3609 = vst [vmem:[%s4 + $0x80] sm:$0xff] %v3474
  %3610 = vst [vmem:[%s4 + $0x88] sm:$0xff] %v3476
  %3611 = vst [vmem:[%s4 + $0x90] sm:$0xff] %v3479
  %3612 = vst [vmem:[%s4 + $0x98] sm:$0xff] %v3481
  %3613 = vst [vmem:[%s4 + $0xa0] sm:$0xff] %v3484
  %3614 = vst [vmem:[%s4 + $0xa8] sm:$0xff] %v3486
  %3615 = vst [vmem:[%s4 + $0xb0] sm:$0xff] %v3489
  %3616 = vst [vmem:[%s4 + $0xb8] sm:$0xff] %v3491
  %3617 = vst [vmem:[%s4 + $0xc0] sm:$0xff] %v3494
  %3618 = vst [vmem:[%s4 + $0xc8] sm:$0xff] %v3496
  %3619 = vst [vmem:[%s4 + $0xd0] sm:$0xff] %v3499
  %3620 = vst [vmem:[%s4 + $0xd8] sm:$0xff] %v3501
  %3621 = vst [vmem:[%s4 + $0xe0] sm:$0xff] %v3504
  %3622 = vst [vmem:[%s4 + $0xe8] sm:$0xff] %v3506
  %3623 = vst [vmem:[%s4 + $0xf0] sm:$0xff] %v3509
  %3624 = vst [vmem:[%s4 + $0xf8] sm:$0xff] %v3511
  %3625 = vst [vmem:[%s4 + $0x100] sm:$0xff] %v3514
  %3626 = vst [vmem:[%s4 + $0x108] sm:$0xff] %v3516
  %3627 = vst [vmem:[%s4 + $0x110] sm:$0xff] %v3519
  %3628 = vst [vmem:[%s4 + $0x118] sm:$0xff] %v3521
  %3629 = vst [vmem:[%s4 + $0x120] sm:$0xff] %v3524
  %3630 = vst [vmem:[%s4 + $0x128] sm:$0xff] %v3526
  %3631 = vst [vmem:[%s4 + $0x130] sm:$0xff] %v3529
  %3632 = vst [vmem:[%s4 + $0x138] sm:$0xff] %v3531
  %3633 = vst [vmem:[%s4 + $0x140] sm:$0xff] %v3534
  %3634 = vst [vmem:[%s4 + $0x148] sm:$0xff] %v3536
  %3635 = vst [vmem:[%s4 + $0x150] sm:$0xff] %v3539
  %3636 = vst [vmem:[%s4 + $0x158] sm:$0xff] %v3541
  %3637 = vst [vmem:[%s4 + $0x160] sm:$0xff] %v3544
  %3638 = vst [vmem:[%s4 + $0x168] sm:$0xff] %v3546
  %3639 = vst [vmem:[%s4 + $0x170] sm:$0xff] %v3549
  %3640 = vst [vmem:[%s4 + $0x178] sm:$0xff] %v3551
  %3641 = vst [vmem:[%s4 + $0x180] sm:$0xff] %v3554
  %3642 = vst [vmem:[%s4 + $0x188] sm:$0xff] %v3556
  %3643 = vst [vmem:[%s4 + $0x190] sm:$0xff] %v3559
  %3644 = vst [vmem:[%s4 + $0x198] sm:$0xff] %v3561
  %3645 = vst [vmem:[%s4 + $0x1a0] sm:$0xff] %v3564
  %3646 = vst [vmem:[%s4 + $0x1a8] sm:$0xff] %v3566
  %3647 = vst [vmem:[%s4 + $0x1b0] sm:$0xff] %v3569
  %3648 = vst [vmem:[%s4 + $0x1b8] sm:$0xff] %v3571
  %3649 = vst [vmem:[%s4 + $0x1c0] sm:$0xff] %v3574
  %3650 = vst [vmem:[%s4 + $0x1c8] sm:$0xff] %v3576
  %3651 = vst [vmem:[%s4 + $0x1d0] sm:$0xff] %v3579
  %3652 = vst [vmem:[%s4 + $0x1d8] sm:$0xff] %v3581
  %3653 = vst [vmem:[%s4 + $0x1e0] sm:$0xff] %v3584
  %3654 = vst [vmem:[%s4 + $0x1e8] sm:$0xff] %v3586
  %3655 = vst [vmem:[%s4 + $0x1f0] sm:$0xff] %v3589
  %3656 = vst [vmem:[%s4 + $0x1f8] sm:$0xff] %v3591
  %v3657 = vadd.f32 %v3434, %v3436
  %v3658 = vadd.f32 %v3657, %v3439
  %v3659 = vadd.f32 %v3658, %v3441
  %v3660 = vadd.f32 %v3659, %v3444
  %v3661 = vadd.f32 %v3660, %v3446
  %v3662 = vadd.f32 %v3661, %v3449
  %v3663 = vadd.f32 %v3662, %v3451
  %v3664 = vadd.f32 %v3663, %v3454
  %v3665 = vadd.f32 %v3664, %v3456
  %v3666 = vadd.f32 %v3665, %v3459
  %v3667 = vadd.f32 %v3666, %v3461
  %v3668 = vadd.f32 %v3667, %v3464
  %v3669 = vadd.f32 %v3668, %v3466
  %v3670 = vadd.f32 %v3669, %v3469
  %v3671 = vadd.f32 %v3670, %v3471
  %v3672 = vadd.f32 %v3671, %v3474
  %v3673 = vadd.f32 %v3672, %v3476
  %v3674 = vadd.f32 %v3673, %v3479
  %v3675 = vadd.f32 %v3674, %v3481
  %v3676 = vadd.f32 %v3675, %v3484
  %v3677 = vadd.f32 %v3676, %v3486
  %v3678 = vadd.f32 %v3677, %v3489
  %v3679 = vadd.f32 %v3678, %v3491
  %v3680 = vadd.f32 %v3679, %v3494
  %v3681 = vadd.f32 %v3680, %v3496
  %v3682 = vadd.f32 %v3681, %v3499
  %v3683 = vadd.f32 %v3682, %v3501
  %v3684 = vadd.f32 %v3683, %v3504
  %v3685 = vadd.f32 %v3684, %v3506
  %v3686 = vadd.f32 %v3685, %v3509
  %v3687 = vadd.f32 %v3686, %v3511
  %v3688 = vadd.f32 %v3687, %v3514
  %v3689 = vadd.f32 %v3688, %v3516
  %v3690 = vadd.f32 %v3689, %v3519
  %v3691 = vadd.f32 %v3690, %v3521
  %v3692 = vadd.f32 %v3691, %v3524
  %v3693 = vadd.f32 %v3692, %v3526
  %v3694 = vadd.f32 %v3693, %v3529
  %v3695 = vadd.f32 %v3694, %v3531
  %v3696 = vadd.f32 %v3695, %v3534
  %v3697 = vadd.f32 %v3696, %v3536
  %v3698 = vadd.f32 %v3697, %v3539
  %v3699 = vadd.f32 %v3698, %v3541
  %v3700 = vadd.f32 %v3699, %v3544
  %v3701 = vadd.f32 %v3700, %v3546
  %v3702 = vadd.f32 %v3701, %v3549
  %v3703 = vadd.f32 %v3702, %v3551
  %v3704 = vadd.f32 %v3703, %v3554
  %v3705 = vadd.f32 %v3704, %v3556
  %v3706 = vadd.f32 %v3705, %v3559
  %v3707 = vadd.f32 %v3706, %v3561
  %v3708 = vadd.f32 %v3707, %v3564
  %v3709 = vadd.f32 %v3708, %v3566
  %v3710 = vadd.f32 %v3709, %v3569
  %v3711 = vadd.f32 %v3710, %v3571
  %v3712 = vadd.f32 %v3711, %v3574
  %v3713 = vadd.f32 %v3712, %v3576
  %v3714 = vadd.f32 %v3713, %v3579
  %v3715 = vadd.f32 %v3714, %v3581
  %v3716 = vadd.f32 %v3715, %v3584
  %v3717 = vadd.f32 %v3716, %v3586
  %v3718 = vadd.f32 %v3717, %v3589
  %v3719 = vadd.f32 %v3718, %v3591
  %v3720 = vrot.slane %v3719, 4
  %v3721 = vadd.f32 %v3719, %v3720
  %v3722 = vrot.slane %v3721, 2
  %v3723 = vadd.f32 %v3721, %v3722
  %v3724 = vrot.slane %v3723, 1
  %v3725 = vadd.f32 %v3723, %v3724
  %v3726 = vmul.f32 %v3434, %v3434
  %v3727 = vmul.f32 %v3436, %v3436
  %v3728 = vmul.f32 %v3439, %v3439
  %v3729 = vmul.f32 %v3441, %v3441
  %v3730 = vmul.f32 %v3444, %v3444
  %v3731 = vmul.f32 %v3446, %v3446
  %v3732 = vmul.f32 %v3449, %v3449
  %v3733 = vmul.f32 %v3451, %v3451
  %v3734 = vmul.f32 %v3454, %v3454
  %v3735 = vmul.f32 %v3456, %v3456
  %v3736 = vmul.f32 %v3459, %v3459
  %v3737 = vmul.f32 %v3461, %v3461
  %v3738 = vmul.f32 %v3464, %v3464
  %v3739 = vmul.f32 %v3466, %v3466
  %v3740 = vmul.f32 %v3469, %v3469
  %v3741 = vmul.f32 %v3471, %v3471
  %v3742 = vmul.f32 %v3474, %v3474
  %v3743 = vmul.f32 %v3476, %v3476
  %v3744 = vmul.f32 %v3479, %v3479
  %v3745 = vmul.f32 %v3481, %v3481
  %v3746 = vmul.f32 %v3484, %v3484
  %v3747 = vmul.f32 %v3486, %v3486
  %v3748 = vmul.f32 %v3489, %v3489
  %v3749 = vmul.f32 %v3491, %v3491
  %v3750 = vmul.f32 %v3494, %v3494
  %v3751 = vmul.f32 %v3496, %v3496
  %v3752 = vmul.f32 %v3499, %v3499
  %v3753 = vmul.f32 %v3501, %v3501
  %v3754 = vmul.f32 %v3504, %v3504
  %v3755 = vmul.f32 %v3506, %v3506
  %v3756 = vmul.f32 %v3509, %v3509
  %v3757 = vmul.f32 %v3511, %v3511
  %v3758 = vmul.f32 %v3514, %v3514
  %v3759 = vmul.f32 %v3516, %v3516
  %v3760 = vmul.f32 %v3519, %v3519
  %v3761 = vmul.f32 %v3521, %v3521
  %v3762 = vmul.f32 %v3524, %v3524
  %v3763 = vmul.f32 %v3526, %v3526
  %v3764 = vmul.f32 %v3529, %v3529
  %v3765 = vmul.f32 %v3531, %v3531
  %v3766 = vmul.f32 %v3534, %v3534
  %v3767 = vmul.f32 %v3536, %v3536
  %v3768 = vmul.f32 %v3539, %v3539
  %v3769 = vmul.f32 %v3541, %v3541
  %v3770 = vmul.f32 %v3544, %v3544
  %v3771 = vmul.f32 %v3546, %v3546
  %v3772 = vmul.f32 %v3549, %v3549
  %v3773 = vmul.f32 %v3551, %v3551
  %v3774 = vmul.f32 %v3554, %v3554
  %v3775 = vmul.f32 %v3556, %v3556
  %v3776 = vmul.f32 %v3559, %v3559
  %v3777 = vmul.f32 %v3561, %v3561
  %v3778 = vmul.f32 %v3564, %v3564
  %v3779 = vmul.f32 %v3566, %v3566
  %v3780 = vmul.f32 %v3569, %v3569
  %v3781 = vmul.f32 %v3571, %v3571
  %v3782 = vmul.f32 %v3574, %v3574
  %v3783 = vmul.f32 %v3576, %v3576
  %v3784 = vmul.f32 %v3579, %v3579
  %v3785 = vmul.f32 %v3581, %v3581
  %v3786 = vmul.f32 %v3584, %v3584
  %v3787 = vmul.f32 %v3586, %v3586
  %v3788 = vmul.f32 %v3589, %v3589
  %v3789 = vmul.f32 %v3591, %v3591
  %v3790 = vadd.f32 %v3726, %v3727
  %v3791 = vadd.f32 %v3790, %v3728
  %v3792 = vadd.f32 %v3791, %v3729
  %v3793 = vadd.f32 %v3792, %v3730
  %v3794 = vadd.f32 %v3793, %v3731
  %v3795 = vadd.f32 %v3794, %v3732
  %v3796 = vadd.f32 %v3795, %v3733
  %v3797 = vadd.f32 %v3796, %v3734
  %v3798 = vadd.f32 %v3797, %v3735
  %v3799 = vadd.f32 %v3798, %v3736
  %v3800 = vadd.f32 %v3799, %v3737
  %v3801 = vadd.f32 %v3800, %v3738
  %v3802 = vadd.f32 %v3801, %v3739
  %v3803 = vadd.f32 %v3802, %v3740
  %v3804 = vadd.f32 %v3803, %v3741
  %v3805 = vadd.f32 %v3804, %v3742
  %v3806 = vadd.f32 %v3805, %v3743
  %v3807 = vadd.f32 %v3806, %v3744
  %v3808 = vadd.f32 %v3807, %v3745
  %v3809 = vadd.f32 %v3808, %v3746
  %v3810 = vadd.f32 %v3809, %v3747
  %v3811 = vadd.f32 %v3810, %v3748
  %v3812 = vadd.f32 %v3811, %v3749
  %v3813 = vadd.f32 %v3812, %v3750
  %v3814 = vadd.f32 %v3813, %v3751
  %v3815 = vadd.f32 %v3814, %v3752
  %v3816 = vadd.f32 %v3815, %v3753
  %v3817 = vadd.f32 %v3816, %v3754
  %v3818 = vadd.f32 %v3817, %v3755
  %v3819 = vadd.f32 %v3818, %v3756
  %v3820 = vadd.f32 %v3819, %v3757
  %v3821 = vadd.f32 %v3820, %v3758
  %v3822 = vadd.f32 %v3821, %v3759
  %v3823 = vadd.f32 %v3822, %v3760
  %v3824 = vadd.f32 %v3823, %v3761
  %v3825 = vadd.f32 %v3824, %v3762
  %v3826 = vadd.f32 %v3825, %v3763
  %v3827 = vadd.f32 %v3826, %v3764
  %v3828 = vadd.f32 %v3827, %v3765
  %v3829 = vadd.f32 %v3828, %v3766
  %v3830 = vadd.f32 %v3829, %v3767
  %v3831 = vadd.f32 %v3830, %v3768
  %v3832 = vadd.f32 %v3831, %v3769
  %v3833 = vadd.f32 %v3832, %v3770
  %v3834 = vadd.f32 %v3833, %v3771
  %v3835 = vadd.f32 %v3834, %v3772
  %v3836 = vadd.f32 %v3835, %v3773
  %v3837 = vadd.f32 %v3836, %v3774
  %v3838 = vadd.f32 %v3837, %v3775
  %v3839 = vadd.f32 %v3838, %v3776
  %v3840 = vadd.f32 %v3839, %v3777
  %v3841 = vadd.f32 %v3840, %v3778
  %v3842 = vadd.f32 %v3841, %v3779
  %v3843 = vadd.f32 %v3842, %v3780
  %v3844 = vadd.f32 %v3843, %v3781
  %v3845 = vadd.f32 %v3844, %v3782
  %v3846 = vadd.f32 %v3845, %v3783
  %v3847 = vadd.f32 %v3846, %v3784
  %v3848 = vadd.f32 %v3847, %v3785
  %v3849 = vadd.f32 %v3848, %v3786
  %v3850 = vadd.f32 %v3849, %v3787
  %v3851 = vadd.f32 %v3850, %v3788
  %v3852 = vadd.f32 %v3851, %v3789
  %v3853 = vrot.slane %v3852, 4
  %v3854 = vadd.f32 %v3852, %v3853
  %v3855 = vrot.slane %v3854, 2
  %v3856 = vadd.f32 %v3854, %v3855
  %v3857 = vrot.slane %v3856, 1
  %v3858 = vadd.f32 %v3856, %v3857
  %vm3859 = vcmask 1040384
  %v3860 = vsel %vm3859, %v3725, %v3858
  %3861 = vst [vmem:[%s5] sm:$0x3] %v3860
  // Predicated region
  $region18: #{irmlp_forward.4} parent=0 // pred_check
    _
  $region19: #{irmlp_forward.4} parent=0 // pred_check_branch
    %3863 = sbr.rel (0) target = $region21
  $region20: #{irmlp_forward.4} parent=0 // pred_region
    _
  $region21: #{irmlp_forward.4} parent=0 // pred_fallthru
    _
  // Predicated region
  $region22: #{irmlp_forward.4} parent=0 // pred_check
    _
  $region23: #{irmlp_forward.4} parent=0 // pred_check_branch
    %3865 = sbr.rel (0) target = $region25
  $region24: #{irmlp_forward.4} parent=0 // pred_region
    _
  $region25: #{irmlp_forward.4} parent=0 // pred_fallthru
    _
  // Predicated region
  $region26: #{irmlp_forward.4} parent=0 // pred_check
    _
  $region27: #{irmlp_forward.4} parent=0 // pred_check_branch
    %3867 = sbr.rel (0) target = $region29
  $region28: #{irmlp_forward.4} parent=0 // pred_region
    _
  $region29: #{irmlp_forward.4} parent=0 // pred_fallthru
    _
  // Predicated region
  $region30: #{irmlp_forward.4} parent=0 // pred_check
    _
  $region31: #{irmlp_forward.4} parent=0 // pred_check_branch
    %3869 = sbr.rel (0) target = $region33
  $region32: #{irmlp_forward.4} parent=0 // pred_region
    _
  $region33: #{irmlp_forward.4} parent=0 // pred_fallthru
    _

// kernel: irmlp_forward.3
$region0: #{irmlp_forward.3}
  #allocation0 [shape = 'u32[]', space=smem, size = 0x4, offset = 0x4, fixed_abs, tag = 'smem constant byte address 0x4 - core index']
  #allocation1 [shape = 'u32[72,128]{1,0:T(1,128)}', space=vmem, size = 0x9000, scoped, tag = 'internal scratch']
  %s0 = inlined_call_operand.vmem [shape: f32[2,18,18,4], index: 0, kind: input, shape index: {}]
  %s1 = inlined_call_operand.vmem [shape: bf16[36,128], index: 1, kind: input, shape index: {}]
  %s2 = inlined_call_operand.vmem [shape: bf16[512,128], index: 2, kind: output, shape index: {0}]
  %s3 = inlined_call_operand.vmem [shape: f32[2,2,128], index: 3, kind: output, shape index: {1}]
  %4 = xla_tuple %s2, %s3
  %s5 = sld [smem:[#allocation0]]
  $region49: #{irmlp_forward.3} parent=0
    _
  %s7 = ssub.s32 1, %s5
  %s8 = scalar_select 0, %s7, %s5
  loop: start=0, step=1, limit=4
  $region2: #{irmlp_forward.3} parent=0 // loop_pre_header
    _
  $region3: #{irmlp_forward.3} parent=0 // loop_header
    %s10 = sphi 0, %s14
    %p11 = scmp.ge.s32.totalorder %s10, 4
    %s20 = sphi 0, %s22
    %s23 = sphi 0, %s20
    %s24 = sphi 0, %s23
    %s40 = sphi 0, %s24
    %s44 = sphi 0, %s44
    %s46 = sphi 0, %s44
    %s47 = sphi 0, %s46
    %s61 = sphi 0, %s47
    %s67 = sphi 0, %s69
    %s70 = sphi 0, %s67
    %s71 = sphi 0, %s70
    %s87 = sphi 0, %s71
    %s93 = sphi 0, %s95
    %s96 = sphi 0, %s93
    %s97 = sphi 0, %s96
    %s113 = sphi 0, %s97
  $region4: #{irmlp_forward.3} parent=0 // loop_header_branch
    %13 = sbr.rel (%p11) target = $region8
  $region5: #{irmlp_forward.3} parent=0 // loop_body
    %s15 = ssub.s32 %s10, 1
    %s16 = ssub.s32 %s10, 2
    %s17 = sadd.s32 %s10, 1
    %s18 = ssub.s32 %s10, %s17
    %p19 = scmp.eq.s32.totalorder %s18, 0
    %s21 = sadd.s32 %s20, 1
    %s22 = scalar_select %p19, %s20, %s21
    %p25 = pneg %p19
    %p26 = scmp.eq.s32.totalorder %s10, 1
    %p27 = por %p25, %p26
    %p28 = scmp.ne.s32.totalorder %s20, %s23
    %p29 = scmp.eq.s32.totalorder %s10, 0
    %p30 = por %p28, %p29
    %p31 = scmp.ne.s32.totalorder %s20, %s23
    %p32 = scmp.eq.s32.totalorder %s15, 1
    %p33 = por %p31, %p32
    %p34 = scmp.ne.s32.totalorder %s23, %s24
    %p35 = scmp.eq.s32.totalorder %s15, 0
    %p36 = por %p34, %p35
    %p37 = scmp.ne.s32.totalorder %s23, %s24
    %p38 = scmp.eq.s32.totalorder %s16, 1
    %p39 = por %p37, %p38
    %p41 = scmp.ne.s32.totalorder %s24, %s40
    %p42 = scmp.eq.s32.totalorder %s16, 0
    %p43 = por %p41, %p42
    %s45 = sadd.s32 %s44, 1
    %p48 = scmp.eq.s32.totalorder %s10, 1
    %p49 = scmp.ne.s32.totalorder %s44, %s46
    %p50 = scmp.eq.s32.totalorder %s10, 0
    %p51 = por %p49, %p50
    %p52 = scmp.ne.s32.totalorder %s44, %s46
    %p53 = scmp.eq.s32.totalorder %s15, 1
    %p54 = por %p52, %p53
    %p55 = scmp.ne.s32.totalorder %s46, %s47
    %p56 = scmp.eq.s32.totalorder %s15, 0
    %p57 = por %p55, %p56
    %p58 = scmp.ne.s32.totalorder %s46, %s47
    %p59 = scmp.eq.s32.totalorder %s16, 1
    %p60 = por %p58, %p59
    %p62 = scmp.ne.s32.totalorder %s47, %s61
    %p63 = scmp.eq.s32.totalorder %s16, 0
    %p64 = por %p62, %p63
    %s65 = ssub.s32 %s10, %s17
    %p66 = scmp.eq.s32.totalorder %s65, 0
    %s68 = sadd.s32 %s67, 1
    %s69 = scalar_select %p66, %s67, %s68
    %p72 = pneg %p66
    %p73 = scmp.eq.s32.totalorder %s10, 1
    %p74 = por %p72, %p73
    %p75 = scmp.ne.s32.totalorder %s67, %s70
    %p76 = scmp.eq.s32.totalorder %s10, 0
    %p77 = por %p75, %p76
    %p78 = scmp.ne.s32.totalorder %s67, %s70
    %p79 = scmp.eq.s32.totalorder %s15, 1
    %p80 = por %p78, %p79
    %p81 = scmp.ne.s32.totalorder %s70, %s71
    %p82 = scmp.eq.s32.totalorder %s15, 0
    %p83 = por %p81, %p82
    %p84 = scmp.ne.s32.totalorder %s70, %s71
    %p85 = scmp.eq.s32.totalorder %s16, 1
    %p86 = por %p84, %p85
    %p88 = scmp.ne.s32.totalorder %s71, %s87
    %p89 = scmp.eq.s32.totalorder %s16, 0
    %p90 = por %p88, %p89
    %s91 = ssub.s32 %s10, %s17
    %p92 = scmp.eq.s32.totalorder %s91, 0
    %s94 = sadd.s32 %s93, 1
    %s95 = scalar_select %p92, %s93, %s94
    %p98 = pneg %p92
    %p99 = scmp.eq.s32.totalorder %s10, 1
    %p100 = por %p98, %p99
    %p101 = scmp.ne.s32.totalorder %s93, %s96
    %p102 = scmp.eq.s32.totalorder %s10, 0
    %p103 = por %p101, %p102
    %p104 = scmp.ne.s32.totalorder %s93, %s96
    %p105 = scmp.eq.s32.totalorder %s15, 1
    %p106 = por %p104, %p105
    %p107 = scmp.ne.s32.totalorder %s96, %s97
    %p108 = scmp.eq.s32.totalorder %s15, 0
    %p109 = por %p107, %p108
    %p110 = scmp.ne.s32.totalorder %s96, %s97
    %p111 = scmp.eq.s32.totalorder %s16, 1
    %p112 = por %p110, %p111
    %p114 = scmp.ne.s32.totalorder %s97, %s113
    %p115 = scmp.eq.s32.totalorder %s16, 0
    %p116 = por %p114, %p115
    %p117 = scmp.le.s32.totalorder 1, %s10
    %p118 = scmp.lt.s32.totalorder %s10, 3
    %p119 = pnand %p117, %p118
    %p120 = pneg %p119
    // Predicated region
    $region9: #{irmlp_forward.3} parent=5 // pred_check
      _
    $region10: #{irmlp_forward.3} parent=5 // pred_check_branch
      %122 = sbr.rel (%p119) target = $region12
    $region11: #{irmlp_forward.3} parent=5 // pred_region
      %s123 = ssub.s32 %s10, 1
      // Predicated region
      $region13: #{irmlp_forward.3} parent=11 // pred_check
        %p124 = pneg %p57
      $region14: #{irmlp_forward.3} parent=11 // pred_check_branch
        %126 = sbr.rel (%p124) target = $region16
      $region15: #{irmlp_forward.3} parent=11 // pred_region
        _
      $region16: #{irmlp_forward.3} parent=11 // pred_fallthru
        _
    $region12: #{irmlp_forward.3} parent=5 // pred_fallthru
      _
    %p127 = scmp.lt.s32.totalorder %s10, 2
    // Predicated region
    $region17: #{irmlp_forward.3} parent=5 // pred_check
      %p128 = pneg %p127
    $region18: #{irmlp_forward.3} parent=5 // pred_check_branch
      %130 = sbr.rel (%p128) target = $region20
    $region19: #{irmlp_forward.3} parent=5 // pred_region
      // Predicated region
      $region21: #{irmlp_forward.3} parent=19 // pred_check
        %p131 = pneg %p30
      $region22: #{irmlp_forward.3} parent=19 // pred_check_branch
        %133 = sbr.rel (%p131) target = $region24
      $region23: #{irmlp_forward.3} parent=19 // pred_region
        %p134 = scmp.lt.s32.totalorder %s10, 1
        %s135 = scalar_select %p134, %s10, 1
        %s136 = smul.addr %s135, 54
        %s137 = smul.addr %s136, 8
        %s138 = scalar_lea.vmem %s0, %s137
      $region24: #{irmlp_forward.3} parent=19 // pred_fallthru
        _
    $region20: #{irmlp_forward.3} parent=5 // pred_fallthru
      _
    %p139 = scmp.le.s32.totalorder 1, %s10
    %p140 = scmp.lt.s32.totalorder %s10, 3
    %p141 = pnand %p139, %p140
    %p142 = pneg %p141
    // Predicated region
    $region25: #{irmlp_forward.3} parent=5 // pred_check
      _
    $region26: #{irmlp_forward.3} parent=5 // pred_check_branch
      %144 = sbr.rel (%p141) target = $region28
    $region27: #{irmlp_forward.3} parent=5 // pred_region
      %s145 = ssub.s32 %s10, 1
      %p146 = scmp.lt.s32.totalorder %s15, 1
      %s147 = scalar_select %p146, %s15, 1
      %s148 = smul.addr %s147, 54
      %s149 = smul.addr %s148, 8
      %s150 = scalar_lea.vmem %s0, %s149
      %p151 = pneg %p36
      %p152 = pneg %p33
      %p153 = pneg %p57
      %p154 = pneg %p54
      %p155 = pneg %p83
      %p156 = pneg %p80
      %s157 = smul.u32 32, %s15
      %p158 = scmp.lt.s32.totalorder %s157, 63
      %s159 = scalar_select %p158, %s157, 63
      %s160 = smul.addr %s159, 4
      %s161 = scalar_lea.vmem %s2, %s160
      %p162 = pneg %p109
      %p163 = pneg %p106
      %p164 = scmp.lt.s32.totalorder %s15, 1
      %s165 = scalar_select %p164, %s15, 1
      %s166 = smul.addr %s165, 2
      %s167 = scalar_lea.vmem %s3, %s166
      %p168 = scmp.lt.s32.totalorder %s15, 1
      %s169 = scalar_select %p168, %s15, 1
      %s170 = smul.addr %s169, 54
      %s171 = smul.addr %s170, 8
      %s172 = scalar_lea.vmem %s0, %s171
      %s173 = smul.u32 32, %s15
      %p174 = scmp.lt.s32.totalorder %s173, 63
      %s175 = scalar_select %p174, %s173, 63
      %s176 = smul.addr %s175, 4
      %s177 = scalar_lea.vmem %s2, %s176
      %s178 = smul.u32 32, %s15
      %p179 = scmp.lt.s32.totalorder %s15, 1
      %s180 = scalar_select %p179, %s15, 1
      %s181 = smul.addr %s180, 2
      %s182 = scalar_lea.vmem %s3, %s181
      %v184 = vld [vmem:[%s172] sm:$0xff]
      %v185 = vld [vmem:[%s172 + $0x8] sm:$0xff]
      %v186 = vld [vmem:[%s172 + $0x10] sm:$0x3]
      %v187 = vld [vmem:[%s172 + $0x18] sm:$0xff]
      %v188 = vld [vmem:[%s172 + $0x20] sm:$0xff]
      %v189 = vld [vmem:[%s172 + $0x28] sm:$0x3]
      %v190 = vld [vmem:[%s172 + $0x30] sm:$0xff]
      %v191 = vld [vmem:[%s172 + $0x38] sm:$0xff]
      %v192 = vld [vmem:[%s172 + $0x40] sm:$0x3]
      %v193 = vld [vmem:[%s172 + $0x48] sm:$0xff]
      %v194 = vld [vmem:[%s172 + $0x50] sm:$0xff]
      %v195 = vld [vmem:[%s172 + $0x58] sm:$0x3]
      %v196 = vld [vmem:[%s172 + $0x60] sm:$0xff]
      %v197 = vld [vmem:[%s172 + $0x68] sm:$0xff]
      %v198 = vld [vmem:[%s172 + $0x70] sm:$0x3]
      %v199 = vld [vmem:[%s172 + $0x78] sm:$0xff]
      %v200 = vld [vmem:[%s172 + $0x80] sm:$0xff]
      %v201 = vld [vmem:[%s172 + $0x88] sm:$0x3]
      %v202 = vld [vmem:[%s172 + $0x90] sm:$0xff]
      %v203 = vld [vmem:[%s172 + $0x98] sm:$0xff]
      %v204 = vld [vmem:[%s172 + $0xa0] sm:$0x3]
      %v205 = vld [vmem:[%s172 + $0xa8] sm:$0xff]
      %v206 = vld [vmem:[%s172 + $0xb0] sm:$0xff]
      %v207 = vld [vmem:[%s172 + $0xb8] sm:$0x3]
      %v208 = vld [vmem:[%s172 + $0xc0] sm:$0xff]
      %v209 = vld [vmem:[%s172 + $0xc8] sm:$0xff]
      %v210 = vld [vmem:[%s172 + $0xd0] sm:$0x3]
      %v211 = vld [vmem:[%s172 + $0xd8] sm:$0xff]
      %v212 = vld [vmem:[%s172 + $0xe0] sm:$0xff]
      %v213 = vld [vmem:[%s172 + $0xe8] sm:$0x3]
      %v214 = vld [vmem:[%s172 + $0xf0] sm:$0xff]
      %v215 = vld [vmem:[%s172 + $0xf8] sm:$0xff]
      %v216 = vld [vmem:[%s172 + $0x100] sm:$0x3]
      %v217 = vld [vmem:[%s172 + $0x108] sm:$0xff]
      %v218 = vld [vmem:[%s172 + $0x110] sm:$0xff]
      %v219 = vld [vmem:[%s172 + $0x118] sm:$0x3]
      %v220 = vld [vmem:[%s172 + $0x120] sm:$0xff]
      %v221 = vld [vmem:[%s172 + $0x128] sm:$0xff]
      %v222 = vld [vmem:[%s172 + $0x130] sm:$0x3]
      %v223 = vld [vmem:[%s172 + $0x138] sm:$0xff]
      %v224 = vld [vmem:[%s172 + $0x140] sm:$0xff]
      %v225 = vld [vmem:[%s172 + $0x148] sm:$0x3]
      %v226 = vld [vmem:[%s172 + $0x150] sm:$0xff]
      %v227 = vld [vmem:[%s172 + $0x158] sm:$0xff]
      %v228 = vld [vmem:[%s172 + $0x160] sm:$0x3]
      %v229 = vld [vmem:[%s172 + $0x168] sm:$0xff]
      %v230 = vld [vmem:[%s172 + $0x170] sm:$0xff]
      %v231 = vld [vmem:[%s172 + $0x178] sm:$0x3]
      %v232 = vld [vmem:[%s172 + $0x180] sm:$0xff]
      %v233 = vld [vmem:[%s172 + $0x188] sm:$0xff]
      %v234 = vld [vmem:[%s172 + $0x190] sm:$0x3]
      %v235 = vld [vmem:[%s172 + $0x198] sm:$0xff]
      %v236 = vld [vmem:[%s172 + $0x1a0] sm:$0xff]
      %v237 = vld [vmem:[%s172 + $0x1a8] sm:$0x3]
      %v238 = vpack.c.bf16 %v184, %v184
      %v239 = vpack.c.bf16 %v185, %v185
      %v240 = vpack.c.bf16 %v186, %v186
      %v241 = vpack.c.bf16 %v187, %v187
      %v242 = vpack.c.bf16 %v188, %v188
      %v243 = vpack.c.bf16 %v189, %v189
      %v244 = vpack.c.bf16 %v190, %v190
      %v245 = vpack.c.bf16 %v191, %v191
      %v246 = vpack.c.bf16 %v192, %v192
      %v247 = vpack.c.bf16 %v193, %v193
      %v248 = vpack.c.bf16 %v194, %v194
      %v249 = vpack.c.bf16 %v195, %v195
      %v250 = vpack.c.bf16 %v196, %v196
      %v251 = vpack.c.bf16 %v197, %v197
      %v252 = vpack.c.bf16 %v198, %v198
      %v253 = vpack.c.bf16 %v199, %v199
      %v254 = vpack.c.bf16 %v200, %v200
      %v255 = vpack.c.bf16 %v201, %v201
      %v256 = vpack.c.bf16 %v202, %v202
      %v257 = vpack.c.bf16 %v203, %v203
      %v258 = vpack.c.bf16 %v204, %v204
      %v259 = vpack.c.bf16 %v205, %v205
      %v260 = vpack.c.bf16 %v206, %v206
      %v261 = vpack.c.bf16 %v207, %v207
      %v262 = vpack.c.bf16 %v208, %v208
      %v263 = vpack.c.bf16 %v209, %v209
      %v264 = vpack.c.bf16 %v210, %v210
      %v265 = vpack.c.bf16 %v211, %v211
      %v266 = vpack.c.bf16 %v212, %v212
      %v267 = vpack.c.bf16 %v213, %v213
      %v268 = vpack.c.bf16 %v214, %v214
      %v269 = vpack.c.bf16 %v215, %v215
      %v270 = vpack.c.bf16 %v216, %v216
      %v271 = vpack.c.bf16 %v217, %v217
      %v272 = vpack.c.bf16 %v218, %v218
      %v273 = vpack.c.bf16 %v219, %v219
      %v274 = vpack.c.bf16 %v220, %v220
      %v275 = vpack.c.bf16 %v221, %v221
      %v276 = vpack.c.bf16 %v222, %v222
      %v277 = vpack.c.bf16 %v223, %v223
      %v278 = vpack.c.bf16 %v224, %v224
      %v279 = vpack.c.bf16 %v225, %v225
      %v280 = vpack.c.bf16 %v226, %v226
      %v281 = vpack.c.bf16 %v227, %v227
      %v282 = vpack.c.bf16 %v228, %v228
      %v283 = vpack.c.bf16 %v229, %v229
      %v284 = vpack.c.bf16 %v230, %v230
      %v285 = vpack.c.bf16 %v231, %v231
      %v286 = vpack.c.bf16 %v232, %v232
      %v287 = vpack.c.bf16 %v233, %v233
      %v288 = vpack.c.bf16 %v234, %v234
      %v289 = vpack.c.bf16 %v235, %v235
      %v290 = vpack.c.bf16 %v236, %v236
      %v291 = vpack.c.bf16 %v237, %v237
      %v324 = vunpack.c.l.b16 %v238
      %v325 = vunpack.c.l.b16 %v239
      %v326 = vunpack.c.l.b16 %v241
      %v327 = vunpack.c.l.b16 %v242
      %v328 = vunpack.c.l.b16 %v244
      %v329 = vunpack.c.l.b16 %v245
      %v330 = vunpack.c.l.b16 %v247
      %v331 = vunpack.c.l.b16 %v248
      %v332 = vunpack.c.l.b16 %v250
      %v333 = vunpack.c.l.b16 %v251
      %v334 = vunpack.c.l.b16 %v253
      %v335 = vunpack.c.l.b16 %v254
      %v336 = vunpack.c.l.b16 %v256
      %v337 = vunpack.c.l.b16 %v257
      %v338 = vunpack.c.l.b16 %v259
      %v339 = vunpack.c.l.b16 %v260
      %v340 = vunpack.c.l.b16 %v262
      %v341 = vunpack.c.l.b16 %v263
      %v342 = vunpack.c.l.b16 %v265
      %v343 = vunpack.c.l.b16 %v266
      %v344 = vunpack.c.l.b16 %v268
      %v345 = vunpack.c.l.b16 %v269
      %v346 = vunpack.c.l.b16 %v271
      %v347 = vunpack.c.l.b16 %v272
      %v348 = vunpack.c.l.b16 %v274
      %v349 = vunpack.c.l.b16 %v275
      %v350 = vunpack.c.l.b16 %v277
      %v351 = vunpack.c.l.b16 %v278
      %v352 = vunpack.c.l.b16 %v280
      %v353 = vunpack.c.l.b16 %v281
      %v354 = vunpack.c.l.b16 %v283
      %v355 = vunpack.c.l.b16 %v284
      %v356 = vpack.c.b16 %v325, %v324
      %v357 = vpack.c.b16 %v327, %v326
      %v358 = vpack.c.b16 %v329, %v328
      %v359 = vpack.c.b16 %v331, %v330
      %v360 = vpack.c.b16 %v333, %v332
      %v361 = vpack.c.b16 %v335, %v334
      %v362 = vpack.c.b16 %v337, %v336
      %v363 = vpack.c.b16 %v339, %v338
      %v364 = vpack.c.b16 %v341, %v340
      %v365 = vpack.c.b16 %v343, %v342
      %v366 = vpack.c.b16 %v345, %v344
      %v367 = vpack.c.b16 %v347, %v346
      %v368 = vpack.c.b16 %v349, %v348
      %v369 = vpack.c.b16 %v351, %v350
      %v370 = vpack.c.b16 %v353, %v352
      %v371 = vpack.c.b16 %v355, %v354
      %v388 = vunpack.c.l.b16 %v240
      %v389 = vunpack.c.l.b16 %v243
      %v390 = vunpack.c.l.b16 %v246
      %v391 = vunpack.c.l.b16 %v249
      %v392 = vunpack.c.l.b16 %v252
      %v393 = vunpack.c.l.b16 %v255
      %v394 = vunpack.c.l.b16 %v258
      %v395 = vunpack.c.l.b16 %v261
      %v396 = vunpack.c.l.b16 %v264
      %v397 = vunpack.c.l.b16 %v267
      %v398 = vunpack.c.l.b16 %v270
      %v399 = vunpack.c.l.b16 %v273
      %v400 = vunpack.c.l.b16 %v276
      %v401 = vunpack.c.l.b16 %v279
      %v402 = vunpack.c.l.b16 %v282
      %v403 = vunpack.c.l.b16 %v285
      %v404 = vpack.c.b16 %v388, %v388
      %v405 = vpack.c.b16 %v389, %v389
      %v406 = vpack.c.b16 %v390, %v390
      %v407 = vpack.c.b16 %v391, %v391
      %v408 = vpack.c.b16 %v392, %v392
      %v409 = vpack.c.b16 %v393, %v393
      %v410 = vpack.c.b16 %v394, %v394
      %v411 = vpack.c.b16 %v395, %v395
      %v412 = vpack.c.b16 %v396, %v396
      %v413 = vpack.c.b16 %v397, %v397
      %v414 = vpack.c.b16 %v398, %v398
      %v415 = vpack.c.b16 %v399, %v399
      %v416 = vpack.c.b16 %v400, %v400
      %v417 = vpack.c.b16 %v401, %v401
      %v418 = vpack.c.b16 %v402, %v402
      %v419 = vpack.c.b16 %v403, %v403
      %vm420 = vsmask.f32 7424
      %v422 = vshrl.u32 %v356, 16
      %v424 = vshll.u32 %v356, 16
      %v426 = vrot.slane %v424, 1
      %v427 = vor.u32 %v422, %v426
      %v429 = vshll.u32 %v404, 16
      %v431 = vrot.slane %v429, 1
      %v432 = vsel %vm420, %v427, %v431
      %v434 = vshrl.u32 %v357, 16
      %v436 = vshll.u32 %v357, 16
      %v438 = vrot.slane %v436, 1
      %v439 = vor.u32 %v434, %v438
      %v441 = vshll.u32 %v405, 16
      %v443 = vrot.slane %v441, 1
      %v444 = vsel %vm420, %v439, %v443
      %v446 = vshrl.u32 %v358, 16
      %v448 = vshll.u32 %v358, 16
      %v450 = vrot.slane %v448, 1
      %v451 = vor.u32 %v446, %v450
      %v453 = vshll.u32 %v406, 16
      %v455 = vrot.slane %v453, 1
      %v456 = vsel %vm420, %v451, %v455
      %v458 = vshrl.u32 %v359, 16
      %v460 = vshll.u32 %v359, 16
      %v462 = vrot.slane %v460, 1
      %v463 = vor.u32 %v458, %v462
      %v465 = vshll.u32 %v407, 16
      %v467 = vrot.slane %v465, 1
      %v468 = vsel %vm420, %v463, %v467
      %v470 = vshrl.u32 %v360, 16
      %v472 = vshll.u32 %v360, 16
      %v474 = vrot.slane %v472, 1
      %v475 = vor.u32 %v470, %v474
      %v477 = vshll.u32 %v408, 16
      %v479 = vrot.slane %v477, 1
      %v480 = vsel %vm420, %v475, %v479
      %v482 = vshrl.u32 %v361, 16
      %v484 = vshll.u32 %v361, 16
      %v486 = vrot.slane %v484, 1
      %v487 = vor.u32 %v482, %v486
      %v489 = vshll.u32 %v409, 16
      %v491 = vrot.slane %v489, 1
      %v492 = vsel %vm420, %v487, %v491
      %v494 = vshrl.u32 %v362, 16
      %v496 = vshll.u32 %v362, 16
      %v498 = vrot.slane %v496, 1
      %v499 = vor.u32 %v494, %v498
      %v501 = vshll.u32 %v410, 16
      %v503 = vrot.slane %v501, 1
      %v504 = vsel %vm420, %v499, %v503
      %v506 = vshrl.u32 %v363, 16
      %v508 = vshll.u32 %v363, 16
      %v510 = vrot.slane %v508, 1
      %v511 = vor.u32 %v506, %v510
      %v513 = vshll.u32 %v411, 16
      %v515 = vrot.slane %v513, 1
      %v516 = vsel %vm420, %v511, %v515
      %v518 = vshrl.u32 %v364, 16
      %v520 = vshll.u32 %v364, 16
      %v522 = vrot.slane %v520, 1
      %v523 = vor.u32 %v518, %v522
      %v525 = vshll.u32 %v412, 16
      %v527 = vrot.slane %v525, 1
      %v528 = vsel %vm420, %v523, %v527
      %v530 = vshrl.u32 %v365, 16
      %v532 = vshll.u32 %v365, 16
      %v534 = vrot.slane %v532, 1
      %v535 = vor.u32 %v530, %v534
      %v537 = vshll.u32 %v413, 16
      %v539 = vrot.slane %v537, 1
      %v540 = vsel %vm420, %v535, %v539
      %v542 = vshrl.u32 %v366, 16
      %v544 = vshll.u32 %v366, 16
      %v546 = vrot.slane %v544, 1
      %v547 = vor.u32 %v542, %v546
      %v549 = vshll.u32 %v414, 16
      %v551 = vrot.slane %v549, 1
      %v552 = vsel %vm420, %v547, %v551
      %v554 = vshrl.u32 %v367, 16
      %v556 = vshll.u32 %v367, 16
      %v558 = vrot.slane %v556, 1
      %v559 = vor.u32 %v554, %v558
      %v561 = vshll.u32 %v415, 16
      %v563 = vrot.slane %v561, 1
      %v564 = vsel %vm420, %v559, %v563
      %v566 = vshrl.u32 %v368, 16
      %v568 = vshll.u32 %v368, 16
      %v570 = vrot.slane %v568, 1
      %v571 = vor.u32 %v566, %v570
      %v573 = vshll.u32 %v416, 16
      %v575 = vrot.slane %v573, 1
      %v576 = vsel %vm420, %v571, %v575
      %v578 = vshrl.u32 %v369, 16
      %v580 = vshll.u32 %v369, 16
      %v582 = vrot.slane %v580, 1
      %v583 = vor.u32 %v578, %v582
      %v585 = vshll.u32 %v417, 16
      %v587 = vrot.slane %v585, 1
      %v588 = vsel %vm420, %v583, %v587
      %v590 = vshrl.u32 %v370, 16
      %v592 = vshll.u32 %v370, 16
      %v594 = vrot.slane %v592, 1
      %v595 = vor.u32 %v590, %v594
      %v597 = vshll.u32 %v418, 16
      %v599 = vrot.slane %v597, 1
      %v600 = vsel %vm420, %v595, %v599
      %v602 = vshrl.u32 %v371, 16
      %v604 = vshll.u32 %v371, 16
      %v606 = vrot.slane %v604, 1
      %v607 = vor.u32 %v602, %v606
      %v609 = vshll.u32 %v419, 16
      %v611 = vrot.slane %v609, 1
      %v612 = vsel %vm420, %v607, %v611
      %613 = vrot.lane.b32.xlu0 %v432, 4
      %v614 = vpop.permute.xlu0 %613
      %615 = vrot.lane.b32.xlu0 %v444, 4
      %v616 = vpop.permute.xlu0 %615
      %617 = vrot.lane.b32.xlu0 %v456, 4
      %v618 = vpop.permute.xlu0 %617
      %619 = vrot.lane.b32.xlu0 %v468, 4
      %v620 = vpop.permute.xlu0 %619
      %621 = vrot.lane.b32.xlu0 %v480, 4
      %v622 = vpop.permute.xlu0 %621
      %623 = vrot.lane.b32.xlu0 %v492, 4
      %v624 = vpop.permute.xlu0 %623
      %625 = vrot.lane.b32.xlu0 %v504, 4
      %v626 = vpop.permute.xlu0 %625
      %627 = vrot.lane.b32.xlu0 %v516, 4
      %v628 = vpop.permute.xlu0 %627
      %629 = vrot.lane.b32.xlu0 %v528, 4
      %v630 = vpop.permute.xlu0 %629
      %631 = vrot.lane.b32.xlu0 %v540, 4
      %v632 = vpop.permute.xlu0 %631
      %633 = vrot.lane.b32.xlu0 %v552, 4
      %v634 = vpop.permute.xlu0 %633
      %635 = vrot.lane.b32.xlu0 %v564, 4
      %v636 = vpop.permute.xlu0 %635
      %637 = vrot.lane.b32.xlu0 %v576, 4
      %v638 = vpop.permute.xlu0 %637
      %639 = vrot.lane.b32.xlu0 %v588, 4
      %v640 = vpop.permute.xlu0 %639
      %641 = vrot.lane.b32.xlu0 %v600, 4
      %v642 = vpop.permute.xlu0 %641
      %643 = vrot.lane.b32.xlu0 %v612, 4
      %v644 = vpop.permute.xlu0 %643
      %vm645 = vcmask 1046528
      %v646 = vrot.slane %v356, 1
      %v647 = vrot.slane %v404, 1
      %v648 = vsel %vm645, %v646, %v647
      %v649 = vrot.slane %v357, 1
      %v650 = vrot.slane %v405, 1
      %v651 = vsel %vm645, %v649, %v650
      %v652 = vrot.slane %v358, 1
      %v653 = vrot.slane %v406, 1
      %v654 = vsel %vm645, %v652, %v653
      %v655 = vrot.slane %v359, 1
      %v656 = vrot.slane %v407, 1
      %v657 = vsel %vm645, %v655, %v656
      %v658 = vrot.slane %v360, 1
      %v659 = vrot.slane %v408, 1
      %v660 = vsel %vm645, %v658, %v659
      %v661 = vrot.slane %v361, 1
      %v662 = vrot.slane %v409, 1
      %v663 = vsel %vm645, %v661, %v662
      %v664 = vrot.slane %v362, 1
      %v665 = vrot.slane %v410, 1
      %v666 = vsel %vm645, %v664, %v665
      %v667 = vrot.slane %v363, 1
      %v668 = vrot.slane %v411, 1
      %v669 = vsel %vm645, %v667, %v668
      %v670 = vrot.slane %v364, 1
      %v671 = vrot.slane %v412, 1
      %v672 = vsel %vm645, %v670, %v671
      %v673 = vrot.slane %v365, 1
      %v674 = vrot.slane %v413, 1
      %v675 = vsel %vm645, %v673, %v674
      %v676 = vrot.slane %v366, 1
      %v677 = vrot.slane %v414, 1
      %v678 = vsel %vm645, %v676, %v677
      %v679 = vrot.slane %v367, 1
      %v680 = vrot.slane %v415, 1
      %v681 = vsel %vm645, %v679, %v680
      %v682 = vrot.slane %v368, 1
      %v683 = vrot.slane %v416, 1
      %v684 = vsel %vm645, %v682, %v683
      %v685 = vrot.slane %v369, 1
      %v686 = vrot.slane %v417, 1
      %v687 = vsel %vm645, %v685, %v686
      %v688 = vrot.slane %v370, 1
      %v689 = vrot.slane %v418, 1
      %v690 = vsel %vm645, %v688, %v689
      %v691 = vrot.slane %v371, 1
      %v692 = vrot.slane %v419, 1
      %v693 = vsel %vm645, %v691, %v692
      %694 = vrot.lane.b32.xlu0 %v648, 8
      %v695 = vpop.permute.xlu0 %694
      %696 = vrot.lane.b32.xlu0 %v651, 8
      %v697 = vpop.permute.xlu0 %696
      %698 = vrot.lane.b32.xlu0 %v654, 8
      %v699 = vpop.permute.xlu0 %698
      %700 = vrot.lane.b32.xlu0 %v657, 8
      %v701 = vpop.permute.xlu0 %700
      %702 = vrot.lane.b32.xlu0 %v660, 8
      %v703 = vpop.permute.xlu0 %702
      %704 = vrot.lane.b32.xlu0 %v663, 8
      %v705 = vpop.permute.xlu0 %704
      %706 = vrot.lane.b32.xlu0 %v666, 8
      %v707 = vpop.permute.xlu0 %706
      %708 = vrot.lane.b32.xlu0 %v669, 8
      %v709 = vpop.permute.xlu0 %708
      %710 = vrot.lane.b32.xlu0 %v672, 8
      %v711 = vpop.permute.xlu0 %710
      %712 = vrot.lane.b32.xlu0 %v675, 8
      %v713 = vpop.permute.xlu0 %712
      %714 = vrot.lane.b32.xlu0 %v678, 8
      %v715 = vpop.permute.xlu0 %714
      %716 = vrot.lane.b32.xlu0 %v681, 8
      %v717 = vpop.permute.xlu0 %716
      %718 = vrot.lane.b32.xlu0 %v684, 8
      %v719 = vpop.permute.xlu0 %718
      %720 = vrot.lane.b32.xlu0 %v687, 8
      %v721 = vpop.permute.xlu0 %720
      %722 = vrot.lane.b32.xlu0 %v690, 8
      %v723 = vpop.permute.xlu0 %722
      %724 = vrot.lane.b32.xlu0 %v693, 8
      %v725 = vpop.permute.xlu0 %724
      %v728 = vunpack.c.l.b16 %v286
      %v729 = vunpack.c.l.b16 %v287
      %v730 = vpack.c.b16 %v729, %v728
      %731 = vrot.lane.b32.xlu0 %v357, 12
      %v732 = vpop.permute.xlu0 %731
      %733 = vrot.lane.b32.xlu0 %v358, 12
      %v734 = vpop.permute.xlu0 %733
      %735 = vrot.lane.b32.xlu0 %v359, 12
      %v736 = vpop.permute.xlu0 %735
      %737 = vrot.lane.b32.xlu0 %v360, 12
      %v738 = vpop.permute.xlu0 %737
      %739 = vrot.lane.b32.xlu0 %v361, 12
      %v740 = vpop.permute.xlu0 %739
      %741 = vrot.lane.b32.xlu0 %v362, 12
      %v742 = vpop.permute.xlu0 %741
      %743 = vrot.lane.b32.xlu0 %v363, 12
      %v744 = vpop.permute.xlu0 %743
      %745 = vrot.lane.b32.xlu0 %v364, 12
      %v746 = vpop.permute.xlu0 %745
      %747 = vrot.lane.b32.xlu0 %v365, 12
      %v748 = vpop.permute.xlu0 %747
      %749 = vrot.lane.b32.xlu0 %v366, 12
      %v750 = vpop.permute.xlu0 %749
      %751 = vrot.lane.b32.xlu0 %v367, 12
      %v752 = vpop.permute.xlu0 %751
      %753 = vrot.lane.b32.xlu0 %v368, 12
      %v754 = vpop.permute.xlu0 %753
      %755 = vrot.lane.b32.xlu0 %v369, 12
      %v756 = vpop.permute.xlu0 %755
      %757 = vrot.lane.b32.xlu0 %v370, 12
      %v758 = vpop.permute.xlu0 %757
      %759 = vrot.lane.b32.xlu0 %v371, 12
      %v760 = vpop.permute.xlu0 %759
      %761 = vrot.lane.b32.xlu0 %v730, 12
      %v762 = vpop.permute.xlu0 %761
      %v764 = vunpack.c.l.b16 %v288
      %v765 = vpack.c.b16 %v764, %v764
      %v767 = vshrl.u32 %v730, 16
      %v769 = vshll.u32 %v730, 16
      %v771 = vrot.slane %v769, 1
      %v772 = vor.u32 %v767, %v771
      %v774 = vshll.u32 %v765, 16
      %v776 = vrot.slane %v774, 1
      %v777 = vsel %vm420, %v772, %v776
      %778 = vrot.lane.b32.xlu0 %v444, 16
      %v779 = vpop.permute.xlu0 %778
      %780 = vrot.lane.b32.xlu0 %v456, 16
      %v781 = vpop.permute.xlu0 %780
      %782 = vrot.lane.b32.xlu0 %v468, 16
      %v783 = vpop.permute.xlu0 %782
      %784 = vrot.lane.b32.xlu0 %v480, 16
      %v785 = vpop.permute.xlu0 %784
      %786 = vrot.lane.b32.xlu0 %v492, 16
      %v787 = vpop.permute.xlu0 %786
      %788 = vrot.lane.b32.xlu0 %v504, 16
      %v789 = vpop.permute.xlu0 %788
      %790 = vrot.lane.b32.xlu0 %v516, 16
      %v791 = vpop.permute.xlu0 %790
      %792 = vrot.lane.b32.xlu0 %v528, 16
      %v793 = vpop.permute.xlu0 %792
      %794 = vrot.lane.b32.xlu0 %v540, 16
      %v795 = vpop.permute.xlu0 %794
      %796 = vrot.lane.b32.xlu0 %v552, 16
      %v797 = vpop.permute.xlu0 %796
      %798 = vrot.lane.b32.xlu0 %v564, 16
      %v799 = vpop.permute.xlu0 %798
      %800 = vrot.lane.b32.xlu0 %v576, 16
      %v801 = vpop.permute.xlu0 %800
      %802 = vrot.lane.b32.xlu0 %v588, 16
      %v803 = vpop.permute.xlu0 %802
      %804 = vrot.lane.b32.xlu0 %v600, 16
      %v805 = vpop.permute.xlu0 %804
      %806 = vrot.lane.b32.xlu0 %v612, 16
      %v807 = vpop.permute.xlu0 %806
      %808 = vrot.lane.b32.xlu0 %v777, 16
      %v809 = vpop.permute.xlu0 %808
      %v810 = vrot.slane %v730, 1
      %v811 = vrot.slane %v765, 1
      %v812 = vsel %vm645, %v810, %v811
      %813 = vrot.lane.b32.xlu0 %v651, 20
      %v814 = vpop.permute.xlu0 %813
      %815 = vrot.lane.b32.xlu0 %v654, 20
      %v816 = vpop.permute.xlu0 %815
      %817 = vrot.lane.b32.xlu0 %v657, 20
      %v818 = vpop.permute.xlu0 %817
      %819 = vrot.lane.b32.xlu0 %v660, 20
      %v820 = vpop.permute.xlu0 %819
      %821 = vrot.lane.b32.xlu0 %v663, 20
      %v822 = vpop.permute.xlu0 %821
      %823 = vrot.lane.b32.xlu0 %v666, 20
      %v824 = vpop.permute.xlu0 %823
      %825 = vrot.lane.b32.xlu0 %v669, 20
      %v826 = vpop.permute.xlu0 %825
      %827 = vrot.lane.b32.xlu0 %v672, 20
      %v828 = vpop.permute.xlu0 %827
      %829 = vrot.lane.b32.xlu0 %v675, 20
      %v830 = vpop.permute.xlu0 %829
      %831 = vrot.lane.b32.xlu0 %v678, 20
      %v832 = vpop.permute.xlu0 %831
      %833 = vrot.lane.b32.xlu0 %v681, 20
      %v834 = vpop.permute.xlu0 %833
      %835 = vrot.lane.b32.xlu0 %v684, 20
      %v836 = vpop.permute.xlu0 %835
      %837 = vrot.lane.b32.xlu0 %v687, 20
      %v838 = vpop.permute.xlu0 %837
      %839 = vrot.lane.b32.xlu0 %v690, 20
      %v840 = vpop.permute.xlu0 %839
      %841 = vrot.lane.b32.xlu0 %v693, 20
      %v842 = vpop.permute.xlu0 %841
      %843 = vrot.lane.b32.xlu0 %v812, 20
      %v844 = vpop.permute.xlu0 %843
      %v847 = vunpack.c.l.b16 %v289
      %v848 = vunpack.c.l.b16 %v290
      %v849 = vpack.c.b16 %v848, %v847
      %850 = vrot.lane.b32.xlu0 %v358, 24
      %v851 = vpop.permute.xlu0 %850
      %852 = vrot.lane.b32.xlu0 %v359, 24
      %v853 = vpop.permute.xlu0 %852
      %854 = vrot.lane.b32.xlu0 %v360, 24
      %v855 = vpop.permute.xlu0 %854
      %856 = vrot.lane.b32.xlu0 %v361, 24
      %v857 = vpop.permute.xlu0 %856
      %858 = vrot.lane.b32.xlu0 %v362, 24
      %v859 = vpop.permute.xlu0 %858
      %860 = vrot.lane.b32.xlu0 %v363, 24
      %v861 = vpop.permute.xlu0 %860
      %862 = vrot.lane.b32.xlu0 %v364, 24
      %v863 = vpop.permute.xlu0 %862
      %864 = vrot.lane.b32.xlu0 %v365, 24
      %v865 = vpop.permute.xlu0 %864
      %866 = vrot.lane.b32.xlu0 %v366, 24
      %v867 = vpop.permute.xlu0 %866
      %868 = vrot.lane.b32.xlu0 %v367, 24
      %v869 = vpop.permute.xlu0 %868
      %870 = vrot.lane.b32.xlu0 %v368, 24
      %v871 = vpop.permute.xlu0 %870
      %872 = vrot.lane.b32.xlu0 %v369, 24
      %v873 = vpop.permute.xlu0 %872
      %874 = vrot.lane.b32.xlu0 %v370, 24
      %v875 = vpop.permute.xlu0 %874
      %876 = vrot.lane.b32.xlu0 %v371, 24
      %v877 = vpop.permute.xlu0 %876
      %878 = vrot.lane.b32.xlu0 %v730, 24
      %v879 = vpop.permute.xlu0 %878
      %880 = vrot.lane.b32.xlu0 %v849, 24
      %v881 = vpop.permute.xlu0 %880
      %v883 = vunpack.c.l.b16 %v291
      %v884 = vpack.c.b16 %v883, %v883
      %v886 = vshrl.u32 %v849, 16
      %v888 = vshll.u32 %v849, 16
      %v890 = vrot.slane %v888, 1
      %v891 = vor.u32 %v886, %v890
      %v893 = vshll.u32 %v884, 16
      %v895 = vrot.slane %v893, 1
      %v896 = vsel %vm420, %v891, %v895
      %897 = vrot.lane.b32.xlu0 %v456, 28
      %v898 = vpop.permute.xlu0 %897
      %899 = vrot.lane.b32.xlu0 %v468, 28
      %v900 = vpop.permute.xlu0 %899
      %901 = vrot.lane.b32.xlu0 %v480, 28
      %v902 = vpop.permute.xlu0 %901
      %903 = vrot.lane.b32.xlu0 %v492, 28
      %v904 = vpop.permute.xlu0 %903
      %905 = vrot.lane.b32.xlu0 %v504, 28
      %v906 = vpop.permute.xlu0 %905
      %907 = vrot.lane.b32.xlu0 %v516, 28
      %v908 = vpop.permute.xlu0 %907
      %909 = vrot.lane.b32.xlu0 %v528, 28
      %v910 = vpop.permute.xlu0 %909
      %911 = vrot.lane.b32.xlu0 %v540, 28
      %v912 = vpop.permute.xlu0 %911
      %913 = vrot.lane.b32.xlu0 %v552, 28
      %v914 = vpop.permute.xlu0 %913
      %915 = vrot.lane.b32.xlu0 %v564, 28
      %v916 = vpop.permute.xlu0 %915
      %917 = vrot.lane.b32.xlu0 %v576, 28
      %v918 = vpop.permute.xlu0 %917
      %919 = vrot.lane.b32.xlu0 %v588, 28
      %v920 = vpop.permute.xlu0 %919
      %921 = vrot.lane.b32.xlu0 %v600, 28
      %v922 = vpop.permute.xlu0 %921
      %923 = vrot.lane.b32.xlu0 %v612, 28
      %v924 = vpop.permute.xlu0 %923
      %925 = vrot.lane.b32.xlu0 %v777, 28
      %v926 = vpop.permute.xlu0 %925
      %927 = vrot.lane.b32.xlu0 %v896, 28
      %v928 = vpop.permute.xlu0 %927
      %v929 = vrot.slane %v849, 1
      %v930 = vrot.slane %v884, 1
      %v931 = vsel %vm645, %v929, %v930
      %932 = vrot.lane.b32.xlu0 %v654, 32
      %v933 = vpop.permute.xlu0 %932
      %934 = vrot.lane.b32.xlu0 %v657, 32
      %v935 = vpop.permute.xlu0 %934
      %936 = vrot.lane.b32.xlu0 %v660, 32
      %v937 = vpop.permute.xlu0 %936
      %938 = vrot.lane.b32.xlu0 %v663, 32
      %v939 = vpop.permute.xlu0 %938
      %940 = vrot.lane.b32.xlu0 %v666, 32
      %v941 = vpop.permute.xlu0 %940
      %942 = vrot.lane.b32.xlu0 %v669, 32
      %v943 = vpop.permute.xlu0 %942
      %944 = vrot.lane.b32.xlu0 %v672, 32
      %v945 = vpop.permute.xlu0 %944
      %946 = vrot.lane.b32.xlu0 %v675, 32
      %v947 = vpop.permute.xlu0 %946
      %948 = vrot.lane.b32.xlu0 %v678, 32
      %v949 = vpop.permute.xlu0 %948
      %950 = vrot.lane.b32.xlu0 %v681, 32
      %v951 = vpop.permute.xlu0 %950
      %952 = vrot.lane.b32.xlu0 %v684, 32
      %v953 = vpop.permute.xlu0 %952
      %954 = vrot.lane.b32.xlu0 %v687, 32
      %v955 = vpop.permute.xlu0 %954
      %956 = vrot.lane.b32.xlu0 %v690, 32
      %v957 = vpop.permute.xlu0 %956
      %958 = vrot.lane.b32.xlu0 %v693, 32
      %v959 = vpop.permute.xlu0 %958
      %960 = vrot.lane.b32.xlu0 %v812, 32
      %v961 = vpop.permute.xlu0 %960
      %962 = vrot.lane.b32.xlu0 %v931, 32
      %v963 = vpop.permute.xlu0 %962
      %vm964 = vcmask 31744
      %v966 = vsel %vm964, %v356, %v614
      %v968 = vsel %vm964, %v357, %v616
      %v970 = vsel %vm964, %v358, %v618
      %v972 = vsel %vm964, %v359, %v620
      %v974 = vsel %vm964, %v360, %v622
      %v976 = vsel %vm964, %v361, %v624
      %v978 = vsel %vm964, %v362, %v626
      %v980 = vsel %vm964, %v363, %v628
      %v982 = vsel %vm964, %v364, %v630
      %v984 = vsel %vm964, %v365, %v632
      %v986 = vsel %vm964, %v366, %v634
      %v988 = vsel %vm964, %v367, %v636
      %v990 = vsel %vm964, %v368, %v638
      %v992 = vsel %vm964, %v369, %v640
      %v994 = vsel %vm964, %v370, %v642
      %v996 = vsel %vm964, %v371, %v644
      %vm997 = vcmask 64512
      %v999 = vsel %vm997, %v966, %v695
      %v1001 = vsel %vm997, %v968, %v697
      %v1003 = vsel %vm997, %v970, %v699
      %v1005 = vsel %vm997, %v972, %v701
      %v1007 = vsel %vm997, %v974, %v703
      %v1009 = vsel %vm997, %v976, %v705
      %v1011 = vsel %vm997, %v978, %v707
      %v1013 = vsel %vm997, %v980, %v709
      %v1015 = vsel %vm997, %v982, %v711
      %v1017 = vsel %vm997, %v984, %v713
      %v1019 = vsel %vm997, %v986, %v715
      %v1021 = vsel %vm997, %v988, %v717
      %v1023 = vsel %vm997, %v990, %v719
      %v1025 = vsel %vm997, %v992, %v721
      %v1027 = vsel %vm997, %v994, %v723
      %v1029 = vsel %vm997, %v996, %v725
      %vm1030 = vcmask 97280
      %v1032 = vsel %vm1030, %v999, %v732
      %v1034 = vsel %vm1030, %v1001, %v734
      %v1036 = vsel %vm1030, %v1003, %v736
      %v1038 = vsel %vm1030, %v1005, %v738
      %v1040 = vsel %vm1030, %v1007, %v740
      %v1042 = vsel %vm1030, %v1009, %v742
      %v1044 = vsel %vm1030, %v1011, %v744
      %v1046 = vsel %vm1030, %v1013, %v746
      %v1048 = vsel %vm1030, %v1015, %v748
      %v1050 = vsel %vm1030, %v1017, %v750
      %v1052 = vsel %vm1030, %v1019, %v752
      %v1054 = vsel %vm1030, %v1021, %v754
      %v1056 = vsel %vm1030, %v1023, %v756
      %v1058 = vsel %vm1030, %v1025, %v758
      %v1060 = vsel %vm1030, %v1027, %v760
      %v1062 = vsel %vm1030, %v1029, %v762
      %vm1063 = vcmask 130048
      %v1065 = vsel %vm1063, %v1032, %v779
      %v1067 = vsel %vm1063, %v1034, %v781
      %v1069 = vsel %vm1063, %v1036, %v783
      %v1071 = vsel %vm1063, %v1038, %v785
      %v1073 = vsel %vm1063, %v1040, %v787
      %v1075 = vsel %vm1063, %v1042, %v789
      %v1077 = vsel %vm1063, %v1044, %v791
      %v1079 = vsel %vm1063, %v1046, %v793
      %v1081 = vsel %vm1063, %v1048, %v795
      %v1083 = vsel %vm1063, %v1050, %v797
      %v1085 = vsel %vm1063, %v1052, %v799
      %v1087 = vsel %vm1063, %v1054, %v801
      %v1089 = vsel %vm1063, %v1056, %v803
      %v1091 = vsel %vm1063, %v1058, %v805
      %v1093 = vsel %vm1063, %v1060, %v807
      %v1095 = vsel %vm1063, %v1062, %v809
      %vm1096 = vcmask 162816
      %v1098 = vsel %vm1096, %v1065, %v814
      %v1100 = vsel %vm1096, %v1067, %v816
      %v1102 = vsel %vm1096, %v1069, %v818
      %v1104 = vsel %vm1096, %v1071, %v820
      %v1106 = vsel %vm1096, %v1073, %v822
      %v1108 = vsel %vm1096, %v1075, %v824
      %v1110 = vsel %vm1096, %v1077, %v826
      %v1112 = vsel %vm1096, %v1079, %v828
      %v1114 = vsel %vm1096, %v1081, %v830
      %v1116 = vsel %vm1096, %v1083, %v832
      %v1118 = vsel %vm1096, %v1085, %v834
      %v1120 = vsel %vm1096, %v1087, %v836
      %v1122 = vsel %vm1096, %v1089, %v838
      %v1124 = vsel %vm1096, %v1091, %v840
      %v1126 = vsel %vm1096, %v1093, %v842
      %v1128 = vsel %vm1096, %v1095, %v844
      %vm1129 = vcmask 195584
      %v1131 = vsel %vm1129, %v1098, %v851
      %v1133 = vsel %vm1129, %v1100, %v853
      %v1135 = vsel %vm1129, %v1102, %v855
      %v1137 = vsel %vm1129, %v1104, %v857
      %v1139 = vsel %vm1129, %v1106, %v859
      %v1141 = vsel %vm1129, %v1108, %v861
      %v1143 = vsel %vm1129, %v1110, %v863
      %v1145 = vsel %vm1129, %v1112, %v865
      %v1147 = vsel %vm1129, %v1114, %v867
      %v1149 = vsel %vm1129, %v1116, %v869
      %v1151 = vsel %vm1129, %v1118, %v871
      %v1153 = vsel %vm1129, %v1120, %v873
      %v1155 = vsel %vm1129, %v1122, %v875
      %v1157 = vsel %vm1129, %v1124, %v877
      %v1159 = vsel %vm1129, %v1126, %v879
      %v1161 = vsel %vm1129, %v1128, %v881
      %vm1162 = vcmask 228352
      %v1164 = vsel %vm1162, %v1131, %v898
      %v1166 = vsel %vm1162, %v1133, %v900
      %v1168 = vsel %vm1162, %v1135, %v902
      %v1170 = vsel %vm1162, %v1137, %v904
      %v1172 = vsel %vm1162, %v1139, %v906
      %v1174 = vsel %vm1162, %v1141, %v908
      %v1176 = vsel %vm1162, %v1143, %v910
      %v1178 = vsel %vm1162, %v1145, %v912
      %v1180 = vsel %vm1162, %v1147, %v914
      %v1182 = vsel %vm1162, %v1149, %v916
      %v1184 = vsel %vm1162, %v1151, %v918
      %v1186 = vsel %vm1162, %v1153, %v920
      %v1188 = vsel %vm1162, %v1155, %v922
      %v1190 = vsel %vm1162, %v1157, %v924
      %v1192 = vsel %vm1162, %v1159, %v926
      %v1194 = vsel %vm1162, %v1161, %v928
      %vm1195 = vcmask 261120
      %v1197 = vsel %vm1195, %v1164, %v933
      %v1199 = vsel %vm1195, %v1166, %v935
      %v1201 = vsel %vm1195, %v1168, %v937
      %v1203 = vsel %vm1195, %v1170, %v939
      %v1205 = vsel %vm1195, %v1172, %v941
      %v1207 = vsel %vm1195, %v1174, %v943
      %v1209 = vsel %vm1195, %v1176, %v945
      %v1211 = vsel %vm1195, %v1178, %v947
      %v1213 = vsel %vm1195, %v1180, %v949
      %v1215 = vsel %vm1195, %v1182, %v951
      %v1217 = vsel %vm1195, %v1184, %v953
      %v1219 = vsel %vm1195, %v1186, %v955
      %v1221 = vsel %vm1195, %v1188, %v957
      %v1223 = vsel %vm1195, %v1190, %v959
      %v1225 = vsel %vm1195, %v1192, %v961
      %v1227 = vsel %vm1195, %v1194, %v963
      %v1228 = vld [vmem:[%s1] sm:$0xf]
      %v1229 = vld [vmem:[%s1 + $0x4] sm:$0xf]
      %v1230 = vld [vmem:[%s1 + $0x8] sm:$0xf]
      %v1231 = vld [vmem:[%s1 + $0xc] sm:$0xf]
      %v1232 = vld [vmem:[%s1 + $0x10] sm:$0x3]
      %v1238 = vunpack.c.l.b16 %v1228
      %v1239 = vunpack.c.l.b16 %v1229
      %v1240 = vunpack.c.l.b16 %v1230
      %v1241 = vunpack.c.l.b16 %v1231
      %v1242 = vunpack.c.l.b16 %v1232
      %v1243 = vpack.c.b16 %v1239, %v1238
      %v1244 = vpack.c.b16 %v1241, %v1240
      %v1245 = vpack.c.b16 %v1242, %v1242
      %vm1248 = vcmask 293888
      %v1249 = vsel %vm1248, %v1197, 0
      %v1251 = vsel %vm1248, %v1199, 0
      %v1253 = vsel %vm1248, %v1201, 0
      %v1255 = vsel %vm1248, %v1203, 0
      %v1257 = vsel %vm1248, %v1205, 0
      %v1259 = vsel %vm1248, %v1207, 0
      %v1261 = vsel %vm1248, %v1209, 0
      %v1263 = vsel %vm1248, %v1211, 0
      %v1265 = vsel %vm1248, %v1213, 0
      %v1267 = vsel %vm1248, %v1215, 0
      %v1269 = vsel %vm1248, %v1217, 0
      %v1271 = vsel %vm1248, %v1219, 0
      %v1273 = vsel %vm1248, %v1221, 0
      %v1275 = vsel %vm1248, %v1223, 0
      %v1277 = vsel %vm1248, %v1225, 0
      %v1279 = vsel %vm1248, %v1227, 0
      %vm1281 = vcmask 1041408
      %v1283 = vsel %vm1281, %v1245, 0
      %1285 = vmatpush.bf16.msra.mxu0 0
      %1286 = vmatpush.bf16.msra.mxu0 0
      %1287 = vmatpush.bf16.msra.mxu0 0
      %1288 = vmatpush.bf16.msra.mxu0 0
      %1289 = vmatpush.bf16.msra.mxu0 0
      %1290 = vmatpush.bf16.msra.mxu0 %v1283
      %1291 = vmatpush.bf16.msra.mxu0 %v1244
      %1292 = vmatpush.bf16.msra.mxu0 %v1243
      %1293 = vmatmul.bf16.gmra.mxu0 %v1249
      %v1294 = vpop.f32.mrf.mxu0
      %v1295 = vadd.f32 0.0, %v1294
      %v1296 = vpop.f32.mrf.mxu0
      %v1297 = vadd.f32 0.0, %v1296
      %1298 = vmatmul.bf16.gmra.mxu0 %v1251
      %v1299 = vpop.f32.mrf.mxu0
      %v1300 = vadd.f32 0.0, %v1299
      %v1301 = vpop.f32.mrf.mxu0
      %v1302 = vadd.f32 0.0, %v1301
      %1303 = vmatmul.bf16.gmra.mxu0 %v1253
      %v1304 = vpop.f32.mrf.mxu0
      %v1305 = vadd.f32 0.0, %v1304
      %v1306 = vpop.f32.mrf.mxu0
      %v1307 = vadd.f32 0.0, %v1306
      %1308 = vmatmul.bf16.gmra.mxu0 %v1255
      %v1309 = vpop.f32.mrf.mxu0
      %v1310 = vadd.f32 0.0, %v1309
      %v1311 = vpop.f32.mrf.mxu0
      %v1312 = vadd.f32 0.0, %v1311
      %1313 = vmatmul.bf16.gmra.mxu0 %v1257
      %v1314 = vpop.f32.mrf.mxu0
      %v1315 = vadd.f32 0.0, %v1314
      %v1316 = vpop.f32.mrf.mxu0
      %v1317 = vadd.f32 0.0, %v1316
      %1318 = vmatmul.bf16.gmra.mxu0 %v1259
      %v1319 = vpop.f32.mrf.mxu0
      %v1320 = vadd.f32 0.0, %v1319
      %v1321 = vpop.f32.mrf.mxu0
      %v1322 = vadd.f32 0.0, %v1321
      %1323 = vmatmul.bf16.gmra.mxu0 %v1261
      %v1324 = vpop.f32.mrf.mxu0
      %v1325 = vadd.f32 0.0, %v1324
      %v1326 = vpop.f32.mrf.mxu0
      %v1327 = vadd.f32 0.0, %v1326
      %1328 = vmatmul.bf16.gmra.mxu0 %v1263
      %v1329 = vpop.f32.mrf.mxu0
      %v1330 = vadd.f32 0.0, %v1329
      %v1331 = vpop.f32.mrf.mxu0
      %v1332 = vadd.f32 0.0, %v1331
      %1333 = vmatmul.bf16.gmra.mxu0 %v1265
      %v1334 = vpop.f32.mrf.mxu0
      %v1335 = vadd.f32 0.0, %v1334
      %v1336 = vpop.f32.mrf.mxu0
      %v1337 = vadd.f32 0.0, %v1336
      %1338 = vmatmul.bf16.gmra.mxu0 %v1267
      %v1339 = vpop.f32.mrf.mxu0
      %v1340 = vadd.f32 0.0, %v1339
      %v1341 = vpop.f32.mrf.mxu0
      %v1342 = vadd.f32 0.0, %v1341
      %1343 = vmatmul.bf16.gmra.mxu0 %v1269
      %v1344 = vpop.f32.mrf.mxu0
      %v1345 = vadd.f32 0.0, %v1344
      %v1346 = vpop.f32.mrf.mxu0
      %v1347 = vadd.f32 0.0, %v1346
      %1348 = vmatmul.bf16.gmra.mxu0 %v1271
      %v1349 = vpop.f32.mrf.mxu0
      %v1350 = vadd.f32 0.0, %v1349
      %v1351 = vpop.f32.mrf.mxu0
      %v1352 = vadd.f32 0.0, %v1351
      %1353 = vmatmul.bf16.gmra.mxu0 %v1273
      %v1354 = vpop.f32.mrf.mxu0
      %v1355 = vadd.f32 0.0, %v1354
      %v1356 = vpop.f32.mrf.mxu0
      %v1357 = vadd.f32 0.0, %v1356
      %1358 = vmatmul.bf16.gmra.mxu0 %v1275
      %v1359 = vpop.f32.mrf.mxu0
      %v1360 = vadd.f32 0.0, %v1359
      %v1361 = vpop.f32.mrf.mxu0
      %v1362 = vadd.f32 0.0, %v1361
      %1363 = vmatmul.bf16.gmra.mxu0 %v1277
      %v1364 = vpop.f32.mrf.mxu0
      %v1365 = vadd.f32 0.0, %v1364
      %v1366 = vpop.f32.mrf.mxu0
      %v1367 = vadd.f32 0.0, %v1366
      %1368 = vmatmul.bf16.gmra.mxu0 %v1279
      %v1369 = vpop.f32.mrf.mxu0
      %v1370 = vadd.f32 0.0, %v1369
      %v1371 = vpop.f32.mrf.mxu0
      %v1372 = vadd.f32 0.0, %v1371
      %1373 = vdwg.mxu0
      %v1374 = vmul.f32 %v1295, 0.5
      %v1375 = vmul.f32 %v1297, 0.5
      %v1376 = vmul.f32 %v1300, 0.5
      %v1377 = vmul.f32 %v1302, 0.5
      %v1378 = vmul.f32 %v1305, 0.5
      %v1379 = vmul.f32 %v1307, 0.5
      %v1380 = vmul.f32 %v1310, 0.5
      %v1381 = vmul.f32 %v1312, 0.5
      %v1382 = vmul.f32 %v1315, 0.5
      %v1383 = vmul.f32 %v1317, 0.5
      %v1384 = vmul.f32 %v1320, 0.5
      %v1385 = vmul.f32 %v1322, 0.5
      %v1386 = vmul.f32 %v1325, 0.5
      %v1387 = vmul.f32 %v1327, 0.5
      %v1388 = vmul.f32 %v1330, 0.5
      %v1389 = vmul.f32 %v1332, 0.5
      %v1390 = vmul.f32 %v1335, 0.5
      %v1391 = vmul.f32 %v1337, 0.5
      %v1392 = vmul.f32 %v1340, 0.5
      %v1393 = vmul.f32 %v1342, 0.5
      %v1394 = vmul.f32 %v1345, 0.5
      %v1395 = vmul.f32 %v1347, 0.5
      %v1396 = vmul.f32 %v1350, 0.5
      %v1397 = vmul.f32 %v1352, 0.5
      %v1398 = vmul.f32 %v1355, 0.5
      %v1399 = vmul.f32 %v1357, 0.5
      %v1400 = vmul.f32 %v1360, 0.5
      %v1401 = vmul.f32 %v1362, 0.5
      %v1402 = vmul.f32 %v1365, 0.5
      %v1403 = vmul.f32 %v1367, 0.5
      %v1404 = vmul.f32 %v1370, 0.5
      %v1405 = vmul.f32 %v1372, 0.5
      %v1406 = vmul.f32 %v1295, 0.70710677
      %v1407 = vmul.f32 %v1297, 0.70710677
      %v1408 = vmul.f32 %v1300, 0.70710677
      %v1409 = vmul.f32 %v1302, 0.70710677
      %v1410 = vmul.f32 %v1305, 0.70710677
      %v1411 = vmul.f32 %v1307, 0.70710677
      %v1412 = vmul.f32 %v1310, 0.70710677
      %v1413 = vmul.f32 %v1312, 0.70710677
      %v1414 = vmul.f32 %v1315, 0.70710677
      %v1415 = vmul.f32 %v1317, 0.70710677
      %v1416 = vmul.f32 %v1320, 0.70710677
      %v1417 = vmul.f32 %v1322, 0.70710677
      %v1418 = vmul.f32 %v1325, 0.70710677
      %v1419 = vmul.f32 %v1327, 0.70710677
      %v1420 = vmul.f32 %v1330, 0.70710677
      %v1421 = vmul.f32 %v1332, 0.70710677
      %v1422 = vmul.f32 %v1335, 0.70710677
      %v1423 = vmul.f32 %v1337, 0.70710677
      %v1424 = vmul.f32 %v1340, 0.70710677
      %v1425 = vmul.f32 %v1342, 0.70710677
      %v1426 = vmul.f32 %v1345, 0.70710677
      %v1427 = vmul.f32 %v1347, 0.70710677
      %v1428 = vmul.f32 %v1350, 0.70710677
      %v1429 = vmul.f32 %v1352, 0.70710677
      %v1430 = vmul.f32 %v1355, 0.70710677
      %v1431 = vmul.f32 %v1357, 0.70710677
      %v1432 = vmul.f32 %v1360, 0.70710677
      %v1433 = vmul.f32 %v1362, 0.70710677
      %v1434 = vmul.f32 %v1365, 0.70710677
      %v1435 = vmul.f32 %v1367, 0.70710677
      %v1436 = vmul.f32 %v1370, 0.70710677
      %v1437 = vmul.f32 %v1372, 0.70710677
      %v1438 = vmul.f32 %v1406, %v1406
      %v1439 = vmin.f32 16.0, %v1438
      %v1440 = vmul.f32 %v1439, 2.1237322e-06
      %v1441 = vadd.f32 %v1440, 0.00028619796
      %v1442 = vmul.f32 %v1439, %v1441
      %v1443 = vadd.f32 %v1442, 0.0036580483
      %v1444 = vmul.f32 %v1439, %v1443
      %v1445 = vadd.f32 %v1444, 0.05243302
      %v1446 = vmul.f32 %v1439, %v1445
      %v1447 = vadd.f32 %v1446, 0.18741608
      %v1448 = vmul.f32 %v1439, %v1447
      %v1449 = vadd.f32 %v1448, 1.1283791
      %v1450 = vmul.f32 %v1406, %v1449
      %v1451 = vmul.f32 %v1439, 3.8918573e-05
      %v1452 = vadd.f32 %v1451, 0.001143296
      %v1453 = vmul.f32 %v1439, %v1452
      %v1454 = vadd.f32 %v1453, 0.014752088
      %v1455 = vmul.f32 %v1439, %v1454
      %v1456 = vadd.f32 %v1455, 0.112945676
      %v1457 = vmul.f32 %v1439, %v1456
      %v1458 = vadd.f32 %v1457, 0.4994258
      %v1459 = vmul.f32 %v1439, %v1458
      %v1460 = vadd.f32 %v1459, 1.0
      %v1461 = vrcp.pop %v1460
      %v1462 = vmul.f32 %v1460, %v1461
      %v1463 = vsub.f32 1.0, %v1462
      %v1464 = vmul.f32 %v1461, %v1463
      %v1465 = vadd.f32 %v1461, %v1464
      %vm1466 = vweird.f32 %v1460
      %vm1467 = vweird.f32 %v1461
      %vm1468 = vmor %vm1466, %vm1467
      %v1469 = vsel %vm1468, %v1461, %v1465
      %v1470 = vand.u32 2147483647, %v1460
      %vm1471 = vcmp.eq.f32.partialorder %v1470, 8.507059e+37
      %v1472 = vand.u32 %v1460, 2147483648
      %v1473 = vor.u32 1.1754944e-38, %v1472
      %v1474 = vsel %vm1471, %v1473, %v1469
      %v1475 = vmul.f32 %v1450, %v1474
      %v1476 = vmin.f32 %v1475, 1.0
      %v1477 = vmax.f32 %v1476, -1.0
      %v1478 = vmul.f32 %v1407, %v1407
      %v1479 = vmin.f32 16.0, %v1478
      %v1480 = vmul.f32 %v1479, 2.1237322e-06
      %v1481 = vadd.f32 %v1480, 0.00028619796
      %v1482 = vmul.f32 %v1479, %v1481
      %v1483 = vadd.f32 %v1482, 0.0036580483
      %v1484 = vmul.f32 %v1479, %v1483
      %v1485 = vadd.f32 %v1484, 0.05243302
      %v1486 = vmul.f32 %v1479, %v1485
      %v1487 = vadd.f32 %v1486, 0.18741608
      %v1488 = vmul.f32 %v1479, %v1487
      %v1489 = vadd.f32 %v1488, 1.1283791
      %v1490 = vmul.f32 %v1407, %v1489
      %v1491 = vmul.f32 %v1479, 3.8918573e-05
      %v1492 = vadd.f32 %v1491, 0.001143296
      %v1493 = vmul.f32 %v1479, %v1492
      %v1494 = vadd.f32 %v1493, 0.014752088
      %v1495 = vmul.f32 %v1479, %v1494
      %v1496 = vadd.f32 %v1495, 0.112945676
      %v1497 = vmul.f32 %v1479, %v1496
      %v1498 = vadd.f32 %v1497, 0.4994258
      %v1499 = vmul.f32 %v1479, %v1498
      %v1500 = vadd.f32 %v1499, 1.0
      %v1501 = vrcp.pop %v1500
      %v1502 = vmul.f32 %v1500, %v1501
      %v1503 = vsub.f32 1.0, %v1502
      %v1504 = vmul.f32 %v1501, %v1503
      %v1505 = vadd.f32 %v1501, %v1504
      %vm1506 = vweird.f32 %v1500
      %vm1507 = vweird.f32 %v1501
      %vm1508 = vmor %vm1506, %vm1507
      %v1509 = vsel %vm1508, %v1501, %v1505
      %v1510 = vand.u32 2147483647, %v1500
      %vm1511 = vcmp.eq.f32.partialorder %v1510, 8.507059e+37
      %v1512 = vand.u32 %v1500, 2147483648
      %v1513 = vor.u32 1.1754944e-38, %v1512
      %v1514 = vsel %vm1511, %v1513, %v1509
      %v1515 = vmul.f32 %v1490, %v1514
      %v1516 = vmin.f32 %v1515, 1.0
      %v1517 = vmax.f32 %v1516, -1.0
      %v1518 = vmul.f32 %v1408, %v1408
      %v1519 = vmin.f32 16.0, %v1518
      %v1520 = vmul.f32 %v1519, 2.1237322e-06
      %v1521 = vadd.f32 %v1520, 0.00028619796
      %v1522 = vmul.f32 %v1519, %v1521
      %v1523 = vadd.f32 %v1522, 0.0036580483
      %v1524 = vmul.f32 %v1519, %v1523
      %v1525 = vadd.f32 %v1524, 0.05243302
      %v1526 = vmul.f32 %v1519, %v1525
      %v1527 = vadd.f32 %v1526, 0.18741608
      %v1528 = vmul.f32 %v1519, %v1527
      %v1529 = vadd.f32 %v1528, 1.1283791
      %v1530 = vmul.f32 %v1408, %v1529
      %v1531 = vmul.f32 %v1519, 3.8918573e-05
      %v1532 = vadd.f32 %v1531, 0.001143296
      %v1533 = vmul.f32 %v1519, %v1532
      %v1534 = vadd.f32 %v1533, 0.014752088
      %v1535 = vmul.f32 %v1519, %v1534
      %v1536 = vadd.f32 %v1535, 0.112945676
      %v1537 = vmul.f32 %v1519, %v1536
      %v1538 = vadd.f32 %v1537, 0.4994258
      %v1539 = vmul.f32 %v1519, %v1538
      %v1540 = vadd.f32 %v1539, 1.0
      %v1541 = vrcp.pop %v1540
      %v1542 = vmul.f32 %v1540, %v1541
      %v1543 = vsub.f32 1.0, %v1542
      %v1544 = vmul.f32 %v1541, %v1543
      %v1545 = vadd.f32 %v1541, %v1544
      %vm1546 = vweird.f32 %v1540
      %vm1547 = vweird.f32 %v1541
      %vm1548 = vmor %vm1546, %vm1547
      %v1549 = vsel %vm1548, %v1541, %v1545
      %v1550 = vand.u32 2147483647, %v1540
      %vm1551 = vcmp.eq.f32.partialorder %v1550, 8.507059e+37
      %v1552 = vand.u32 %v1540, 2147483648
      %v1553 = vor.u32 1.1754944e-38, %v1552
      %v1554 = vsel %vm1551, %v1553, %v1549
      %v1555 = vmul.f32 %v1530, %v1554
      %v1556 = vmin.f32 %v1555, 1.0
      %v1557 = vmax.f32 %v1556, -1.0
      %v1558 = vmul.f32 %v1409, %v1409
      %v1559 = vmin.f32 16.0, %v1558
      %v1560 = vmul.f32 %v1559, 2.1237322e-06
      %v1561 = vadd.f32 %v1560, 0.00028619796
      %v1562 = vmul.f32 %v1559, %v1561
      %v1563 = vadd.f32 %v1562, 0.0036580483
      %v1564 = vmul.f32 %v1559, %v1563
      %v1565 = vadd.f32 %v1564, 0.05243302
      %v1566 = vmul.f32 %v1559, %v1565
      %v1567 = vadd.f32 %v1566, 0.18741608
      %v1568 = vmul.f32 %v1559, %v1567
      %v1569 = vadd.f32 %v1568, 1.1283791
      %v1570 = vmul.f32 %v1409, %v1569
      %v1571 = vmul.f32 %v1559, 3.8918573e-05
      %v1572 = vadd.f32 %v1571, 0.001143296
      %v1573 = vmul.f32 %v1559, %v1572
      %v1574 = vadd.f32 %v1573, 0.014752088
      %v1575 = vmul.f32 %v1559, %v1574
      %v1576 = vadd.f32 %v1575, 0.112945676
      %v1577 = vmul.f32 %v1559, %v1576
      %v1578 = vadd.f32 %v1577, 0.4994258
      %v1579 = vmul.f32 %v1559, %v1578
      %v1580 = vadd.f32 %v1579, 1.0
      %v1581 = vrcp.pop %v1580
      %v1582 = vmul.f32 %v1580, %v1581
      %v1583 = vsub.f32 1.0, %v1582
      %v1584 = vmul.f32 %v1581, %v1583
      %v1585 = vadd.f32 %v1581, %v1584
      %vm1586 = vweird.f32 %v1580
      %vm1587 = vweird.f32 %v1581
      %vm1588 = vmor %vm1586, %vm1587
      %v1589 = vsel %vm1588, %v1581, %v1585
      %v1590 = vand.u32 2147483647, %v1580
      %vm1591 = vcmp.eq.f32.partialorder %v1590, 8.507059e+37
      %v1592 = vand.u32 %v1580, 2147483648
      %v1593 = vor.u32 1.1754944e-38, %v1592
      %v1594 = vsel %vm1591, %v1593, %v1589
      %v1595 = vmul.f32 %v1570, %v1594
      %v1596 = vmin.f32 %v1595, 1.0
      %v1597 = vmax.f32 %v1596, -1.0
      %v1598 = vmul.f32 %v1410, %v1410
      %v1599 = vmin.f32 16.0, %v1598
      %v1600 = vmul.f32 %v1599, 2.1237322e-06
      %v1601 = vadd.f32 %v1600, 0.00028619796
      %v1602 = vmul.f32 %v1599, %v1601
      %v1603 = vadd.f32 %v1602, 0.0036580483
      %v1604 = vmul.f32 %v1599, %v1603
      %v1605 = vadd.f32 %v1604, 0.05243302
      %v1606 = vmul.f32 %v1599, %v1605
      %v1607 = vadd.f32 %v1606, 0.18741608
      %v1608 = vmul.f32 %v1599, %v1607
      %v1609 = vadd.f32 %v1608, 1.1283791
      %v1610 = vmul.f32 %v1410, %v1609
      %v1611 = vmul.f32 %v1599, 3.8918573e-05
      %v1612 = vadd.f32 %v1611, 0.001143296
      %v1613 = vmul.f32 %v1599, %v1612
      %v1614 = vadd.f32 %v1613, 0.014752088
      %v1615 = vmul.f32 %v1599, %v1614
      %v1616 = vadd.f32 %v1615, 0.112945676
      %v1617 = vmul.f32 %v1599, %v1616
      %v1618 = vadd.f32 %v1617, 0.4994258
      %v1619 = vmul.f32 %v1599, %v1618
      %v1620 = vadd.f32 %v1619, 1.0
      %v1621 = vrcp.pop %v1620
      %v1622 = vmul.f32 %v1620, %v1621
      %v1623 = vsub.f32 1.0, %v1622
      %v1624 = vmul.f32 %v1621, %v1623
      %v1625 = vadd.f32 %v1621, %v1624
      %vm1626 = vweird.f32 %v1620
      %vm1627 = vweird.f32 %v1621
      %vm1628 = vmor %vm1626, %vm1627
      %v1629 = vsel %vm1628, %v1621, %v1625
      %v1630 = vand.u32 2147483647, %v1620
      %vm1631 = vcmp.eq.f32.partialorder %v1630, 8.507059e+37
      %v1632 = vand.u32 %v1620, 2147483648
      %v1633 = vor.u32 1.1754944e-38, %v1632
      %v1634 = vsel %vm1631, %v1633, %v1629
      %v1635 = vmul.f32 %v1610, %v1634
      %v1636 = vmin.f32 %v1635, 1.0
      %v1637 = vmax.f32 %v1636, -1.0
      %v1638 = vmul.f32 %v1411, %v1411
      %v1639 = vmin.f32 16.0, %v1638
      %v1640 = vmul.f32 %v1639, 2.1237322e-06
      %v1641 = vadd.f32 %v1640, 0.00028619796
      %v1642 = vmul.f32 %v1639, %v1641
      %v1643 = vadd.f32 %v1642, 0.0036580483
      %v1644 = vmul.f32 %v1639, %v1643
      %v1645 = vadd.f32 %v1644, 0.05243302
      %v1646 = vmul.f32 %v1639, %v1645
      %v1647 = vadd.f32 %v1646, 0.18741608
      %v1648 = vmul.f32 %v1639, %v1647
      %v1649 = vadd.f32 %v1648, 1.1283791
      %v1650 = vmul.f32 %v1411, %v1649
      %v1651 = vmul.f32 %v1639, 3.8918573e-05
      %v1652 = vadd.f32 %v1651, 0.001143296
      %v1653 = vmul.f32 %v1639, %v1652
      %v1654 = vadd.f32 %v1653, 0.014752088
      %v1655 = vmul.f32 %v1639, %v1654
      %v1656 = vadd.f32 %v1655, 0.112945676
      %v1657 = vmul.f32 %v1639, %v1656
      %v1658 = vadd.f32 %v1657, 0.4994258
      %v1659 = vmul.f32 %v1639, %v1658
      %v1660 = vadd.f32 %v1659, 1.0
      %v1661 = vrcp.pop %v1660
      %v1662 = vmul.f32 %v1660, %v1661
      %v1663 = vsub.f32 1.0, %v1662
      %v1664 = vmul.f32 %v1661, %v1663
      %v1665 = vadd.f32 %v1661, %v1664
      %vm1666 = vweird.f32 %v1660
      %vm1667 = vweird.f32 %v1661
      %vm1668 = vmor %vm1666, %vm1667
      %v1669 = vsel %vm1668, %v1661, %v1665
      %v1670 = vand.u32 2147483647, %v1660
      %vm1671 = vcmp.eq.f32.partialorder %v1670, 8.507059e+37
      %v1672 = vand.u32 %v1660, 2147483648
      %v1673 = vor.u32 1.1754944e-38, %v1672
      %v1674 = vsel %vm1671, %v1673, %v1669
      %v1675 = vmul.f32 %v1650, %v1674
      %v1676 = vmin.f32 %v1675, 1.0
      %v1677 = vmax.f32 %v1676, -1.0
      %v1678 = vmul.f32 %v1412, %v1412
      %v1679 = vmin.f32 16.0, %v1678
      %v1680 = vmul.f32 %v1679, 2.1237322e-06
      %v1681 = vadd.f32 %v1680, 0.00028619796
      %v1682 = vmul.f32 %v1679, %v1681
      %v1683 = vadd.f32 %v1682, 0.0036580483
      %v1684 = vmul.f32 %v1679, %v1683
      %v1685 = vadd.f32 %v1684, 0.05243302
      %v1686 = vmul.f32 %v1679, %v1685
      %v1687 = vadd.f32 %v1686, 0.18741608
      %v1688 = vmul.f32 %v1679, %v1687
      %v1689 = vadd.f32 %v1688, 1.1283791
      %v1690 = vmul.f32 %v1412, %v1689
      %v1691 = vmul.f32 %v1679, 3.8918573e-05
      %v1692 = vadd.f32 %v1691, 0.001143296
      %v1693 = vmul.f32 %v1679, %v1692
      %v1694 = vadd.f32 %v1693, 0.014752088
      %v1695 = vmul.f32 %v1679, %v1694
      %v1696 = vadd.f32 %v1695, 0.112945676
      %v1697 = vmul.f32 %v1679, %v1696
      %v1698 = vadd.f32 %v1697, 0.4994258
      %v1699 = vmul.f32 %v1679, %v1698
      %v1700 = vadd.f32 %v1699, 1.0
      %v1701 = vrcp.pop %v1700
      %v1702 = vmul.f32 %v1700, %v1701
      %v1703 = vsub.f32 1.0, %v1702
      %v1704 = vmul.f32 %v1701, %v1703
      %v1705 = vadd.f32 %v1701, %v1704
      %vm1706 = vweird.f32 %v1700
      %vm1707 = vweird.f32 %v1701
      %vm1708 = vmor %vm1706, %vm1707
      %v1709 = vsel %vm1708, %v1701, %v1705
      %v1710 = vand.u32 2147483647, %v1700
      %vm1711 = vcmp.eq.f32.partialorder %v1710, 8.507059e+37
      %v1712 = vand.u32 %v1700, 2147483648
      %v1713 = vor.u32 1.1754944e-38, %v1712
      %v1714 = vsel %vm1711, %v1713, %v1709
      %v1715 = vmul.f32 %v1690, %v1714
      %v1716 = vmin.f32 %v1715, 1.0
      %v1717 = vmax.f32 %v1716, -1.0
      %v1718 = vmul.f32 %v1413, %v1413
      %v1719 = vmin.f32 16.0, %v1718
      %v1720 = vmul.f32 %v1719, 2.1237322e-06
      %v1721 = vadd.f32 %v1720, 0.00028619796
      %v1722 = vmul.f32 %v1719, %v1721
      %v1723 = vadd.f32 %v1722, 0.0036580483
      %v1724 = vmul.f32 %v1719, %v1723
      %v1725 = vadd.f32 %v1724, 0.05243302
      %v1726 = vmul.f32 %v1719, %v1725
      %v1727 = vadd.f32 %v1726, 0.18741608
      %v1728 = vmul.f32 %v1719, %v1727
      %v1729 = vadd.f32 %v1728, 1.1283791
      %v1730 = vmul.f32 %v1413, %v1729
      %v1731 = vmul.f32 %v1719, 3.8918573e-05
      %v1732 = vadd.f32 %v1731, 0.001143296
      %v1733 = vmul.f32 %v1719, %v1732
      %v1734 = vadd.f32 %v1733, 0.014752088
      %v1735 = vmul.f32 %v1719, %v1734
      %v1736 = vadd.f32 %v1735, 0.112945676
      %v1737 = vmul.f32 %v1719, %v1736
      %v1738 = vadd.f32 %v1737, 0.4994258
      %v1739 = vmul.f32 %v1719, %v1738
      %v1740 = vadd.f32 %v1739, 1.0
      %v1741 = vrcp.pop %v1740
      %v1742 = vmul.f32 %v1740, %v1741
      %v1743 = vsub.f32 1.0, %v1742
      %v1744 = vmul.f32 %v1741, %v1743
      %v1745 = vadd.f32 %v1741, %v1744
      %vm1746 = vweird.f32 %v1740
      %vm1747 = vweird.f32 %v1741
      %vm1748 = vmor %vm1746, %vm1747
      %v1749 = vsel %vm1748, %v1741, %v1745
      %v1750 = vand.u32 2147483647, %v1740
      %vm1751 = vcmp.eq.f32.partialorder %v1750, 8.507059e+37
      %v1752 = vand.u32 %v1740, 2147483648
      %v1753 = vor.u32 1.1754944e-38, %v1752
      %v1754 = vsel %vm1751, %v1753, %v1749
      %v1755 = vmul.f32 %v1730, %v1754
      %v1756 = vmin.f32 %v1755, 1.0
      %v1757 = vmax.f32 %v1756, -1.0
      %v1758 = vmul.f32 %v1414, %v1414
      %v1759 = vmin.f32 16.0, %v1758
      %v1760 = vmul.f32 %v1759, 2.1237322e-06
      %v1761 = vadd.f32 %v1760, 0.00028619796
      %v1762 = vmul.f32 %v1759, %v1761
      %v1763 = vadd.f32 %v1762, 0.0036580483
      %v1764 = vmul.f32 %v1759, %v1763
      %v1765 = vadd.f32 %v1764, 0.05243302
      %v1766 = vmul.f32 %v1759, %v1765
      %v1767 = vadd.f32 %v1766, 0.18741608
      %v1768 = vmul.f32 %v1759, %v1767
      %v1769 = vadd.f32 %v1768, 1.1283791
      %v1770 = vmul.f32 %v1414, %v1769
      %v1771 = vmul.f32 %v1759, 3.8918573e-05
      %v1772 = vadd.f32 %v1771, 0.001143296
      %v1773 = vmul.f32 %v1759, %v1772
      %v1774 = vadd.f32 %v1773, 0.014752088
      %v1775 = vmul.f32 %v1759, %v1774
      %v1776 = vadd.f32 %v1775, 0.112945676
      %v1777 = vmul.f32 %v1759, %v1776
      %v1778 = vadd.f32 %v1777, 0.4994258
      %v1779 = vmul.f32 %v1759, %v1778
      %v1780 = vadd.f32 %v1779, 1.0
      %v1781 = vrcp.pop %v1780
      %v1782 = vmul.f32 %v1780, %v1781
      %v1783 = vsub.f32 1.0, %v1782
      %v1784 = vmul.f32 %v1781, %v1783
      %v1785 = vadd.f32 %v1781, %v1784
      %vm1786 = vweird.f32 %v1780
      %vm1787 = vweird.f32 %v1781
      %vm1788 = vmor %vm1786, %vm1787
      %v1789 = vsel %vm1788, %v1781, %v1785
      %v1790 = vand.u32 2147483647, %v1780
      %vm1791 = vcmp.eq.f32.partialorder %v1790, 8.507059e+37
      %v1792 = vand.u32 %v1780, 2147483648
      %v1793 = vor.u32 1.1754944e-38, %v1792
      %v1794 = vsel %vm1791, %v1793, %v1789
      %v1795 = vmul.f32 %v1770, %v1794
      %v1796 = vmin.f32 %v1795, 1.0
      %v1797 = vmax.f32 %v1796, -1.0
      %v1798 = vmul.f32 %v1415, %v1415
      %v1799 = vmin.f32 16.0, %v1798
      %v1800 = vmul.f32 %v1799, 2.1237322e-06
      %v1801 = vadd.f32 %v1800, 0.00028619796
      %v1802 = vmul.f32 %v1799, %v1801
      %v1803 = vadd.f32 %v1802, 0.0036580483
      %v1804 = vmul.f32 %v1799, %v1803
      %v1805 = vadd.f32 %v1804, 0.05243302
      %v1806 = vmul.f32 %v1799, %v1805
      %v1807 = vadd.f32 %v1806, 0.18741608
      %v1808 = vmul.f32 %v1799, %v1807
      %v1809 = vadd.f32 %v1808, 1.1283791
      %v1810 = vmul.f32 %v1415, %v1809
      %v1811 = vmul.f32 %v1799, 3.8918573e-05
      %v1812 = vadd.f32 %v1811, 0.001143296
      %v1813 = vmul.f32 %v1799, %v1812
      %v1814 = vadd.f32 %v1813, 0.014752088
      %v1815 = vmul.f32 %v1799, %v1814
      %v1816 = vadd.f32 %v1815, 0.112945676
      %v1817 = vmul.f32 %v1799, %v1816
      %v1818 = vadd.f32 %v1817, 0.4994258
      %v1819 = vmul.f32 %v1799, %v1818
      %v1820 = vadd.f32 %v1819, 1.0
      %v1821 = vrcp.pop %v1820
      %v1822 = vmul.f32 %v1820, %v1821
      %v1823 = vsub.f32 1.0, %v1822
      %v1824 = vmul.f32 %v1821, %v1823
      %v1825 = vadd.f32 %v1821, %v1824
      %vm1826 = vweird.f32 %v1820
      %vm1827 = vweird.f32 %v1821
      %vm1828 = vmor %vm1826, %vm1827
      %v1829 = vsel %vm1828, %v1821, %v1825
      %v1830 = vand.u32 2147483647, %v1820
      %vm1831 = vcmp.eq.f32.partialorder %v1830, 8.507059e+37
      %v1832 = vand.u32 %v1820, 2147483648
      %v1833 = vor.u32 1.1754944e-38, %v1832
      %v1834 = vsel %vm1831, %v1833, %v1829
      %v1835 = vmul.f32 %v1810, %v1834
      %v1836 = vmin.f32 %v1835, 1.0
      %v1837 = vmax.f32 %v1836, -1.0
      %v1838 = vmul.f32 %v1416, %v1416
      %v1839 = vmin.f32 16.0, %v1838
      %v1840 = vmul.f32 %v1839, 2.1237322e-06
      %v1841 = vadd.f32 %v1840, 0.00028619796
      %v1842 = vmul.f32 %v1839, %v1841
      %v1843 = vadd.f32 %v1842, 0.0036580483
      %v1844 = vmul.f32 %v1839, %v1843
      %v1845 = vadd.f32 %v1844, 0.05243302
      %v1846 = vmul.f32 %v1839, %v1845
      %v1847 = vadd.f32 %v1846, 0.18741608
      %v1848 = vmul.f32 %v1839, %v1847
      %v1849 = vadd.f32 %v1848, 1.1283791
      %v1850 = vmul.f32 %v1416, %v1849
      %v1851 = vmul.f32 %v1839, 3.8918573e-05
      %v1852 = vadd.f32 %v1851, 0.001143296
      %v1853 = vmul.f32 %v1839, %v1852
      %v1854 = vadd.f32 %v1853, 0.014752088
      %v1855 = vmul.f32 %v1839, %v1854
      %v1856 = vadd.f32 %v1855, 0.112945676
      %v1857 = vmul.f32 %v1839, %v1856
      %v1858 = vadd.f32 %v1857, 0.4994258
      %v1859 = vmul.f32 %v1839, %v1858
      %v1860 = vadd.f32 %v1859, 1.0
      %v1861 = vrcp.pop %v1860
      %v1862 = vmul.f32 %v1860, %v1861
      %v1863 = vsub.f32 1.0, %v1862
      %v1864 = vmul.f32 %v1861, %v1863
      %v1865 = vadd.f32 %v1861, %v1864
      %vm1866 = vweird.f32 %v1860
      %vm1867 = vweird.f32 %v1861
      %vm1868 = vmor %vm1866, %vm1867
      %v1869 = vsel %vm1868, %v1861, %v1865
      %v1870 = vand.u32 2147483647, %v1860
      %vm1871 = vcmp.eq.f32.partialorder %v1870, 8.507059e+37
      %v1872 = vand.u32 %v1860, 2147483648
      %v1873 = vor.u32 1.1754944e-38, %v1872
      %v1874 = vsel %vm1871, %v1873, %v1869
      %v1875 = vmul.f32 %v1850, %v1874
      %v1876 = vmin.f32 %v1875, 1.0
      %v1877 = vmax.f32 %v1876, -1.0
      %v1878 = vmul.f32 %v1417, %v1417
      %v1879 = vmin.f32 16.0, %v1878
      %v1880 = vmul.f32 %v1879, 2.1237322e-06
      %v1881 = vadd.f32 %v1880, 0.00028619796
      %v1882 = vmul.f32 %v1879, %v1881
      %v1883 = vadd.f32 %v1882, 0.0036580483
      %v1884 = vmul.f32 %v1879, %v1883
      %v1885 = vadd.f32 %v1884, 0.05243302
      %v1886 = vmul.f32 %v1879, %v1885
      %v1887 = vadd.f32 %v1886, 0.18741608
      %v1888 = vmul.f32 %v1879, %v1887
      %v1889 = vadd.f32 %v1888, 1.1283791
      %v1890 = vmul.f32 %v1417, %v1889
      %v1891 = vmul.f32 %v1879, 3.8918573e-05
      %v1892 = vadd.f32 %v1891, 0.001143296
      %v1893 = vmul.f32 %v1879, %v1892
      %v1894 = vadd.f32 %v1893, 0.014752088
      %v1895 = vmul.f32 %v1879, %v1894
      %v1896 = vadd.f32 %v1895, 0.112945676
      %v1897 = vmul.f32 %v1879, %v1896
      %v1898 = vadd.f32 %v1897, 0.4994258
      %v1899 = vmul.f32 %v1879, %v1898
      %v1900 = vadd.f32 %v1899, 1.0
      %v1901 = vrcp.pop %v1900
      %v1902 = vmul.f32 %v1900, %v1901
      %v1903 = vsub.f32 1.0, %v1902
      %v1904 = vmul.f32 %v1901, %v1903
      %v1905 = vadd.f32 %v1901, %v1904
      %vm1906 = vweird.f32 %v1900
      %vm1907 = vweird.f32 %v1901
      %vm1908 = vmor %vm1906, %vm1907
      %v1909 = vsel %vm1908, %v1901, %v1905
      %v1910 = vand.u32 2147483647, %v1900
      %vm1911 = vcmp.eq.f32.partialorder %v1910, 8.507059e+37
      %v1912 = vand.u32 %v1900, 2147483648
      %v1913 = vor.u32 1.1754944e-38, %v1912
      %v1914 = vsel %vm1911, %v1913, %v1909
      %v1915 = vmul.f32 %v1890, %v1914
      %v1916 = vmin.f32 %v1915, 1.0
      %v1917 = vmax.f32 %v1916, -1.0
      %v1918 = vmul.f32 %v1418, %v1418
      %v1919 = vmin.f32 16.0, %v1918
      %v1920 = vmul.f32 %v1919, 2.1237322e-06
      %v1921 = vadd.f32 %v1920, 0.00028619796
      %v1922 = vmul.f32 %v1919, %v1921
      %v1923 = vadd.f32 %v1922, 0.0036580483
      %v1924 = vmul.f32 %v1919, %v1923
      %v1925 = vadd.f32 %v1924, 0.05243302
      %v1926 = vmul.f32 %v1919, %v1925
      %v1927 = vadd.f32 %v1926, 0.18741608
      %v1928 = vmul.f32 %v1919, %v1927
      %v1929 = vadd.f32 %v1928, 1.1283791
      %v1930 = vmul.f32 %v1418, %v1929
      %v1931 = vmul.f32 %v1919, 3.8918573e-05
      %v1932 = vadd.f32 %v1931, 0.001143296
      %v1933 = vmul.f32 %v1919, %v1932
      %v1934 = vadd.f32 %v1933, 0.014752088
      %v1935 = vmul.f32 %v1919, %v1934
      %v1936 = vadd.f32 %v1935, 0.112945676
      %v1937 = vmul.f32 %v1919, %v1936
      %v1938 = vadd.f32 %v1937, 0.4994258
      %v1939 = vmul.f32 %v1919, %v1938
      %v1940 = vadd.f32 %v1939, 1.0
      %v1941 = vrcp.pop %v1940
      %v1942 = vmul.f32 %v1940, %v1941
      %v1943 = vsub.f32 1.0, %v1942
      %v1944 = vmul.f32 %v1941, %v1943
      %v1945 = vadd.f32 %v1941, %v1944
      %vm1946 = vweird.f32 %v1940
      %vm1947 = vweird.f32 %v1941
      %vm1948 = vmor %vm1946, %vm1947
      %v1949 = vsel %vm1948, %v1941, %v1945
      %v1950 = vand.u32 2147483647, %v1940
      %vm1951 = vcmp.eq.f32.partialorder %v1950, 8.507059e+37
      %v1952 = vand.u32 %v1940, 2147483648
      %v1953 = vor.u32 1.1754944e-38, %v1952
      %v1954 = vsel %vm1951, %v1953, %v1949
      %v1955 = vmul.f32 %v1930, %v1954
      %v1956 = vmin.f32 %v1955, 1.0
      %v1957 = vmax.f32 %v1956, -1.0
      %v1958 = vmul.f32 %v1419, %v1419
      %v1959 = vmin.f32 16.0, %v1958
      %v1960 = vmul.f32 %v1959, 2.1237322e-06
      %v1961 = vadd.f32 %v1960, 0.00028619796
      %v1962 = vmul.f32 %v1959, %v1961
      %v1963 = vadd.f32 %v1962, 0.0036580483
      %v1964 = vmul.f32 %v1959, %v1963
      %v1965 = vadd.f32 %v1964, 0.05243302
      %v1966 = vmul.f32 %v1959, %v1965
      %v1967 = vadd.f32 %v1966, 0.18741608
      %v1968 = vmul.f32 %v1959, %v1967
      %v1969 = vadd.f32 %v1968, 1.1283791
      %v1970 = vmul.f32 %v1419, %v1969
      %v1971 = vmul.f32 %v1959, 3.8918573e-05
      %v1972 = vadd.f32 %v1971, 0.001143296
      %v1973 = vmul.f32 %v1959, %v1972
      %v1974 = vadd.f32 %v1973, 0.014752088
      %v1975 = vmul.f32 %v1959, %v1974
      %v1976 = vadd.f32 %v1975, 0.112945676
      %v1977 = vmul.f32 %v1959, %v1976
      %v1978 = vadd.f32 %v1977, 0.4994258
      %v1979 = vmul.f32 %v1959, %v1978
      %v1980 = vadd.f32 %v1979, 1.0
      %v1981 = vrcp.pop %v1980
      %v1982 = vmul.f32 %v1980, %v1981
      %v1983 = vsub.f32 1.0, %v1982
      %v1984 = vmul.f32 %v1981, %v1983
      %v1985 = vadd.f32 %v1981, %v1984
      %vm1986 = vweird.f32 %v1980
      %vm1987 = vweird.f32 %v1981
      %vm1988 = vmor %vm1986, %vm1987
      %v1989 = vsel %vm1988, %v1981, %v1985
      %v1990 = vand.u32 2147483647, %v1980
      %vm1991 = vcmp.eq.f32.partialorder %v1990, 8.507059e+37
      %v1992 = vand.u32 %v1980, 2147483648
      %v1993 = vor.u32 1.1754944e-38, %v1992
      %v1994 = vsel %vm1991, %v1993, %v1989
      %v1995 = vmul.f32 %v1970, %v1994
      %v1996 = vmin.f32 %v1995, 1.0
      %v1997 = vmax.f32 %v1996, -1.0
      %v1998 = vmul.f32 %v1420, %v1420
      %v1999 = vmin.f32 16.0, %v1998
      %v2000 = vmul.f32 %v1999, 2.1237322e-06
      %v2001 = vadd.f32 %v2000, 0.00028619796
      %v2002 = vmul.f32 %v1999, %v2001
      %v2003 = vadd.f32 %v2002, 0.0036580483
      %v2004 = vmul.f32 %v1999, %v2003
      %v2005 = vadd.f32 %v2004, 0.05243302
      %v2006 = vmul.f32 %v1999, %v2005
      %v2007 = vadd.f32 %v2006, 0.18741608
      %v2008 = vmul.f32 %v1999, %v2007
      %v2009 = vadd.f32 %v2008, 1.1283791
      %v2010 = vmul.f32 %v1420, %v2009
      %v2011 = vmul.f32 %v1999, 3.8918573e-05
      %v2012 = vadd.f32 %v2011, 0.001143296
      %v2013 = vmul.f32 %v1999, %v2012
      %v2014 = vadd.f32 %v2013, 0.014752088
      %v2015 = vmul.f32 %v1999, %v2014
      %v2016 = vadd.f32 %v2015, 0.112945676
      %v2017 = vmul.f32 %v1999, %v2016
      %v2018 = vadd.f32 %v2017, 0.4994258
      %v2019 = vmul.f32 %v1999, %v2018
      %v2020 = vadd.f32 %v2019, 1.0
      %v2021 = vrcp.pop %v2020
      %v2022 = vmul.f32 %v2020, %v2021
      %v2023 = vsub.f32 1.0, %v2022
      %v2024 = vmul.f32 %v2021, %v2023
      %v2025 = vadd.f32 %v2021, %v2024
      %vm2026 = vweird.f32 %v2020
      %vm2027 = vweird.f32 %v2021
      %vm2028 = vmor %vm2026, %vm2027
      %v2029 = vsel %vm2028, %v2021, %v2025
      %v2030 = vand.u32 2147483647, %v2020
      %vm2031 = vcmp.eq.f32.partialorder %v2030, 8.507059e+37
      %v2032 = vand.u32 %v2020, 2147483648
      %v2033 = vor.u32 1.1754944e-38, %v2032
      %v2034 = vsel %vm2031, %v2033, %v2029
      %v2035 = vmul.f32 %v2010, %v2034
      %v2036 = vmin.f32 %v2035, 1.0
      %v2037 = vmax.f32 %v2036, -1.0
      %v2038 = vmul.f32 %v1421, %v1421
      %v2039 = vmin.f32 16.0, %v2038
      %v2040 = vmul.f32 %v2039, 2.1237322e-06
      %v2041 = vadd.f32 %v2040, 0.00028619796
      %v2042 = vmul.f32 %v2039, %v2041
      %v2043 = vadd.f32 %v2042, 0.0036580483
      %v2044 = vmul.f32 %v2039, %v2043
      %v2045 = vadd.f32 %v2044, 0.05243302
      %v2046 = vmul.f32 %v2039, %v2045
      %v2047 = vadd.f32 %v2046, 0.18741608
      %v2048 = vmul.f32 %v2039, %v2047
      %v2049 = vadd.f32 %v2048, 1.1283791
      %v2050 = vmul.f32 %v1421, %v2049
      %v2051 = vmul.f32 %v2039, 3.8918573e-05
      %v2052 = vadd.f32 %v2051, 0.001143296
      %v2053 = vmul.f32 %v2039, %v2052
      %v2054 = vadd.f32 %v2053, 0.014752088
      %v2055 = vmul.f32 %v2039, %v2054
      %v2056 = vadd.f32 %v2055, 0.112945676
      %v2057 = vmul.f32 %v2039, %v2056
      %v2058 = vadd.f32 %v2057, 0.4994258
      %v2059 = vmul.f32 %v2039, %v2058
      %v2060 = vadd.f32 %v2059, 1.0
      %v2061 = vrcp.pop %v2060
      %v2062 = vmul.f32 %v2060, %v2061
      %v2063 = vsub.f32 1.0, %v2062
      %v2064 = vmul.f32 %v2061, %v2063
      %v2065 = vadd.f32 %v2061, %v2064
      %vm2066 = vweird.f32 %v2060
      %vm2067 = vweird.f32 %v2061
      %vm2068 = vmor %vm2066, %vm2067
      %v2069 = vsel %vm2068, %v2061, %v2065
      %v2070 = vand.u32 2147483647, %v2060
      %vm2071 = vcmp.eq.f32.partialorder %v2070, 8.507059e+37
      %v2072 = vand.u32 %v2060, 2147483648
      %v2073 = vor.u32 1.1754944e-38, %v2072
      %v2074 = vsel %vm2071, %v2073, %v2069
      %v2075 = vmul.f32 %v2050, %v2074
      %v2076 = vmin.f32 %v2075, 1.0
      %v2077 = vmax.f32 %v2076, -1.0
      %v2078 = vmul.f32 %v1422, %v1422
      %v2079 = vmin.f32 16.0, %v2078
      %v2080 = vmul.f32 %v2079, 2.1237322e-06
      %v2081 = vadd.f32 %v2080, 0.00028619796
      %v2082 = vmul.f32 %v2079, %v2081
      %v2083 = vadd.f32 %v2082, 0.0036580483
      %v2084 = vmul.f32 %v2079, %v2083
      %v2085 = vadd.f32 %v2084, 0.05243302
      %v2086 = vmul.f32 %v2079, %v2085
      %v2087 = vadd.f32 %v2086, 0.18741608
      %v2088 = vmul.f32 %v2079, %v2087
      %v2089 = vadd.f32 %v2088, 1.1283791
      %v2090 = vmul.f32 %v1422, %v2089
      %v2091 = vmul.f32 %v2079, 3.8918573e-05
      %v2092 = vadd.f32 %v2091, 0.001143296
      %v2093 = vmul.f32 %v2079, %v2092
      %v2094 = vadd.f32 %v2093, 0.014752088
      %v2095 = vmul.f32 %v2079, %v2094
      %v2096 = vadd.f32 %v2095, 0.112945676
      %v2097 = vmul.f32 %v2079, %v2096
      %v2098 = vadd.f32 %v2097, 0.4994258
      %v2099 = vmul.f32 %v2079, %v2098
      %v2100 = vadd.f32 %v2099, 1.0
      %v2101 = vrcp.pop %v2100
      %v2102 = vmul.f32 %v2100, %v2101
      %v2103 = vsub.f32 1.0, %v2102
      %v2104 = vmul.f32 %v2101, %v2103
      %v2105 = vadd.f32 %v2101, %v2104
      %vm2106 = vweird.f32 %v2100
      %vm2107 = vweird.f32 %v2101
      %vm2108 = vmor %vm2106, %vm2107
      %v2109 = vsel %vm2108, %v2101, %v2105
      %v2110 = vand.u32 2147483647, %v2100
      %vm2111 = vcmp.eq.f32.partialorder %v2110, 8.507059e+37
      %v2112 = vand.u32 %v2100, 2147483648
      %v2113 = vor.u32 1.1754944e-38, %v2112
      %v2114 = vsel %vm2111, %v2113, %v2109
      %v2115 = vmul.f32 %v2090, %v2114
      %v2116 = vmin.f32 %v2115, 1.0
      %v2117 = vmax.f32 %v2116, -1.0
      %v2118 = vmul.f32 %v1423, %v1423
      %v2119 = vmin.f32 16.0, %v2118
      %v2120 = vmul.f32 %v2119, 2.1237322e-06
      %v2121 = vadd.f32 %v2120, 0.00028619796
      %v2122 = vmul.f32 %v2119, %v2121
      %v2123 = vadd.f32 %v2122, 0.0036580483
      %v2124 = vmul.f32 %v2119, %v2123
      %v2125 = vadd.f32 %v2124, 0.05243302
      %v2126 = vmul.f32 %v2119, %v2125
      %v2127 = vadd.f32 %v2126, 0.18741608
      %v2128 = vmul.f32 %v2119, %v2127
      %v2129 = vadd.f32 %v2128, 1.1283791
      %v2130 = vmul.f32 %v1423, %v2129
      %v2131 = vmul.f32 %v2119, 3.8918573e-05
      %v2132 = vadd.f32 %v2131, 0.001143296
      %v2133 = vmul.f32 %v2119, %v2132
      %v2134 = vadd.f32 %v2133, 0.014752088
      %v2135 = vmul.f32 %v2119, %v2134
      %v2136 = vadd.f32 %v2135, 0.112945676
      %v2137 = vmul.f32 %v2119, %v2136
      %v2138 = vadd.f32 %v2137, 0.4994258
      %v2139 = vmul.f32 %v2119, %v2138
      %v2140 = vadd.f32 %v2139, 1.0
      %v2141 = vrcp.pop %v2140
      %v2142 = vmul.f32 %v2140, %v2141
      %v2143 = vsub.f32 1.0, %v2142
      %v2144 = vmul.f32 %v2141, %v2143
      %v2145 = vadd.f32 %v2141, %v2144
      %vm2146 = vweird.f32 %v2140
      %vm2147 = vweird.f32 %v2141
      %vm2148 = vmor %vm2146, %vm2147
      %v2149 = vsel %vm2148, %v2141, %v2145
      %v2150 = vand.u32 2147483647, %v2140
      %vm2151 = vcmp.eq.f32.partialorder %v2150, 8.507059e+37
      %v2152 = vand.u32 %v2140, 2147483648
      %v2153 = vor.u32 1.1754944e-38, %v2152
      %v2154 = vsel %vm2151, %v2153, %v2149
      %v2155 = vmul.f32 %v2130, %v2154
      %v2156 = vmin.f32 %v2155, 1.0
      %v2157 = vmax.f32 %v2156, -1.0
      %v2158 = vmul.f32 %v1424, %v1424
      %v2159 = vmin.f32 16.0, %v2158
      %v2160 = vmul.f32 %v2159, 2.1237322e-06
      %v2161 = vadd.f32 %v2160, 0.00028619796
      %v2162 = vmul.f32 %v2159, %v2161
      %v2163 = vadd.f32 %v2162, 0.0036580483
      %v2164 = vmul.f32 %v2159, %v2163
      %v2165 = vadd.f32 %v2164, 0.05243302
      %v2166 = vmul.f32 %v2159, %v2165
      %v2167 = vadd.f32 %v2166, 0.18741608
      %v2168 = vmul.f32 %v2159, %v2167
      %v2169 = vadd.f32 %v2168, 1.1283791
      %v2170 = vmul.f32 %v1424, %v2169
      %v2171 = vmul.f32 %v2159, 3.8918573e-05
      %v2172 = vadd.f32 %v2171, 0.001143296
      %v2173 = vmul.f32 %v2159, %v2172
      %v2174 = vadd.f32 %v2173, 0.014752088
      %v2175 = vmul.f32 %v2159, %v2174
      %v2176 = vadd.f32 %v2175, 0.112945676
      %v2177 = vmul.f32 %v2159, %v2176
      %v2178 = vadd.f32 %v2177, 0.4994258
      %v2179 = vmul.f32 %v2159, %v2178
      %v2180 = vadd.f32 %v2179, 1.0
      %v2181 = vrcp.pop %v2180
      %v2182 = vmul.f32 %v2180, %v2181
      %v2183 = vsub.f32 1.0, %v2182
      %v2184 = vmul.f32 %v2181, %v2183
      %v2185 = vadd.f32 %v2181, %v2184
      %vm2186 = vweird.f32 %v2180
      %vm2187 = vweird.f32 %v2181
      %vm2188 = vmor %vm2186, %vm2187
      %v2189 = vsel %vm2188, %v2181, %v2185
      %v2190 = vand.u32 2147483647, %v2180
      %vm2191 = vcmp.eq.f32.partialorder %v2190, 8.507059e+37
      %v2192 = vand.u32 %v2180, 2147483648
      %v2193 = vor.u32 1.1754944e-38, %v2192
      %v2194 = vsel %vm2191, %v2193, %v2189
      %v2195 = vmul.f32 %v2170, %v2194
      %v2196 = vmin.f32 %v2195, 1.0
      %v2197 = vmax.f32 %v2196, -1.0
      %v2198 = vmul.f32 %v1425, %v1425
      %v2199 = vmin.f32 16.0, %v2198
      %v2200 = vmul.f32 %v2199, 2.1237322e-06
      %v2201 = vadd.f32 %v2200, 0.00028619796
      %v2202 = vmul.f32 %v2199, %v2201
      %v2203 = vadd.f32 %v2202, 0.0036580483
      %v2204 = vmul.f32 %v2199, %v2203
      %v2205 = vadd.f32 %v2204, 0.05243302
      %v2206 = vmul.f32 %v2199, %v2205
      %v2207 = vadd.f32 %v2206, 0.18741608
      %v2208 = vmul.f32 %v2199, %v2207
      %v2209 = vadd.f32 %v2208, 1.1283791
      %v2210 = vmul.f32 %v1425, %v2209
      %v2211 = vmul.f32 %v2199, 3.8918573e-05
      %v2212 = vadd.f32 %v2211, 0.001143296
      %v2213 = vmul.f32 %v2199, %v2212
      %v2214 = vadd.f32 %v2213, 0.014752088
      %v2215 = vmul.f32 %v2199, %v2214
      %v2216 = vadd.f32 %v2215, 0.112945676
      %v2217 = vmul.f32 %v2199, %v2216
      %v2218 = vadd.f32 %v2217, 0.4994258
      %v2219 = vmul.f32 %v2199, %v2218
      %v2220 = vadd.f32 %v2219, 1.0
      %v2221 = vrcp.pop %v2220
      %v2222 = vmul.f32 %v2220, %v2221
      %v2223 = vsub.f32 1.0, %v2222
      %v2224 = vmul.f32 %v2221, %v2223
      %v2225 = vadd.f32 %v2221, %v2224
      %vm2226 = vweird.f32 %v2220
      %vm2227 = vweird.f32 %v2221
      %vm2228 = vmor %vm2226, %vm2227
      %v2229 = vsel %vm2228, %v2221, %v2225
      %v2230 = vand.u32 2147483647, %v2220
      %vm2231 = vcmp.eq.f32.partialorder %v2230, 8.507059e+37
      %v2232 = vand.u32 %v2220, 2147483648
      %v2233 = vor.u32 1.1754944e-38, %v2232
      %v2234 = vsel %vm2231, %v2233, %v2229
      %v2235 = vmul.f32 %v2210, %v2234
      %v2236 = vmin.f32 %v2235, 1.0
      %v2237 = vmax.f32 %v2236, -1.0
      %v2238 = vmul.f32 %v1426, %v1426
      %v2239 = vmin.f32 16.0, %v2238
      %v2240 = vmul.f32 %v2239, 2.1237322e-06
      %v2241 = vadd.f32 %v2240, 0.00028619796
      %v2242 = vmul.f32 %v2239, %v2241
      %v2243 = vadd.f32 %v2242, 0.0036580483
      %v2244 = vmul.f32 %v2239, %v2243
      %v2245 = vadd.f32 %v2244, 0.05243302
      %v2246 = vmul.f32 %v2239, %v2245
      %v2247 = vadd.f32 %v2246, 0.18741608
      %v2248 = vmul.f32 %v2239, %v2247
      %v2249 = vadd.f32 %v2248, 1.1283791
      %v2250 = vmul.f32 %v1426, %v2249
      %v2251 = vmul.f32 %v2239, 3.8918573e-05
      %v2252 = vadd.f32 %v2251, 0.001143296
      %v2253 = vmul.f32 %v2239, %v2252
      %v2254 = vadd.f32 %v2253, 0.014752088
      %v2255 = vmul.f32 %v2239, %v2254
      %v2256 = vadd.f32 %v2255, 0.112945676
      %v2257 = vmul.f32 %v2239, %v2256
      %v2258 = vadd.f32 %v2257, 0.4994258
      %v2259 = vmul.f32 %v2239, %v2258
      %v2260 = vadd.f32 %v2259, 1.0
      %v2261 = vrcp.pop %v2260
      %v2262 = vmul.f32 %v2260, %v2261
      %v2263 = vsub.f32 1.0, %v2262
      %v2264 = vmul.f32 %v2261, %v2263
      %v2265 = vadd.f32 %v2261, %v2264
      %vm2266 = vweird.f32 %v2260
      %vm2267 = vweird.f32 %v2261
      %vm2268 = vmor %vm2266, %vm2267
      %v2269 = vsel %vm2268, %v2261, %v2265
      %v2270 = vand.u32 2147483647, %v2260
      %vm2271 = vcmp.eq.f32.partialorder %v2270, 8.507059e+37
      %v2272 = vand.u32 %v2260, 2147483648
      %v2273 = vor.u32 1.1754944e-38, %v2272
      %v2274 = vsel %vm2271, %v2273, %v2269
      %v2275 = vmul.f32 %v2250, %v2274
      %v2276 = vmin.f32 %v2275, 1.0
      %v2277 = vmax.f32 %v2276, -1.0
      %v2278 = vmul.f32 %v1427, %v1427
      %v2279 = vmin.f32 16.0, %v2278
      %v2280 = vmul.f32 %v2279, 2.1237322e-06
      %v2281 = vadd.f32 %v2280, 0.00028619796
      %v2282 = vmul.f32 %v2279, %v2281
      %v2283 = vadd.f32 %v2282, 0.0036580483
      %v2284 = vmul.f32 %v2279, %v2283
      %v2285 = vadd.f32 %v2284, 0.05243302
      %v2286 = vmul.f32 %v2279, %v2285
      %v2287 = vadd.f32 %v2286, 0.18741608
      %v2288 = vmul.f32 %v2279, %v2287
      %v2289 = vadd.f32 %v2288, 1.1283791
      %v2290 = vmul.f32 %v1427, %v2289
      %v2291 = vmul.f32 %v2279, 3.8918573e-05
      %v2292 = vadd.f32 %v2291, 0.001143296
      %v2293 = vmul.f32 %v2279, %v2292
      %v2294 = vadd.f32 %v2293, 0.014752088
      %v2295 = vmul.f32 %v2279, %v2294
      %v2296 = vadd.f32 %v2295, 0.112945676
      %v2297 = vmul.f32 %v2279, %v2296
      %v2298 = vadd.f32 %v2297, 0.4994258
      %v2299 = vmul.f32 %v2279, %v2298
      %v2300 = vadd.f32 %v2299, 1.0
      %v2301 = vrcp.pop %v2300
      %v2302 = vmul.f32 %v2300, %v2301
      %v2303 = vsub.f32 1.0, %v2302
      %v2304 = vmul.f32 %v2301, %v2303
      %v2305 = vadd.f32 %v2301, %v2304
      %vm2306 = vweird.f32 %v2300
      %vm2307 = vweird.f32 %v2301
      %vm2308 = vmor %vm2306, %vm2307
      %v2309 = vsel %vm2308, %v2301, %v2305
      %v2310 = vand.u32 2147483647, %v2300
      %vm2311 = vcmp.eq.f32.partialorder %v2310, 8.507059e+37
      %v2312 = vand.u32 %v2300, 2147483648
      %v2313 = vor.u32 1.1754944e-38, %v2312
      %v2314 = vsel %vm2311, %v2313, %v2309
      %v2315 = vmul.f32 %v2290, %v2314
      %v2316 = vmin.f32 %v2315, 1.0
      %v2317 = vmax.f32 %v2316, -1.0
      %v2318 = vmul.f32 %v1428, %v1428
      %v2319 = vmin.f32 16.0, %v2318
      %v2320 = vmul.f32 %v2319, 2.1237322e-06
      %v2321 = vadd.f32 %v2320, 0.00028619796
      %v2322 = vmul.f32 %v2319, %v2321
      %v2323 = vadd.f32 %v2322, 0.0036580483
      %v2324 = vmul.f32 %v2319, %v2323
      %v2325 = vadd.f32 %v2324, 0.05243302
      %v2326 = vmul.f32 %v2319, %v2325
      %v2327 = vadd.f32 %v2326, 0.18741608
      %v2328 = vmul.f32 %v2319, %v2327
      %v2329 = vadd.f32 %v2328, 1.1283791
      %v2330 = vmul.f32 %v1428, %v2329
      %v2331 = vmul.f32 %v2319, 3.8918573e-05
      %v2332 = vadd.f32 %v2331, 0.001143296
      %v2333 = vmul.f32 %v2319, %v2332
      %v2334 = vadd.f32 %v2333, 0.014752088
      %v2335 = vmul.f32 %v2319, %v2334
      %v2336 = vadd.f32 %v2335, 0.112945676
      %v2337 = vmul.f32 %v2319, %v2336
      %v2338 = vadd.f32 %v2337, 0.4994258
      %v2339 = vmul.f32 %v2319, %v2338
      %v2340 = vadd.f32 %v2339, 1.0
      %v2341 = vrcp.pop %v2340
      %v2342 = vmul.f32 %v2340, %v2341
      %v2343 = vsub.f32 1.0, %v2342
      %v2344 = vmul.f32 %v2341, %v2343
      %v2345 = vadd.f32 %v2341, %v2344
      %vm2346 = vweird.f32 %v2340
      %vm2347 = vweird.f32 %v2341
      %vm2348 = vmor %vm2346, %vm2347
      %v2349 = vsel %vm2348, %v2341, %v2345
      %v2350 = vand.u32 2147483647, %v2340
      %vm2351 = vcmp.eq.f32.partialorder %v2350, 8.507059e+37
      %v2352 = vand.u32 %v2340, 2147483648
      %v2353 = vor.u32 1.1754944e-38, %v2352
      %v2354 = vsel %vm2351, %v2353, %v2349
      %v2355 = vmul.f32 %v2330, %v2354
      %v2356 = vmin.f32 %v2355, 1.0
      %v2357 = vmax.f32 %v2356, -1.0
      %v2358 = vmul.f32 %v1429, %v1429
      %v2359 = vmin.f32 16.0, %v2358
      %v2360 = vmul.f32 %v2359, 2.1237322e-06
      %v2361 = vadd.f32 %v2360, 0.00028619796
      %v2362 = vmul.f32 %v2359, %v2361
      %v2363 = vadd.f32 %v2362, 0.0036580483
      %v2364 = vmul.f32 %v2359, %v2363
      %v2365 = vadd.f32 %v2364, 0.05243302
      %v2366 = vmul.f32 %v2359, %v2365
      %v2367 = vadd.f32 %v2366, 0.18741608
      %v2368 = vmul.f32 %v2359, %v2367
      %v2369 = vadd.f32 %v2368, 1.1283791
      %v2370 = vmul.f32 %v1429, %v2369
      %v2371 = vmul.f32 %v2359, 3.8918573e-05
      %v2372 = vadd.f32 %v2371, 0.001143296
      %v2373 = vmul.f32 %v2359, %v2372
      %v2374 = vadd.f32 %v2373, 0.014752088
      %v2375 = vmul.f32 %v2359, %v2374
      %v2376 = vadd.f32 %v2375, 0.112945676
      %v2377 = vmul.f32 %v2359, %v2376
      %v2378 = vadd.f32 %v2377, 0.4994258
      %v2379 = vmul.f32 %v2359, %v2378
      %v2380 = vadd.f32 %v2379, 1.0
      %v2381 = vrcp.pop %v2380
      %v2382 = vmul.f32 %v2380, %v2381
      %v2383 = vsub.f32 1.0, %v2382
      %v2384 = vmul.f32 %v2381, %v2383
      %v2385 = vadd.f32 %v2381, %v2384
      %vm2386 = vweird.f32 %v2380
      %vm2387 = vweird.f32 %v2381
      %vm2388 = vmor %vm2386, %vm2387
      %v2389 = vsel %vm2388, %v2381, %v2385
      %v2390 = vand.u32 2147483647, %v2380
      %vm2391 = vcmp.eq.f32.partialorder %v2390, 8.507059e+37
      %v2392 = vand.u32 %v2380, 2147483648
      %v2393 = vor.u32 1.1754944e-38, %v2392
      %v2394 = vsel %vm2391, %v2393, %v2389
      %v2395 = vmul.f32 %v2370, %v2394
      %v2396 = vmin.f32 %v2395, 1.0
      %v2397 = vmax.f32 %v2396, -1.0
      %v2398 = vmul.f32 %v1430, %v1430
      %v2399 = vmin.f32 16.0, %v2398
      %v2400 = vmul.f32 %v2399, 2.1237322e-06
      %v2401 = vadd.f32 %v2400, 0.00028619796
      %v2402 = vmul.f32 %v2399, %v2401
      %v2403 = vadd.f32 %v2402, 0.0036580483
      %v2404 = vmul.f32 %v2399, %v2403
      %v2405 = vadd.f32 %v2404, 0.05243302
      %v2406 = vmul.f32 %v2399, %v2405
      %v2407 = vadd.f32 %v2406, 0.18741608
      %v2408 = vmul.f32 %v2399, %v2407
      %v2409 = vadd.f32 %v2408, 1.1283791
      %v2410 = vmul.f32 %v1430, %v2409
      %v2411 = vmul.f32 %v2399, 3.8918573e-05
      %v2412 = vadd.f32 %v2411, 0.001143296
      %v2413 = vmul.f32 %v2399, %v2412
      %v2414 = vadd.f32 %v2413, 0.014752088
      %v2415 = vmul.f32 %v2399, %v2414
      %v2416 = vadd.f32 %v2415, 0.112945676
      %v2417 = vmul.f32 %v2399, %v2416
      %v2418 = vadd.f32 %v2417, 0.4994258
      %v2419 = vmul.f32 %v2399, %v2418
      %v2420 = vadd.f32 %v2419, 1.0
      %v2421 = vrcp.pop %v2420
      %v2422 = vmul.f32 %v2420, %v2421
      %v2423 = vsub.f32 1.0, %v2422
      %v2424 = vmul.f32 %v2421, %v2423
      %v2425 = vadd.f32 %v2421, %v2424
      %vm2426 = vweird.f32 %v2420
      %vm2427 = vweird.f32 %v2421
      %vm2428 = vmor %vm2426, %vm2427
      %v2429 = vsel %vm2428, %v2421, %v2425
      %v2430 = vand.u32 2147483647, %v2420
      %vm2431 = vcmp.eq.f32.partialorder %v2430, 8.507059e+37
      %v2432 = vand.u32 %v2420, 2147483648
      %v2433 = vor.u32 1.1754944e-38, %v2432
      %v2434 = vsel %vm2431, %v2433, %v2429
      %v2435 = vmul.f32 %v2410, %v2434
      %v2436 = vmin.f32 %v2435, 1.0
      %v2437 = vmax.f32 %v2436, -1.0
      %v2438 = vmul.f32 %v1431, %v1431
      %v2439 = vmin.f32 16.0, %v2438
      %v2440 = vmul.f32 %v2439, 2.1237322e-06
      %v2441 = vadd.f32 %v2440, 0.00028619796
      %v2442 = vmul.f32 %v2439, %v2441
      %v2443 = vadd.f32 %v2442, 0.0036580483
      %v2444 = vmul.f32 %v2439, %v2443
      %v2445 = vadd.f32 %v2444, 0.05243302
      %v2446 = vmul.f32 %v2439, %v2445
      %v2447 = vadd.f32 %v2446, 0.18741608
      %v2448 = vmul.f32 %v2439, %v2447
      %v2449 = vadd.f32 %v2448, 1.1283791
      %v2450 = vmul.f32 %v1431, %v2449
      %v2451 = vmul.f32 %v2439, 3.8918573e-05
      %v2452 = vadd.f32 %v2451, 0.001143296
      %v2453 = vmul.f32 %v2439, %v2452
      %v2454 = vadd.f32 %v2453, 0.014752088
      %v2455 = vmul.f32 %v2439, %v2454
      %v2456 = vadd.f32 %v2455, 0.112945676
      %v2457 = vmul.f32 %v2439, %v2456
      %v2458 = vadd.f32 %v2457, 0.4994258
      %v2459 = vmul.f32 %v2439, %v2458
      %v2460 = vadd.f32 %v2459, 1.0
      %v2461 = vrcp.pop %v2460
      %v2462 = vmul.f32 %v2460, %v2461
      %v2463 = vsub.f32 1.0, %v2462
      %v2464 = vmul.f32 %v2461, %v2463
      %v2465 = vadd.f32 %v2461, %v2464
      %vm2466 = vweird.f32 %v2460
      %vm2467 = vweird.f32 %v2461
      %vm2468 = vmor %vm2466, %vm2467
      %v2469 = vsel %vm2468, %v2461, %v2465
      %v2470 = vand.u32 2147483647, %v2460
      %vm2471 = vcmp.eq.f32.partialorder %v2470, 8.507059e+37
      %v2472 = vand.u32 %v2460, 2147483648
      %v2473 = vor.u32 1.1754944e-38, %v2472
      %v2474 = vsel %vm2471, %v2473, %v2469
      %v2475 = vmul.f32 %v2450, %v2474
      %v2476 = vmin.f32 %v2475, 1.0
      %v2477 = vmax.f32 %v2476, -1.0
      %v2478 = vmul.f32 %v1432, %v1432
      %v2479 = vmin.f32 16.0, %v2478
      %v2480 = vmul.f32 %v2479, 2.1237322e-06
      %v2481 = vadd.f32 %v2480, 0.00028619796
      %v2482 = vmul.f32 %v2479, %v2481
      %v2483 = vadd.f32 %v2482, 0.0036580483
      %v2484 = vmul.f32 %v2479, %v2483
      %v2485 = vadd.f32 %v2484, 0.05243302
      %v2486 = vmul.f32 %v2479, %v2485
      %v2487 = vadd.f32 %v2486, 0.18741608
      %v2488 = vmul.f32 %v2479, %v2487
      %v2489 = vadd.f32 %v2488, 1.1283791
      %v2490 = vmul.f32 %v1432, %v2489
      %v2491 = vmul.f32 %v2479, 3.8918573e-05
      %v2492 = vadd.f32 %v2491, 0.001143296
      %v2493 = vmul.f32 %v2479, %v2492
      %v2494 = vadd.f32 %v2493, 0.014752088
      %v2495 = vmul.f32 %v2479, %v2494
      %v2496 = vadd.f32 %v2495, 0.112945676
      %v2497 = vmul.f32 %v2479, %v2496
      %v2498 = vadd.f32 %v2497, 0.4994258
      %v2499 = vmul.f32 %v2479, %v2498
      %v2500 = vadd.f32 %v2499, 1.0
      %v2501 = vrcp.pop %v2500
      %v2502 = vmul.f32 %v2500, %v2501
      %v2503 = vsub.f32 1.0, %v2502
      %v2504 = vmul.f32 %v2501, %v2503
      %v2505 = vadd.f32 %v2501, %v2504
      %vm2506 = vweird.f32 %v2500
      %vm2507 = vweird.f32 %v2501
      %vm2508 = vmor %vm2506, %vm2507
      %v2509 = vsel %vm2508, %v2501, %v2505
      %v2510 = vand.u32 2147483647, %v2500
      %vm2511 = vcmp.eq.f32.partialorder %v2510, 8.507059e+37
      %v2512 = vand.u32 %v2500, 2147483648
      %v2513 = vor.u32 1.1754944e-38, %v2512
      %v2514 = vsel %vm2511, %v2513, %v2509
      %v2515 = vmul.f32 %v2490, %v2514
      %v2516 = vmin.f32 %v2515, 1.0
      %v2517 = vmax.f32 %v2516, -1.0
      %v2518 = vmul.f32 %v1433, %v1433
      %v2519 = vmin.f32 16.0, %v2518
      %v2520 = vmul.f32 %v2519, 2.1237322e-06
      %v2521 = vadd.f32 %v2520, 0.00028619796
      %v2522 = vmul.f32 %v2519, %v2521
      %v2523 = vadd.f32 %v2522, 0.0036580483
      %v2524 = vmul.f32 %v2519, %v2523
      %v2525 = vadd.f32 %v2524, 0.05243302
      %v2526 = vmul.f32 %v2519, %v2525
      %v2527 = vadd.f32 %v2526, 0.18741608
      %v2528 = vmul.f32 %v2519, %v2527
      %v2529 = vadd.f32 %v2528, 1.1283791
      %v2530 = vmul.f32 %v1433, %v2529
      %v2531 = vmul.f32 %v2519, 3.8918573e-05
      %v2532 = vadd.f32 %v2531, 0.001143296
      %v2533 = vmul.f32 %v2519, %v2532
      %v2534 = vadd.f32 %v2533, 0.014752088
      %v2535 = vmul.f32 %v2519, %v2534
      %v2536 = vadd.f32 %v2535, 0.112945676
      %v2537 = vmul.f32 %v2519, %v2536
      %v2538 = vadd.f32 %v2537, 0.4994258
      %v2539 = vmul.f32 %v2519, %v2538
      %v2540 = vadd.f32 %v2539, 1.0
      %v2541 = vrcp.pop %v2540
      %v2542 = vmul.f32 %v2540, %v2541
      %v2543 = vsub.f32 1.0, %v2542
      %v2544 = vmul.f32 %v2541, %v2543
      %v2545 = vadd.f32 %v2541, %v2544
      %vm2546 = vweird.f32 %v2540
      %vm2547 = vweird.f32 %v2541
      %vm2548 = vmor %vm2546, %vm2547
      %v2549 = vsel %vm2548, %v2541, %v2545
      %v2550 = vand.u32 2147483647, %v2540
      %vm2551 = vcmp.eq.f32.partialorder %v2550, 8.507059e+37
      %v2552 = vand.u32 %v2540, 2147483648
      %v2553 = vor.u32 1.1754944e-38, %v2552
      %v2554 = vsel %vm2551, %v2553, %v2549
      %v2555 = vmul.f32 %v2530, %v2554
      %v2556 = vmin.f32 %v2555, 1.0
      %v2557 = vmax.f32 %v2556, -1.0
      %v2558 = vmul.f32 %v1434, %v1434
      %v2559 = vmin.f32 16.0, %v2558
      %v2560 = vmul.f32 %v2559, 2.1237322e-06
      %v2561 = vadd.f32 %v2560, 0.00028619796
      %v2562 = vmul.f32 %v2559, %v2561
      %v2563 = vadd.f32 %v2562, 0.0036580483
      %v2564 = vmul.f32 %v2559, %v2563
      %v2565 = vadd.f32 %v2564, 0.05243302
      %v2566 = vmul.f32 %v2559, %v2565
      %v2567 = vadd.f32 %v2566, 0.18741608
      %v2568 = vmul.f32 %v2559, %v2567
      %v2569 = vadd.f32 %v2568, 1.1283791
      %v2570 = vmul.f32 %v1434, %v2569
      %v2571 = vmul.f32 %v2559, 3.8918573e-05
      %v2572 = vadd.f32 %v2571, 0.001143296
      %v2573 = vmul.f32 %v2559, %v2572
      %v2574 = vadd.f32 %v2573, 0.014752088
      %v2575 = vmul.f32 %v2559, %v2574
      %v2576 = vadd.f32 %v2575, 0.112945676
      %v2577 = vmul.f32 %v2559, %v2576
      %v2578 = vadd.f32 %v2577, 0.4994258
      %v2579 = vmul.f32 %v2559, %v2578
      %v2580 = vadd.f32 %v2579, 1.0
      %v2581 = vrcp.pop %v2580
      %v2582 = vmul.f32 %v2580, %v2581
      %v2583 = vsub.f32 1.0, %v2582
      %v2584 = vmul.f32 %v2581, %v2583
      %v2585 = vadd.f32 %v2581, %v2584
      %vm2586 = vweird.f32 %v2580
      %vm2587 = vweird.f32 %v2581
      %vm2588 = vmor %vm2586, %vm2587
      %v2589 = vsel %vm2588, %v2581, %v2585
      %v2590 = vand.u32 2147483647, %v2580
      %vm2591 = vcmp.eq.f32.partialorder %v2590, 8.507059e+37
      %v2592 = vand.u32 %v2580, 2147483648
      %v2593 = vor.u32 1.1754944e-38, %v2592
      %v2594 = vsel %vm2591, %v2593, %v2589
      %v2595 = vmul.f32 %v2570, %v2594
      %v2596 = vmin.f32 %v2595, 1.0
      %v2597 = vmax.f32 %v2596, -1.0
      %v2598 = vmul.f32 %v1435, %v1435
      %v2599 = vmin.f32 16.0, %v2598
      %v2600 = vmul.f32 %v2599, 2.1237322e-06
      %v2601 = vadd.f32 %v2600, 0.00028619796
      %v2602 = vmul.f32 %v2599, %v2601
      %v2603 = vadd.f32 %v2602, 0.0036580483
      %v2604 = vmul.f32 %v2599, %v2603
      %v2605 = vadd.f32 %v2604, 0.05243302
      %v2606 = vmul.f32 %v2599, %v2605
      %v2607 = vadd.f32 %v2606, 0.18741608
      %v2608 = vmul.f32 %v2599, %v2607
      %v2609 = vadd.f32 %v2608, 1.1283791
      %v2610 = vmul.f32 %v1435, %v2609
      %v2611 = vmul.f32 %v2599, 3.8918573e-05
      %v2612 = vadd.f32 %v2611, 0.001143296
      %v2613 = vmul.f32 %v2599, %v2612
      %v2614 = vadd.f32 %v2613, 0.014752088
      %v2615 = vmul.f32 %v2599, %v2614
      %v2616 = vadd.f32 %v2615, 0.112945676
      %v2617 = vmul.f32 %v2599, %v2616
      %v2618 = vadd.f32 %v2617, 0.4994258
      %v2619 = vmul.f32 %v2599, %v2618
      %v2620 = vadd.f32 %v2619, 1.0
      %v2621 = vrcp.pop %v2620
      %v2622 = vmul.f32 %v2620, %v2621
      %v2623 = vsub.f32 1.0, %v2622
      %v2624 = vmul.f32 %v2621, %v2623
      %v2625 = vadd.f32 %v2621, %v2624
      %vm2626 = vweird.f32 %v2620
      %vm2627 = vweird.f32 %v2621
      %vm2628 = vmor %vm2626, %vm2627
      %v2629 = vsel %vm2628, %v2621, %v2625
      %v2630 = vand.u32 2147483647, %v2620
      %vm2631 = vcmp.eq.f32.partialorder %v2630, 8.507059e+37
      %v2632 = vand.u32 %v2620, 2147483648
      %v2633 = vor.u32 1.1754944e-38, %v2632
      %v2634 = vsel %vm2631, %v2633, %v2629
      %v2635 = vmul.f32 %v2610, %v2634
      %v2636 = vmin.f32 %v2635, 1.0
      %v2637 = vmax.f32 %v2636, -1.0
      %v2638 = vmul.f32 %v1436, %v1436
      %v2639 = vmin.f32 16.0, %v2638
      %v2640 = vmul.f32 %v2639, 2.1237322e-06
      %v2641 = vadd.f32 %v2640, 0.00028619796
      %v2642 = vmul.f32 %v2639, %v2641
      %v2643 = vadd.f32 %v2642, 0.0036580483
      %v2644 = vmul.f32 %v2639, %v2643
      %v2645 = vadd.f32 %v2644, 0.05243302
      %v2646 = vmul.f32 %v2639, %v2645
      %v2647 = vadd.f32 %v2646, 0.18741608
      %v2648 = vmul.f32 %v2639, %v2647
      %v2649 = vadd.f32 %v2648, 1.1283791
      %v2650 = vmul.f32 %v1436, %v2649
      %v2651 = vmul.f32 %v2639, 3.8918573e-05
      %v2652 = vadd.f32 %v2651, 0.001143296
      %v2653 = vmul.f32 %v2639, %v2652
      %v2654 = vadd.f32 %v2653, 0.014752088
      %v2655 = vmul.f32 %v2639, %v2654
      %v2656 = vadd.f32 %v2655, 0.112945676
      %v2657 = vmul.f32 %v2639, %v2656
      %v2658 = vadd.f32 %v2657, 0.4994258
      %v2659 = vmul.f32 %v2639, %v2658
      %v2660 = vadd.f32 %v2659, 1.0
      %v2661 = vrcp.pop %v2660
      %v2662 = vmul.f32 %v2660, %v2661
      %v2663 = vsub.f32 1.0, %v2662
      %v2664 = vmul.f32 %v2661, %v2663
      %v2665 = vadd.f32 %v2661, %v2664
      %vm2666 = vweird.f32 %v2660
      %vm2667 = vweird.f32 %v2661
      %vm2668 = vmor %vm2666, %vm2667
      %v2669 = vsel %vm2668, %v2661, %v2665
      %v2670 = vand.u32 2147483647, %v2660
      %vm2671 = vcmp.eq.f32.partialorder %v2670, 8.507059e+37
      %v2672 = vand.u32 %v2660, 2147483648
      %v2673 = vor.u32 1.1754944e-38, %v2672
      %v2674 = vsel %vm2671, %v2673, %v2669
      %v2675 = vmul.f32 %v2650, %v2674
      %v2676 = vmin.f32 %v2675, 1.0
      %v2677 = vmax.f32 %v2676, -1.0
      %v2678 = vmul.f32 %v1437, %v1437
      %v2679 = vmin.f32 16.0, %v2678
      %v2680 = vmul.f32 %v2679, 2.1237322e-06
      %v2681 = vadd.f32 %v2680, 0.00028619796
      %v2682 = vmul.f32 %v2679, %v2681
      %v2683 = vadd.f32 %v2682, 0.0036580483
      %v2684 = vmul.f32 %v2679, %v2683
      %v2685 = vadd.f32 %v2684, 0.05243302
      %v2686 = vmul.f32 %v2679, %v2685
      %v2687 = vadd.f32 %v2686, 0.18741608
      %v2688 = vmul.f32 %v2679, %v2687
      %v2689 = vadd.f32 %v2688, 1.1283791
      %v2690 = vmul.f32 %v1437, %v2689
      %v2691 = vmul.f32 %v2679, 3.8918573e-05
      %v2692 = vadd.f32 %v2691, 0.001143296
      %v2693 = vmul.f32 %v2679, %v2692
      %v2694 = vadd.f32 %v2693, 0.014752088
      %v2695 = vmul.f32 %v2679, %v2694
      %v2696 = vadd.f32 %v2695, 0.112945676
      %v2697 = vmul.f32 %v2679, %v2696
      %v2698 = vadd.f32 %v2697, 0.4994258
      %v2699 = vmul.f32 %v2679, %v2698
      %v2700 = vadd.f32 %v2699, 1.0
      %v2701 = vrcp.pop %v2700
      %v2702 = vmul.f32 %v2700, %v2701
      %v2703 = vsub.f32 1.0, %v2702
      %v2704 = vmul.f32 %v2701, %v2703
      %v2705 = vadd.f32 %v2701, %v2704
      %vm2706 = vweird.f32 %v2700
      %vm2707 = vweird.f32 %v2701
      %vm2708 = vmor %vm2706, %vm2707
      %v2709 = vsel %vm2708, %v2701, %v2705
      %v2710 = vand.u32 2147483647, %v2700
      %vm2711 = vcmp.eq.f32.partialorder %v2710, 8.507059e+37
      %v2712 = vand.u32 %v2700, 2147483648
      %v2713 = vor.u32 1.1754944e-38, %v2712
      %v2714 = vsel %vm2711, %v2713, %v2709
      %v2715 = vmul.f32 %v2690, %v2714
      %v2716 = vmin.f32 %v2715, 1.0
      %v2717 = vmax.f32 %v2716, -1.0
      %v2718 = vadd.f32 %v1477, 1.0
      %v2719 = vadd.f32 %v1517, 1.0
      %v2720 = vadd.f32 %v1557, 1.0
      %v2721 = vadd.f32 %v1597, 1.0
      %v2722 = vadd.f32 %v1637, 1.0
      %v2723 = vadd.f32 %v1677, 1.0
      %v2724 = vadd.f32 %v1717, 1.0
      %v2725 = vadd.f32 %v1757, 1.0
      %v2726 = vadd.f32 %v1797, 1.0
      %v2727 = vadd.f32 %v1837, 1.0
      %v2728 = vadd.f32 %v1877, 1.0
      %v2729 = vadd.f32 %v1917, 1.0
      %v2730 = vadd.f32 %v1957, 1.0
      %v2731 = vadd.f32 %v1997, 1.0
      %v2732 = vadd.f32 %v2037, 1.0
      %v2733 = vadd.f32 %v2077, 1.0
      %v2734 = vadd.f32 %v2117, 1.0
      %v2735 = vadd.f32 %v2157, 1.0
      %v2736 = vadd.f32 %v2197, 1.0
      %v2737 = vadd.f32 %v2237, 1.0
      %v2738 = vadd.f32 %v2277, 1.0
      %v2739 = vadd.f32 %v2317, 1.0
      %v2740 = vadd.f32 %v2357, 1.0
      %v2741 = vadd.f32 %v2397, 1.0
      %v2742 = vadd.f32 %v2437, 1.0
      %v2743 = vadd.f32 %v2477, 1.0
      %v2744 = vadd.f32 %v2517, 1.0
      %v2745 = vadd.f32 %v2557, 1.0
      %v2746 = vadd.f32 %v2597, 1.0
      %v2747 = vadd.f32 %v2637, 1.0
      %v2748 = vadd.f32 %v2677, 1.0
      %v2749 = vadd.f32 %v2717, 1.0
      %v2750 = vmul.f32 %v1374, %v2718
      %v2751 = vmul.f32 %v1375, %v2719
      %v2752 = vmul.f32 %v1376, %v2720
      %v2753 = vmul.f32 %v1377, %v2721
      %v2754 = vmul.f32 %v1378, %v2722
      %v2755 = vmul.f32 %v1379, %v2723
      %v2756 = vmul.f32 %v1380, %v2724
      %v2757 = vmul.f32 %v1381, %v2725
      %v2758 = vmul.f32 %v1382, %v2726
      %v2759 = vmul.f32 %v1383, %v2727
      %v2760 = vmul.f32 %v1384, %v2728
      %v2761 = vmul.f32 %v1385, %v2729
      %v2762 = vmul.f32 %v1386, %v2730
      %v2763 = vmul.f32 %v1387, %v2731
      %v2764 = vmul.f32 %v1388, %v2732
      %v2765 = vmul.f32 %v1389, %v2733
      %v2766 = vmul.f32 %v1390, %v2734
      %v2767 = vmul.f32 %v1391, %v2735
      %v2768 = vmul.f32 %v1392, %v2736
      %v2769 = vmul.f32 %v1393, %v2737
      %v2770 = vmul.f32 %v1394, %v2738
      %v2771 = vmul.f32 %v1395, %v2739
      %v2772 = vmul.f32 %v1396, %v2740
      %v2773 = vmul.f32 %v1397, %v2741
      %v2774 = vmul.f32 %v1398, %v2742
      %v2775 = vmul.f32 %v1399, %v2743
      %v2776 = vmul.f32 %v1400, %v2744
      %v2777 = vmul.f32 %v1401, %v2745
      %v2778 = vmul.f32 %v1402, %v2746
      %v2779 = vmul.f32 %v1403, %v2747
      %v2780 = vmul.f32 %v1404, %v2748
      %v2781 = vmul.f32 %v1405, %v2749
      %vm2830 = vcmask 1046528
      %v2831 = vrot.slane %v187, 1
      %v2832 = vrot.slane %v188, 1
      %v2833 = vsel %vm2830, %v2831, %v2832
      %v2834 = vrot.slane %v189, 1
      %v2835 = vsel %vm2830, %v2832, %v2834
      %v2836 = vrot.slane %v190, 1
      %v2837 = vrot.slane %v191, 1
      %v2838 = vsel %vm2830, %v2836, %v2837
      %v2839 = vrot.slane %v192, 1
      %v2840 = vsel %vm2830, %v2837, %v2839
      %v2841 = vrot.slane %v193, 1
      %v2842 = vrot.slane %v194, 1
      %v2843 = vsel %vm2830, %v2841, %v2842
      %v2844 = vrot.slane %v195, 1
      %v2845 = vsel %vm2830, %v2842, %v2844
      %v2846 = vrot.slane %v196, 1
      %v2847 = vrot.slane %v197, 1
      %v2848 = vsel %vm2830, %v2846, %v2847
      %v2849 = vrot.slane %v198, 1
      %v2850 = vsel %vm2830, %v2847, %v2849
      %v2851 = vrot.slane %v199, 1
      %v2852 = vrot.slane %v200, 1
      %v2853 = vsel %vm2830, %v2851, %v2852
      %v2854 = vrot.slane %v201, 1
      %v2855 = vsel %vm2830, %v2852, %v2854
      %v2856 = vrot.slane %v202, 1
      %v2857 = vrot.slane %v203, 1
      %v2858 = vsel %vm2830, %v2856, %v2857
      %v2859 = vrot.slane %v204, 1
      %v2860 = vsel %vm2830, %v2857, %v2859
      %v2861 = vrot.slane %v205, 1
      %v2862 = vrot.slane %v206, 1
      %v2863 = vsel %vm2830, %v2861, %v2862
      %v2864 = vrot.slane %v207, 1
      %v2865 = vsel %vm2830, %v2862, %v2864
      %v2866 = vrot.slane %v208, 1
      %v2867 = vrot.slane %v209, 1
      %v2868 = vsel %vm2830, %v2866, %v2867
      %v2869 = vrot.slane %v210, 1
      %v2870 = vsel %vm2830, %v2867, %v2869
      %v2871 = vrot.slane %v211, 1
      %v2872 = vrot.slane %v212, 1
      %v2873 = vsel %vm2830, %v2871, %v2872
      %v2874 = vrot.slane %v213, 1
      %v2875 = vsel %vm2830, %v2872, %v2874
      %v2876 = vrot.slane %v214, 1
      %v2877 = vrot.slane %v215, 1
      %v2878 = vsel %vm2830, %v2876, %v2877
      %v2879 = vrot.slane %v216, 1
      %v2880 = vsel %vm2830, %v2877, %v2879
      %v2881 = vrot.slane %v217, 1
      %v2882 = vrot.slane %v218, 1
      %v2883 = vsel %vm2830, %v2881, %v2882
      %v2884 = vrot.slane %v219, 1
      %v2885 = vsel %vm2830, %v2882, %v2884
      %v2886 = vrot.slane %v220, 1
      %v2887 = vrot.slane %v221, 1
      %v2888 = vsel %vm2830, %v2886, %v2887
      %v2889 = vrot.slane %v222, 1
      %v2890 = vsel %vm2830, %v2887, %v2889
      %v2891 = vrot.slane %v223, 1
      %v2892 = vrot.slane %v224, 1
      %v2893 = vsel %vm2830, %v2891, %v2892
      %v2894 = vrot.slane %v225, 1
      %v2895 = vsel %vm2830, %v2892, %v2894
      %v2896 = vrot.slane %v226, 1
      %v2897 = vrot.slane %v227, 1
      %v2898 = vsel %vm2830, %v2896, %v2897
      %v2899 = vrot.slane %v228, 1
      %v2900 = vsel %vm2830, %v2897, %v2899
      %v2901 = vrot.slane %v229, 1
      %v2902 = vrot.slane %v230, 1
      %v2903 = vsel %vm2830, %v2901, %v2902
      %v2904 = vrot.slane %v231, 1
      %v2905 = vsel %vm2830, %v2902, %v2904
      %v2906 = vrot.slane %v232, 1
      %v2907 = vrot.slane %v233, 1
      %v2908 = vsel %vm2830, %v2906, %v2907
      %v2909 = vrot.slane %v234, 1
      %v2910 = vsel %vm2830, %v2907, %v2909
      %v2943 = vsel %vm964, %v2833, 0.0
      %v2944 = vsel %vm964, %v2835, 0.0
      %v2945 = vsel %vm964, %v2838, 0.0
      %v2946 = vsel %vm964, %v2840, 0.0
      %v2947 = vsel %vm964, %v2843, 0.0
      %v2948 = vsel %vm964, %v2845, 0.0
      %v2949 = vsel %vm964, %v2848, 0.0
      %v2950 = vsel %vm964, %v2850, 0.0
      %v2951 = vsel %vm964, %v2853, 0.0
      %v2952 = vsel %vm964, %v2855, 0.0
      %v2953 = vsel %vm964, %v2858, 0.0
      %v2954 = vsel %vm964, %v2860, 0.0
      %v2955 = vsel %vm964, %v2863, 0.0
      %v2956 = vsel %vm964, %v2865, 0.0
      %v2957 = vsel %vm964, %v2868, 0.0
      %v2958 = vsel %vm964, %v2870, 0.0
      %v2959 = vsel %vm964, %v2873, 0.0
      %v2960 = vsel %vm964, %v2875, 0.0
      %v2961 = vsel %vm964, %v2878, 0.0
      %v2962 = vsel %vm964, %v2880, 0.0
      %v2963 = vsel %vm964, %v2883, 0.0
      %v2964 = vsel %vm964, %v2885, 0.0
      %v2965 = vsel %vm964, %v2888, 0.0
      %v2966 = vsel %vm964, %v2890, 0.0
      %v2967 = vsel %vm964, %v2893, 0.0
      %v2968 = vsel %vm964, %v2895, 0.0
      %v2969 = vsel %vm964, %v2898, 0.0
      %v2970 = vsel %vm964, %v2900, 0.0
      %v2971 = vsel %vm964, %v2903, 0.0
      %v2972 = vsel %vm964, %v2905, 0.0
      %v2973 = vsel %vm964, %v2908, 0.0
      %v2974 = vsel %vm964, %v2910, 0.0
      %v2975 = vadd.f32 %v2750, %v2943
      %v2976 = vadd.f32 %v2751, %v2944
      %v2977 = vadd.f32 %v2752, %v2945
      %v2978 = vadd.f32 %v2753, %v2946
      %v2979 = vadd.f32 %v2754, %v2947
      %v2980 = vadd.f32 %v2755, %v2948
      %v2981 = vadd.f32 %v2756, %v2949
      %v2982 = vadd.f32 %v2757, %v2950
      %v2983 = vadd.f32 %v2758, %v2951
      %v2984 = vadd.f32 %v2759, %v2952
      %v2985 = vadd.f32 %v2760, %v2953
      %v2986 = vadd.f32 %v2761, %v2954
      %v2987 = vadd.f32 %v2762, %v2955
      %v2988 = vadd.f32 %v2763, %v2956
      %v2989 = vadd.f32 %v2764, %v2957
      %v2990 = vadd.f32 %v2765, %v2958
      %v2991 = vadd.f32 %v2766, %v2959
      %v2992 = vadd.f32 %v2767, %v2960
      %v2993 = vadd.f32 %v2768, %v2961
      %v2994 = vadd.f32 %v2769, %v2962
      %v2995 = vadd.f32 %v2770, %v2963
      %v2996 = vadd.f32 %v2771, %v2964
      %v2997 = vadd.f32 %v2772, %v2965
      %v2998 = vadd.f32 %v2773, %v2966
      %v2999 = vadd.f32 %v2774, %v2967
      %v3000 = vadd.f32 %v2775, %v2968
      %v3001 = vadd.f32 %v2776, %v2969
      %v3002 = vadd.f32 %v2777, %v2970
      %v3003 = vadd.f32 %v2778, %v2971
      %v3004 = vadd.f32 %v2779, %v2972
      %v3005 = vadd.f32 %v2780, %v2973
      %v3006 = vadd.f32 %v2781, %v2974
      %v3007 = vpack.c.bf16 %v2975, %v2975
      %v3008 = vpack.c.bf16 %v2976, %v2976
      %v3009 = vpack.c.bf16 %v2977, %v2977
      %v3010 = vpack.c.bf16 %v2978, %v2978
      %v3011 = vpack.c.bf16 %v2979, %v2979
      %v3012 = vpack.c.bf16 %v2980, %v2980
      %v3013 = vpack.c.bf16 %v2981, %v2981
      %v3014 = vpack.c.bf16 %v2982, %v2982
      %v3015 = vpack.c.bf16 %v2983, %v2983
      %v3016 = vpack.c.bf16 %v2984, %v2984
      %v3017 = vpack.c.bf16 %v2985, %v2985
      %v3018 = vpack.c.bf16 %v2986, %v2986
      %v3019 = vpack.c.bf16 %v2987, %v2987
      %v3020 = vpack.c.bf16 %v2988, %v2988
      %v3021 = vpack.c.bf16 %v2989, %v2989
      %v3022 = vpack.c.bf16 %v2990, %v2990
      %v3023 = vpack.c.bf16 %v2991, %v2991
      %v3024 = vpack.c.bf16 %v2992, %v2992
      %v3025 = vpack.c.bf16 %v2993, %v2993
      %v3026 = vpack.c.bf16 %v2994, %v2994
      %v3027 = vpack.c.bf16 %v2995, %v2995
      %v3028 = vpack.c.bf16 %v2996, %v2996
      %v3029 = vpack.c.bf16 %v2997, %v2997
      %v3030 = vpack.c.bf16 %v2998, %v2998
      %v3031 = vpack.c.bf16 %v2999, %v2999
      %v3032 = vpack.c.bf16 %v3000, %v3000
      %v3033 = vpack.c.bf16 %v3001, %v3001
      %v3034 = vpack.c.bf16 %v3002, %v3002
      %v3035 = vpack.c.bf16 %v3003, %v3003
      %v3036 = vpack.c.bf16 %v3004, %v3004
      %v3037 = vpack.c.bf16 %v3005, %v3005
      %v3038 = vpack.c.bf16 %v3006, %v3006
      %3039 = vst [vmem:[%s177] sm:$0xf] %v3007
      %3040 = vst [vmem:[%s177 + $0x4] sm:$0xf] %v3008
      %3041 = vst [vmem:[%s177 + $0x8] sm:$0xf] %v3009
      %3042 = vst [vmem:[%s177 + $0xc] sm:$0xf] %v3010
      %3043 = vst [vmem:[%s177 + $0x10] sm:$0xf] %v3011
      %3044 = vst [vmem:[%s177 + $0x14] sm:$0xf] %v3012
      %3045 = vst [vmem:[%s177 + $0x18] sm:$0xf] %v3013
      %3046 = vst [vmem:[%s177 + $0x1c] sm:$0xf] %v3014
      %3047 = vst [vmem:[%s177 + $0x20] sm:$0xf] %v3015
      %3048 = vst [vmem:[%s177 + $0x24] sm:$0xf] %v3016
      %3049 = vst [vmem:[%s177 + $0x28] sm:$0xf] %v3017
      %3050 = vst [vmem:[%s177 + $0x2c] sm:$0xf] %v3018
      %3051 = vst [vmem:[%s177 + $0x30] sm:$0xf] %v3019
      %3052 = vst [vmem:[%s177 + $0x34] sm:$0xf] %v3020
      %3053 = vst [vmem:[%s177 + $0x38] sm:$0xf] %v3021
      %3054 = vst [vmem:[%s177 + $0x3c] sm:$0xf] %v3022
      %3055 = vst [vmem:[%s177 + $0x40] sm:$0xf] %v3023
      %3056 = vst [vmem:[%s177 + $0x44] sm:$0xf] %v3024
      %3057 = vst [vmem:[%s177 + $0x48] sm:$0xf] %v3025
      %3058 = vst [vmem:[%s177 + $0x4c] sm:$0xf] %v3026
      %3059 = vst [vmem:[%s177 + $0x50] sm:$0xf] %v3027
      %3060 = vst [vmem:[%s177 + $0x54] sm:$0xf] %v3028
      %3061 = vst [vmem:[%s177 + $0x58] sm:$0xf] %v3029
      %3062 = vst [vmem:[%s177 + $0x5c] sm:$0xf] %v3030
      %3063 = vst [vmem:[%s177 + $0x60] sm:$0xf] %v3031
      %3064 = vst [vmem:[%s177 + $0x64] sm:$0xf] %v3032
      %3065 = vst [vmem:[%s177 + $0x68] sm:$0xf] %v3033
      %3066 = vst [vmem:[%s177 + $0x6c] sm:$0xf] %v3034
      %3067 = vst [vmem:[%s177 + $0x70] sm:$0xf] %v3035
      %3068 = vst [vmem:[%s177 + $0x74] sm:$0xf] %v3036
      %3069 = vst [vmem:[%s177 + $0x78] sm:$0xf] %v3037
      %3070 = vst [vmem:[%s177 + $0x7c] sm:$0xf] %v3038
      %v3071 = vunpack.c.l.bf16 %v3007
      %v3072 = vunpack.c.l.bf16 %v3008
      %v3073 = vunpack.c.l.bf16 %v3009
      %v3074 = vunpack.c.l.bf16 %v3010
      %v3075 = vunpack.c.l.bf16 %v3011
      %v3076 = vunpack.c.l.bf16 %v3012
      %v3077 = vunpack.c.l.bf16 %v3013
      %v3078 = vunpack.c.l.bf16 %v3014
      %v3079 = vunpack.c.l.bf16 %v3015
      %v3080 = vunpack.c.l.bf16 %v3016
      %v3081 = vunpack.c.l.bf16 %v3017
      %v3082 = vunpack.c.l.bf16 %v3018
      %v3083 = vunpack.c.l.bf16 %v3019
      %v3084 = vunpack.c.l.bf16 %v3020
      %v3085 = vunpack.c.l.bf16 %v3021
      %v3086 = vunpack.c.l.bf16 %v3022
      %v3087 = vunpack.c.l.bf16 %v3023
      %v3088 = vunpack.c.l.bf16 %v3024
      %v3089 = vunpack.c.l.bf16 %v3025
      %v3090 = vunpack.c.l.bf16 %v3026
      %v3091 = vunpack.c.l.bf16 %v3027
      %v3092 = vunpack.c.l.bf16 %v3028
      %v3093 = vunpack.c.l.bf16 %v3029
      %v3094 = vunpack.c.l.bf16 %v3030
      %v3095 = vunpack.c.l.bf16 %v3031
      %v3096 = vunpack.c.l.bf16 %v3032
      %v3097 = vunpack.c.l.bf16 %v3033
      %v3098 = vunpack.c.l.bf16 %v3034
      %v3099 = vunpack.c.l.bf16 %v3035
      %v3100 = vunpack.c.l.bf16 %v3036
      %v3101 = vunpack.c.l.bf16 %v3037
      %v3102 = vunpack.c.l.bf16 %v3038
      %v3103 = vadd.f32 %v3071, %v3072
      %v3104 = vadd.f32 %v3103, %v3073
      %v3105 = vadd.f32 %v3104, %v3074
      %v3106 = vadd.f32 %v3105, %v3075
      %v3107 = vadd.f32 %v3106, %v3076
      %v3108 = vadd.f32 %v3107, %v3077
      %v3109 = vadd.f32 %v3108, %v3078
      %v3110 = vadd.f32 %v3109, %v3079
      %v3111 = vadd.f32 %v3110, %v3080
      %v3112 = vadd.f32 %v3111, %v3081
      %v3113 = vadd.f32 %v3112, %v3082
      %v3114 = vadd.f32 %v3113, %v3083
      %v3115 = vadd.f32 %v3114, %v3084
      %v3116 = vadd.f32 %v3115, %v3085
      %v3117 = vadd.f32 %v3116, %v3086
      %v3118 = vadd.f32 %v3117, %v3087
      %v3119 = vadd.f32 %v3118, %v3088
      %v3120 = vadd.f32 %v3119, %v3089
      %v3121 = vadd.f32 %v3120, %v3090
      %v3122 = vadd.f32 %v3121, %v3091
      %v3123 = vadd.f32 %v3122, %v3092
      %v3124 = vadd.f32 %v3123, %v3093
      %v3125 = vadd.f32 %v3124, %v3094
      %v3126 = vadd.f32 %v3125, %v3095
      %v3127 = vadd.f32 %v3126, %v3096
      %v3128 = vadd.f32 %v3127, %v3097
      %v3129 = vadd.f32 %v3128, %v3098
      %v3130 = vadd.f32 %v3129, %v3099
      %v3131 = vadd.f32 %v3130, %v3100
      %v3132 = vadd.f32 %v3131, %v3101
      %v3133 = vadd.f32 %v3132, %v3102
      %v3134 = vrot.slane %v3133, 4
      %v3135 = vadd.f32 %v3133, %v3134
      %v3136 = vrot.slane %v3135, 2
      %v3137 = vadd.f32 %v3135, %v3136
      %v3138 = vrot.slane %v3137, 1
      %v3139 = vadd.f32 %v3137, %v3138
      %v3140 = vmul.f32 %v3071, %v3071
      %v3141 = vmul.f32 %v3072, %v3072
      %v3142 = vmul.f32 %v3073, %v3073
      %v3143 = vmul.f32 %v3074, %v3074
      %v3144 = vmul.f32 %v3075, %v3075
      %v3145 = vmul.f32 %v3076, %v3076
      %v3146 = vmul.f32 %v3077, %v3077
      %v3147 = vmul.f32 %v3078, %v3078
      %v3148 = vmul.f32 %v3079, %v3079
      %v3149 = vmul.f32 %v3080, %v3080
      %v3150 = vmul.f32 %v3081, %v3081
      %v3151 = vmul.f32 %v3082, %v3082
      %v3152 = vmul.f32 %v3083, %v3083
      %v3153 = vmul.f32 %v3084, %v3084
      %v3154 = vmul.f32 %v3085, %v3085
      %v3155 = vmul.f32 %v3086, %v3086
      %v3156 = vmul.f32 %v3087, %v3087
      %v3157 = vmul.f32 %v3088, %v3088
      %v3158 = vmul.f32 %v3089, %v3089
      %v3159 = vmul.f32 %v3090, %v3090
      %v3160 = vmul.f32 %v3091, %v3091
      %v3161 = vmul.f32 %v3092, %v3092
      %v3162 = vmul.f32 %v3093, %v3093
      %v3163 = vmul.f32 %v3094, %v3094
      %v3164 = vmul.f32 %v3095, %v3095
      %v3165 = vmul.f32 %v3096, %v3096
      %v3166 = vmul.f32 %v3097, %v3097
      %v3167 = vmul.f32 %v3098, %v3098
      %v3168 = vmul.f32 %v3099, %v3099
      %v3169 = vmul.f32 %v3100, %v3100
      %v3170 = vmul.f32 %v3101, %v3101
      %v3171 = vmul.f32 %v3102, %v3102
      %v3172 = vadd.f32 %v3140, %v3141
      %v3173 = vadd.f32 %v3172, %v3142
      %v3174 = vadd.f32 %v3173, %v3143
      %v3175 = vadd.f32 %v3174, %v3144
      %v3176 = vadd.f32 %v3175, %v3145
      %v3177 = vadd.f32 %v3176, %v3146
      %v3178 = vadd.f32 %v3177, %v3147
      %v3179 = vadd.f32 %v3178, %v3148
      %v3180 = vadd.f32 %v3179, %v3149
      %v3181 = vadd.f32 %v3180, %v3150
      %v3182 = vadd.f32 %v3181, %v3151
      %v3183 = vadd.f32 %v3182, %v3152
      %v3184 = vadd.f32 %v3183, %v3153
      %v3185 = vadd.f32 %v3184, %v3154
      %v3186 = vadd.f32 %v3185, %v3155
      %v3187 = vadd.f32 %v3186, %v3156
      %v3188 = vadd.f32 %v3187, %v3157
      %v3189 = vadd.f32 %v3188, %v3158
      %v3190 = vadd.f32 %v3189, %v3159
      %v3191 = vadd.f32 %v3190, %v3160
      %v3192 = vadd.f32 %v3191, %v3161
      %v3193 = vadd.f32 %v3192, %v3162
      %v3194 = vadd.f32 %v3193, %v3163
      %v3195 = vadd.f32 %v3194, %v3164
      %v3196 = vadd.f32 %v3195, %v3165
      %v3197 = vadd.f32 %v3196, %v3166
      %v3198 = vadd.f32 %v3197, %v3167
      %v3199 = vadd.f32 %v3198, %v3168
      %v3200 = vadd.f32 %v3199, %v3169
      %v3201 = vadd.f32 %v3200, %v3170
      %v3202 = vadd.f32 %v3201, %v3171
      %v3203 = vrot.slane %v3202, 4
      %v3204 = vadd.f32 %v3202, %v3203
      %v3205 = vrot.slane %v3204, 2
      %v3206 = vadd.f32 %v3204, %v3205
      %v3207 = vrot.slane %v3206, 1
      %v3208 = vadd.f32 %v3206, %v3207
      %vm3209 = vcmask 1040384
      %v3210 = vsel %vm3209, %v3139, %v3208
      %3211 = vst [vmem:[%s182] sm:$0x3] %v3210
      %s3212 = smul.u32 32, %s15
      %p3213 = scmp.lt.s32.totalorder %s3212, 63
      %s3214 = scalar_select %p3213, %s3212, 63
      %s3215 = smul.addr %s3214, 4
      %s3216 = scalar_lea.vmem %s2, %s3215
      %p3217 = scmp.lt.s32.totalorder %s15, 1
      %s3218 = scalar_select %p3217, %s15, 1
      %s3219 = smul.addr %s3218, 2
      %s3220 = scalar_lea.vmem %s3, %s3219
      // Predicated region
      $region29: #{irmlp_forward.3} parent=27 // pred_check
        %p3221 = pneg %p80
      $region30: #{irmlp_forward.3} parent=27 // pred_check_branch
        %3223 = sbr.rel (%p3221) target = $region32
      $region31: #{irmlp_forward.3} parent=27 // pred_region
        %s3224 = smul.u32 32, %s15
      $region32: #{irmlp_forward.3} parent=27 // pred_fallthru
        _
      // Predicated region
      $region33: #{irmlp_forward.3} parent=27 // pred_check
        %p3225 = pneg %p106
      $region34: #{irmlp_forward.3} parent=27 // pred_check_branch
        %3227 = sbr.rel (%p3225) target = $region36
      $region35: #{irmlp_forward.3} parent=27 // pred_region
        _
      $region36: #{irmlp_forward.3} parent=27 // pred_fallthru
        _
    $region28: #{irmlp_forward.3} parent=5 // pred_fallthru
      _
    %p3228 = scmp.le.s32.totalorder 2, %s10
    // Predicated region
    $region37: #{irmlp_forward.3} parent=5 // pred_check
      %p3229 = pneg %p3228
    $region38: #{irmlp_forward.3} parent=5 // pred_check_branch
      %3231 = sbr.rel (%p3229) target = $region40
    $region39: #{irmlp_forward.3} parent=5 // pred_region
      %s3232 = ssub.s32 %s10, 2
      // Predicated region
      $region41: #{irmlp_forward.3} parent=39 // pred_check
        %p3233 = pneg %p86
      $region42: #{irmlp_forward.3} parent=39 // pred_check_branch
        %3235 = sbr.rel (%p3233) target = $region44
      $region43: #{irmlp_forward.3} parent=39 // pred_region
        %s3236 = smul.u32 32, %s16
        %p3237 = scmp.lt.s32.totalorder %s3236, 63
        %s3238 = scalar_select %p3237, %s3236, 63
        %s3239 = smul.addr %s3238, 4
        %s3240 = scalar_lea.vmem %s2, %s3239
      $region44: #{irmlp_forward.3} parent=39 // pred_fallthru
        _
      // Predicated region
      $region45: #{irmlp_forward.3} parent=39 // pred_check
        %p3241 = pneg %p112
      $region46: #{irmlp_forward.3} parent=39 // pred_check_branch
        %3243 = sbr.rel (%p3241) target = $region48
      $region47: #{irmlp_forward.3} parent=39 // pred_region
        %p3244 = scmp.lt.s32.totalorder %s16, 1
        %s3245 = scalar_select %p3244, %s16, 1
        %s3246 = smul.addr %s3245, 2
        %s3247 = scalar_lea.vmem %s3, %s3246
      $region48: #{irmlp_forward.3} parent=39 // pred_fallthru
        _
    $region40: #{irmlp_forward.3} parent=5 // pred_fallthru
      _
  $region6: #{irmlp_forward.3} parent=0 // loop_footer
    %s14 = sadd.s32 1, %s10
  $region7: #{irmlp_forward.3} parent=0 // loop_footer_branch
    %9 = sbr.rel target = $region3
  $region8: #{irmlp_forward.3} parent=0 // loop_exit
    _

</llo_original>
